<compile_context>
chip_gen: v7x
topology: tpu7x:2x2x1
jax: 0.10.0
libtpu: 0.0.40
codegen_flags: <defaults>
</compile_context>

<pallas_src>
import jax
import jax.numpy as jnp
from jax.experimental import pallas as pl
from jax.experimental.pallas import tpu as pltpu


def _round_up(x, m):
    return ((x + m - 1) // m) * m


# ----------------------------------------------------------------------------
# Fused Pallas kernel (3x conv3x3+ReLU, flatten, actor+critic heads, softmax)
# ----------------------------------------------------------------------------
def _build_fused_call(B, H, W, C3=256, n_act=6):
    H1, W1 = H - 2, W - 2
    H2, W2 = H - 4, W - 4
    H3, W3 = H - 6, W - 6
    assert H3 >= 1 and W3 >= 1, "input spatial dims must be >= 7"

    WP = _round_up(max(W, 8), 8)          # shared padded width (16 for 9x9)
    n = H3 * W3 * C3                      # flattened feature count

    # one extra zero spatial row so the widest (kh,kw) slab stays in bounds
    x_rows = B * H * WP + WP
    a1_rows = B * H1 * WP + WP
    a2_rows = B * H2 * WP + WP
    a3_rows = B * H3 * WP

    def conv_layer(in_ref, w_ref, b_ref, out_ref, Hin, Hout):
        cout = w_ref.shape[2]
        L = ((B - 1) * Hin + Hout) * WP   # one slab covers all images
        acc = jnp.dot(in_ref[0:L, :], w_ref[0],
                      preferred_element_type=jnp.float32)
        for t in range(1, 9):
            kh, kw = t // 3, t % 3
            off = kh * WP + kw
            acc = acc + jnp.dot(in_ref[off:off + L, :], w_ref[t],
                                preferred_element_type=jnp.float32)
        act = jnp.maximum(acc + b_ref[...], 0.0)     # bias bcast + ReLU fused
        # keep only the Hout valid spatial rows of each image
        for b in range(B):
            out_ref[b * Hout * WP:(b + 1) * Hout * WP, :] = (
                act[b * Hin * WP:b * Hin * WP + Hout * WP, :])

    def kernel(x_ref, w1_ref, b1_ref, w2_ref, b2_ref, w3_ref, b3_ref,
               wh_ref, bh_ref,
               feat_ref, probs_ref, val_ref,
               a1_ref, a2_ref, a3_ref):
        # Only the WP tail rows of a1/a2 can be read before being written
        # (and only by rows that end up in discarded padded columns); zero
        # just those to keep every intermediate value finite/deterministic.
        a1_ref[B * H1 * WP:B * H1 * WP + WP, :] = jnp.zeros((WP, 64),
                                                            a1_ref.dtype)
        a2_ref[B * H2 * WP:B * H2 * WP + WP, :] = jnp.zeros((WP, 128),
                                                            a2_ref.dtype)

        conv_layer(x_ref, w1_ref, b1_ref, a1_ref, H, H1)
        conv_layer(a1_ref, w2_ref, b2_ref, a2_ref, H1, H2)
        conv_layer(a2_ref, w3_ref, b3_ref, a3_ref, H2, H3)

        # gather the H3 x W3 valid positions (NHWC order) into the flat
        # feature vector: feat[b, (i*W3 + j)*C3 + c] = conv3[b, i, j, c]
        for b in range(B):
            for i in range(H3):
                for j in range(W3):
                    row = b * H3 * WP + i * WP + j
                    k = i * W3 + j
                    feat_ref[b:b + 1, k * C3:(k + 1) * C3] = (
                        a3_ref[row:row + 1, :])

        feats = feat_ref[...]                                    # (B, n)
        out = jnp.dot(feats, wh_ref[...],
                      preferred_element_type=jnp.float32) + bh_ref[...]
        logits = out[:, 0:n_act]
        m = jnp.max(logits, axis=-1, keepdims=True)
        e = jnp.exp(logits - m)
        inv = pl.reciprocal(jnp.sum(e, axis=-1, keepdims=True), approx=True)
        probs_ref[...] = (e * inv).astype(probs_ref.dtype)
        val_ref[...] = out[:, n_act:n_act + 1].astype(val_ref.dtype)

    vspec = pl.BlockSpec(memory_space=pltpu.MemorySpace.VMEM)
    call = pl.pallas_call(
        kernel,
        out_shape=(jax.ShapeDtypeStruct((B, n), jnp.float32),      # NHWC feats
                   jax.ShapeDtypeStruct((B, n_act), jnp.float32),  # probs
                   jax.ShapeDtypeStruct((B, 1), jnp.float32)),     # values
        in_specs=[vspec] * 9,
        out_specs=(vspec, vspec, vspec),
        scratch_shapes=[
            pltpu.VMEM((a1_rows, 64), jnp.float32),
            pltpu.VMEM((a2_rows, 128), jnp.float32),
            pltpu.VMEM((a3_rows, C3), jnp.float32),
        ],
    )
    return call, WP, x_rows


# ----------------------------------------------------------------------------
# Wrappers (data-layout plumbing in plain JAX, all under one jit)
# ----------------------------------------------------------------------------
def _prep_x(x_nchw, WP):
    B, C, H, W = x_nchw.shape
    x = jnp.transpose(x_nchw, (0, 2, 3, 1)).astype(jnp.float32)   # NHWC
    x = jnp.pad(x, ((0, 0), (0, 0), (0, WP - W), (0, 0)))          # width pad
    x = x.reshape(B * H * WP, C)
    x = jnp.pad(x, ((0, WP), (0, 0)))                              # tail rows
    return x


def _prep_head_weights(params, H3, W3, C3=256):
    # Permute the (NCHW flatten-order) actor/critic rows into the NHWC flatten
    # order produced by the kernel, and merge them into one (n, 8) RHS.
    n = H3 * W3 * C3
    p = jnp.arange(n)
    i = p // (W3 * C3)
    j = (p // C3) % W3
    c = p % C3
    perm = c * (H3 * W3) + i * W3 + j      # NCHW flat index of NHWC position p
    wa = params["wa"][perm]                # (n, 6)
    wc = params["wc"][perm]                # (n, 1)
    wh = jnp.concatenate([wa, wc, jnp.zeros((n, 1), jnp.float32)], axis=1)
    bh = jnp.concatenate([params["ba"], params["bc"],
                          jnp.zeros((1, 1), jnp.float32)], axis=1)
    return wh, bh


@jax.jit
def actor_critic_apply(params, x_nchw):
    """Fused forward: returns (feats_nchw_flat, action_probs, state_values)."""
    B, _, H, W = x_nchw.shape
    H3, W3 = H - 6, W - 6
    call, WP, _ = _build_fused_call(B, H, W)
    x2d = _prep_x(x_nchw, WP)
    (w1, b1), (w2, b2), (w3, b3) = params["conv"]
    w1 = w1.reshape(9, w1.shape[2], w1.shape[3])
    w2 = w2.reshape(9, w2.shape[2], w2.shape[3])
    w3 = w3.reshape(9, w3.shape[2], w3.shape[3])
    wh, bh = _prep_head_weights(params, H3, W3)
    feats_nhwc, probs, values = call(x2d, w1, b1, w2, b2, w3, b3, wh, bh)
    # Present features in PyTorch's NCHW view(B, -1) order (tiny, off hot path).
    feats_nchw = jnp.transpose(feats_nhwc.reshape(B, H3, W3, 256),
                               (0, 3, 1, 2)).reshape(B, -1)
    return feats_nchw, probs, values


def forward(params, x_nchw):
    """PyTorch ActorCritic.forward: conv stack then view(B, -1)."""
    return actor_critic_apply(params, x_nchw)[0]


def evaluate_actions(params, x_nchw):
    """PyTorch ActorCritic.evaluate_actions: (softmax(actor(f)), critic(f))."""
    _, probs, values = actor_critic_apply(params, x_nchw)
    return probs, values


# ----------------------------------------------------------------------------
# Parameter init (PyTorch layouts: HWIO conv weights, NCHW-flatten head rows)
# ----------------------------------------------------------------------------
def init_params(key, input_shape):
    C, H, W = input_shape
    assert C == 13, "ActorCritic expects 13 input channels"
    n = 256 * (H - 6) * (W - 6)               # same as _get_conv_output
    ks = jax.random.split(key, 10)
    conv = [
        (jax.random.normal(ks[0], (3, 3, 13, 64), jnp.float32) * 0.05,
         jax.random.normal(ks[1], (1, 64), jnp.float32) * 0.05),
        (jax.random.normal(ks[2], (3, 3, 64, 128), jnp.float32) * 0.05,
         jax.random.normal(ks[3], (1, 128), jnp.float32) * 0.05),
        (jax.random.normal(ks[4], (3, 3, 128, 256), jnp.float32) * 0.05,
         jax.random.normal(ks[5], (1, 256), jnp.float32) * 0.05),
    ]
    return {
        "conv": conv,
        "wa": jax.random.normal(ks[6], (n, 6), jnp.float32) * 0.02,
        "ba": jax.random.normal(ks[7], (1, 6), jnp.float32) * 0.02,
        "wc": jax.random.normal(ks[8], (n, 1), jnp.float32) * 0.02,
        "bc": jax.random.normal(ks[9], (1, 1), jnp.float32) * 0.02,
    }


# ----------------------------------------------------------------------------
# Pure-JAX reference for validation
# ----------------------------------------------------------------------------
def ref_evaluate(params, x_nchw):
    h = x_nchw
    for (w, b) in params["conv"]:
        h = jax.lax.conv_general_dilated(
            h, w, (1, 1), "VALID",
            dimension_numbers=("NCHW", "HWIO", "NCHW")) + b.reshape(1, -1, 1, 1)
        h = jnp.maximum(h, 0.0)
    feats = h.reshape(h.shape[0], -1)
    logits = feats @ params["wa"] + params["ba"][0]
    probs = jax.nn.softmax(logits, axis=1)
    values = feats @ params["wc"] + params["bc"][0]
    return feats, probs, values


if __name__ == "__main__":
    key = jax.random.PRNGKey(0)
    k_param, k_x = jax.random.split(key)

    input_shape = (13, 9, 9)                  # (C, H, W), Bomberman board
    batch = 2
    params = init_params(k_param, input_shape)
    x = jax.random.uniform(k_x, (batch,) + input_shape, jnp.float32)

    feats, probs, values = actor_critic_apply(params, x)
    jax.block_until_ready((feats, probs, values))

    # public-API smoke test (same jit cache entry)
    p2, v2 = evaluate_actions(params, x)
    f2 = forward(params, x)
    jax.block_until_ready((p2, v2, f2))

    r_feats, r_probs, r_values = ref_evaluate(params, x)
    assert feats.shape == (batch, 256 * 3 * 3)
    assert probs.shape == (batch, 6) and values.shape == (batch, 1)
    assert jnp.allclose(feats, r_feats, rtol=1e-2, atol=1e-2)
    assert jnp.allclose(probs, r_probs, rtol=1e-2, atol=1e-2)
    assert jnp.allclose(values, r_values, rtol=1e-2, atol=1e-2)

    print("KERNEL_OK")
</pallas_src>

<mosaic_0001>
module attributes {stable_mosaic.version = 11 : i64} {
  func.func private @main(%arg0: i32) attributes {dimension_semantics = [#tpu.dimension_semantics<core_parallel>], iteration_bounds = array<i64: 2>, tpu.core_type = #tpu.core_type<sc_scalar_subcore>, window_params = []} {
    return
  }
}

module attributes {stable_mosaic.version = 11 : i64} {
  func.func private @main(%arg0: i32) attributes {dimension_semantics = [#tpu.dimension_semantics<core_parallel>], iteration_bounds = array<i64: 2>, tpu.core_type = #tpu.core_type<sc_scalar_subcore>, window_params = []} {
    return
  }
}

module attributes {stable_mosaic.version = 11 : i64} {
  func.func @kernel(%arg0: memref<304x13xf32, #tpu.memory_space<vmem>>, %arg1: memref<9x13x64xf32, #tpu.memory_space<vmem>>, %arg2: memref<1x64xf32, #tpu.memory_space<vmem>>, %arg3: memref<9x64x128xf32, #tpu.memory_space<vmem>>, %arg4: memref<1x128xf32, #tpu.memory_space<vmem>>, %arg5: memref<9x128x256xf32, #tpu.memory_space<vmem>>, %arg6: memref<1x256xf32, #tpu.memory_space<vmem>>, %arg7: memref<2304x8xf32, #tpu.memory_space<vmem>>, %arg8: memref<1x8xf32, #tpu.memory_space<vmem>>, %arg9: memref<2x2304xf32, #tpu.memory_space<vmem>>, %arg10: memref<2x6xf32, #tpu.memory_space<vmem>>, %arg11: memref<2x1xf32, #tpu.memory_space<vmem>>, %arg12: memref<240x64xf32, #tpu.memory_space<vmem>>, %arg13: memref<176x128xf32, #tpu.memory_space<vmem>>, %arg14: memref<96x256xf32, #tpu.memory_space<vmem>>) attributes {dimension_semantics = [], scalar_prefetch = 0 : i64, scratch_operands = 3 : i64, tpu.core_type = #tpu.core_type<tc>} {
    %cst = arith.constant 0.000000e+00 : f32
    %0 = vector.broadcast %cst : f32 to vector<16x64xf32>
    %c224 = arith.constant 224 : index
    %c0 = arith.constant 0 : index
    %1 = vector.load %arg12[%c224, %c0] : memref<240x64xf32, #tpu.memory_space<vmem>>, vector<16x64xf32>
    tpu.vector_store %arg12[%c224, %c0], %0 {strides = array<i32>} : memref<240x64xf32, #tpu.memory_space<vmem>>, vector<16x64xf32>,
    %cst_0 = arith.constant 0.000000e+00 : f32
    %2 = vector.broadcast %cst_0 : f32 to vector<16x128xf32>
    %c160 = arith.constant 160 : index
    %c0_1 = arith.constant 0 : index
    %3 = vector.load %arg13[%c160, %c0_1] : memref<176x128xf32, #tpu.memory_space<vmem>>, vector<16x128xf32>
    tpu.vector_store %arg13[%c160, %c0_1], %2 {strides = array<i32>} : memref<176x128xf32, #tpu.memory_space<vmem>>, vector<16x128xf32>,
    %c0_2 = arith.constant 0 : index
    %c0_3 = arith.constant 0 : index
    %4 = vector.load %arg0[%c0_2, %c0_3] : memref<304x13xf32, #tpu.memory_space<vmem>>, vector<256x13xf32>
    %c0_4 = arith.constant 0 : index
    %c0_5 = arith.constant 0 : index
    %c0_6 = arith.constant 0 : index
    %5 = vector.load %arg1[%c0_4, %c0_5, %c0_6] : memref<9x13x64xf32, #tpu.memory_space<vmem>>, vector<1x13x64xf32>
    %6 = vector.shape_cast %5 : vector<1x13x64xf32> to vector<13x64xf32>
    %cst_7 = arith.constant dense<0.000000e+00> : vector<256x64xf32>
    %7 = tpu.matmul %4, %6, %cst_7 {dimension_numbers = #tpu.dot_dimension_numbers<[1], [0], [0], [1], [0, 0, 1, 1], [], []>} : vector<256x13xf32>, vector<13x64xf32>, vector<256x64xf32> -> vector<256x64xf32>
    %c1 = arith.constant 1 : index
    %c0_8 = arith.constant 0 : index
    %8 = vector.load %arg0[%c1, %c0_8] : memref<304x13xf32, #tpu.memory_space<vmem>>, vector<256x13xf32>
    %c1_9 = arith.constant 1 : index
    %c0_10 = arith.constant 0 : index
    %c0_11 = arith.constant 0 : index
    %9 = vector.load %arg1[%c1_9, %c0_10, %c0_11] : memref<9x13x64xf32, #tpu.memory_space<vmem>>, vector<1x13x64xf32>
    %10 = vector.shape_cast %9 : vector<1x13x64xf32> to vector<13x64xf32>
    %cst_12 = arith.constant dense<0.000000e+00> : vector<256x64xf32>
    %11 = tpu.matmul %8, %10, %cst_12 {dimension_numbers = #tpu.dot_dimension_numbers<[1], [0], [0], [1], [0, 0, 1, 1], [], []>} : vector<256x13xf32>, vector<13x64xf32>, vector<256x64xf32> -> vector<256x64xf32>
    %12 = arith.addf %7, %11 : vector<256x64xf32>
    %c2 = arith.constant 2 : index
    %c0_13 = arith.constant 0 : index
    %13 = vector.load %arg0[%c2, %c0_13] : memref<304x13xf32, #tpu.memory_space<vmem>>, vector<256x13xf32>
    %c2_14 = arith.constant 2 : index
    %c0_15 = arith.constant 0 : index
    %c0_16 = arith.constant 0 : index
    %14 = vector.load %arg1[%c2_14, %c0_15, %c0_16] : memref<9x13x64xf32, #tpu.memory_space<vmem>>, vector<1x13x64xf32>
    %15 = vector.shape_cast %14 : vector<1x13x64xf32> to vector<13x64xf32>
    %cst_17 = arith.constant dense<0.000000e+00> : vector<256x64xf32>
    %16 = tpu.matmul %13, %15, %cst_17 {dimension_numbers = #tpu.dot_dimension_numbers<[1], [0], [0], [1], [0, 0, 1, 1], [], []>} : vector<256x13xf32>, vector<13x64xf32>, vector<256x64xf32> -> vector<256x64xf32>
    %17 = arith.addf %12, %16 : vector<256x64xf32>
    %c16 = arith.constant 16 : index
    %c0_18 = arith.constant 0 : index
    %18 = vector.load %arg0[%c16, %c0_18] : memref<304x13xf32, #tpu.memory_space<vmem>>, vector<256x13xf32>
    %c3 = arith.constant 3 : index
    %c0_19 = arith.constant 0 : index
    %c0_20 = arith.constant 0 : index
    %19 = vector.load %arg1[%c3, %c0_19, %c0_20] : memref<9x13x64xf32, #tpu.memory_space<vmem>>, vector<1x13x64xf32>
    %20 = vector.shape_cast %19 : vector<1x13x64xf32> to vector<13x64xf32>
    %cst_21 = arith.constant dense<0.000000e+00> : vector<256x64xf32>
    %21 = tpu.matmul %18, %20, %cst_21 {dimension_numbers = #tpu.dot_dimension_numbers<[1], [0], [0], [1], [0, 0, 1, 1], [], []>} : vector<256x13xf32>, vector<13x64xf32>, vector<256x64xf32> -> vector<256x64xf32>
    %22 = arith.addf %17, %21 : vector<256x64xf32>
    %c17 = arith.constant 17 : index
    %c0_22 = arith.constant 0 : index
    %23 = vector.load %arg0[%c17, %c0_22] : memref<304x13xf32, #tpu.memory_space<vmem>>, vector<256x13xf32>
    %c4 = arith.constant 4 : index
    %c0_23 = arith.constant 0 : index
    %c0_24 = arith.constant 0 : index
    %24 = vector.load %arg1[%c4, %c0_23, %c0_24] : memref<9x13x64xf32, #tpu.memory_space<vmem>>, vector<1x13x64xf32>
    %25 = vector.shape_cast %24 : vector<1x13x64xf32> to vector<13x64xf32>
    %cst_25 = arith.constant dense<0.000000e+00> : vector<256x64xf32>
    %26 = tpu.matmul %23, %25, %cst_25 {dimension_numbers = #tpu.dot_dimension_numbers<[1], [0], [0], [1], [0, 0, 1, 1], [], []>} : vector<256x13xf32>, vector<13x64xf32>, vector<256x64xf32> -> vector<256x64xf32>
    %27 = arith.addf %22, %26 : vector<256x64xf32>
    %c18 = arith.constant 18 : index
    %c0_26 = arith.constant 0 : index
    %28 = vector.load %arg0[%c18, %c0_26] : memref<304x13xf32, #tpu.memory_space<vmem>>, vector<256x13xf32>
    %c5 = arith.constant 5 : index
    %c0_27 = arith.constant 0 : index
    %c0_28 = arith.constant 0 : index
    %29 = vector.load %arg1[%c5, %c0_27, %c0_28] : memref<9x13x64xf32, #tpu.memory_space<vmem>>, vector<1x13x64xf32>
    %30 = vector.shape_cast %29 : vector<1x13x64xf32> to vector<13x64xf32>
    %cst_29 = arith.constant dense<0.000000e+00> : vector<256x64xf32>
    %31 = tpu.matmul %28, %30, %cst_29 {dimension_numbers = #tpu.dot_dimension_numbers<[1], [0], [0], [1], [0, 0, 1, 1], [], []>} : vector<256x13xf32>, vector<13x64xf32>, vector<256x64xf32> -> vector<256x64xf32>
    %32 = arith.addf %27, %31 : vector<256x64xf32>
    %c32 = arith.constant 32 : index
    %c0_30 = arith.constant 0 : index
    %33 = vector.load %arg0[%c32, %c0_30] : memref<304x13xf32, #tpu.memory_space<vmem>>, vector<256x13xf32>
    %c6 = arith.constant 6 : index
    %c0_31 = arith.constant 0 : index
    %c0_32 = arith.constant 0 : index
    %34 = vector.load %arg1[%c6, %c0_31, %c0_32] : memref<9x13x64xf32, #tpu.memory_space<vmem>>, vector<1x13x64xf32>
    %35 = vector.shape_cast %34 : vector<1x13x64xf32> to vector<13x64xf32>
    %cst_33 = arith.constant dense<0.000000e+00> : vector<256x64xf32>
    %36 = tpu.matmul %33, %35, %cst_33 {dimension_numbers = #tpu.dot_dimension_numbers<[1], [0], [0], [1], [0, 0, 1, 1], [], []>} : vector<256x13xf32>, vector<13x64xf32>, vector<256x64xf32> -> vector<256x64xf32>
    %37 = arith.addf %32, %36 : vector<256x64xf32>
    %c33 = arith.constant 33 : index
    %c0_34 = arith.constant 0 : index
    %38 = vector.load %arg0[%c33, %c0_34] : memref<304x13xf32, #tpu.memory_space<vmem>>, vector<256x13xf32>
    %c7 = arith.constant 7 : index
    %c0_35 = arith.constant 0 : index
    %c0_36 = arith.constant 0 : index
    %39 = vector.load %arg1[%c7, %c0_35, %c0_36] : memref<9x13x64xf32, #tpu.memory_space<vmem>>, vector<1x13x64xf32>
    %40 = vector.shape_cast %39 : vector<1x13x64xf32> to vector<13x64xf32>
    %cst_37 = arith.constant dense<0.000000e+00> : vector<256x64xf32>
    %41 = tpu.matmul %38, %40, %cst_37 {dimension_numbers = #tpu.dot_dimension_numbers<[1], [0], [0], [1], [0, 0, 1, 1], [], []>} : vector<256x13xf32>, vector<13x64xf32>, vector<256x64xf32> -> vector<256x64xf32>
    %42 = arith.addf %37, %41 : vector<256x64xf32>
    %c34 = arith.constant 34 : index
    %c0_38 = arith.constant 0 : index
    %43 = vector.load %arg0[%c34, %c0_38] : memref<304x13xf32, #tpu.memory_space<vmem>>, vector<256x13xf32>
    %c8 = arith.constant 8 : index
    %c0_39 = arith.constant 0 : index
    %c0_40 = arith.constant 0 : index
    %44 = vector.load %arg1[%c8, %c0_39, %c0_40] : memref<9x13x64xf32, #tpu.memory_space<vmem>>, vector<1x13x64xf32>
    %45 = vector.shape_cast %44 : vector<1x13x64xf32> to vector<13x64xf32>
    %cst_41 = arith.constant dense<0.000000e+00> : vector<256x64xf32>
    %46 = tpu.matmul %43, %45, %cst_41 {dimension_numbers = #tpu.dot_dimension_numbers<[1], [0], [0], [1], [0, 0, 1, 1], [], []>} : vector<256x13xf32>, vector<13x64xf32>, vector<256x64xf32> -> vector<256x64xf32>
    %47 = arith.addf %42, %46 : vector<256x64xf32>
    %c0_42 = arith.constant 0 : index
    %c0_43 = arith.constant 0 : index
    %48 = vector.load %arg2[%c0_42, %c0_43] : memref<1x64xf32, #tpu.memory_space<vmem>>, vector<1x64xf32>
    %49 = vector.broadcast %48 : vector<1x64xf32> to vector<256x64xf32>
    %50 = arith.addf %47, %49 : vector<256x64xf32>
    %cst_44 = arith.constant 0.000000e+00 : f32
    %51 = vector.broadcast %cst_44 : f32 to vector<256x64xf32>
    %52 = arith.maximumf %50, %51 : vector<256x64xf32>
    %53 = vector.extract_strided_slice %52 {offsets = [0, 0], sizes = [112, 64], strides = [1, 1]} : vector<256x64xf32> to vector<112x64xf32>
    %c0_45 = arith.constant 0 : index
    %c0_46 = arith.constant 0 : index
    %54 = vector.load %arg12[%c0_45, %c0_46] : memref<240x64xf32, #tpu.memory_space<vmem>>, vector<112x64xf32>
    tpu.vector_store %arg12[%c0_45, %c0_46], %53 {strides = array<i32>} : memref<240x64xf32, #tpu.memory_space<vmem>>, vector<112x64xf32>,
    %55 = vector.extract_strided_slice %52 {offsets = [144, 0], sizes = [112, 64], strides = [1, 1]} : vector<256x64xf32> to vector<112x64xf32>
    %c112 = arith.constant 112 : index
    %c0_47 = arith.constant 0 : index
    %56 = vector.load %arg12[%c112, %c0_47] : memref<240x64xf32, #tpu.memory_space<vmem>>, vector<112x64xf32>
    tpu.vector_store %arg12[%c112, %c0_47], %55 {strides = array<i32>} : memref<240x64xf32, #tpu.memory_space<vmem>>, vector<112x64xf32>,
    %c0_48 = arith.constant 0 : index
    %c0_49 = arith.constant 0 : index
    %57 = vector.load %arg12[%c0_48, %c0_49] : memref<240x64xf32, #tpu.memory_space<vmem>>, vector<192x64xf32>
    %c0_50 = arith.constant 0 : index
    %c0_51 = arith.constant 0 : index
    %c0_52 = arith.constant 0 : index
    %58 = vector.load %arg3[%c0_50, %c0_51, %c0_52] : memref<9x64x128xf32, #tpu.memory_space<vmem>>, vector<1x64x128xf32>
    %59 = vector.shape_cast %58 : vector<1x64x128xf32> to vector<64x128xf32>
    %cst_53 = arith.constant dense<0.000000e+00> : vector<192x128xf32>
    %60 = tpu.matmul %57, %59, %cst_53 {dimension_numbers = #tpu.dot_dimension_numbers<[1], [0], [0], [1], [0, 0, 1, 1], [], []>} : vector<192x64xf32>, vector<64x128xf32>, vector<192x128xf32> -> vector<192x128xf32>
    %c1_54 = arith.constant 1 : index
    %c0_55 = arith.constant 0 : index
    %61 = vector.load %arg12[%c1_54, %c0_55] : memref<240x64xf32, #tpu.memory_space<vmem>>, vector<192x64xf32>
    %c1_56 = arith.constant 1 : index
    %c0_57 = arith.constant 0 : index
    %c0_58 = arith.constant 0 : index
    %62 = vector.load %arg3[%c1_56, %c0_57, %c0_58] : memref<9x64x128xf32, #tpu.memory_space<vmem>>, vector<1x64x128xf32>
    %63 = vector.shape_cast %62 : vector<1x64x128xf32> to vector<64x128xf32>
    %cst_59 = arith.constant dense<0.000000e+00> : vector<192x128xf32>
    %64 = tpu.matmul %61, %63, %cst_59 {dimension_numbers = #tpu.dot_dimension_numbers<[1], [0], [0], [1], [0, 0, 1, 1], [], []>} : vector<192x64xf32>, vector<64x128xf32>, vector<192x128xf32> -> vector<192x128xf32>
    %65 = arith.addf %60, %64 : vector<192x128xf32>
    %c2_60 = arith.constant 2 : index
    %c0_61 = arith.constant 0 : index
    %66 = vector.load %arg12[%c2_60, %c0_61] : memref<240x64xf32, #tpu.memory_space<vmem>>, vector<192x64xf32>
    %c2_62 = arith.constant 2 : index
    %c0_63 = arith.constant 0 : index
    %c0_64 = arith.constant 0 : index
    %67 = vector.load %arg3[%c2_62, %c0_63, %c0_64] : memref<9x64x128xf32, #tpu.memory_space<vmem>>, vector<1x64x128xf32>
    %68 = vector.shape_cast %67 : vector<1x64x128xf32> to vector<64x128xf32>
    %cst_65 = arith.constant dense<0.000000e+00> : vector<192x128xf32>
    %69 = tpu.matmul %66, %68, %cst_65 {dimension_numbers = #tpu.dot_dimension_numbers<[1], [0], [0], [1], [0, 0, 1, 1], [], []>} : vector<192x64xf32>, vector<64x128xf32>, vector<192x128xf32> -> vector<192x128xf32>
    %70 = arith.addf %65, %69 : vector<192x128xf32>
    %c16_66 = arith.constant 16 : index
    %c0_67 = arith.constant 0 : index
    %71 = vector.load %arg12[%c16_66, %c0_67] : memref<240x64xf32, #tpu.memory_space<vmem>>, vector<192x64xf32>
    %c3_68 = arith.constant 3 : index
    %c0_69 = arith.constant 0 : index
    %c0_70 = arith.constant 0 : index
    %72 = vector.load %arg3[%c3_68, %c0_69, %c0_70] : memref<9x64x128xf32, #tpu.memory_space<vmem>>, vector<1x64x128xf32>
    %73 = vector.shape_cast %72 : vector<1x64x128xf32> to vector<64x128xf32>
    %cst_71 = arith.constant dense<0.000000e+00> : vector<192x128xf32>
    %74 = tpu.matmul %71, %73, %cst_71 {dimension_numbers = #tpu.dot_dimension_numbers<[1], [0], [0], [1], [0, 0, 1, 1], [], []>} : vector<192x64xf32>, vector<64x128xf32>, vector<192x128xf32> -> vector<192x128xf32>
    %75 = arith.addf %70, %74 : vector<192x128xf32>
    %c17_72 = arith.constant 17 : index
    %c0_73 = arith.constant 0 : index
    %76 = vector.load %arg12[%c17_72, %c0_73] : memref<240x64xf32, #tpu.memory_space<vmem>>, vector<192x64xf32>
    %c4_74 = arith.constant 4 : index
    %c0_75 = arith.constant 0 : index
    %c0_76 = arith.constant 0 : index
    %77 = vector.load %arg3[%c4_74, %c0_75, %c0_76] : memref<9x64x128xf32, #tpu.memory_space<vmem>>, vector<1x64x128xf32>
    %78 = vector.shape_cast %77 : vector<1x64x128xf32> to vector<64x128xf32>
    %cst_77 = arith.constant dense<0.000000e+00> : vector<192x128xf32>
    %79 = tpu.matmul %76, %78, %cst_77 {dimension_numbers = #tpu.dot_dimension_numbers<[1], [0], [0], [1], [0, 0, 1, 1], [], []>} : vector<192x64xf32>, vector<64x128xf32>, vector<192x128xf32> -> vector<192x128xf32>
    %80 = arith.addf %75, %79 : vector<192x128xf32>
    %c18_78 = arith.constant 18 : index
    %c0_79 = arith.constant 0 : index
    %81 = vector.load %arg12[%c18_78, %c0_79] : memref<240x64xf32, #tpu.memory_space<vmem>>, vector<192x64xf32>
    %c5_80 = arith.constant 5 : index
    %c0_81 = arith.constant 0 : index
    %c0_82 = arith.constant 0 : index
    %82 = vector.load %arg3[%c5_80, %c0_81, %c0_82] : memref<9x64x128xf32, #tpu.memory_space<vmem>>, vector<1x64x128xf32>
    %83 = vector.shape_cast %82 : vector<1x64x128xf32> to vector<64x128xf32>
    %cst_83 = arith.constant dense<0.000000e+00> : vector<192x128xf32>
    %84 = tpu.matmul %81, %83, %cst_83 {dimension_numbers = #tpu.dot_dimension_numbers<[1], [0], [0], [1], [0, 0, 1, 1], [], []>} : vector<192x64xf32>, vector<64x128xf32>, vector<192x128xf32> -> vector<192x128xf32>
    %85 = arith.addf %80, %84 : vector<192x128xf32>
    %c32_84 = arith.constant 32 : index
    %c0_85 = arith.constant 0 : index
    %86 = vector.load %arg12[%c32_84, %c0_85] : memref<240x64xf32, #tpu.memory_space<vmem>>, vector<192x64xf32>
    %c6_86 = arith.constant 6 : index
    %c0_87 = arith.constant 0 : index
    %c0_88 = arith.constant 0 : index
    %87 = vector.load %arg3[%c6_86, %c0_87, %c0_88] : memref<9x64x128xf32, #tpu.memory_space<vmem>>, vector<1x64x128xf32>
    %88 = vector.shape_cast %87 : vector<1x64x128xf32> to vector<64x128xf32>
    %cst_89 = arith.constant dense<0.000000e+00> : vector<192x128xf32>
    %89 = tpu.matmul %86, %88, %cst_89 {dimension_numbers = #tpu.dot_dimension_numbers<[1], [0], [0], [1], [0, 0, 1, 1], [], []>} : vector<192x64xf32>, vector<64x128xf32>, vector<192x128xf32> -> vector<192x128xf32>
    %90 = arith.addf %85, %89 : vector<192x128xf32>
    %c33_90 = arith.constant 33 : index
    %c0_91 = arith.constant 0 : index
    %91 = vector.load %arg12[%c33_90, %c0_91] : memref<240x64xf32, #tpu.memory_space<vmem>>, vector<192x64xf32>
    %c7_92 = arith.constant 7 : index
    %c0_93 = arith.constant 0 : index
    %c0_94 = arith.constant 0 : index
    %92 = vector.load %arg3[%c7_92, %c0_93, %c0_94] : memref<9x64x128xf32, #tpu.memory_space<vmem>>, vector<1x64x128xf32>
    %93 = vector.shape_cast %92 : vector<1x64x128xf32> to vector<64x128xf32>
    %cst_95 = arith.constant dense<0.000000e+00> : vector<192x128xf32>
    %94 = tpu.matmul %91, %93, %cst_95 {dimension_numbers = #tpu.dot_dimension_numbers<[1], [0], [0], [1], [0, 0, 1, 1], [], []>} : vector<192x64xf32>, vector<64x128xf32>, vector<192x128xf32> -> vector<192x128xf32>
    %95 = arith.addf %90, %94 : vector<192x128xf32>
    %c34_96 = arith.constant 34 : index
    %c0_97 = arith.constant 0 : index
    %96 = vector.load %arg12[%c34_96, %c0_97] : memref<240x64xf32, #tpu.memory_space<vmem>>, vector<192x64xf32>
    %c8_98 = arith.constant 8 : index
    %c0_99 = arith.constant 0 : index
    %c0_100 = arith.constant 0 : index
    %97 = vector.load %arg3[%c8_98, %c0_99, %c0_100] : memref<9x64x128xf32, #tpu.memory_space<vmem>>, vector<1x64x128xf32>
    %98 = vector.shape_cast %97 : vector<1x64x128xf32> to vector<64x128xf32>
    %cst_101 = arith.constant dense<0.000000e+00> : vector<192x128xf32>
    %99 = tpu.matmul %96, %98, %cst_101 {dimension_numbers = #tpu.dot_dimension_numbers<[1], [0], [0], [1], [0, 0, 1, 1], [], []>} : vector<192x64xf32>, vector<64x128xf32>, vector<192x128xf32> -> vector<192x128xf32>
    %100 = arith.addf %95, %99 : vector<192x128xf32>
    %c0_102 = arith.constant 0 : index
    %c0_103 = arith.constant 0 : index
    %101 = vector.load %arg4[%c0_102, %c0_103] : memref<1x128xf32, #tpu.memory_space<vmem>>, vector<1x128xf32>
    %102 = vector.broadcast %101 : vector<1x128xf32> to vector<192x128xf32>
    %103 = arith.addf %100, %102 : vector<192x128xf32>
    %cst_104 = arith.constant 0.000000e+00 : f32
    %104 = vector.broadcast %cst_104 : f32 to vector<192x128xf32>
    %105 = arith.maximumf %103, %104 : vector<192x128xf32>
    %106 = vector.extract_strided_slice %105 {offsets = [0, 0], sizes = [80, 128], strides = [1, 1]} : vector<192x128xf32> to vector<80x128xf32>
    %c0_105 = arith.constant 0 : index
    %c0_106 = arith.constant 0 : index
    %107 = vector.load %arg13[%c0_105, %c0_106] : memref<176x128xf32, #tpu.memory_space<vmem>>, vector<80x128xf32>
    tpu.vector_store %arg13[%c0_105, %c0_106], %106 {strides = array<i32>} : memref<176x128xf32, #tpu.memory_space<vmem>>, vector<80x128xf32>,
    %108 = vector.extract_strided_slice %105 {offsets = [112, 0], sizes = [80, 128], strides = [1, 1]} : vector<192x128xf32> to vector<80x128xf32>
    %c80 = arith.constant 80 : index
    %c0_107 = arith.constant 0 : index
    %109 = vector.load %arg13[%c80, %c0_107] : memref<176x128xf32, #tpu.memory_space<vmem>>, vector<80x128xf32>
    tpu.vector_store %arg13[%c80, %c0_107], %108 {strides = array<i32>} : memref<176x128xf32, #tpu.memory_space<vmem>>, vector<80x128xf32>,
    %c0_108 = arith.constant 0 : index
    %c0_109 = arith.constant 0 : index
    %110 = vector.load %arg13[%c0_108, %c0_109] : memref<176x128xf32, #tpu.memory_space<vmem>>, vector<128x128xf32>
    %c0_110 = arith.constant 0 : index
    %c0_111 = arith.constant 0 : index
    %c0_112 = arith.constant 0 : index
    %111 = vector.load %arg5[%c0_110, %c0_111, %c0_112] : memref<9x128x256xf32, #tpu.memory_space<vmem>>, vector<1x128x256xf32>
    %112 = vector.shape_cast %111 : vector<1x128x256xf32> to vector<128x256xf32>
    %cst_113 = arith.constant dense<0.000000e+00> : vector<128x256xf32>
    %113 = tpu.matmul %110, %112, %cst_113 {dimension_numbers = #tpu.dot_dimension_numbers<[1], [0], [0], [1], [0, 0, 1, 1], [], []>} : vector<128x128xf32>, vector<128x256xf32>, vector<128x256xf32> -> vector<128x256xf32>
    %c1_114 = arith.constant 1 : index
    %c0_115 = arith.constant 0 : index
    %114 = vector.load %arg13[%c1_114, %c0_115] : memref<176x128xf32, #tpu.memory_space<vmem>>, vector<128x128xf32>
    %c1_116 = arith.constant 1 : index
    %c0_117 = arith.constant 0 : index
    %c0_118 = arith.constant 0 : index
    %115 = vector.load %arg5[%c1_116, %c0_117, %c0_118] : memref<9x128x256xf32, #tpu.memory_space<vmem>>, vector<1x128x256xf32>
    %116 = vector.shape_cast %115 : vector<1x128x256xf32> to vector<128x256xf32>
    %cst_119 = arith.constant dense<0.000000e+00> : vector<128x256xf32>
    %117 = tpu.matmul %114, %116, %cst_119 {dimension_numbers = #tpu.dot_dimension_numbers<[1], [0], [0], [1], [0, 0, 1, 1], [], []>} : vector<128x128xf32>, vector<128x256xf32>, vector<128x256xf32> -> vector<128x256xf32>
    %118 = arith.addf %113, %117 : vector<128x256xf32>
    %c2_120 = arith.constant 2 : index
    %c0_121 = arith.constant 0 : index
    %119 = vector.load %arg13[%c2_120, %c0_121] : memref<176x128xf32, #tpu.memory_space<vmem>>, vector<128x128xf32>
    %c2_122 = arith.constant 2 : index
    %c0_123 = arith.constant 0 : index
    %c0_124 = arith.constant 0 : index
    %120 = vector.load %arg5[%c2_122, %c0_123, %c0_124] : memref<9x128x256xf32, #tpu.memory_space<vmem>>, vector<1x128x256xf32>
    %121 = vector.shape_cast %120 : vector<1x128x256xf32> to vector<128x256xf32>
    %cst_125 = arith.constant dense<0.000000e+00> : vector<128x256xf32>
    %122 = tpu.matmul %119, %121, %cst_125 {dimension_numbers = #tpu.dot_dimension_numbers<[1], [0], [0], [1], [0, 0, 1, 1], [], []>} : vector<128x128xf32>, vector<128x256xf32>, vector<128x256xf32> -> vector<128x256xf32>
    %123 = arith.addf %118, %122 : vector<128x256xf32>
    %c16_126 = arith.constant 16 : index
    %c0_127 = arith.constant 0 : index
    %124 = vector.load %arg13[%c16_126, %c0_127] : memref<176x128xf32, #tpu.memory_space<vmem>>, vector<128x128xf32>
    %c3_128 = arith.constant 3 : index
    %c0_129 = arith.constant 0 : index
    %c0_130 = arith.constant 0 : index
    %125 = vector.load %arg5[%c3_128, %c0_129, %c0_130] : memref<9x128x256xf32, #tpu.memory_space<vmem>>, vector<1x128x256xf32>
    %126 = vector.shape_cast %125 : vector<1x128x256xf32> to vector<128x256xf32>
    %cst_131 = arith.constant dense<0.000000e+00> : vector<128x256xf32>
    %127 = tpu.matmul %124, %126, %cst_131 {dimension_numbers = #tpu.dot_dimension_numbers<[1], [0], [0], [1], [0, 0, 1, 1], [], []>} : vector<128x128xf32>, vector<128x256xf32>, vector<128x256xf32> -> vector<128x256xf32>
    %128 = arith.addf %123, %127 : vector<128x256xf32>
    %c17_132 = arith.constant 17 : index
    %c0_133 = arith.constant 0 : index
    %129 = vector.load %arg13[%c17_132, %c0_133] : memref<176x128xf32, #tpu.memory_space<vmem>>, vector<128x128xf32>
    %c4_134 = arith.constant 4 : index
    %c0_135 = arith.constant 0 : index
    %c0_136 = arith.constant 0 : index
    %130 = vector.load %arg5[%c4_134, %c0_135, %c0_136] : memref<9x128x256xf32, #tpu.memory_space<vmem>>, vector<1x128x256xf32>
    %131 = vector.shape_cast %130 : vector<1x128x256xf32> to vector<128x256xf32>
    %cst_137 = arith.constant dense<0.000000e+00> : vector<128x256xf32>
    %132 = tpu.matmul %129, %131, %cst_137 {dimension_numbers = #tpu.dot_dimension_numbers<[1], [0], [0], [1], [0, 0, 1, 1], [], []>} : vector<128x128xf32>, vector<128x256xf32>, vector<128x256xf32> -> vector<128x256xf32>
    %133 = arith.addf %128, %132 : vector<128x256xf32>
    %c18_138 = arith.constant 18 : index
    %c0_139 = arith.constant 0 : index
    %134 = vector.load %arg13[%c18_138, %c0_139] : memref<176x128xf32, #tpu.memory_space<vmem>>, vector<128x128xf32>
    %c5_140 = arith.constant 5 : index
    %c0_141 = arith.constant 0 : index
    %c0_142 = arith.constant 0 : index
    %135 = vector.load %arg5[%c5_140, %c0_141, %c0_142] : memref<9x128x256xf32, #tpu.memory_space<vmem>>, vector<1x128x256xf32>
    %136 = vector.shape_cast %135 : vector<1x128x256xf32> to vector<128x256xf32>
    %cst_143 = arith.constant dense<0.000000e+00> : vector<128x256xf32>
    %137 = tpu.matmul %134, %136, %cst_143 {dimension_numbers = #tpu.dot_dimension_numbers<[1], [0], [0], [1], [0, 0, 1, 1], [], []>} : vector<128x128xf32>, vector<128x256xf32>, vector<128x256xf32> -> vector<128x256xf32>
    %138 = arith.addf %133, %137 : vector<128x256xf32>
    %c32_144 = arith.constant 32 : index
    %c0_145 = arith.constant 0 : index
    %139 = vector.load %arg13[%c32_144, %c0_145] : memref<176x128xf32, #tpu.memory_space<vmem>>, vector<128x128xf32>
    %c6_146 = arith.constant 6 : index
    %c0_147 = arith.constant 0 : index
    %c0_148 = arith.constant 0 : index
    %140 = vector.load %arg5[%c6_146, %c0_147, %c0_148] : memref<9x128x256xf32, #tpu.memory_space<vmem>>, vector<1x128x256xf32>
    %141 = vector.shape_cast %140 : vector<1x128x256xf32> to vector<128x256xf32>
    %cst_149 = arith.constant dense<0.000000e+00> : vector<128x256xf32>
    %142 = tpu.matmul %139, %141, %cst_149 {dimension_numbers = #tpu.dot_dimension_numbers<[1], [0], [0], [1], [0, 0, 1, 1], [], []>} : vector<128x128xf32>, vector<128x256xf32>, vector<128x256xf32> -> vector<128x256xf32>
    %143 = arith.addf %138, %142 : vector<128x256xf32>
    %c33_150 = arith.constant 33 : index
    %c0_151 = arith.constant 0 : index
    %144 = vector.load %arg13[%c33_150, %c0_151] : memref<176x128xf32, #tpu.memory_space<vmem>>, vector<128x128xf32>
    %c7_152 = arith.constant 7 : index
    %c0_153 = arith.constant 0 : index
    %c0_154 = arith.constant 0 : index
    %145 = vector.load %arg5[%c7_152, %c0_153, %c0_154] : memref<9x128x256xf32, #tpu.memory_space<vmem>>, vector<1x128x256xf32>
    %146 = vector.shape_cast %145 : vector<1x128x256xf32> to vector<128x256xf32>
    %cst_155 = arith.constant dense<0.000000e+00> : vector<128x256xf32>
    %147 = tpu.matmul %144, %146, %cst_155 {dimension_numbers = #tpu.dot_dimension_numbers<[1], [0], [0], [1], [0, 0, 1, 1], [], []>} : vector<128x128xf32>, vector<128x256xf32>, vector<128x256xf32> -> vector<128x256xf32>
    %148 = arith.addf %143, %147 : vector<128x256xf32>
    %c34_156 = arith.constant 34 : index
    %c0_157 = arith.constant 0 : index
    %149 = vector.load %arg13[%c34_156, %c0_157] : memref<176x128xf32, #tpu.memory_space<vmem>>, vector<128x128xf32>
    %c8_158 = arith.constant 8 : index
    %c0_159 = arith.constant 0 : index
    %c0_160 = arith.constant 0 : index
    %150 = vector.load %arg5[%c8_158, %c0_159, %c0_160] : memref<9x128x256xf32, #tpu.memory_space<vmem>>, vector<1x128x256xf32>
    %151 = vector.shape_cast %150 : vector<1x128x256xf32> to vector<128x256xf32>
    %cst_161 = arith.constant dense<0.000000e+00> : vector<128x256xf32>
    %152 = tpu.matmul %149, %151, %cst_161 {dimension_numbers = #tpu.dot_dimension_numbers<[1], [0], [0], [1], [0, 0, 1, 1], [], []>} : vector<128x128xf32>, vector<128x256xf32>, vector<128x256xf32> -> vector<128x256xf32>
    %153 = arith.addf %148, %152 : vector<128x256xf32>
    %c0_162 = arith.constant 0 : index
    %c0_163 = arith.constant 0 : index
    %154 = vector.load %arg6[%c0_162, %c0_163] : memref<1x256xf32, #tpu.memory_space<vmem>>, vector<1x256xf32>
    %155 = vector.broadcast %154 : vector<1x256xf32> to vector<128x256xf32>
    %156 = arith.addf %153, %155 : vector<128x256xf32>
    %cst_164 = arith.constant 0.000000e+00 : f32
    %157 = vector.broadcast %cst_164 : f32 to vector<128x256xf32>
    %158 = arith.maximumf %156, %157 : vector<128x256xf32>
    %159 = vector.extract_strided_slice %158 {offsets = [0, 0], sizes = [48, 256], strides = [1, 1]} : vector<128x256xf32> to vector<48x256xf32>
    %c0_165 = arith.constant 0 : index
    %c0_166 = arith.constant 0 : index
    %160 = vector.load %arg14[%c0_165, %c0_166] : memref<96x256xf32, #tpu.memory_space<vmem>>, vector<48x256xf32>
    tpu.vector_store %arg14[%c0_165, %c0_166], %159 {strides = array<i32>} : memref<96x256xf32, #tpu.memory_space<vmem>>, vector<48x256xf32>,
    %161 = vector.extract_strided_slice %158 {offsets = [80, 0], sizes = [48, 256], strides = [1, 1]} : vector<128x256xf32> to vector<48x256xf32>
    %c48 = arith.constant 48 : index
    %c0_167 = arith.constant 0 : index
    %162 = vector.load %arg14[%c48, %c0_167] : memref<96x256xf32, #tpu.memory_space<vmem>>, vector<48x256xf32>
    tpu.vector_store %arg14[%c48, %c0_167], %161 {strides = array<i32>} : memref<96x256xf32, #tpu.memory_space<vmem>>, vector<48x256xf32>,
    %c0_168 = arith.constant 0 : index
    %c0_169 = arith.constant 0 : index
    %163 = vector.load %arg14[%c0_168, %c0_169] : memref<96x256xf32, #tpu.memory_space<vmem>>, vector<1x256xf32>
    %c0_170 = arith.constant 0 : index
    %c0_171 = arith.constant 0 : index
    %164 = vector.load %arg9[%c0_170, %c0_171] : memref<2x2304xf32, #tpu.memory_space<vmem>>, vector<1x256xf32>
    tpu.vector_store %arg9[%c0_170, %c0_171], %163 {strides = array<i32>} : memref<2x2304xf32, #tpu.memory_space<vmem>>, vector<1x256xf32>,
    %c1_172 = arith.constant 1 : index
    %c0_173 = arith.constant 0 : index
    %165 = vector.load %arg14[%c1_172, %c0_173] : memref<96x256xf32, #tpu.memory_space<vmem>>, vector<1x256xf32>
    %c0_174 = arith.constant 0 : index
    %c256 = arith.constant 256 : index
    %166 = vector.load %arg9[%c0_174, %c256] : memref<2x2304xf32, #tpu.memory_space<vmem>>, vector<1x256xf32>
    tpu.vector_store %arg9[%c0_174, %c256], %165 {strides = array<i32>} : memref<2x2304xf32, #tpu.memory_space<vmem>>, vector<1x256xf32>,
    %c2_175 = arith.constant 2 : index
    %c0_176 = arith.constant 0 : index
    %167 = vector.load %arg14[%c2_175, %c0_176] : memref<96x256xf32, #tpu.memory_space<vmem>>, vector<1x256xf32>
    %c0_177 = arith.constant 0 : index
    %c512 = arith.constant 512 : index
    %168 = vector.load %arg9[%c0_177, %c512] : memref<2x2304xf32, #tpu.memory_space<vmem>>, vector<1x256xf32>
    tpu.vector_store %arg9[%c0_177, %c512], %167 {strides = array<i32>} : memref<2x2304xf32, #tpu.memory_space<vmem>>, vector<1x256xf32>,
    %c16_178 = arith.constant 16 : index
    %c0_179 = arith.constant 0 : index
    %169 = vector.load %arg14[%c16_178, %c0_179] : memref<96x256xf32, #tpu.memory_space<vmem>>, vector<1x256xf32>
    %c0_180 = arith.constant 0 : index
    %c768 = arith.constant 768 : index
    %170 = vector.load %arg9[%c0_180, %c768] : memref<2x2304xf32, #tpu.memory_space<vmem>>, vector<1x256xf32>
    tpu.vector_store %arg9[%c0_180, %c768], %169 {strides = array<i32>} : memref<2x2304xf32, #tpu.memory_space<vmem>>, vector<1x256xf32>,
    %c17_181 = arith.constant 17 : index
    %c0_182 = arith.constant 0 : index
    %171 = vector.load %arg14[%c17_181, %c0_182] : memref<96x256xf32, #tpu.memory_space<vmem>>, vector<1x256xf32>
    %c0_183 = arith.constant 0 : index
    %c1024 = arith.constant 1024 : index
    %172 = vector.load %arg9[%c0_183, %c1024] : memref<2x2304xf32, #tpu.memory_space<vmem>>, vector<1x256xf32>
    tpu.vector_store %arg9[%c0_183, %c1024], %171 {strides = array<i32>} : memref<2x2304xf32, #tpu.memory_space<vmem>>, vector<1x256xf32>,
    %c18_184 = arith.constant 18 : index
    %c0_185 = arith.constant 0 : index
    %173 = vector.load %arg14[%c18_184, %c0_185] : memref<96x256xf32, #tpu.memory_space<vmem>>, vector<1x256xf32>
    %c0_186 = arith.constant 0 : index
    %c1280 = arith.constant 1280 : index
    %174 = vector.load %arg9[%c0_186, %c1280] : memref<2x2304xf32, #tpu.memory_space<vmem>>, vector<1x256xf32>
    tpu.vector_store %arg9[%c0_186, %c1280], %173 {strides = array<i32>} : memref<2x2304xf32, #tpu.memory_space<vmem>>, vector<1x256xf32>,
    %c32_187 = arith.constant 32 : index
    %c0_188 = arith.constant 0 : index
    %175 = vector.load %arg14[%c32_187, %c0_188] : memref<96x256xf32, #tpu.memory_space<vmem>>, vector<1x256xf32>
    %c0_189 = arith.constant 0 : index
    %c1536 = arith.constant 1536 : index
    %176 = vector.load %arg9[%c0_189, %c1536] : memref<2x2304xf32, #tpu.memory_space<vmem>>, vector<1x256xf32>
    tpu.vector_store %arg9[%c0_189, %c1536], %175 {strides = array<i32>} : memref<2x2304xf32, #tpu.memory_space<vmem>>, vector<1x256xf32>,
    %c33_190 = arith.constant 33 : index
    %c0_191 = arith.constant 0 : index
    %177 = vector.load %arg14[%c33_190, %c0_191] : memref<96x256xf32, #tpu.memory_space<vmem>>, vector<1x256xf32>
    %c0_192 = arith.constant 0 : index
    %c1792 = arith.constant 1792 : index
    %178 = vector.load %arg9[%c0_192, %c1792] : memref<2x2304xf32, #tpu.memory_space<vmem>>, vector<1x256xf32>
    tpu.vector_store %arg9[%c0_192, %c1792], %177 {strides = array<i32>} : memref<2x2304xf32, #tpu.memory_space<vmem>>, vector<1x256xf32>,
    %c34_193 = arith.constant 34 : index
    %c0_194 = arith.constant 0 : index
    %179 = vector.load %arg14[%c34_193, %c0_194] : memref<96x256xf32, #tpu.memory_space<vmem>>, vector<1x256xf32>
    %c0_195 = arith.constant 0 : index
    %c2048 = arith.constant 2048 : index
    %180 = vector.load %arg9[%c0_195, %c2048] : memref<2x2304xf32, #tpu.memory_space<vmem>>, vector<1x256xf32>
    tpu.vector_store %arg9[%c0_195, %c2048], %179 {strides = array<i32>} : memref<2x2304xf32, #tpu.memory_space<vmem>>, vector<1x256xf32>,
    %c48_196 = arith.constant 48 : index
    %c0_197 = arith.constant 0 : index
    %181 = vector.load %arg14[%c48_196, %c0_197] : memref<96x256xf32, #tpu.memory_space<vmem>>, vector<1x256xf32>
    %c1_198 = arith.constant 1 : index
    %c0_199 = arith.constant 0 : index
    %182 = vector.load %arg9[%c1_198, %c0_199] : memref<2x2304xf32, #tpu.memory_space<vmem>>, vector<1x256xf32>
    tpu.vector_store %arg9[%c1_198, %c0_199], %181 {strides = array<i32>} : memref<2x2304xf32, #tpu.memory_space<vmem>>, vector<1x256xf32>,
    %c49 = arith.constant 49 : index
    %c0_200 = arith.constant 0 : index
    %183 = vector.load %arg14[%c49, %c0_200] : memref<96x256xf32, #tpu.memory_space<vmem>>, vector<1x256xf32>
    %c1_201 = arith.constant 1 : index
    %c256_202 = arith.constant 256 : index
    %184 = vector.load %arg9[%c1_201, %c256_202] : memref<2x2304xf32, #tpu.memory_space<vmem>>, vector<1x256xf32>
    tpu.vector_store %arg9[%c1_201, %c256_202], %183 {strides = array<i32>} : memref<2x2304xf32, #tpu.memory_space<vmem>>, vector<1x256xf32>,
    %c50 = arith.constant 50 : index
    %c0_203 = arith.constant 0 : index
    %185 = vector.load %arg14[%c50, %c0_203] : memref<96x256xf32, #tpu.memory_space<vmem>>, vector<1x256xf32>
    %c1_204 = arith.constant 1 : index
    %c512_205 = arith.constant 512 : index
    %186 = vector.load %arg9[%c1_204, %c512_205] : memref<2x2304xf32, #tpu.memory_space<vmem>>, vector<1x256xf32>
    tpu.vector_store %arg9[%c1_204, %c512_205], %185 {strides = array<i32>} : memref<2x2304xf32, #tpu.memory_space<vmem>>, vector<1x256xf32>,
    %c64 = arith.constant 64 : index
    %c0_206 = arith.constant 0 : index
    %187 = vector.load %arg14[%c64, %c0_206] : memref<96x256xf32, #tpu.memory_space<vmem>>, vector<1x256xf32>
    %c1_207 = arith.constant 1 : index
    %c768_208 = arith.constant 768 : index
    %188 = vector.load %arg9[%c1_207, %c768_208] : memref<2x2304xf32, #tpu.memory_space<vmem>>, vector<1x256xf32>
    tpu.vector_store %arg9[%c1_207, %c768_208], %187 {strides = array<i32>} : memref<2x2304xf32, #tpu.memory_space<vmem>>, vector<1x256xf32>,
    %c65 = arith.constant 65 : index
    %c0_209 = arith.constant 0 : index
    %189 = vector.load %arg14[%c65, %c0_209] : memref<96x256xf32, #tpu.memory_space<vmem>>, vector<1x256xf32>
    %c1_210 = arith.constant 1 : index
    %c1024_211 = arith.constant 1024 : index
    %190 = vector.load %arg9[%c1_210, %c1024_211] : memref<2x2304xf32, #tpu.memory_space<vmem>>, vector<1x256xf32>
    tpu.vector_store %arg9[%c1_210, %c1024_211], %189 {strides = array<i32>} : memref<2x2304xf32, #tpu.memory_space<vmem>>, vector<1x256xf32>,
    %c66 = arith.constant 66 : index
    %c0_212 = arith.constant 0 : index
    %191 = vector.load %arg14[%c66, %c0_212] : memref<96x256xf32, #tpu.memory_space<vmem>>, vector<1x256xf32>
    %c1_213 = arith.constant 1 : index
    %c1280_214 = arith.constant 1280 : index
    %192 = vector.load %arg9[%c1_213, %c1280_214] : memref<2x2304xf32, #tpu.memory_space<vmem>>, vector<1x256xf32>
    tpu.vector_store %arg9[%c1_213, %c1280_214], %191 {strides = array<i32>} : memref<2x2304xf32, #tpu.memory_space<vmem>>, vector<1x256xf32>,
    %c80_215 = arith.constant 80 : index
    %c0_216 = arith.constant 0 : index
    %193 = vector.load %arg14[%c80_215, %c0_216] : memref<96x256xf32, #tpu.memory_space<vmem>>, vector<1x256xf32>
    %c1_217 = arith.constant 1 : index
    %c1536_218 = arith.constant 1536 : index
    %194 = vector.load %arg9[%c1_217, %c1536_218] : memref<2x2304xf32, #tpu.memory_space<vmem>>, vector<1x256xf32>
    tpu.vector_store %arg9[%c1_217, %c1536_218], %193 {strides = array<i32>} : memref<2x2304xf32, #tpu.memory_space<vmem>>, vector<1x256xf32>,
    %c81 = arith.constant 81 : index
    %c0_219 = arith.constant 0 : index
    %195 = vector.load %arg14[%c81, %c0_219] : memref<96x256xf32, #tpu.memory_space<vmem>>, vector<1x256xf32>
    %c1_220 = arith.constant 1 : index
    %c1792_221 = arith.constant 1792 : index
    %196 = vector.load %arg9[%c1_220, %c1792_221] : memref<2x2304xf32, #tpu.memory_space<vmem>>, vector<1x256xf32>
    tpu.vector_store %arg9[%c1_220, %c1792_221], %195 {strides = array<i32>} : memref<2x2304xf32, #tpu.memory_space<vmem>>, vector<1x256xf32>,
    %c82 = arith.constant 82 : index
    %c0_222 = arith.constant 0 : index
    %197 = vector.load %arg14[%c82, %c0_222] : memref<96x256xf32, #tpu.memory_space<vmem>>, vector<1x256xf32>
    %c1_223 = arith.constant 1 : index
    %c2048_224 = arith.constant 2048 : index
    %198 = vector.load %arg9[%c1_223, %c2048_224] : memref<2x2304xf32, #tpu.memory_space<vmem>>, vector<1x256xf32>
    tpu.vector_store %arg9[%c1_223, %c2048_224], %197 {strides = array<i32>} : memref<2x2304xf32, #tpu.memory_space<vmem>>, vector<1x256xf32>,
    %c0_225 = arith.constant 0 : index
    %c0_226 = arith.constant 0 : index
    %199 = vector.load %arg9[%c0_225, %c0_226] : memref<2x2304xf32, #tpu.memory_space<vmem>>, vector<2x2304xf32>
    %c0_227 = arith.constant 0 : index
    %c0_228 = arith.constant 0 : index
    %200 = vector.load %arg7[%c0_227, %c0_228] : memref<2304x8xf32, #tpu.memory_space<vmem>>, vector<2304x8xf32>
    %cst_229 = arith.constant dense<0.000000e+00> : vector<2x8xf32>
    %201 = tpu.matmul %199, %200, %cst_229 {dimension_numbers = #tpu.dot_dimension_numbers<[1], [0], [0], [1], [0, 0, 1, 1], [], []>} : vector<2x2304xf32>, vector<2304x8xf32>, vector<2x8xf32> -> vector<2x8xf32>
    %c0_230 = arith.constant 0 : index
    %c0_231 = arith.constant 0 : index
    %202 = vector.load %arg8[%c0_230, %c0_231] : memref<1x8xf32, #tpu.memory_space<vmem>>, vector<1x8xf32>
    %203 = vector.broadcast %202 : vector<1x8xf32> to vector<2x8xf32>
    %204 = arith.addf %201, %203 : vector<2x8xf32>
    %205 = vector.extract_strided_slice %204 {offsets = [0, 0], sizes = [2, 6], strides = [1, 1]} : vector<2x8xf32> to vector<2x6xf32>
    %cst_232 = arith.constant dense<0xFF800000> : vector<2xf32>
    %206 = vector.multi_reduction <maximumf>, %205, %cst_232 [1] : vector<2x6xf32> to vector<2xf32>
    %207 = vector.shape_cast %206 : vector<2xf32> to vector<2x1xf32>
    %208 = vector.broadcast %207 : vector<2x1xf32> to vector<2x6xf32>
    %209 = arith.subf %205, %208 : vector<2x6xf32>
    %210 = math.exp %209 : vector<2x6xf32>
    %cst_233 = arith.constant dense<0.000000e+00> : vector<2xf32>
    %211 = vector.multi_reduction <add>, %210, %cst_233 [1] : vector<2x6xf32> to vector<2xf32>
    %212 = vector.shape_cast %211 : vector<2xf32> to vector<2x1xf32>
    %213 = tpu.reciprocal %212 {approx = true} : vector<2x1xf32> -> vector<2x1xf32>
    %214 = vector.broadcast %213 : vector<2x1xf32> to vector<2x6xf32>
    %215 = arith.mulf %210, %214 : vector<2x6xf32>
    %c0_234 = arith.constant 0 : index
    %c0_235 = arith.constant 0 : index
    %216 = vector.load %arg10[%c0_234, %c0_235] : memref<2x6xf32, #tpu.memory_space<vmem>>, vector<2x6xf32>
    tpu.vector_store %arg10[%c0_234, %c0_235], %215 {strides = array<i32>} : memref<2x6xf32, #tpu.memory_space<vmem>>, vector<2x6xf32>,
    %217 = vector.extract_strided_slice %204 {offsets = [0, 6], sizes = [2, 1], strides = [1, 1]} : vector<2x8xf32> to vector<2x1xf32>
    %c0_236 = arith.constant 0 : index
    %c0_237 = arith.constant 0 : index
    %218 = vector.load %arg11[%c0_236, %c0_237] : memref<2x1xf32, #tpu.memory_space<vmem>>, vector<2x1xf32>
    tpu.vector_store %arg11[%c0_236, %c0_237], %217 {strides = array<i32>} : memref<2x1xf32, #tpu.memory_space<vmem>>, vector<2x1xf32>,
    return
  }
}

</mosaic_0001>

<llo_original>
// kernel: actor_critic_apply.1
$region0: #{actor_critic_apply.1}
  #allocation0 [shape = 'u32[]', space=smem, size = 0x4, offset = 0x4, fixed_abs, tag = 'smem constant byte address 0x4 - core index']
  #allocation1 [shape = 'u32[144,128]{1,0:T(1,128)}', space=vmem, size = 0x12000, scoped, tag = 'internal scratch']
  #allocation2 [shape = 'f32[240,64]{1,0:T(8,128)}', space=vmem, size = 0x1e000, scoped, tag = 'scratch operand']
  #allocation3 [shape = 'f32[176,128]{1,0:T(8,128)}', space=vmem, size = 0x16000, scoped, tag = 'scratch operand']
  #allocation4 [shape = 'f32[96,256]{1,0:T(8,128)}', space=vmem, size = 0x18000, scoped, tag = 'scratch operand']
  %s0 = inlined_call_operand.vmem [shape: f32[304,13], index: 0, kind: input, shape index: {}]
  %s1 = inlined_call_operand.vmem [shape: f32[9,13,64], index: 1, kind: input, shape index: {}]
  %s2 = inlined_call_operand.vmem [shape: f32[1,64], index: 2, kind: input, shape index: {}]
  %s3 = inlined_call_operand.vmem [shape: f32[9,64,128], index: 3, kind: input, shape index: {}]
  %s4 = inlined_call_operand.vmem [shape: f32[1,128], index: 4, kind: input, shape index: {}]
  %s5 = inlined_call_operand.vmem [shape: f32[9,128,256], index: 5, kind: input, shape index: {}]
  %s6 = inlined_call_operand.vmem [shape: f32[1,256], index: 6, kind: input, shape index: {}]
  %s7 = inlined_call_operand.vmem [shape: f32[2304,8], index: 7, kind: input, shape index: {}]
  %s8 = inlined_call_operand.vmem [shape: f32[1,8], index: 8, kind: input, shape index: {}]
  %s9 = inlined_call_operand.vmem [shape: f32[2,2304], index: 9, kind: output, shape index: {0}]
  %s10 = inlined_call_operand.hbm [shape: f32[2,6], index: 10, kind: output, shape index: {1}]
  %s11 = inlined_call_operand.vmem [shape: f32[2,1], index: 11, kind: output, shape index: {2}]
  %12 = xla_tuple %s9, %s10, %s11
  %s13 = sld [smem:[#allocation0]]
  $region62: #{actor_critic_apply.1} parent=0
    _
  %s15 = ssub.s32 1, %s13
  %s16 = scalar_select 0, %s15, %s13
  $region1: #{actor_critic_apply.1} parent=0
    #allocation5 [shape = 'u8[1024]{0}', space=vmem, size = 0x400, scoped, tag = 'output window, operand 1, single buffered']
    #allocation6 [shape = 's32[1]{0}', space=sflag, size = 0x4, scoped, tag = 'scoped memory for actor_critic_apply.1']
    %17 = vsyncpa [#allocation6], 0
    // Predicated region
    $region2: #{actor_critic_apply.1} parent=1 // pred_check
      _
    $region3: #{actor_critic_apply.1} parent=1 // pred_check_branch
      %19 = sbr.rel (0) target = $region5
    $region4: #{actor_critic_apply.1} parent=1 // pred_region
      _
    $region5: #{actor_critic_apply.1} parent=1 // pred_fallthru
      _
    // Predicated region
    $region6: #{actor_critic_apply.1} parent=1 // pred_check
      _
    $region7: #{actor_critic_apply.1} parent=1 // pred_check_branch
      %21 = sbr.rel (0) target = $region9
    $region8: #{actor_critic_apply.1} parent=1 // pred_region
      _
    $region9: #{actor_critic_apply.1} parent=1 // pred_fallthru
      _
    // Predicated region
    $region10: #{actor_critic_apply.1} parent=1 // pred_check
      _
    $region11: #{actor_critic_apply.1} parent=1 // pred_check_branch
      %23 = sbr.rel (0) target = $region13
    $region12: #{actor_critic_apply.1} parent=1 // pred_region
      _
    $region13: #{actor_critic_apply.1} parent=1 // pred_fallthru
      _
    // Predicated region
    $region14: #{actor_critic_apply.1} parent=1 // pred_check
      _
    $region15: #{actor_critic_apply.1} parent=1 // pred_check_branch
      %25 = sbr.rel (0) target = $region17
    $region16: #{actor_critic_apply.1} parent=1 // pred_region
      _
    $region17: #{actor_critic_apply.1} parent=1 // pred_fallthru
      _
    // Predicated region
    $region18: #{actor_critic_apply.1} parent=1 // pred_check
      _
    $region19: #{actor_critic_apply.1} parent=1 // pred_check_branch
      %27 = sbr.rel (0) target = $region21
    $region20: #{actor_critic_apply.1} parent=1 // pred_region
      _
    $region21: #{actor_critic_apply.1} parent=1 // pred_fallthru
      _
    // Predicated region
    $region22: #{actor_critic_apply.1} parent=1 // pred_check
      _
    $region23: #{actor_critic_apply.1} parent=1 // pred_check_branch
      %29 = sbr.rel (0) target = $region25
    $region24: #{actor_critic_apply.1} parent=1 // pred_region
      _
    $region25: #{actor_critic_apply.1} parent=1 // pred_fallthru
      _
    // Predicated region
    $region26: #{actor_critic_apply.1} parent=1 // pred_check
      _
    $region27: #{actor_critic_apply.1} parent=1 // pred_check_branch
      %31 = sbr.rel (0) target = $region29
    $region28: #{actor_critic_apply.1} parent=1 // pred_region
      _
    $region29: #{actor_critic_apply.1} parent=1 // pred_fallthru
      _
    // Predicated region
    $region30: #{actor_critic_apply.1} parent=1 // pred_check
      _
    $region31: #{actor_critic_apply.1} parent=1 // pred_check_branch
      %33 = sbr.rel (0) target = $region33
    $region32: #{actor_critic_apply.1} parent=1 // pred_region
      _
    $region33: #{actor_critic_apply.1} parent=1 // pred_fallthru
      _
    // Predicated region
    $region34: #{actor_critic_apply.1} parent=1 // pred_check
      _
    $region35: #{actor_critic_apply.1} parent=1 // pred_check_branch
      %35 = sbr.rel (0) target = $region37
    $region36: #{actor_critic_apply.1} parent=1 // pred_region
      _
    $region37: #{actor_critic_apply.1} parent=1 // pred_fallthru
      _
    %vm36 = vcmask 523264
    %37 = vst.msk [vmem:[#allocation2 + $0xe0] sm:$0xff] %vm36, 0.0
    %38 = vst.msk [vmem:[#allocation2 + $0xe8] sm:$0xff] %vm36, 0.0
    %39 = vst [vmem:[#allocation3 + $0xa0] sm:$0xff] 0.0
    %40 = vst [vmem:[#allocation3 + $0xa8] sm:$0xff] 0.0
    %v41 = vld [vmem:[%s0] sm:$0xff]
    %v42 = vld [vmem:[%s0 + $0x8] sm:$0xff]
    %v43 = vld [vmem:[%s0 + $0x10] sm:$0xff]
    %v44 = vld [vmem:[%s0 + $0x18] sm:$0xff]
    %v45 = vld [vmem:[%s0 + $0x20] sm:$0xff]
    %v46 = vld [vmem:[%s0 + $0x28] sm:$0xff]
    %v47 = vld [vmem:[%s0 + $0x30] sm:$0xff]
    %v48 = vld [vmem:[%s0 + $0x38] sm:$0xff]
    %v49 = vld [vmem:[%s0 + $0x40] sm:$0xff]
    %v50 = vld [vmem:[%s0 + $0x48] sm:$0xff]
    %v51 = vld [vmem:[%s0 + $0x50] sm:$0xff]
    %v52 = vld [vmem:[%s0 + $0x58] sm:$0xff]
    %v53 = vld [vmem:[%s0 + $0x60] sm:$0xff]
    %v54 = vld [vmem:[%s0 + $0x68] sm:$0xff]
    %v55 = vld [vmem:[%s0 + $0x70] sm:$0xff]
    %v56 = vld [vmem:[%s0 + $0x78] sm:$0xff]
    %v57 = vld [vmem:[%s0 + $0x80] sm:$0xff]
    %v58 = vld [vmem:[%s0 + $0x88] sm:$0xff]
    %v59 = vld [vmem:[%s0 + $0x90] sm:$0xff]
    %v60 = vld [vmem:[%s0 + $0x98] sm:$0xff]
    %v61 = vld [vmem:[%s0 + $0xa0] sm:$0xff]
    %v62 = vld [vmem:[%s0 + $0xa8] sm:$0xff]
    %v63 = vld [vmem:[%s0 + $0xb0] sm:$0xff]
    %v64 = vld [vmem:[%s0 + $0xb8] sm:$0xff]
    %v65 = vld [vmem:[%s0 + $0xc0] sm:$0xff]
    %v66 = vld [vmem:[%s0 + $0xc8] sm:$0xff]
    %v67 = vld [vmem:[%s0 + $0xd0] sm:$0xff]
    %v68 = vld [vmem:[%s0 + $0xd8] sm:$0xff]
    %v69 = vld [vmem:[%s0 + $0xe0] sm:$0xff]
    %v70 = vld [vmem:[%s0 + $0xe8] sm:$0xff]
    %v71 = vld [vmem:[%s0 + $0xf0] sm:$0xff]
    %v72 = vld [vmem:[%s0 + $0xf8] sm:$0xff]
    %v73 = vld [vmem:[%s1] sm:$0xff]
    %v74 = vld [vmem:[%s1 + $0x8] sm:$0x1f]
    %v75 = vld [vmem:[%s0 + $0x1] sm:$0xff]
    %v76 = vld [vmem:[%s0 + $0x9] sm:$0xff]
    %v77 = vld [vmem:[%s0 + $0x11] sm:$0xff]
    %v78 = vld [vmem:[%s0 + $0x19] sm:$0xff]
    %v79 = vld [vmem:[%s0 + $0x21] sm:$0xff]
    %v80 = vld [vmem:[%s0 + $0x29] sm:$0xff]
    %v81 = vld [vmem:[%s0 + $0x31] sm:$0xff]
    %v82 = vld [vmem:[%s0 + $0x39] sm:$0xff]
    %v83 = vld [vmem:[%s0 + $0x41] sm:$0xff]
    %v84 = vld [vmem:[%s0 + $0x49] sm:$0xff]
    %v85 = vld [vmem:[%s0 + $0x51] sm:$0xff]
    %v86 = vld [vmem:[%s0 + $0x59] sm:$0xff]
    %v87 = vld [vmem:[%s0 + $0x61] sm:$0xff]
    %v88 = vld [vmem:[%s0 + $0x69] sm:$0xff]
    %v89 = vld [vmem:[%s0 + $0x71] sm:$0xff]
    %v90 = vld [vmem:[%s0 + $0x79] sm:$0xff]
    %v91 = vld [vmem:[%s0 + $0x81] sm:$0xff]
    %v92 = vld [vmem:[%s0 + $0x89] sm:$0xff]
    %v93 = vld [vmem:[%s0 + $0x91] sm:$0xff]
    %v94 = vld [vmem:[%s0 + $0x99] sm:$0xff]
    %v95 = vld [vmem:[%s0 + $0xa1] sm:$0xff]
    %v96 = vld [vmem:[%s0 + $0xa9] sm:$0xff]
    %v97 = vld [vmem:[%s0 + $0xb1] sm:$0xff]
    %v98 = vld [vmem:[%s0 + $0xb9] sm:$0xff]
    %v99 = vld [vmem:[%s0 + $0xc1] sm:$0xff]
    %v100 = vld [vmem:[%s0 + $0xc9] sm:$0xff]
    %v101 = vld [vmem:[%s0 + $0xd1] sm:$0xff]
    %v102 = vld [vmem:[%s0 + $0xd9] sm:$0xff]
    %v103 = vld [vmem:[%s0 + $0xe1] sm:$0xff]
    %v104 = vld [vmem:[%s0 + $0xe9] sm:$0xff]
    %v105 = vld [vmem:[%s0 + $0xf1] sm:$0xff]
    %v106 = vld [vmem:[%s0 + $0xf9] sm:$0xff]
    %s107 = scalar_lea.vmem %s1, 16
    %v108 = vld [vmem:[%s107] sm:$0xff]
    %v109 = vld [vmem:[%s107 + $0x8] sm:$0x1f]
    %vm110 = vcmask 105472
    %v112 = vsel %vm110, %v75, 0
    %v115 = vsel %vm110, %v76, 0
    %v118 = vsel %vm110, %v77, 0
    %v121 = vsel %vm110, %v78, 0
    %v124 = vsel %vm110, %v79, 0
    %v127 = vsel %vm110, %v80, 0
    %v130 = vsel %vm110, %v81, 0
    %v133 = vsel %vm110, %v82, 0
    %v136 = vsel %vm110, %v83, 0
    %v139 = vsel %vm110, %v84, 0
    %v142 = vsel %vm110, %v85, 0
    %v145 = vsel %vm110, %v86, 0
    %v148 = vsel %vm110, %v87, 0
    %v151 = vsel %vm110, %v88, 0
    %v154 = vsel %vm110, %v89, 0
    %v157 = vsel %vm110, %v90, 0
    %v160 = vsel %vm110, %v91, 0
    %v163 = vsel %vm110, %v92, 0
    %v166 = vsel %vm110, %v93, 0
    %v169 = vsel %vm110, %v94, 0
    %v172 = vsel %vm110, %v95, 0
    %v175 = vsel %vm110, %v96, 0
    %v178 = vsel %vm110, %v97, 0
    %v181 = vsel %vm110, %v98, 0
    %v184 = vsel %vm110, %v99, 0
    %v187 = vsel %vm110, %v100, 0
    %v190 = vsel %vm110, %v101, 0
    %v193 = vsel %vm110, %v102, 0
    %v196 = vsel %vm110, %v103, 0
    %v199 = vsel %vm110, %v104, 0
    %v202 = vsel %vm110, %v105, 0
    %v205 = vsel %vm110, %v106, 0
    %vm207 = vcmask 1044480
    %v209 = vsel %vm207, %v109, 0
    %211 = vmatprep.subr.mxu0 0.0
    %212 = vmatpush1.msra.mxu0 %v108
    %213 = vmatprep.subr.mxu0 0.0
    %214 = vmatpush1.msra.mxu0 %v209
    %215 = vmatprep.subr.mxu0 0.0
    %216 = vmatpush1.msra.mxu0 0.0
    %217 = vmatprep.subr.mxu0 0.0
    %218 = vmatpush1.msra.mxu0 0.0
    %219 = vmatprep.subr.mxu0 0.0
    %220 = vmatpush1.msra.mxu0 0.0
    %221 = vmatprep.subr.mxu0 0.0
    %222 = vmatpush1.msra.mxu0 0.0
    %223 = vmatprep.subr.mxu0 0.0
    %224 = vmatpush1.msra.mxu0 0.0
    %225 = vmatprep.subr.mxu0 0.0
    %226 = vmatpush1.msra.mxu0 0.0
    %227 = vmatprep.subr.mxu0 0.0
    %228 = vmatpush1.msra.mxu0 0.0
    %229 = vmatprep.subr.mxu0 0.0
    %230 = vmatpush1.msra.mxu0 0.0
    %231 = vmatprep.subr.mxu0 0.0
    %232 = vmatpush1.msra.mxu0 0.0
    %233 = vmatprep.subr.mxu0 0.0
    %234 = vmatpush1.msra.mxu0 0.0
    %235 = vmatprep.subr.mxu0 0.0
    %236 = vmatpush1.msra.mxu0 0.0
    %237 = vmatprep.subr.mxu0 0.0
    %238 = vmatpush1.msra.mxu0 0.0
    %239 = vmatprep.subr.mxu0 0.0
    %240 = vmatpush1.msra.mxu0 0.0
    %241 = vmatprep.subr.mxu0 0.0
    %242 = vmatpush1.msra.mxu0 0.0
    %243 = vmatprep.subr.mxu0 0.0
    %244 = vmatpush1.msra.mxu0 0.0
    %245 = vmatprep.subr.mxu0 0.0
    %246 = vmatpush1.msra.mxu0 0.0
    %247 = vmatprep.subr.mxu0 0.0
    %248 = vmatpush1.msra.mxu0 0.0
    %249 = vmatprep.subr.mxu0 0.0
    %250 = vmatpush1.msra.mxu0 0.0
    %251 = vmatprep.subr.mxu0 0.0
    %252 = vmatpush1.msra.mxu0 0.0
    %253 = vmatprep.subr.mxu0 0.0
    %254 = vmatpush1.msra.mxu0 0.0
    %255 = vmatprep.subr.mxu0 0.0
    %256 = vmatpush1.msra.mxu0 0.0
    %257 = vmatprep.subr.mxu0 0.0
    %258 = vmatpush1.msra.mxu0 0.0
    %259 = vmatprep.subr.mxu0 0.0
    %260 = vmatpush1.msra.mxu0 0.0
    %261 = vmatprep.subr.mxu0 0.0
    %262 = vmatpush1.msra.mxu0 0.0
    %263 = vmatprep.subr.mxu0 0.0
    %264 = vmatpush1.msra.mxu0 0.0
    %265 = vmatprep.subr.mxu0 0.0
    %266 = vmatpush1.msra.mxu0 0.0
    %267 = vmatprep.subr.mxu0 0.0
    %268 = vmatpush1.msra.mxu0 0.0
    %269 = vmatprep.subr.mxu0 0.0
    %270 = vmatpush1.msra.mxu0 0.0
    %271 = vmatprep.subr.mxu0 0.0
    %272 = vmatpush1.msra.mxu0 0.0
    %273 = vmatprep.subr.mxu0 0.0
    %274 = vmatpush1.msra.mxu0 0.0
    %275 = vmatprep.mubr.f32.mxu0 0.0
    %276 = vmatmul.mubr.f32.gmra.mrb[0].mxu0 %v112
    %v277 = vpop.f32.mrb[0].mxu0
    %v278 = vadd.f32 0.0, %v277
    %v279 = vpop.f32.mrb[0].mxu0
    %280 = vmatprep.mubr.f32.mxu0 0.0
    %281 = vmatmul.mubr.f32.gmra.mrb[0].mxu0 %v115
    %v282 = vpop.f32.mrb[0].mxu0
    %v283 = vadd.f32 0.0, %v282
    %v284 = vpop.f32.mrb[0].mxu0
    %285 = vmatprep.mubr.f32.mxu0 0.0
    %286 = vmatmul.mubr.f32.gmra.mrb[0].mxu0 %v118
    %v287 = vpop.f32.mrb[0].mxu0
    %v288 = vadd.f32 0.0, %v287
    %v289 = vpop.f32.mrb[0].mxu0
    %290 = vmatprep.mubr.f32.mxu0 0.0
    %291 = vmatmul.mubr.f32.gmra.mrb[0].mxu0 %v121
    %v292 = vpop.f32.mrb[0].mxu0
    %v293 = vadd.f32 0.0, %v292
    %v294 = vpop.f32.mrb[0].mxu0
    %295 = vmatprep.mubr.f32.mxu0 0.0
    %296 = vmatmul.mubr.f32.gmra.mrb[0].mxu0 %v124
    %v297 = vpop.f32.mrb[0].mxu0
    %v298 = vadd.f32 0.0, %v297
    %v299 = vpop.f32.mrb[0].mxu0
    %300 = vmatprep.mubr.f32.mxu0 0.0
    %301 = vmatmul.mubr.f32.gmra.mrb[0].mxu0 %v127
    %v302 = vpop.f32.mrb[0].mxu0
    %v303 = vadd.f32 0.0, %v302
    %v304 = vpop.f32.mrb[0].mxu0
    %305 = vmatprep.mubr.f32.mxu0 0.0
    %306 = vmatmul.mubr.f32.gmra.mrb[0].mxu0 %v130
    %v307 = vpop.f32.mrb[0].mxu0
    %v308 = vadd.f32 0.0, %v307
    %v309 = vpop.f32.mrb[0].mxu0
    %310 = vmatprep.mubr.f32.mxu0 0.0
    %311 = vmatmul.mubr.f32.gmra.mrb[0].mxu0 %v133
    %v312 = vpop.f32.mrb[0].mxu0
    %v313 = vadd.f32 0.0, %v312
    %v314 = vpop.f32.mrb[0].mxu0
    %315 = vmatprep.mubr.f32.mxu0 0.0
    %316 = vmatmul.mubr.f32.gmra.mrb[0].mxu0 %v136
    %v317 = vpop.f32.mrb[0].mxu0
    %v318 = vadd.f32 0.0, %v317
    %v319 = vpop.f32.mrb[0].mxu0
    %320 = vmatprep.mubr.f32.mxu0 0.0
    %321 = vmatmul.mubr.f32.gmra.mrb[0].mxu0 %v139
    %v322 = vpop.f32.mrb[0].mxu0
    %v323 = vadd.f32 0.0, %v322
    %v324 = vpop.f32.mrb[0].mxu0
    %325 = vmatprep.mubr.f32.mxu0 0.0
    %326 = vmatmul.mubr.f32.gmra.mrb[0].mxu0 %v142
    %v327 = vpop.f32.mrb[0].mxu0
    %v328 = vadd.f32 0.0, %v327
    %v329 = vpop.f32.mrb[0].mxu0
    %330 = vmatprep.mubr.f32.mxu0 0.0
    %331 = vmatmul.mubr.f32.gmra.mrb[0].mxu0 %v145
    %v332 = vpop.f32.mrb[0].mxu0
    %v333 = vadd.f32 0.0, %v332
    %v334 = vpop.f32.mrb[0].mxu0
    %335 = vmatprep.mubr.f32.mxu0 0.0
    %336 = vmatmul.mubr.f32.gmra.mrb[0].mxu0 %v148
    %v337 = vpop.f32.mrb[0].mxu0
    %v338 = vadd.f32 0.0, %v337
    %v339 = vpop.f32.mrb[0].mxu0
    %340 = vmatprep.mubr.f32.mxu0 0.0
    %341 = vmatmul.mubr.f32.gmra.mrb[0].mxu0 %v151
    %v342 = vpop.f32.mrb[0].mxu0
    %v343 = vadd.f32 0.0, %v342
    %v344 = vpop.f32.mrb[0].mxu0
    %345 = vmatprep.mubr.f32.mxu0 0.0
    %346 = vmatmul.mubr.f32.gmra.mrb[0].mxu0 %v154
    %v347 = vpop.f32.mrb[0].mxu0
    %v348 = vpop.f32.mrb[0].mxu0
    %349 = vmatprep.mubr.f32.mxu0 0.0
    %350 = vmatmul.mubr.f32.gmra.mrb[0].mxu0 %v157
    %v351 = vpop.f32.mrb[0].mxu0
    %v352 = vpop.f32.mrb[0].mxu0
    %353 = vmatprep.mubr.f32.mxu0 0.0
    %354 = vmatmul.mubr.f32.gmra.mrb[0].mxu0 %v160
    %v355 = vpop.f32.mrb[0].mxu0
    %v356 = vpop.f32.mrb[0].mxu0
    %357 = vmatprep.mubr.f32.mxu0 0.0
    %358 = vmatmul.mubr.f32.gmra.mrb[0].mxu0 %v163
    %v359 = vpop.f32.mrb[0].mxu0
    %v360 = vpop.f32.mrb[0].mxu0
    %361 = vmatprep.mubr.f32.mxu0 0.0
    %362 = vmatmul.mubr.f32.gmra.mrb[0].mxu0 %v166
    %v363 = vpop.f32.mrb[0].mxu0
    %v364 = vadd.f32 0.0, %v363
    %v365 = vpop.f32.mrb[0].mxu0
    %366 = vmatprep.mubr.f32.mxu0 0.0
    %367 = vmatmul.mubr.f32.gmra.mrb[0].mxu0 %v169
    %v368 = vpop.f32.mrb[0].mxu0
    %v369 = vadd.f32 0.0, %v368
    %v370 = vpop.f32.mrb[0].mxu0
    %371 = vmatprep.mubr.f32.mxu0 0.0
    %372 = vmatmul.mubr.f32.gmra.mrb[0].mxu0 %v172
    %v373 = vpop.f32.mrb[0].mxu0
    %v374 = vadd.f32 0.0, %v373
    %v375 = vpop.f32.mrb[0].mxu0
    %376 = vmatprep.mubr.f32.mxu0 0.0
    %377 = vmatmul.mubr.f32.gmra.mrb[0].mxu0 %v175
    %v378 = vpop.f32.mrb[0].mxu0
    %v379 = vadd.f32 0.0, %v378
    %v380 = vpop.f32.mrb[0].mxu0
    %381 = vmatprep.mubr.f32.mxu0 0.0
    %382 = vmatmul.mubr.f32.gmra.mrb[0].mxu0 %v178
    %v383 = vpop.f32.mrb[0].mxu0
    %v384 = vadd.f32 0.0, %v383
    %v385 = vpop.f32.mrb[0].mxu0
    %386 = vmatprep.mubr.f32.mxu0 0.0
    %387 = vmatmul.mubr.f32.gmra.mrb[0].mxu0 %v181
    %v388 = vpop.f32.mrb[0].mxu0
    %v389 = vadd.f32 0.0, %v388
    %v390 = vpop.f32.mrb[0].mxu0
    %391 = vmatprep.mubr.f32.mxu0 0.0
    %392 = vmatmul.mubr.f32.gmra.mrb[0].mxu0 %v184
    %v393 = vpop.f32.mrb[0].mxu0
    %v394 = vadd.f32 0.0, %v393
    %v395 = vpop.f32.mrb[0].mxu0
    %396 = vmatprep.mubr.f32.mxu0 0.0
    %397 = vmatmul.mubr.f32.gmra.mrb[0].mxu0 %v187
    %v398 = vpop.f32.mrb[0].mxu0
    %v399 = vadd.f32 0.0, %v398
    %v400 = vpop.f32.mrb[0].mxu0
    %401 = vmatprep.mubr.f32.mxu0 0.0
    %402 = vmatmul.mubr.f32.gmra.mrb[0].mxu0 %v190
    %v403 = vpop.f32.mrb[0].mxu0
    %v404 = vadd.f32 0.0, %v403
    %v405 = vpop.f32.mrb[0].mxu0
    %406 = vmatprep.mubr.f32.mxu0 0.0
    %407 = vmatmul.mubr.f32.gmra.mrb[0].mxu0 %v193
    %v408 = vpop.f32.mrb[0].mxu0
    %v409 = vadd.f32 0.0, %v408
    %v410 = vpop.f32.mrb[0].mxu0
    %411 = vmatprep.mubr.f32.mxu0 0.0
    %412 = vmatmul.mubr.f32.gmra.mrb[0].mxu0 %v196
    %v413 = vpop.f32.mrb[0].mxu0
    %v414 = vadd.f32 0.0, %v413
    %v415 = vpop.f32.mrb[0].mxu0
    %416 = vmatprep.mubr.f32.mxu0 0.0
    %417 = vmatmul.mubr.f32.gmra.mrb[0].mxu0 %v199
    %v418 = vpop.f32.mrb[0].mxu0
    %v419 = vadd.f32 0.0, %v418
    %v420 = vpop.f32.mrb[0].mxu0
    %421 = vmatprep.mubr.f32.mxu0 0.0
    %422 = vmatmul.mubr.f32.gmra.mrb[0].mxu0 %v202
    %v423 = vpop.f32.mrb[0].mxu0
    %v424 = vadd.f32 0.0, %v423
    %v425 = vpop.f32.mrb[0].mxu0
    %426 = vmatprep.mubr.f32.mxu0 0.0
    %427 = vmatmul.mubr.f32.gmra.mrb[0].mxu0 %v205
    %v428 = vpop.f32.mrb[0].mxu0
    %v429 = vadd.f32 0.0, %v428
    %v430 = vpop.f32.mrb[0].mxu0
    %431 = vdwg.mxu0
    %v433 = vsel %vm110, %v41, 0
    %v436 = vsel %vm110, %v42, 0
    %v439 = vsel %vm110, %v43, 0
    %v442 = vsel %vm110, %v44, 0
    %v445 = vsel %vm110, %v45, 0
    %v448 = vsel %vm110, %v46, 0
    %v451 = vsel %vm110, %v47, 0
    %v454 = vsel %vm110, %v48, 0
    %v457 = vsel %vm110, %v49, 0
    %v460 = vsel %vm110, %v50, 0
    %v463 = vsel %vm110, %v51, 0
    %v466 = vsel %vm110, %v52, 0
    %v469 = vsel %vm110, %v53, 0
    %v472 = vsel %vm110, %v54, 0
    %v475 = vsel %vm110, %v55, 0
    %v478 = vsel %vm110, %v56, 0
    %v481 = vsel %vm110, %v57, 0
    %v484 = vsel %vm110, %v58, 0
    %v487 = vsel %vm110, %v59, 0
    %v490 = vsel %vm110, %v60, 0
    %v493 = vsel %vm110, %v61, 0
    %v496 = vsel %vm110, %v62, 0
    %v499 = vsel %vm110, %v63, 0
    %v502 = vsel %vm110, %v64, 0
    %v505 = vsel %vm110, %v65, 0
    %v508 = vsel %vm110, %v66, 0
    %v511 = vsel %vm110, %v67, 0
    %v514 = vsel %vm110, %v68, 0
    %v517 = vsel %vm110, %v69, 0
    %v520 = vsel %vm110, %v70, 0
    %v523 = vsel %vm110, %v71, 0
    %v526 = vsel %vm110, %v72, 0
    %v529 = vsel %vm207, %v74, 0
    %531 = vmatprep.subr.mxu0 0.0
    %532 = vmatpush1.msra.mxu0 %v73
    %533 = vmatprep.subr.mxu0 0.0
    %534 = vmatpush1.msra.mxu0 %v529
    %535 = vmatprep.subr.mxu0 0.0
    %536 = vmatpush1.msra.mxu0 0.0
    %537 = vmatprep.subr.mxu0 0.0
    %538 = vmatpush1.msra.mxu0 0.0
    %539 = vmatprep.subr.mxu0 0.0
    %540 = vmatpush1.msra.mxu0 0.0
    %541 = vmatprep.subr.mxu0 0.0
    %542 = vmatpush1.msra.mxu0 0.0
    %543 = vmatprep.subr.mxu0 0.0
    %544 = vmatpush1.msra.mxu0 0.0
    %545 = vmatprep.subr.mxu0 0.0
    %546 = vmatpush1.msra.mxu0 0.0
    %547 = vmatprep.subr.mxu0 0.0
    %548 = vmatpush1.msra.mxu0 0.0
    %549 = vmatprep.subr.mxu0 0.0
    %550 = vmatpush1.msra.mxu0 0.0
    %551 = vmatprep.subr.mxu0 0.0
    %552 = vmatpush1.msra.mxu0 0.0
    %553 = vmatprep.subr.mxu0 0.0
    %554 = vmatpush1.msra.mxu0 0.0
    %555 = vmatprep.subr.mxu0 0.0
    %556 = vmatpush1.msra.mxu0 0.0
    %557 = vmatprep.subr.mxu0 0.0
    %558 = vmatpush1.msra.mxu0 0.0
    %559 = vmatprep.subr.mxu0 0.0
    %560 = vmatpush1.msra.mxu0 0.0
    %561 = vmatprep.subr.mxu0 0.0
    %562 = vmatpush1.msra.mxu0 0.0
    %563 = vmatprep.subr.mxu0 0.0
    %564 = vmatpush1.msra.mxu0 0.0
    %565 = vmatprep.subr.mxu0 0.0
    %566 = vmatpush1.msra.mxu0 0.0
    %567 = vmatprep.subr.mxu0 0.0
    %568 = vmatpush1.msra.mxu0 0.0
    %569 = vmatprep.subr.mxu0 0.0
    %570 = vmatpush1.msra.mxu0 0.0
    %571 = vmatprep.subr.mxu0 0.0
    %572 = vmatpush1.msra.mxu0 0.0
    %573 = vmatprep.subr.mxu0 0.0
    %574 = vmatpush1.msra.mxu0 0.0
    %575 = vmatprep.subr.mxu0 0.0
    %576 = vmatpush1.msra.mxu0 0.0
    %577 = vmatprep.subr.mxu0 0.0
    %578 = vmatpush1.msra.mxu0 0.0
    %579 = vmatprep.subr.mxu0 0.0
    %580 = vmatpush1.msra.mxu0 0.0
    %581 = vmatprep.subr.mxu0 0.0
    %582 = vmatpush1.msra.mxu0 0.0
    %583 = vmatprep.subr.mxu0 0.0
    %584 = vmatpush1.msra.mxu0 0.0
    %585 = vmatprep.subr.mxu0 0.0
    %586 = vmatpush1.msra.mxu0 0.0
    %587 = vmatprep.subr.mxu0 0.0
    %588 = vmatpush1.msra.mxu0 0.0
    %589 = vmatprep.subr.mxu0 0.0
    %590 = vmatpush1.msra.mxu0 0.0
    %591 = vmatprep.subr.mxu0 0.0
    %592 = vmatpush1.msra.mxu0 0.0
    %593 = vmatprep.subr.mxu0 0.0
    %594 = vmatpush1.msra.mxu0 0.0
    %595 = vmatprep.mubr.f32.mxu0 0.0
    %596 = vmatmul.mubr.f32.gmra.mrb[0].mxu0 %v433
    %v597 = vpop.f32.mrb[0].mxu0
    %v598 = vadd.f32 %v278, %v597
    %v599 = vpop.f32.mrb[0].mxu0
    %600 = vmatprep.mubr.f32.mxu0 0.0
    %601 = vmatmul.mubr.f32.gmra.mrb[0].mxu0 %v436
    %v602 = vpop.f32.mrb[0].mxu0
    %v603 = vadd.f32 %v283, %v602
    %v604 = vpop.f32.mrb[0].mxu0
    %605 = vmatprep.mubr.f32.mxu0 0.0
    %606 = vmatmul.mubr.f32.gmra.mrb[0].mxu0 %v439
    %v607 = vpop.f32.mrb[0].mxu0
    %v608 = vadd.f32 %v288, %v607
    %v609 = vpop.f32.mrb[0].mxu0
    %610 = vmatprep.mubr.f32.mxu0 0.0
    %611 = vmatmul.mubr.f32.gmra.mrb[0].mxu0 %v442
    %v612 = vpop.f32.mrb[0].mxu0
    %v613 = vadd.f32 %v293, %v612
    %v614 = vpop.f32.mrb[0].mxu0
    %615 = vmatprep.mubr.f32.mxu0 0.0
    %616 = vmatmul.mubr.f32.gmra.mrb[0].mxu0 %v445
    %v617 = vpop.f32.mrb[0].mxu0
    %v618 = vadd.f32 %v298, %v617
    %v619 = vpop.f32.mrb[0].mxu0
    %620 = vmatprep.mubr.f32.mxu0 0.0
    %621 = vmatmul.mubr.f32.gmra.mrb[0].mxu0 %v448
    %v622 = vpop.f32.mrb[0].mxu0
    %v623 = vadd.f32 %v303, %v622
    %v624 = vpop.f32.mrb[0].mxu0
    %625 = vmatprep.mubr.f32.mxu0 0.0
    %626 = vmatmul.mubr.f32.gmra.mrb[0].mxu0 %v451
    %v627 = vpop.f32.mrb[0].mxu0
    %v628 = vadd.f32 %v308, %v627
    %v629 = vpop.f32.mrb[0].mxu0
    %630 = vmatprep.mubr.f32.mxu0 0.0
    %631 = vmatmul.mubr.f32.gmra.mrb[0].mxu0 %v454
    %v632 = vpop.f32.mrb[0].mxu0
    %v633 = vadd.f32 %v313, %v632
    %v634 = vpop.f32.mrb[0].mxu0
    %635 = vmatprep.mubr.f32.mxu0 0.0
    %636 = vmatmul.mubr.f32.gmra.mrb[0].mxu0 %v457
    %v637 = vpop.f32.mrb[0].mxu0
    %v638 = vadd.f32 %v318, %v637
    %v639 = vpop.f32.mrb[0].mxu0
    %640 = vmatprep.mubr.f32.mxu0 0.0
    %641 = vmatmul.mubr.f32.gmra.mrb[0].mxu0 %v460
    %v642 = vpop.f32.mrb[0].mxu0
    %v643 = vadd.f32 %v323, %v642
    %v644 = vpop.f32.mrb[0].mxu0
    %645 = vmatprep.mubr.f32.mxu0 0.0
    %646 = vmatmul.mubr.f32.gmra.mrb[0].mxu0 %v463
    %v647 = vpop.f32.mrb[0].mxu0
    %v648 = vadd.f32 %v328, %v647
    %v649 = vpop.f32.mrb[0].mxu0
    %650 = vmatprep.mubr.f32.mxu0 0.0
    %651 = vmatmul.mubr.f32.gmra.mrb[0].mxu0 %v466
    %v652 = vpop.f32.mrb[0].mxu0
    %v653 = vadd.f32 %v333, %v652
    %v654 = vpop.f32.mrb[0].mxu0
    %655 = vmatprep.mubr.f32.mxu0 0.0
    %656 = vmatmul.mubr.f32.gmra.mrb[0].mxu0 %v469
    %v657 = vpop.f32.mrb[0].mxu0
    %v658 = vadd.f32 %v338, %v657
    %v659 = vpop.f32.mrb[0].mxu0
    %660 = vmatprep.mubr.f32.mxu0 0.0
    %661 = vmatmul.mubr.f32.gmra.mrb[0].mxu0 %v472
    %v662 = vpop.f32.mrb[0].mxu0
    %v663 = vadd.f32 %v343, %v662
    %v664 = vpop.f32.mrb[0].mxu0
    %665 = vmatprep.mubr.f32.mxu0 0.0
    %666 = vmatmul.mubr.f32.gmra.mrb[0].mxu0 %v475
    %v667 = vpop.f32.mrb[0].mxu0
    %v668 = vpop.f32.mrb[0].mxu0
    %669 = vmatprep.mubr.f32.mxu0 0.0
    %670 = vmatmul.mubr.f32.gmra.mrb[0].mxu0 %v478
    %v671 = vpop.f32.mrb[0].mxu0
    %v672 = vpop.f32.mrb[0].mxu0
    %673 = vmatprep.mubr.f32.mxu0 0.0
    %674 = vmatmul.mubr.f32.gmra.mrb[0].mxu0 %v481
    %v675 = vpop.f32.mrb[0].mxu0
    %v676 = vpop.f32.mrb[0].mxu0
    %677 = vmatprep.mubr.f32.mxu0 0.0
    %678 = vmatmul.mubr.f32.gmra.mrb[0].mxu0 %v484
    %v679 = vpop.f32.mrb[0].mxu0
    %v680 = vpop.f32.mrb[0].mxu0
    %681 = vmatprep.mubr.f32.mxu0 0.0
    %682 = vmatmul.mubr.f32.gmra.mrb[0].mxu0 %v487
    %v683 = vpop.f32.mrb[0].mxu0
    %v684 = vadd.f32 %v364, %v683
    %v685 = vpop.f32.mrb[0].mxu0
    %686 = vmatprep.mubr.f32.mxu0 0.0
    %687 = vmatmul.mubr.f32.gmra.mrb[0].mxu0 %v490
    %v688 = vpop.f32.mrb[0].mxu0
    %v689 = vadd.f32 %v369, %v688
    %v690 = vpop.f32.mrb[0].mxu0
    %691 = vmatprep.mubr.f32.mxu0 0.0
    %692 = vmatmul.mubr.f32.gmra.mrb[0].mxu0 %v493
    %v693 = vpop.f32.mrb[0].mxu0
    %v694 = vadd.f32 %v374, %v693
    %v695 = vpop.f32.mrb[0].mxu0
    %696 = vmatprep.mubr.f32.mxu0 0.0
    %697 = vmatmul.mubr.f32.gmra.mrb[0].mxu0 %v496
    %v698 = vpop.f32.mrb[0].mxu0
    %v699 = vadd.f32 %v379, %v698
    %v700 = vpop.f32.mrb[0].mxu0
    %701 = vmatprep.mubr.f32.mxu0 0.0
    %702 = vmatmul.mubr.f32.gmra.mrb[0].mxu0 %v499
    %v703 = vpop.f32.mrb[0].mxu0
    %v704 = vadd.f32 %v384, %v703
    %v705 = vpop.f32.mrb[0].mxu0
    %706 = vmatprep.mubr.f32.mxu0 0.0
    %707 = vmatmul.mubr.f32.gmra.mrb[0].mxu0 %v502
    %v708 = vpop.f32.mrb[0].mxu0
    %v709 = vadd.f32 %v389, %v708
    %v710 = vpop.f32.mrb[0].mxu0
    %711 = vmatprep.mubr.f32.mxu0 0.0
    %712 = vmatmul.mubr.f32.gmra.mrb[0].mxu0 %v505
    %v713 = vpop.f32.mrb[0].mxu0
    %v714 = vadd.f32 %v394, %v713
    %v715 = vpop.f32.mrb[0].mxu0
    %716 = vmatprep.mubr.f32.mxu0 0.0
    %717 = vmatmul.mubr.f32.gmra.mrb[0].mxu0 %v508
    %v718 = vpop.f32.mrb[0].mxu0
    %v719 = vadd.f32 %v399, %v718
    %v720 = vpop.f32.mrb[0].mxu0
    %721 = vmatprep.mubr.f32.mxu0 0.0
    %722 = vmatmul.mubr.f32.gmra.mrb[0].mxu0 %v511
    %v723 = vpop.f32.mrb[0].mxu0
    %v724 = vadd.f32 %v404, %v723
    %v725 = vpop.f32.mrb[0].mxu0
    %726 = vmatprep.mubr.f32.mxu0 0.0
    %727 = vmatmul.mubr.f32.gmra.mrb[0].mxu0 %v514
    %v728 = vpop.f32.mrb[0].mxu0
    %v729 = vadd.f32 %v409, %v728
    %v730 = vpop.f32.mrb[0].mxu0
    %731 = vmatprep.mubr.f32.mxu0 0.0
    %732 = vmatmul.mubr.f32.gmra.mrb[0].mxu0 %v517
    %v733 = vpop.f32.mrb[0].mxu0
    %v734 = vadd.f32 %v414, %v733
    %v735 = vpop.f32.mrb[0].mxu0
    %736 = vmatprep.mubr.f32.mxu0 0.0
    %737 = vmatmul.mubr.f32.gmra.mrb[0].mxu0 %v520
    %v738 = vpop.f32.mrb[0].mxu0
    %v739 = vadd.f32 %v419, %v738
    %v740 = vpop.f32.mrb[0].mxu0
    %741 = vmatprep.mubr.f32.mxu0 0.0
    %742 = vmatmul.mubr.f32.gmra.mrb[0].mxu0 %v523
    %v743 = vpop.f32.mrb[0].mxu0
    %v744 = vadd.f32 %v424, %v743
    %v745 = vpop.f32.mrb[0].mxu0
    %746 = vmatprep.mubr.f32.mxu0 0.0
    %747 = vmatmul.mubr.f32.gmra.mrb[0].mxu0 %v526
    %v748 = vpop.f32.mrb[0].mxu0
    %v749 = vadd.f32 %v429, %v748
    %v750 = vpop.f32.mrb[0].mxu0
    %751 = vdwg.mxu0
    %v752 = vld [vmem:[%s0 + $0x2] sm:$0xff]
    %v753 = vld [vmem:[%s0 + $0xa] sm:$0xff]
    %v754 = vld [vmem:[%s0 + $0x12] sm:$0xff]
    %v755 = vld [vmem:[%s0 + $0x1a] sm:$0xff]
    %v756 = vld [vmem:[%s0 + $0x22] sm:$0xff]
    %v757 = vld [vmem:[%s0 + $0x2a] sm:$0xff]
    %v758 = vld [vmem:[%s0 + $0x32] sm:$0xff]
    %v759 = vld [vmem:[%s0 + $0x3a] sm:$0xff]
    %v760 = vld [vmem:[%s0 + $0x42] sm:$0xff]
    %v761 = vld [vmem:[%s0 + $0x4a] sm:$0xff]
    %v762 = vld [vmem:[%s0 + $0x52] sm:$0xff]
    %v763 = vld [vmem:[%s0 + $0x5a] sm:$0xff]
    %v764 = vld [vmem:[%s0 + $0x62] sm:$0xff]
    %v765 = vld [vmem:[%s0 + $0x6a] sm:$0xff]
    %v766 = vld [vmem:[%s0 + $0x72] sm:$0xff]
    %v767 = vld [vmem:[%s0 + $0x7a] sm:$0xff]
    %v768 = vld [vmem:[%s0 + $0x82] sm:$0xff]
    %v769 = vld [vmem:[%s0 + $0x8a] sm:$0xff]
    %v770 = vld [vmem:[%s0 + $0x92] sm:$0xff]
    %v771 = vld [vmem:[%s0 + $0x9a] sm:$0xff]
    %v772 = vld [vmem:[%s0 + $0xa2] sm:$0xff]
    %v773 = vld [vmem:[%s0 + $0xaa] sm:$0xff]
    %v774 = vld [vmem:[%s0 + $0xb2] sm:$0xff]
    %v775 = vld [vmem:[%s0 + $0xba] sm:$0xff]
    %v776 = vld [vmem:[%s0 + $0xc2] sm:$0xff]
    %v777 = vld [vmem:[%s0 + $0xca] sm:$0xff]
    %v778 = vld [vmem:[%s0 + $0xd2] sm:$0xff]
    %v779 = vld [vmem:[%s0 + $0xda] sm:$0xff]
    %v780 = vld [vmem:[%s0 + $0xe2] sm:$0xff]
    %v781 = vld [vmem:[%s0 + $0xea] sm:$0xff]
    %v782 = vld [vmem:[%s0 + $0xf2] sm:$0xff]
    %v783 = vld [vmem:[%s0 + $0xfa] sm:$0xff]
    %s784 = scalar_lea.vmem %s1, 32
    %v785 = vld [vmem:[%s784] sm:$0xff]
    %v786 = vld [vmem:[%s784 + $0x8] sm:$0x1f]
    %v788 = vsel %vm110, %v752, 0
    %v791 = vsel %vm110, %v753, 0
    %v794 = vsel %vm110, %v754, 0
    %v797 = vsel %vm110, %v755, 0
    %v800 = vsel %vm110, %v756, 0
    %v803 = vsel %vm110, %v757, 0
    %v806 = vsel %vm110, %v758, 0
    %v809 = vsel %vm110, %v759, 0
    %v812 = vsel %vm110, %v760, 0
    %v815 = vsel %vm110, %v761, 0
    %v818 = vsel %vm110, %v762, 0
    %v821 = vsel %vm110, %v763, 0
    %v824 = vsel %vm110, %v764, 0
    %v827 = vsel %vm110, %v765, 0
    %v830 = vsel %vm110, %v766, 0
    %v833 = vsel %vm110, %v767, 0
    %v836 = vsel %vm110, %v768, 0
    %v839 = vsel %vm110, %v769, 0
    %v842 = vsel %vm110, %v770, 0
    %v845 = vsel %vm110, %v771, 0
    %v848 = vsel %vm110, %v772, 0
    %v851 = vsel %vm110, %v773, 0
    %v854 = vsel %vm110, %v774, 0
    %v857 = vsel %vm110, %v775, 0
    %v860 = vsel %vm110, %v776, 0
    %v863 = vsel %vm110, %v777, 0
    %v866 = vsel %vm110, %v778, 0
    %v869 = vsel %vm110, %v779, 0
    %v872 = vsel %vm110, %v780, 0
    %v875 = vsel %vm110, %v781, 0
    %v878 = vsel %vm110, %v782, 0
    %v881 = vsel %vm110, %v783, 0
    %v884 = vsel %vm207, %v786, 0
    %886 = vmatprep.subr.mxu0 0.0
    %887 = vmatpush1.msra.mxu0 %v785
    %888 = vmatprep.subr.mxu0 0.0
    %889 = vmatpush1.msra.mxu0 %v884
    %890 = vmatprep.subr.mxu0 0.0
    %891 = vmatpush1.msra.mxu0 0.0
    %892 = vmatprep.subr.mxu0 0.0
    %893 = vmatpush1.msra.mxu0 0.0
    %894 = vmatprep.subr.mxu0 0.0
    %895 = vmatpush1.msra.mxu0 0.0
    %896 = vmatprep.subr.mxu0 0.0
    %897 = vmatpush1.msra.mxu0 0.0
    %898 = vmatprep.subr.mxu0 0.0
    %899 = vmatpush1.msra.mxu0 0.0
    %900 = vmatprep.subr.mxu0 0.0
    %901 = vmatpush1.msra.mxu0 0.0
    %902 = vmatprep.subr.mxu0 0.0
    %903 = vmatpush1.msra.mxu0 0.0
    %904 = vmatprep.subr.mxu0 0.0
    %905 = vmatpush1.msra.mxu0 0.0
    %906 = vmatprep.subr.mxu0 0.0
    %907 = vmatpush1.msra.mxu0 0.0
    %908 = vmatprep.subr.mxu0 0.0
    %909 = vmatpush1.msra.mxu0 0.0
    %910 = vmatprep.subr.mxu0 0.0
    %911 = vmatpush1.msra.mxu0 0.0
    %912 = vmatprep.subr.mxu0 0.0
    %913 = vmatpush1.msra.mxu0 0.0
    %914 = vmatprep.subr.mxu0 0.0
    %915 = vmatpush1.msra.mxu0 0.0
    %916 = vmatprep.subr.mxu0 0.0
    %917 = vmatpush1.msra.mxu0 0.0
    %918 = vmatprep.subr.mxu0 0.0
    %919 = vmatpush1.msra.mxu0 0.0
    %920 = vmatprep.subr.mxu0 0.0
    %921 = vmatpush1.msra.mxu0 0.0
    %922 = vmatprep.subr.mxu0 0.0
    %923 = vmatpush1.msra.mxu0 0.0
    %924 = vmatprep.subr.mxu0 0.0
    %925 = vmatpush1.msra.mxu0 0.0
    %926 = vmatprep.subr.mxu0 0.0
    %927 = vmatpush1.msra.mxu0 0.0
    %928 = vmatprep.subr.mxu0 0.0
    %929 = vmatpush1.msra.mxu0 0.0
    %930 = vmatprep.subr.mxu0 0.0
    %931 = vmatpush1.msra.mxu0 0.0
    %932 = vmatprep.subr.mxu0 0.0
    %933 = vmatpush1.msra.mxu0 0.0
    %934 = vmatprep.subr.mxu0 0.0
    %935 = vmatpush1.msra.mxu0 0.0
    %936 = vmatprep.subr.mxu0 0.0
    %937 = vmatpush1.msra.mxu0 0.0
    %938 = vmatprep.subr.mxu0 0.0
    %939 = vmatpush1.msra.mxu0 0.0
    %940 = vmatprep.subr.mxu0 0.0
    %941 = vmatpush1.msra.mxu0 0.0
    %942 = vmatprep.subr.mxu0 0.0
    %943 = vmatpush1.msra.mxu0 0.0
    %944 = vmatprep.subr.mxu0 0.0
    %945 = vmatpush1.msra.mxu0 0.0
    %946 = vmatprep.subr.mxu0 0.0
    %947 = vmatpush1.msra.mxu0 0.0
    %948 = vmatprep.subr.mxu0 0.0
    %949 = vmatpush1.msra.mxu0 0.0
    %950 = vmatprep.mubr.f32.mxu0 0.0
    %951 = vmatmul.mubr.f32.gmra.mrb[0].mxu0 %v788
    %v952 = vpop.f32.mrb[0].mxu0
    %v953 = vadd.f32 0.0, %v952
    %v954 = vpop.f32.mrb[0].mxu0
    %955 = vmatprep.mubr.f32.mxu0 0.0
    %956 = vmatmul.mubr.f32.gmra.mrb[0].mxu0 %v791
    %v957 = vpop.f32.mrb[0].mxu0
    %v958 = vadd.f32 0.0, %v957
    %v959 = vpop.f32.mrb[0].mxu0
    %960 = vmatprep.mubr.f32.mxu0 0.0
    %961 = vmatmul.mubr.f32.gmra.mrb[0].mxu0 %v794
    %v962 = vpop.f32.mrb[0].mxu0
    %v963 = vadd.f32 0.0, %v962
    %v964 = vpop.f32.mrb[0].mxu0
    %965 = vmatprep.mubr.f32.mxu0 0.0
    %966 = vmatmul.mubr.f32.gmra.mrb[0].mxu0 %v797
    %v967 = vpop.f32.mrb[0].mxu0
    %v968 = vadd.f32 0.0, %v967
    %v969 = vpop.f32.mrb[0].mxu0
    %970 = vmatprep.mubr.f32.mxu0 0.0
    %971 = vmatmul.mubr.f32.gmra.mrb[0].mxu0 %v800
    %v972 = vpop.f32.mrb[0].mxu0
    %v973 = vadd.f32 0.0, %v972
    %v974 = vpop.f32.mrb[0].mxu0
    %975 = vmatprep.mubr.f32.mxu0 0.0
    %976 = vmatmul.mubr.f32.gmra.mrb[0].mxu0 %v803
    %v977 = vpop.f32.mrb[0].mxu0
    %v978 = vadd.f32 0.0, %v977
    %v979 = vpop.f32.mrb[0].mxu0
    %980 = vmatprep.mubr.f32.mxu0 0.0
    %981 = vmatmul.mubr.f32.gmra.mrb[0].mxu0 %v806
    %v982 = vpop.f32.mrb[0].mxu0
    %v983 = vadd.f32 0.0, %v982
    %v984 = vpop.f32.mrb[0].mxu0
    %985 = vmatprep.mubr.f32.mxu0 0.0
    %986 = vmatmul.mubr.f32.gmra.mrb[0].mxu0 %v809
    %v987 = vpop.f32.mrb[0].mxu0
    %v988 = vadd.f32 0.0, %v987
    %v989 = vpop.f32.mrb[0].mxu0
    %990 = vmatprep.mubr.f32.mxu0 0.0
    %991 = vmatmul.mubr.f32.gmra.mrb[0].mxu0 %v812
    %v992 = vpop.f32.mrb[0].mxu0
    %v993 = vadd.f32 0.0, %v992
    %v994 = vpop.f32.mrb[0].mxu0
    %995 = vmatprep.mubr.f32.mxu0 0.0
    %996 = vmatmul.mubr.f32.gmra.mrb[0].mxu0 %v815
    %v997 = vpop.f32.mrb[0].mxu0
    %v998 = vadd.f32 0.0, %v997
    %v999 = vpop.f32.mrb[0].mxu0
    %1000 = vmatprep.mubr.f32.mxu0 0.0
    %1001 = vmatmul.mubr.f32.gmra.mrb[0].mxu0 %v818
    %v1002 = vpop.f32.mrb[0].mxu0
    %v1003 = vadd.f32 0.0, %v1002
    %v1004 = vpop.f32.mrb[0].mxu0
    %1005 = vmatprep.mubr.f32.mxu0 0.0
    %1006 = vmatmul.mubr.f32.gmra.mrb[0].mxu0 %v821
    %v1007 = vpop.f32.mrb[0].mxu0
    %v1008 = vadd.f32 0.0, %v1007
    %v1009 = vpop.f32.mrb[0].mxu0
    %1010 = vmatprep.mubr.f32.mxu0 0.0
    %1011 = vmatmul.mubr.f32.gmra.mrb[0].mxu0 %v824
    %v1012 = vpop.f32.mrb[0].mxu0
    %v1013 = vadd.f32 0.0, %v1012
    %v1014 = vpop.f32.mrb[0].mxu0
    %1015 = vmatprep.mubr.f32.mxu0 0.0
    %1016 = vmatmul.mubr.f32.gmra.mrb[0].mxu0 %v827
    %v1017 = vpop.f32.mrb[0].mxu0
    %v1018 = vadd.f32 0.0, %v1017
    %v1019 = vpop.f32.mrb[0].mxu0
    %1020 = vmatprep.mubr.f32.mxu0 0.0
    %1021 = vmatmul.mubr.f32.gmra.mrb[0].mxu0 %v830
    %v1022 = vpop.f32.mrb[0].mxu0
    %v1023 = vpop.f32.mrb[0].mxu0
    %1024 = vmatprep.mubr.f32.mxu0 0.0
    %1025 = vmatmul.mubr.f32.gmra.mrb[0].mxu0 %v833
    %v1026 = vpop.f32.mrb[0].mxu0
    %v1027 = vpop.f32.mrb[0].mxu0
    %1028 = vmatprep.mubr.f32.mxu0 0.0
    %1029 = vmatmul.mubr.f32.gmra.mrb[0].mxu0 %v836
    %v1030 = vpop.f32.mrb[0].mxu0
    %v1031 = vpop.f32.mrb[0].mxu0
    %1032 = vmatprep.mubr.f32.mxu0 0.0
    %1033 = vmatmul.mubr.f32.gmra.mrb[0].mxu0 %v839
    %v1034 = vpop.f32.mrb[0].mxu0
    %v1035 = vpop.f32.mrb[0].mxu0
    %1036 = vmatprep.mubr.f32.mxu0 0.0
    %1037 = vmatmul.mubr.f32.gmra.mrb[0].mxu0 %v842
    %v1038 = vpop.f32.mrb[0].mxu0
    %v1039 = vadd.f32 0.0, %v1038
    %v1040 = vpop.f32.mrb[0].mxu0
    %1041 = vmatprep.mubr.f32.mxu0 0.0
    %1042 = vmatmul.mubr.f32.gmra.mrb[0].mxu0 %v845
    %v1043 = vpop.f32.mrb[0].mxu0
    %v1044 = vadd.f32 0.0, %v1043
    %v1045 = vpop.f32.mrb[0].mxu0
    %1046 = vmatprep.mubr.f32.mxu0 0.0
    %1047 = vmatmul.mubr.f32.gmra.mrb[0].mxu0 %v848
    %v1048 = vpop.f32.mrb[0].mxu0
    %v1049 = vadd.f32 0.0, %v1048
    %v1050 = vpop.f32.mrb[0].mxu0
    %1051 = vmatprep.mubr.f32.mxu0 0.0
    %1052 = vmatmul.mubr.f32.gmra.mrb[0].mxu0 %v851
    %v1053 = vpop.f32.mrb[0].mxu0
    %v1054 = vadd.f32 0.0, %v1053
    %v1055 = vpop.f32.mrb[0].mxu0
    %1056 = vmatprep.mubr.f32.mxu0 0.0
    %1057 = vmatmul.mubr.f32.gmra.mrb[0].mxu0 %v854
    %v1058 = vpop.f32.mrb[0].mxu0
    %v1059 = vadd.f32 0.0, %v1058
    %v1060 = vpop.f32.mrb[0].mxu0
    %1061 = vmatprep.mubr.f32.mxu0 0.0
    %1062 = vmatmul.mubr.f32.gmra.mrb[0].mxu0 %v857
    %v1063 = vpop.f32.mrb[0].mxu0
    %v1064 = vadd.f32 0.0, %v1063
    %v1065 = vpop.f32.mrb[0].mxu0
    %1066 = vmatprep.mubr.f32.mxu0 0.0
    %1067 = vmatmul.mubr.f32.gmra.mrb[0].mxu0 %v860
    %v1068 = vpop.f32.mrb[0].mxu0
    %v1069 = vadd.f32 0.0, %v1068
    %v1070 = vpop.f32.mrb[0].mxu0
    %1071 = vmatprep.mubr.f32.mxu0 0.0
    %1072 = vmatmul.mubr.f32.gmra.mrb[0].mxu0 %v863
    %v1073 = vpop.f32.mrb[0].mxu0
    %v1074 = vadd.f32 0.0, %v1073
    %v1075 = vpop.f32.mrb[0].mxu0
    %1076 = vmatprep.mubr.f32.mxu0 0.0
    %1077 = vmatmul.mubr.f32.gmra.mrb[0].mxu0 %v866
    %v1078 = vpop.f32.mrb[0].mxu0
    %v1079 = vadd.f32 0.0, %v1078
    %v1080 = vpop.f32.mrb[0].mxu0
    %1081 = vmatprep.mubr.f32.mxu0 0.0
    %1082 = vmatmul.mubr.f32.gmra.mrb[0].mxu0 %v869
    %v1083 = vpop.f32.mrb[0].mxu0
    %v1084 = vadd.f32 0.0, %v1083
    %v1085 = vpop.f32.mrb[0].mxu0
    %1086 = vmatprep.mubr.f32.mxu0 0.0
    %1087 = vmatmul.mubr.f32.gmra.mrb[0].mxu0 %v872
    %v1088 = vpop.f32.mrb[0].mxu0
    %v1089 = vadd.f32 0.0, %v1088
    %v1090 = vpop.f32.mrb[0].mxu0
    %1091 = vmatprep.mubr.f32.mxu0 0.0
    %1092 = vmatmul.mubr.f32.gmra.mrb[0].mxu0 %v875
    %v1093 = vpop.f32.mrb[0].mxu0
    %v1094 = vadd.f32 0.0, %v1093
    %v1095 = vpop.f32.mrb[0].mxu0
    %1096 = vmatprep.mubr.f32.mxu0 0.0
    %1097 = vmatmul.mubr.f32.gmra.mrb[0].mxu0 %v878
    %v1098 = vpop.f32.mrb[0].mxu0
    %v1099 = vadd.f32 0.0, %v1098
    %v1100 = vpop.f32.mrb[0].mxu0
    %1101 = vmatprep.mubr.f32.mxu0 0.0
    %1102 = vmatmul.mubr.f32.gmra.mrb[0].mxu0 %v881
    %v1103 = vpop.f32.mrb[0].mxu0
    %v1104 = vadd.f32 0.0, %v1103
    %v1105 = vpop.f32.mrb[0].mxu0
    %1106 = vdwg.mxu0
    %v1107 = vadd.f32 %v598, %v953
    %v1108 = vadd.f32 %v603, %v958
    %v1109 = vadd.f32 %v608, %v963
    %v1110 = vadd.f32 %v613, %v968
    %v1111 = vadd.f32 %v618, %v973
    %v1112 = vadd.f32 %v623, %v978
    %v1113 = vadd.f32 %v628, %v983
    %v1114 = vadd.f32 %v633, %v988
    %v1115 = vadd.f32 %v638, %v993
    %v1116 = vadd.f32 %v643, %v998
    %v1117 = vadd.f32 %v648, %v1003
    %v1118 = vadd.f32 %v653, %v1008
    %v1119 = vadd.f32 %v658, %v1013
    %v1120 = vadd.f32 %v663, %v1018
    %v1121 = vadd.f32 %v684, %v1039
    %v1122 = vadd.f32 %v689, %v1044
    %v1123 = vadd.f32 %v694, %v1049
    %v1124 = vadd.f32 %v699, %v1054
    %v1125 = vadd.f32 %v704, %v1059
    %v1126 = vadd.f32 %v709, %v1064
    %v1127 = vadd.f32 %v714, %v1069
    %v1128 = vadd.f32 %v719, %v1074
    %v1129 = vadd.f32 %v724, %v1079
    %v1130 = vadd.f32 %v729, %v1084
    %v1131 = vadd.f32 %v734, %v1089
    %v1132 = vadd.f32 %v739, %v1094
    %v1133 = vadd.f32 %v744, %v1099
    %v1134 = vadd.f32 %v749, %v1104
    %v1135 = vld [vmem:[%s0 + $0x10] sm:$0xff]
    %v1136 = vld [vmem:[%s0 + $0x18] sm:$0xff]
    %v1137 = vld [vmem:[%s0 + $0x20] sm:$0xff]
    %v1138 = vld [vmem:[%s0 + $0x28] sm:$0xff]
    %v1139 = vld [vmem:[%s0 + $0x30] sm:$0xff]
    %v1140 = vld [vmem:[%s0 + $0x38] sm:$0xff]
    %v1141 = vld [vmem:[%s0 + $0x40] sm:$0xff]
    %v1142 = vld [vmem:[%s0 + $0x48] sm:$0xff]
    %v1143 = vld [vmem:[%s0 + $0x50] sm:$0xff]
    %v1144 = vld [vmem:[%s0 + $0x58] sm:$0xff]
    %v1145 = vld [vmem:[%s0 + $0x60] sm:$0xff]
    %v1146 = vld [vmem:[%s0 + $0x68] sm:$0xff]
    %v1147 = vld [vmem:[%s0 + $0x70] sm:$0xff]
    %v1148 = vld [vmem:[%s0 + $0x78] sm:$0xff]
    %v1149 = vld [vmem:[%s0 + $0x80] sm:$0xff]
    %v1150 = vld [vmem:[%s0 + $0x88] sm:$0xff]
    %v1151 = vld [vmem:[%s0 + $0x90] sm:$0xff]
    %v1152 = vld [vmem:[%s0 + $0x98] sm:$0xff]
    %v1153 = vld [vmem:[%s0 + $0xa0] sm:$0xff]
    %v1154 = vld [vmem:[%s0 + $0xa8] sm:$0xff]
    %v1155 = vld [vmem:[%s0 + $0xb0] sm:$0xff]
    %v1156 = vld [vmem:[%s0 + $0xb8] sm:$0xff]
    %v1157 = vld [vmem:[%s0 + $0xc0] sm:$0xff]
    %v1158 = vld [vmem:[%s0 + $0xc8] sm:$0xff]
    %v1159 = vld [vmem:[%s0 + $0xd0] sm:$0xff]
    %v1160 = vld [vmem:[%s0 + $0xd8] sm:$0xff]
    %v1161 = vld [vmem:[%s0 + $0xe0] sm:$0xff]
    %v1162 = vld [vmem:[%s0 + $0xe8] sm:$0xff]
    %v1163 = vld [vmem:[%s0 + $0xf0] sm:$0xff]
    %v1164 = vld [vmem:[%s0 + $0xf8] sm:$0xff]
    %v1165 = vld [vmem:[%s0 + $0x100] sm:$0xff]
    %v1166 = vld [vmem:[%s0 + $0x108] sm:$0xff]
    %s1167 = scalar_lea.vmem %s1, 48
    %v1168 = vld [vmem:[%s1167] sm:$0xff]
    %v1169 = vld [vmem:[%s1167 + $0x8] sm:$0x1f]
    %v1171 = vsel %vm110, %v1135, 0
    %v1174 = vsel %vm110, %v1136, 0
    %v1177 = vsel %vm110, %v1137, 0
    %v1180 = vsel %vm110, %v1138, 0
    %v1183 = vsel %vm110, %v1139, 0
    %v1186 = vsel %vm110, %v1140, 0
    %v1189 = vsel %vm110, %v1141, 0
    %v1192 = vsel %vm110, %v1142, 0
    %v1195 = vsel %vm110, %v1143, 0
    %v1198 = vsel %vm110, %v1144, 0
    %v1201 = vsel %vm110, %v1145, 0
    %v1204 = vsel %vm110, %v1146, 0
    %v1207 = vsel %vm110, %v1147, 0
    %v1210 = vsel %vm110, %v1148, 0
    %v1213 = vsel %vm110, %v1149, 0
    %v1216 = vsel %vm110, %v1150, 0
    %v1219 = vsel %vm110, %v1151, 0
    %v1222 = vsel %vm110, %v1152, 0
    %v1225 = vsel %vm110, %v1153, 0
    %v1228 = vsel %vm110, %v1154, 0
    %v1231 = vsel %vm110, %v1155, 0
    %v1234 = vsel %vm110, %v1156, 0
    %v1237 = vsel %vm110, %v1157, 0
    %v1240 = vsel %vm110, %v1158, 0
    %v1243 = vsel %vm110, %v1159, 0
    %v1246 = vsel %vm110, %v1160, 0
    %v1249 = vsel %vm110, %v1161, 0
    %v1252 = vsel %vm110, %v1162, 0
    %v1255 = vsel %vm110, %v1163, 0
    %v1258 = vsel %vm110, %v1164, 0
    %v1261 = vsel %vm110, %v1165, 0
    %v1264 = vsel %vm110, %v1166, 0
    %v1267 = vsel %vm207, %v1169, 0
    %1269 = vmatprep.subr.mxu0 0.0
    %1270 = vmatpush1.msra.mxu0 %v1168
    %1271 = vmatprep.subr.mxu0 0.0
    %1272 = vmatpush1.msra.mxu0 %v1267
    %1273 = vmatprep.subr.mxu0 0.0
    %1274 = vmatpush1.msra.mxu0 0.0
    %1275 = vmatprep.subr.mxu0 0.0
    %1276 = vmatpush1.msra.mxu0 0.0
    %1277 = vmatprep.subr.mxu0 0.0
    %1278 = vmatpush1.msra.mxu0 0.0
    %1279 = vmatprep.subr.mxu0 0.0
    %1280 = vmatpush1.msra.mxu0 0.0
    %1281 = vmatprep.subr.mxu0 0.0
    %1282 = vmatpush1.msra.mxu0 0.0
    %1283 = vmatprep.subr.mxu0 0.0
    %1284 = vmatpush1.msra.mxu0 0.0
    %1285 = vmatprep.subr.mxu0 0.0
    %1286 = vmatpush1.msra.mxu0 0.0
    %1287 = vmatprep.subr.mxu0 0.0
    %1288 = vmatpush1.msra.mxu0 0.0
    %1289 = vmatprep.subr.mxu0 0.0
    %1290 = vmatpush1.msra.mxu0 0.0
    %1291 = vmatprep.subr.mxu0 0.0
    %1292 = vmatpush1.msra.mxu0 0.0
    %1293 = vmatprep.subr.mxu0 0.0
    %1294 = vmatpush1.msra.mxu0 0.0
    %1295 = vmatprep.subr.mxu0 0.0
    %1296 = vmatpush1.msra.mxu0 0.0
    %1297 = vmatprep.subr.mxu0 0.0
    %1298 = vmatpush1.msra.mxu0 0.0
    %1299 = vmatprep.subr.mxu0 0.0
    %1300 = vmatpush1.msra.mxu0 0.0
    %1301 = vmatprep.subr.mxu0 0.0
    %1302 = vmatpush1.msra.mxu0 0.0
    %1303 = vmatprep.subr.mxu0 0.0
    %1304 = vmatpush1.msra.mxu0 0.0
    %1305 = vmatprep.subr.mxu0 0.0
    %1306 = vmatpush1.msra.mxu0 0.0
    %1307 = vmatprep.subr.mxu0 0.0
    %1308 = vmatpush1.msra.mxu0 0.0
    %1309 = vmatprep.subr.mxu0 0.0
    %1310 = vmatpush1.msra.mxu0 0.0
    %1311 = vmatprep.subr.mxu0 0.0
    %1312 = vmatpush1.msra.mxu0 0.0
    %1313 = vmatprep.subr.mxu0 0.0
    %1314 = vmatpush1.msra.mxu0 0.0
    %1315 = vmatprep.subr.mxu0 0.0
    %1316 = vmatpush1.msra.mxu0 0.0
    %1317 = vmatprep.subr.mxu0 0.0
    %1318 = vmatpush1.msra.mxu0 0.0
    %1319 = vmatprep.subr.mxu0 0.0
    %1320 = vmatpush1.msra.mxu0 0.0
    %1321 = vmatprep.subr.mxu0 0.0
    %1322 = vmatpush1.msra.mxu0 0.0
    %1323 = vmatprep.subr.mxu0 0.0
    %1324 = vmatpush1.msra.mxu0 0.0
    %1325 = vmatprep.subr.mxu0 0.0
    %1326 = vmatpush1.msra.mxu0 0.0
    %1327 = vmatprep.subr.mxu0 0.0
    %1328 = vmatpush1.msra.mxu0 0.0
    %1329 = vmatprep.subr.mxu0 0.0
    %1330 = vmatpush1.msra.mxu0 0.0
    %1331 = vmatprep.subr.mxu0 0.0
    %1332 = vmatpush1.msra.mxu0 0.0
    %1333 = vmatprep.mubr.f32.mxu0 0.0
    %1334 = vmatmul.mubr.f32.gmra.mrb[0].mxu0 %v1171
    %v1335 = vpop.f32.mrb[0].mxu0
    %v1336 = vadd.f32 0.0, %v1335
    %v1337 = vpop.f32.mrb[0].mxu0
    %1338 = vmatprep.mubr.f32.mxu0 0.0
    %1339 = vmatmul.mubr.f32.gmra.mrb[0].mxu0 %v1174
    %v1340 = vpop.f32.mrb[0].mxu0
    %v1341 = vadd.f32 0.0, %v1340
    %v1342 = vpop.f32.mrb[0].mxu0
    %1343 = vmatprep.mubr.f32.mxu0 0.0
    %1344 = vmatmul.mubr.f32.gmra.mrb[0].mxu0 %v1177
    %v1345 = vpop.f32.mrb[0].mxu0
    %v1346 = vadd.f32 0.0, %v1345
    %v1347 = vpop.f32.mrb[0].mxu0
    %1348 = vmatprep.mubr.f32.mxu0 0.0
    %1349 = vmatmul.mubr.f32.gmra.mrb[0].mxu0 %v1180
    %v1350 = vpop.f32.mrb[0].mxu0
    %v1351 = vadd.f32 0.0, %v1350
    %v1352 = vpop.f32.mrb[0].mxu0
    %1353 = vmatprep.mubr.f32.mxu0 0.0
    %1354 = vmatmul.mubr.f32.gmra.mrb[0].mxu0 %v1183
    %v1355 = vpop.f32.mrb[0].mxu0
    %v1356 = vadd.f32 0.0, %v1355
    %v1357 = vpop.f32.mrb[0].mxu0
    %1358 = vmatprep.mubr.f32.mxu0 0.0
    %1359 = vmatmul.mubr.f32.gmra.mrb[0].mxu0 %v1186
    %v1360 = vpop.f32.mrb[0].mxu0
    %v1361 = vadd.f32 0.0, %v1360
    %v1362 = vpop.f32.mrb[0].mxu0
    %1363 = vmatprep.mubr.f32.mxu0 0.0
    %1364 = vmatmul.mubr.f32.gmra.mrb[0].mxu0 %v1189
    %v1365 = vpop.f32.mrb[0].mxu0
    %v1366 = vadd.f32 0.0, %v1365
    %v1367 = vpop.f32.mrb[0].mxu0
    %1368 = vmatprep.mubr.f32.mxu0 0.0
    %1369 = vmatmul.mubr.f32.gmra.mrb[0].mxu0 %v1192
    %v1370 = vpop.f32.mrb[0].mxu0
    %v1371 = vadd.f32 0.0, %v1370
    %v1372 = vpop.f32.mrb[0].mxu0
    %1373 = vmatprep.mubr.f32.mxu0 0.0
    %1374 = vmatmul.mubr.f32.gmra.mrb[0].mxu0 %v1195
    %v1375 = vpop.f32.mrb[0].mxu0
    %v1376 = vadd.f32 0.0, %v1375
    %v1377 = vpop.f32.mrb[0].mxu0
    %1378 = vmatprep.mubr.f32.mxu0 0.0
    %1379 = vmatmul.mubr.f32.gmra.mrb[0].mxu0 %v1198
    %v1380 = vpop.f32.mrb[0].mxu0
    %v1381 = vadd.f32 0.0, %v1380
    %v1382 = vpop.f32.mrb[0].mxu0
    %1383 = vmatprep.mubr.f32.mxu0 0.0
    %1384 = vmatmul.mubr.f32.gmra.mrb[0].mxu0 %v1201
    %v1385 = vpop.f32.mrb[0].mxu0
    %v1386 = vadd.f32 0.0, %v1385
    %v1387 = vpop.f32.mrb[0].mxu0
    %1388 = vmatprep.mubr.f32.mxu0 0.0
    %1389 = vmatmul.mubr.f32.gmra.mrb[0].mxu0 %v1204
    %v1390 = vpop.f32.mrb[0].mxu0
    %v1391 = vadd.f32 0.0, %v1390
    %v1392 = vpop.f32.mrb[0].mxu0
    %1393 = vmatprep.mubr.f32.mxu0 0.0
    %1394 = vmatmul.mubr.f32.gmra.mrb[0].mxu0 %v1207
    %v1395 = vpop.f32.mrb[0].mxu0
    %v1396 = vadd.f32 0.0, %v1395
    %v1397 = vpop.f32.mrb[0].mxu0
    %1398 = vmatprep.mubr.f32.mxu0 0.0
    %1399 = vmatmul.mubr.f32.gmra.mrb[0].mxu0 %v1210
    %v1400 = vpop.f32.mrb[0].mxu0
    %v1401 = vadd.f32 0.0, %v1400
    %v1402 = vpop.f32.mrb[0].mxu0
    %1403 = vmatprep.mubr.f32.mxu0 0.0
    %1404 = vmatmul.mubr.f32.gmra.mrb[0].mxu0 %v1213
    %v1405 = vpop.f32.mrb[0].mxu0
    %v1406 = vpop.f32.mrb[0].mxu0
    %1407 = vmatprep.mubr.f32.mxu0 0.0
    %1408 = vmatmul.mubr.f32.gmra.mrb[0].mxu0 %v1216
    %v1409 = vpop.f32.mrb[0].mxu0
    %v1410 = vpop.f32.mrb[0].mxu0
    %1411 = vmatprep.mubr.f32.mxu0 0.0
    %1412 = vmatmul.mubr.f32.gmra.mrb[0].mxu0 %v1219
    %v1413 = vpop.f32.mrb[0].mxu0
    %v1414 = vpop.f32.mrb[0].mxu0
    %1415 = vmatprep.mubr.f32.mxu0 0.0
    %1416 = vmatmul.mubr.f32.gmra.mrb[0].mxu0 %v1222
    %v1417 = vpop.f32.mrb[0].mxu0
    %v1418 = vpop.f32.mrb[0].mxu0
    %1419 = vmatprep.mubr.f32.mxu0 0.0
    %1420 = vmatmul.mubr.f32.gmra.mrb[0].mxu0 %v1225
    %v1421 = vpop.f32.mrb[0].mxu0
    %v1422 = vadd.f32 0.0, %v1421
    %v1423 = vpop.f32.mrb[0].mxu0
    %1424 = vmatprep.mubr.f32.mxu0 0.0
    %1425 = vmatmul.mubr.f32.gmra.mrb[0].mxu0 %v1228
    %v1426 = vpop.f32.mrb[0].mxu0
    %v1427 = vadd.f32 0.0, %v1426
    %v1428 = vpop.f32.mrb[0].mxu0
    %1429 = vmatprep.mubr.f32.mxu0 0.0
    %1430 = vmatmul.mubr.f32.gmra.mrb[0].mxu0 %v1231
    %v1431 = vpop.f32.mrb[0].mxu0
    %v1432 = vadd.f32 0.0, %v1431
    %v1433 = vpop.f32.mrb[0].mxu0
    %1434 = vmatprep.mubr.f32.mxu0 0.0
    %1435 = vmatmul.mubr.f32.gmra.mrb[0].mxu0 %v1234
    %v1436 = vpop.f32.mrb[0].mxu0
    %v1437 = vadd.f32 0.0, %v1436
    %v1438 = vpop.f32.mrb[0].mxu0
    %1439 = vmatprep.mubr.f32.mxu0 0.0
    %1440 = vmatmul.mubr.f32.gmra.mrb[0].mxu0 %v1237
    %v1441 = vpop.f32.mrb[0].mxu0
    %v1442 = vadd.f32 0.0, %v1441
    %v1443 = vpop.f32.mrb[0].mxu0
    %1444 = vmatprep.mubr.f32.mxu0 0.0
    %1445 = vmatmul.mubr.f32.gmra.mrb[0].mxu0 %v1240
    %v1446 = vpop.f32.mrb[0].mxu0
    %v1447 = vadd.f32 0.0, %v1446
    %v1448 = vpop.f32.mrb[0].mxu0
    %1449 = vmatprep.mubr.f32.mxu0 0.0
    %1450 = vmatmul.mubr.f32.gmra.mrb[0].mxu0 %v1243
    %v1451 = vpop.f32.mrb[0].mxu0
    %v1452 = vadd.f32 0.0, %v1451
    %v1453 = vpop.f32.mrb[0].mxu0
    %1454 = vmatprep.mubr.f32.mxu0 0.0
    %1455 = vmatmul.mubr.f32.gmra.mrb[0].mxu0 %v1246
    %v1456 = vpop.f32.mrb[0].mxu0
    %v1457 = vadd.f32 0.0, %v1456
    %v1458 = vpop.f32.mrb[0].mxu0
    %1459 = vmatprep.mubr.f32.mxu0 0.0
    %1460 = vmatmul.mubr.f32.gmra.mrb[0].mxu0 %v1249
    %v1461 = vpop.f32.mrb[0].mxu0
    %v1462 = vadd.f32 0.0, %v1461
    %v1463 = vpop.f32.mrb[0].mxu0
    %1464 = vmatprep.mubr.f32.mxu0 0.0
    %1465 = vmatmul.mubr.f32.gmra.mrb[0].mxu0 %v1252
    %v1466 = vpop.f32.mrb[0].mxu0
    %v1467 = vadd.f32 0.0, %v1466
    %v1468 = vpop.f32.mrb[0].mxu0
    %1469 = vmatprep.mubr.f32.mxu0 0.0
    %1470 = vmatmul.mubr.f32.gmra.mrb[0].mxu0 %v1255
    %v1471 = vpop.f32.mrb[0].mxu0
    %v1472 = vadd.f32 0.0, %v1471
    %v1473 = vpop.f32.mrb[0].mxu0
    %1474 = vmatprep.mubr.f32.mxu0 0.0
    %1475 = vmatmul.mubr.f32.gmra.mrb[0].mxu0 %v1258
    %v1476 = vpop.f32.mrb[0].mxu0
    %v1477 = vadd.f32 0.0, %v1476
    %v1478 = vpop.f32.mrb[0].mxu0
    %1479 = vmatprep.mubr.f32.mxu0 0.0
    %1480 = vmatmul.mubr.f32.gmra.mrb[0].mxu0 %v1261
    %v1481 = vpop.f32.mrb[0].mxu0
    %v1482 = vadd.f32 0.0, %v1481
    %v1483 = vpop.f32.mrb[0].mxu0
    %1484 = vmatprep.mubr.f32.mxu0 0.0
    %1485 = vmatmul.mubr.f32.gmra.mrb[0].mxu0 %v1264
    %v1486 = vpop.f32.mrb[0].mxu0
    %v1487 = vadd.f32 0.0, %v1486
    %v1488 = vpop.f32.mrb[0].mxu0
    %1489 = vdwg.mxu0
    %v1490 = vadd.f32 %v1107, %v1336
    %v1491 = vadd.f32 %v1108, %v1341
    %v1492 = vadd.f32 %v1109, %v1346
    %v1493 = vadd.f32 %v1110, %v1351
    %v1494 = vadd.f32 %v1111, %v1356
    %v1495 = vadd.f32 %v1112, %v1361
    %v1496 = vadd.f32 %v1113, %v1366
    %v1497 = vadd.f32 %v1114, %v1371
    %v1498 = vadd.f32 %v1115, %v1376
    %v1499 = vadd.f32 %v1116, %v1381
    %v1500 = vadd.f32 %v1117, %v1386
    %v1501 = vadd.f32 %v1118, %v1391
    %v1502 = vadd.f32 %v1119, %v1396
    %v1503 = vadd.f32 %v1120, %v1401
    %v1504 = vadd.f32 %v1121, %v1422
    %v1505 = vadd.f32 %v1122, %v1427
    %v1506 = vadd.f32 %v1123, %v1432
    %v1507 = vadd.f32 %v1124, %v1437
    %v1508 = vadd.f32 %v1125, %v1442
    %v1509 = vadd.f32 %v1126, %v1447
    %v1510 = vadd.f32 %v1127, %v1452
    %v1511 = vadd.f32 %v1128, %v1457
    %v1512 = vadd.f32 %v1129, %v1462
    %v1513 = vadd.f32 %v1130, %v1467
    %v1514 = vadd.f32 %v1131, %v1472
    %v1515 = vadd.f32 %v1132, %v1477
    %v1516 = vadd.f32 %v1133, %v1482
    %v1517 = vadd.f32 %v1134, %v1487
    %v1518 = vld [vmem:[%s0 + $0x11] sm:$0xff]
    %v1519 = vld [vmem:[%s0 + $0x19] sm:$0xff]
    %v1520 = vld [vmem:[%s0 + $0x21] sm:$0xff]
    %v1521 = vld [vmem:[%s0 + $0x29] sm:$0xff]
    %v1522 = vld [vmem:[%s0 + $0x31] sm:$0xff]
    %v1523 = vld [vmem:[%s0 + $0x39] sm:$0xff]
    %v1524 = vld [vmem:[%s0 + $0x41] sm:$0xff]
    %v1525 = vld [vmem:[%s0 + $0x49] sm:$0xff]
    %v1526 = vld [vmem:[%s0 + $0x51] sm:$0xff]
    %v1527 = vld [vmem:[%s0 + $0x59] sm:$0xff]
    %v1528 = vld [vmem:[%s0 + $0x61] sm:$0xff]
    %v1529 = vld [vmem:[%s0 + $0x69] sm:$0xff]
    %v1530 = vld [vmem:[%s0 + $0x71] sm:$0xff]
    %v1531 = vld [vmem:[%s0 + $0x79] sm:$0xff]
    %v1532 = vld [vmem:[%s0 + $0x81] sm:$0xff]
    %v1533 = vld [vmem:[%s0 + $0x89] sm:$0xff]
    %v1534 = vld [vmem:[%s0 + $0x91] sm:$0xff]
    %v1535 = vld [vmem:[%s0 + $0x99] sm:$0xff]
    %v1536 = vld [vmem:[%s0 + $0xa1] sm:$0xff]
    %v1537 = vld [vmem:[%s0 + $0xa9] sm:$0xff]
    %v1538 = vld [vmem:[%s0 + $0xb1] sm:$0xff]
    %v1539 = vld [vmem:[%s0 + $0xb9] sm:$0xff]
    %v1540 = vld [vmem:[%s0 + $0xc1] sm:$0xff]
    %v1541 = vld [vmem:[%s0 + $0xc9] sm:$0xff]
    %v1542 = vld [vmem:[%s0 + $0xd1] sm:$0xff]
    %v1543 = vld [vmem:[%s0 + $0xd9] sm:$0xff]
    %v1544 = vld [vmem:[%s0 + $0xe1] sm:$0xff]
    %v1545 = vld [vmem:[%s0 + $0xe9] sm:$0xff]
    %v1546 = vld [vmem:[%s0 + $0xf1] sm:$0xff]
    %v1547 = vld [vmem:[%s0 + $0xf9] sm:$0xff]
    %v1548 = vld [vmem:[%s0 + $0x101] sm:$0xff]
    %v1549 = vld [vmem:[%s0 + $0x109] sm:$0xff]
    %s1550 = scalar_lea.vmem %s1, 64
    %v1551 = vld [vmem:[%s1550] sm:$0xff]
    %v1552 = vld [vmem:[%s1550 + $0x8] sm:$0x1f]
    %v1554 = vsel %vm110, %v1518, 0
    %v1557 = vsel %vm110, %v1519, 0
    %v1560 = vsel %vm110, %v1520, 0
    %v1563 = vsel %vm110, %v1521, 0
    %v1566 = vsel %vm110, %v1522, 0
    %v1569 = vsel %vm110, %v1523, 0
    %v1572 = vsel %vm110, %v1524, 0
    %v1575 = vsel %vm110, %v1525, 0
    %v1578 = vsel %vm110, %v1526, 0
    %v1581 = vsel %vm110, %v1527, 0
    %v1584 = vsel %vm110, %v1528, 0
    %v1587 = vsel %vm110, %v1529, 0
    %v1590 = vsel %vm110, %v1530, 0
    %v1593 = vsel %vm110, %v1531, 0
    %v1596 = vsel %vm110, %v1532, 0
    %v1599 = vsel %vm110, %v1533, 0
    %v1602 = vsel %vm110, %v1534, 0
    %v1605 = vsel %vm110, %v1535, 0
    %v1608 = vsel %vm110, %v1536, 0
    %v1611 = vsel %vm110, %v1537, 0
    %v1614 = vsel %vm110, %v1538, 0
    %v1617 = vsel %vm110, %v1539, 0
    %v1620 = vsel %vm110, %v1540, 0
    %v1623 = vsel %vm110, %v1541, 0
    %v1626 = vsel %vm110, %v1542, 0
    %v1629 = vsel %vm110, %v1543, 0
    %v1632 = vsel %vm110, %v1544, 0
    %v1635 = vsel %vm110, %v1545, 0
    %v1638 = vsel %vm110, %v1546, 0
    %v1641 = vsel %vm110, %v1547, 0
    %v1644 = vsel %vm110, %v1548, 0
    %v1647 = vsel %vm110, %v1549, 0
    %v1650 = vsel %vm207, %v1552, 0
    %1652 = vmatprep.subr.mxu0 0.0
    %1653 = vmatpush1.msra.mxu0 %v1551
    %1654 = vmatprep.subr.mxu0 0.0
    %1655 = vmatpush1.msra.mxu0 %v1650
    %1656 = vmatprep.subr.mxu0 0.0
    %1657 = vmatpush1.msra.mxu0 0.0
    %1658 = vmatprep.subr.mxu0 0.0
    %1659 = vmatpush1.msra.mxu0 0.0
    %1660 = vmatprep.subr.mxu0 0.0
    %1661 = vmatpush1.msra.mxu0 0.0
    %1662 = vmatprep.subr.mxu0 0.0
    %1663 = vmatpush1.msra.mxu0 0.0
    %1664 = vmatprep.subr.mxu0 0.0
    %1665 = vmatpush1.msra.mxu0 0.0
    %1666 = vmatprep.subr.mxu0 0.0
    %1667 = vmatpush1.msra.mxu0 0.0
    %1668 = vmatprep.subr.mxu0 0.0
    %1669 = vmatpush1.msra.mxu0 0.0
    %1670 = vmatprep.subr.mxu0 0.0
    %1671 = vmatpush1.msra.mxu0 0.0
    %1672 = vmatprep.subr.mxu0 0.0
    %1673 = vmatpush1.msra.mxu0 0.0
    %1674 = vmatprep.subr.mxu0 0.0
    %1675 = vmatpush1.msra.mxu0 0.0
    %1676 = vmatprep.subr.mxu0 0.0
    %1677 = vmatpush1.msra.mxu0 0.0
    %1678 = vmatprep.subr.mxu0 0.0
    %1679 = vmatpush1.msra.mxu0 0.0
    %1680 = vmatprep.subr.mxu0 0.0
    %1681 = vmatpush1.msra.mxu0 0.0
    %1682 = vmatprep.subr.mxu0 0.0
    %1683 = vmatpush1.msra.mxu0 0.0
    %1684 = vmatprep.subr.mxu0 0.0
    %1685 = vmatpush1.msra.mxu0 0.0
    %1686 = vmatprep.subr.mxu0 0.0
    %1687 = vmatpush1.msra.mxu0 0.0
    %1688 = vmatprep.subr.mxu0 0.0
    %1689 = vmatpush1.msra.mxu0 0.0
    %1690 = vmatprep.subr.mxu0 0.0
    %1691 = vmatpush1.msra.mxu0 0.0
    %1692 = vmatprep.subr.mxu0 0.0
    %1693 = vmatpush1.msra.mxu0 0.0
    %1694 = vmatprep.subr.mxu0 0.0
    %1695 = vmatpush1.msra.mxu0 0.0
    %1696 = vmatprep.subr.mxu0 0.0
    %1697 = vmatpush1.msra.mxu0 0.0
    %1698 = vmatprep.subr.mxu0 0.0
    %1699 = vmatpush1.msra.mxu0 0.0
    %1700 = vmatprep.subr.mxu0 0.0
    %1701 = vmatpush1.msra.mxu0 0.0
    %1702 = vmatprep.subr.mxu0 0.0
    %1703 = vmatpush1.msra.mxu0 0.0
    %1704 = vmatprep.subr.mxu0 0.0
    %1705 = vmatpush1.msra.mxu0 0.0
    %1706 = vmatprep.subr.mxu0 0.0
    %1707 = vmatpush1.msra.mxu0 0.0
    %1708 = vmatprep.subr.mxu0 0.0
    %1709 = vmatpush1.msra.mxu0 0.0
    %1710 = vmatprep.subr.mxu0 0.0
    %1711 = vmatpush1.msra.mxu0 0.0
    %1712 = vmatprep.subr.mxu0 0.0
    %1713 = vmatpush1.msra.mxu0 0.0
    %1714 = vmatprep.subr.mxu0 0.0
    %1715 = vmatpush1.msra.mxu0 0.0
    %1716 = vmatprep.mubr.f32.mxu0 0.0
    %1717 = vmatmul.mubr.f32.gmra.mrb[0].mxu0 %v1554
    %v1718 = vpop.f32.mrb[0].mxu0
    %v1719 = vadd.f32 0.0, %v1718
    %v1720 = vpop.f32.mrb[0].mxu0
    %1721 = vmatprep.mubr.f32.mxu0 0.0
    %1722 = vmatmul.mubr.f32.gmra.mrb[0].mxu0 %v1557
    %v1723 = vpop.f32.mrb[0].mxu0
    %v1724 = vadd.f32 0.0, %v1723
    %v1725 = vpop.f32.mrb[0].mxu0
    %1726 = vmatprep.mubr.f32.mxu0 0.0
    %1727 = vmatmul.mubr.f32.gmra.mrb[0].mxu0 %v1560
    %v1728 = vpop.f32.mrb[0].mxu0
    %v1729 = vadd.f32 0.0, %v1728
    %v1730 = vpop.f32.mrb[0].mxu0
    %1731 = vmatprep.mubr.f32.mxu0 0.0
    %1732 = vmatmul.mubr.f32.gmra.mrb[0].mxu0 %v1563
    %v1733 = vpop.f32.mrb[0].mxu0
    %v1734 = vadd.f32 0.0, %v1733
    %v1735 = vpop.f32.mrb[0].mxu0
    %1736 = vmatprep.mubr.f32.mxu0 0.0
    %1737 = vmatmul.mubr.f32.gmra.mrb[0].mxu0 %v1566
    %v1738 = vpop.f32.mrb[0].mxu0
    %v1739 = vadd.f32 0.0, %v1738
    %v1740 = vpop.f32.mrb[0].mxu0
    %1741 = vmatprep.mubr.f32.mxu0 0.0
    %1742 = vmatmul.mubr.f32.gmra.mrb[0].mxu0 %v1569
    %v1743 = vpop.f32.mrb[0].mxu0
    %v1744 = vadd.f32 0.0, %v1743
    %v1745 = vpop.f32.mrb[0].mxu0
    %1746 = vmatprep.mubr.f32.mxu0 0.0
    %1747 = vmatmul.mubr.f32.gmra.mrb[0].mxu0 %v1572
    %v1748 = vpop.f32.mrb[0].mxu0
    %v1749 = vadd.f32 0.0, %v1748
    %v1750 = vpop.f32.mrb[0].mxu0
    %1751 = vmatprep.mubr.f32.mxu0 0.0
    %1752 = vmatmul.mubr.f32.gmra.mrb[0].mxu0 %v1575
    %v1753 = vpop.f32.mrb[0].mxu0
    %v1754 = vadd.f32 0.0, %v1753
    %v1755 = vpop.f32.mrb[0].mxu0
    %1756 = vmatprep.mubr.f32.mxu0 0.0
    %1757 = vmatmul.mubr.f32.gmra.mrb[0].mxu0 %v1578
    %v1758 = vpop.f32.mrb[0].mxu0
    %v1759 = vadd.f32 0.0, %v1758
    %v1760 = vpop.f32.mrb[0].mxu0
    %1761 = vmatprep.mubr.f32.mxu0 0.0
    %1762 = vmatmul.mubr.f32.gmra.mrb[0].mxu0 %v1581
    %v1763 = vpop.f32.mrb[0].mxu0
    %v1764 = vadd.f32 0.0, %v1763
    %v1765 = vpop.f32.mrb[0].mxu0
    %1766 = vmatprep.mubr.f32.mxu0 0.0
    %1767 = vmatmul.mubr.f32.gmra.mrb[0].mxu0 %v1584
    %v1768 = vpop.f32.mrb[0].mxu0
    %v1769 = vadd.f32 0.0, %v1768
    %v1770 = vpop.f32.mrb[0].mxu0
    %1771 = vmatprep.mubr.f32.mxu0 0.0
    %1772 = vmatmul.mubr.f32.gmra.mrb[0].mxu0 %v1587
    %v1773 = vpop.f32.mrb[0].mxu0
    %v1774 = vadd.f32 0.0, %v1773
    %v1775 = vpop.f32.mrb[0].mxu0
    %1776 = vmatprep.mubr.f32.mxu0 0.0
    %1777 = vmatmul.mubr.f32.gmra.mrb[0].mxu0 %v1590
    %v1778 = vpop.f32.mrb[0].mxu0
    %v1779 = vadd.f32 0.0, %v1778
    %v1780 = vpop.f32.mrb[0].mxu0
    %1781 = vmatprep.mubr.f32.mxu0 0.0
    %1782 = vmatmul.mubr.f32.gmra.mrb[0].mxu0 %v1593
    %v1783 = vpop.f32.mrb[0].mxu0
    %v1784 = vadd.f32 0.0, %v1783
    %v1785 = vpop.f32.mrb[0].mxu0
    %1786 = vmatprep.mubr.f32.mxu0 0.0
    %1787 = vmatmul.mubr.f32.gmra.mrb[0].mxu0 %v1596
    %v1788 = vpop.f32.mrb[0].mxu0
    %v1789 = vpop.f32.mrb[0].mxu0
    %1790 = vmatprep.mubr.f32.mxu0 0.0
    %1791 = vmatmul.mubr.f32.gmra.mrb[0].mxu0 %v1599
    %v1792 = vpop.f32.mrb[0].mxu0
    %v1793 = vpop.f32.mrb[0].mxu0
    %1794 = vmatprep.mubr.f32.mxu0 0.0
    %1795 = vmatmul.mubr.f32.gmra.mrb[0].mxu0 %v1602
    %v1796 = vpop.f32.mrb[0].mxu0
    %v1797 = vpop.f32.mrb[0].mxu0
    %1798 = vmatprep.mubr.f32.mxu0 0.0
    %1799 = vmatmul.mubr.f32.gmra.mrb[0].mxu0 %v1605
    %v1800 = vpop.f32.mrb[0].mxu0
    %v1801 = vpop.f32.mrb[0].mxu0
    %1802 = vmatprep.mubr.f32.mxu0 0.0
    %1803 = vmatmul.mubr.f32.gmra.mrb[0].mxu0 %v1608
    %v1804 = vpop.f32.mrb[0].mxu0
    %v1805 = vadd.f32 0.0, %v1804
    %v1806 = vpop.f32.mrb[0].mxu0
    %1807 = vmatprep.mubr.f32.mxu0 0.0
    %1808 = vmatmul.mubr.f32.gmra.mrb[0].mxu0 %v1611
    %v1809 = vpop.f32.mrb[0].mxu0
    %v1810 = vadd.f32 0.0, %v1809
    %v1811 = vpop.f32.mrb[0].mxu0
    %1812 = vmatprep.mubr.f32.mxu0 0.0
    %1813 = vmatmul.mubr.f32.gmra.mrb[0].mxu0 %v1614
    %v1814 = vpop.f32.mrb[0].mxu0
    %v1815 = vadd.f32 0.0, %v1814
    %v1816 = vpop.f32.mrb[0].mxu0
    %1817 = vmatprep.mubr.f32.mxu0 0.0
    %1818 = vmatmul.mubr.f32.gmra.mrb[0].mxu0 %v1617
    %v1819 = vpop.f32.mrb[0].mxu0
    %v1820 = vadd.f32 0.0, %v1819
    %v1821 = vpop.f32.mrb[0].mxu0
    %1822 = vmatprep.mubr.f32.mxu0 0.0
    %1823 = vmatmul.mubr.f32.gmra.mrb[0].mxu0 %v1620
    %v1824 = vpop.f32.mrb[0].mxu0
    %v1825 = vadd.f32 0.0, %v1824
    %v1826 = vpop.f32.mrb[0].mxu0
    %1827 = vmatprep.mubr.f32.mxu0 0.0
    %1828 = vmatmul.mubr.f32.gmra.mrb[0].mxu0 %v1623
    %v1829 = vpop.f32.mrb[0].mxu0
    %v1830 = vadd.f32 0.0, %v1829
    %v1831 = vpop.f32.mrb[0].mxu0
    %1832 = vmatprep.mubr.f32.mxu0 0.0
    %1833 = vmatmul.mubr.f32.gmra.mrb[0].mxu0 %v1626
    %v1834 = vpop.f32.mrb[0].mxu0
    %v1835 = vadd.f32 0.0, %v1834
    %v1836 = vpop.f32.mrb[0].mxu0
    %1837 = vmatprep.mubr.f32.mxu0 0.0
    %1838 = vmatmul.mubr.f32.gmra.mrb[0].mxu0 %v1629
    %v1839 = vpop.f32.mrb[0].mxu0
    %v1840 = vadd.f32 0.0, %v1839
    %v1841 = vpop.f32.mrb[0].mxu0
    %1842 = vmatprep.mubr.f32.mxu0 0.0
    %1843 = vmatmul.mubr.f32.gmra.mrb[0].mxu0 %v1632
    %v1844 = vpop.f32.mrb[0].mxu0
    %v1845 = vadd.f32 0.0, %v1844
    %v1846 = vpop.f32.mrb[0].mxu0
    %1847 = vmatprep.mubr.f32.mxu0 0.0
    %1848 = vmatmul.mubr.f32.gmra.mrb[0].mxu0 %v1635
    %v1849 = vpop.f32.mrb[0].mxu0
    %v1850 = vadd.f32 0.0, %v1849
    %v1851 = vpop.f32.mrb[0].mxu0
    %1852 = vmatprep.mubr.f32.mxu0 0.0
    %1853 = vmatmul.mubr.f32.gmra.mrb[0].mxu0 %v1638
    %v1854 = vpop.f32.mrb[0].mxu0
    %v1855 = vadd.f32 0.0, %v1854
    %v1856 = vpop.f32.mrb[0].mxu0
    %1857 = vmatprep.mubr.f32.mxu0 0.0
    %1858 = vmatmul.mubr.f32.gmra.mrb[0].mxu0 %v1641
    %v1859 = vpop.f32.mrb[0].mxu0
    %v1860 = vadd.f32 0.0, %v1859
    %v1861 = vpop.f32.mrb[0].mxu0
    %1862 = vmatprep.mubr.f32.mxu0 0.0
    %1863 = vmatmul.mubr.f32.gmra.mrb[0].mxu0 %v1644
    %v1864 = vpop.f32.mrb[0].mxu0
    %v1865 = vadd.f32 0.0, %v1864
    %v1866 = vpop.f32.mrb[0].mxu0
    %1867 = vmatprep.mubr.f32.mxu0 0.0
    %1868 = vmatmul.mubr.f32.gmra.mrb[0].mxu0 %v1647
    %v1869 = vpop.f32.mrb[0].mxu0
    %v1870 = vadd.f32 0.0, %v1869
    %v1871 = vpop.f32.mrb[0].mxu0
    %1872 = vdwg.mxu0
    %v1873 = vadd.f32 %v1490, %v1719
    %v1874 = vadd.f32 %v1491, %v1724
    %v1875 = vadd.f32 %v1492, %v1729
    %v1876 = vadd.f32 %v1493, %v1734
    %v1877 = vadd.f32 %v1494, %v1739
    %v1878 = vadd.f32 %v1495, %v1744
    %v1879 = vadd.f32 %v1496, %v1749
    %v1880 = vadd.f32 %v1497, %v1754
    %v1881 = vadd.f32 %v1498, %v1759
    %v1882 = vadd.f32 %v1499, %v1764
    %v1883 = vadd.f32 %v1500, %v1769
    %v1884 = vadd.f32 %v1501, %v1774
    %v1885 = vadd.f32 %v1502, %v1779
    %v1886 = vadd.f32 %v1503, %v1784
    %v1887 = vadd.f32 %v1504, %v1805
    %v1888 = vadd.f32 %v1505, %v1810
    %v1889 = vadd.f32 %v1506, %v1815
    %v1890 = vadd.f32 %v1507, %v1820
    %v1891 = vadd.f32 %v1508, %v1825
    %v1892 = vadd.f32 %v1509, %v1830
    %v1893 = vadd.f32 %v1510, %v1835
    %v1894 = vadd.f32 %v1511, %v1840
    %v1895 = vadd.f32 %v1512, %v1845
    %v1896 = vadd.f32 %v1513, %v1850
    %v1897 = vadd.f32 %v1514, %v1855
    %v1898 = vadd.f32 %v1515, %v1860
    %v1899 = vadd.f32 %v1516, %v1865
    %v1900 = vadd.f32 %v1517, %v1870
    %v1901 = vld [vmem:[%s0 + $0x12] sm:$0xff]
    %v1902 = vld [vmem:[%s0 + $0x1a] sm:$0xff]
    %v1903 = vld [vmem:[%s0 + $0x22] sm:$0xff]
    %v1904 = vld [vmem:[%s0 + $0x2a] sm:$0xff]
    %v1905 = vld [vmem:[%s0 + $0x32] sm:$0xff]
    %v1906 = vld [vmem:[%s0 + $0x3a] sm:$0xff]
    %v1907 = vld [vmem:[%s0 + $0x42] sm:$0xff]
    %v1908 = vld [vmem:[%s0 + $0x4a] sm:$0xff]
    %v1909 = vld [vmem:[%s0 + $0x52] sm:$0xff]
    %v1910 = vld [vmem:[%s0 + $0x5a] sm:$0xff]
    %v1911 = vld [vmem:[%s0 + $0x62] sm:$0xff]
    %v1912 = vld [vmem:[%s0 + $0x6a] sm:$0xff]
    %v1913 = vld [vmem:[%s0 + $0x72] sm:$0xff]
    %v1914 = vld [vmem:[%s0 + $0x7a] sm:$0xff]
    %v1915 = vld [vmem:[%s0 + $0x82] sm:$0xff]
    %v1916 = vld [vmem:[%s0 + $0x8a] sm:$0xff]
    %v1917 = vld [vmem:[%s0 + $0x92] sm:$0xff]
    %v1918 = vld [vmem:[%s0 + $0x9a] sm:$0xff]
    %v1919 = vld [vmem:[%s0 + $0xa2] sm:$0xff]
    %v1920 = vld [vmem:[%s0 + $0xaa] sm:$0xff]
    %v1921 = vld [vmem:[%s0 + $0xb2] sm:$0xff]
    %v1922 = vld [vmem:[%s0 + $0xba] sm:$0xff]
    %v1923 = vld [vmem:[%s0 + $0xc2] sm:$0xff]
    %v1924 = vld [vmem:[%s0 + $0xca] sm:$0xff]
    %v1925 = vld [vmem:[%s0 + $0xd2] sm:$0xff]
    %v1926 = vld [vmem:[%s0 + $0xda] sm:$0xff]
    %v1927 = vld [vmem:[%s0 + $0xe2] sm:$0xff]
    %v1928 = vld [vmem:[%s0 + $0xea] sm:$0xff]
    %v1929 = vld [vmem:[%s0 + $0xf2] sm:$0xff]
    %v1930 = vld [vmem:[%s0 + $0xfa] sm:$0xff]
    %v1931 = vld [vmem:[%s0 + $0x102] sm:$0xff]
    %v1932 = vld [vmem:[%s0 + $0x10a] sm:$0xff]
    %s1933 = scalar_lea.vmem %s1, 80
    %v1934 = vld [vmem:[%s1933] sm:$0xff]
    %v1935 = vld [vmem:[%s1933 + $0x8] sm:$0x1f]
    %v1937 = vsel %vm110, %v1901, 0
    %v1940 = vsel %vm110, %v1902, 0
    %v1943 = vsel %vm110, %v1903, 0
    %v1946 = vsel %vm110, %v1904, 0
    %v1949 = vsel %vm110, %v1905, 0
    %v1952 = vsel %vm110, %v1906, 0
    %v1955 = vsel %vm110, %v1907, 0
    %v1958 = vsel %vm110, %v1908, 0
    %v1961 = vsel %vm110, %v1909, 0
    %v1964 = vsel %vm110, %v1910, 0
    %v1967 = vsel %vm110, %v1911, 0
    %v1970 = vsel %vm110, %v1912, 0
    %v1973 = vsel %vm110, %v1913, 0
    %v1976 = vsel %vm110, %v1914, 0
    %v1979 = vsel %vm110, %v1915, 0
    %v1982 = vsel %vm110, %v1916, 0
    %v1985 = vsel %vm110, %v1917, 0
    %v1988 = vsel %vm110, %v1918, 0
    %v1991 = vsel %vm110, %v1919, 0
    %v1994 = vsel %vm110, %v1920, 0
    %v1997 = vsel %vm110, %v1921, 0
    %v2000 = vsel %vm110, %v1922, 0
    %v2003 = vsel %vm110, %v1923, 0
    %v2006 = vsel %vm110, %v1924, 0
    %v2009 = vsel %vm110, %v1925, 0
    %v2012 = vsel %vm110, %v1926, 0
    %v2015 = vsel %vm110, %v1927, 0
    %v2018 = vsel %vm110, %v1928, 0
    %v2021 = vsel %vm110, %v1929, 0
    %v2024 = vsel %vm110, %v1930, 0
    %v2027 = vsel %vm110, %v1931, 0
    %v2030 = vsel %vm110, %v1932, 0
    %v2033 = vsel %vm207, %v1935, 0
    %2035 = vmatprep.subr.mxu0 0.0
    %2036 = vmatpush1.msra.mxu0 %v1934
    %2037 = vmatprep.subr.mxu0 0.0
    %2038 = vmatpush1.msra.mxu0 %v2033
    %2039 = vmatprep.subr.mxu0 0.0
    %2040 = vmatpush1.msra.mxu0 0.0
    %2041 = vmatprep.subr.mxu0 0.0
    %2042 = vmatpush1.msra.mxu0 0.0
    %2043 = vmatprep.subr.mxu0 0.0
    %2044 = vmatpush1.msra.mxu0 0.0
    %2045 = vmatprep.subr.mxu0 0.0
    %2046 = vmatpush1.msra.mxu0 0.0
    %2047 = vmatprep.subr.mxu0 0.0
    %2048 = vmatpush1.msra.mxu0 0.0
    %2049 = vmatprep.subr.mxu0 0.0
    %2050 = vmatpush1.msra.mxu0 0.0
    %2051 = vmatprep.subr.mxu0 0.0
    %2052 = vmatpush1.msra.mxu0 0.0
    %2053 = vmatprep.subr.mxu0 0.0
    %2054 = vmatpush1.msra.mxu0 0.0
    %2055 = vmatprep.subr.mxu0 0.0
    %2056 = vmatpush1.msra.mxu0 0.0
    %2057 = vmatprep.subr.mxu0 0.0
    %2058 = vmatpush1.msra.mxu0 0.0
    %2059 = vmatprep.subr.mxu0 0.0
    %2060 = vmatpush1.msra.mxu0 0.0
    %2061 = vmatprep.subr.mxu0 0.0
    %2062 = vmatpush1.msra.mxu0 0.0
    %2063 = vmatprep.subr.mxu0 0.0
    %2064 = vmatpush1.msra.mxu0 0.0
    %2065 = vmatprep.subr.mxu0 0.0
    %2066 = vmatpush1.msra.mxu0 0.0
    %2067 = vmatprep.subr.mxu0 0.0
    %2068 = vmatpush1.msra.mxu0 0.0
    %2069 = vmatprep.subr.mxu0 0.0
    %2070 = vmatpush1.msra.mxu0 0.0
    %2071 = vmatprep.subr.mxu0 0.0
    %2072 = vmatpush1.msra.mxu0 0.0
    %2073 = vmatprep.subr.mxu0 0.0
    %2074 = vmatpush1.msra.mxu0 0.0
    %2075 = vmatprep.subr.mxu0 0.0
    %2076 = vmatpush1.msra.mxu0 0.0
    %2077 = vmatprep.subr.mxu0 0.0
    %2078 = vmatpush1.msra.mxu0 0.0
    %2079 = vmatprep.subr.mxu0 0.0
    %2080 = vmatpush1.msra.mxu0 0.0
    %2081 = vmatprep.subr.mxu0 0.0
    %2082 = vmatpush1.msra.mxu0 0.0
    %2083 = vmatprep.subr.mxu0 0.0
    %2084 = vmatpush1.msra.mxu0 0.0
    %2085 = vmatprep.subr.mxu0 0.0
    %2086 = vmatpush1.msra.mxu0 0.0
    %2087 = vmatprep.subr.mxu0 0.0
    %2088 = vmatpush1.msra.mxu0 0.0
    %2089 = vmatprep.subr.mxu0 0.0
    %2090 = vmatpush1.msra.mxu0 0.0
    %2091 = vmatprep.subr.mxu0 0.0
    %2092 = vmatpush1.msra.mxu0 0.0
    %2093 = vmatprep.subr.mxu0 0.0
    %2094 = vmatpush1.msra.mxu0 0.0
    %2095 = vmatprep.subr.mxu0 0.0
    %2096 = vmatpush1.msra.mxu0 0.0
    %2097 = vmatprep.subr.mxu0 0.0
    %2098 = vmatpush1.msra.mxu0 0.0
    %2099 = vmatprep.mubr.f32.mxu0 0.0
    %2100 = vmatmul.mubr.f32.gmra.mrb[0].mxu0 %v1937
    %v2101 = vpop.f32.mrb[0].mxu0
    %v2102 = vadd.f32 0.0, %v2101
    %v2103 = vpop.f32.mrb[0].mxu0
    %2104 = vmatprep.mubr.f32.mxu0 0.0
    %2105 = vmatmul.mubr.f32.gmra.mrb[0].mxu0 %v1940
    %v2106 = vpop.f32.mrb[0].mxu0
    %v2107 = vadd.f32 0.0, %v2106
    %v2108 = vpop.f32.mrb[0].mxu0
    %2109 = vmatprep.mubr.f32.mxu0 0.0
    %2110 = vmatmul.mubr.f32.gmra.mrb[0].mxu0 %v1943
    %v2111 = vpop.f32.mrb[0].mxu0
    %v2112 = vadd.f32 0.0, %v2111
    %v2113 = vpop.f32.mrb[0].mxu0
    %2114 = vmatprep.mubr.f32.mxu0 0.0
    %2115 = vmatmul.mubr.f32.gmra.mrb[0].mxu0 %v1946
    %v2116 = vpop.f32.mrb[0].mxu0
    %v2117 = vadd.f32 0.0, %v2116
    %v2118 = vpop.f32.mrb[0].mxu0
    %2119 = vmatprep.mubr.f32.mxu0 0.0
    %2120 = vmatmul.mubr.f32.gmra.mrb[0].mxu0 %v1949
    %v2121 = vpop.f32.mrb[0].mxu0
    %v2122 = vadd.f32 0.0, %v2121
    %v2123 = vpop.f32.mrb[0].mxu0
    %2124 = vmatprep.mubr.f32.mxu0 0.0
    %2125 = vmatmul.mubr.f32.gmra.mrb[0].mxu0 %v1952
    %v2126 = vpop.f32.mrb[0].mxu0
    %v2127 = vadd.f32 0.0, %v2126
    %v2128 = vpop.f32.mrb[0].mxu0
    %2129 = vmatprep.mubr.f32.mxu0 0.0
    %2130 = vmatmul.mubr.f32.gmra.mrb[0].mxu0 %v1955
    %v2131 = vpop.f32.mrb[0].mxu0
    %v2132 = vadd.f32 0.0, %v2131
    %v2133 = vpop.f32.mrb[0].mxu0
    %2134 = vmatprep.mubr.f32.mxu0 0.0
    %2135 = vmatmul.mubr.f32.gmra.mrb[0].mxu0 %v1958
    %v2136 = vpop.f32.mrb[0].mxu0
    %v2137 = vadd.f32 0.0, %v2136
    %v2138 = vpop.f32.mrb[0].mxu0
    %2139 = vmatprep.mubr.f32.mxu0 0.0
    %2140 = vmatmul.mubr.f32.gmra.mrb[0].mxu0 %v1961
    %v2141 = vpop.f32.mrb[0].mxu0
    %v2142 = vadd.f32 0.0, %v2141
    %v2143 = vpop.f32.mrb[0].mxu0
    %2144 = vmatprep.mubr.f32.mxu0 0.0
    %2145 = vmatmul.mubr.f32.gmra.mrb[0].mxu0 %v1964
    %v2146 = vpop.f32.mrb[0].mxu0
    %v2147 = vadd.f32 0.0, %v2146
    %v2148 = vpop.f32.mrb[0].mxu0
    %2149 = vmatprep.mubr.f32.mxu0 0.0
    %2150 = vmatmul.mubr.f32.gmra.mrb[0].mxu0 %v1967
    %v2151 = vpop.f32.mrb[0].mxu0
    %v2152 = vadd.f32 0.0, %v2151
    %v2153 = vpop.f32.mrb[0].mxu0
    %2154 = vmatprep.mubr.f32.mxu0 0.0
    %2155 = vmatmul.mubr.f32.gmra.mrb[0].mxu0 %v1970
    %v2156 = vpop.f32.mrb[0].mxu0
    %v2157 = vadd.f32 0.0, %v2156
    %v2158 = vpop.f32.mrb[0].mxu0
    %2159 = vmatprep.mubr.f32.mxu0 0.0
    %2160 = vmatmul.mubr.f32.gmra.mrb[0].mxu0 %v1973
    %v2161 = vpop.f32.mrb[0].mxu0
    %v2162 = vadd.f32 0.0, %v2161
    %v2163 = vpop.f32.mrb[0].mxu0
    %2164 = vmatprep.mubr.f32.mxu0 0.0
    %2165 = vmatmul.mubr.f32.gmra.mrb[0].mxu0 %v1976
    %v2166 = vpop.f32.mrb[0].mxu0
    %v2167 = vadd.f32 0.0, %v2166
    %v2168 = vpop.f32.mrb[0].mxu0
    %2169 = vmatprep.mubr.f32.mxu0 0.0
    %2170 = vmatmul.mubr.f32.gmra.mrb[0].mxu0 %v1979
    %v2171 = vpop.f32.mrb[0].mxu0
    %v2172 = vpop.f32.mrb[0].mxu0
    %2173 = vmatprep.mubr.f32.mxu0 0.0
    %2174 = vmatmul.mubr.f32.gmra.mrb[0].mxu0 %v1982
    %v2175 = vpop.f32.mrb[0].mxu0
    %v2176 = vpop.f32.mrb[0].mxu0
    %2177 = vmatprep.mubr.f32.mxu0 0.0
    %2178 = vmatmul.mubr.f32.gmra.mrb[0].mxu0 %v1985
    %v2179 = vpop.f32.mrb[0].mxu0
    %v2180 = vpop.f32.mrb[0].mxu0
    %2181 = vmatprep.mubr.f32.mxu0 0.0
    %2182 = vmatmul.mubr.f32.gmra.mrb[0].mxu0 %v1988
    %v2183 = vpop.f32.mrb[0].mxu0
    %v2184 = vpop.f32.mrb[0].mxu0
    %2185 = vmatprep.mubr.f32.mxu0 0.0
    %2186 = vmatmul.mubr.f32.gmra.mrb[0].mxu0 %v1991
    %v2187 = vpop.f32.mrb[0].mxu0
    %v2188 = vadd.f32 0.0, %v2187
    %v2189 = vpop.f32.mrb[0].mxu0
    %2190 = vmatprep.mubr.f32.mxu0 0.0
    %2191 = vmatmul.mubr.f32.gmra.mrb[0].mxu0 %v1994
    %v2192 = vpop.f32.mrb[0].mxu0
    %v2193 = vadd.f32 0.0, %v2192
    %v2194 = vpop.f32.mrb[0].mxu0
    %2195 = vmatprep.mubr.f32.mxu0 0.0
    %2196 = vmatmul.mubr.f32.gmra.mrb[0].mxu0 %v1997
    %v2197 = vpop.f32.mrb[0].mxu0
    %v2198 = vadd.f32 0.0, %v2197
    %v2199 = vpop.f32.mrb[0].mxu0
    %2200 = vmatprep.mubr.f32.mxu0 0.0
    %2201 = vmatmul.mubr.f32.gmra.mrb[0].mxu0 %v2000
    %v2202 = vpop.f32.mrb[0].mxu0
    %v2203 = vadd.f32 0.0, %v2202
    %v2204 = vpop.f32.mrb[0].mxu0
    %2205 = vmatprep.mubr.f32.mxu0 0.0
    %2206 = vmatmul.mubr.f32.gmra.mrb[0].mxu0 %v2003
    %v2207 = vpop.f32.mrb[0].mxu0
    %v2208 = vadd.f32 0.0, %v2207
    %v2209 = vpop.f32.mrb[0].mxu0
    %2210 = vmatprep.mubr.f32.mxu0 0.0
    %2211 = vmatmul.mubr.f32.gmra.mrb[0].mxu0 %v2006
    %v2212 = vpop.f32.mrb[0].mxu0
    %v2213 = vadd.f32 0.0, %v2212
    %v2214 = vpop.f32.mrb[0].mxu0
    %2215 = vmatprep.mubr.f32.mxu0 0.0
    %2216 = vmatmul.mubr.f32.gmra.mrb[0].mxu0 %v2009
    %v2217 = vpop.f32.mrb[0].mxu0
    %v2218 = vadd.f32 0.0, %v2217
    %v2219 = vpop.f32.mrb[0].mxu0
    %2220 = vmatprep.mubr.f32.mxu0 0.0
    %2221 = vmatmul.mubr.f32.gmra.mrb[0].mxu0 %v2012
    %v2222 = vpop.f32.mrb[0].mxu0
    %v2223 = vadd.f32 0.0, %v2222
    %v2224 = vpop.f32.mrb[0].mxu0
    %2225 = vmatprep.mubr.f32.mxu0 0.0
    %2226 = vmatmul.mubr.f32.gmra.mrb[0].mxu0 %v2015
    %v2227 = vpop.f32.mrb[0].mxu0
    %v2228 = vadd.f32 0.0, %v2227
    %v2229 = vpop.f32.mrb[0].mxu0
    %2230 = vmatprep.mubr.f32.mxu0 0.0
    %2231 = vmatmul.mubr.f32.gmra.mrb[0].mxu0 %v2018
    %v2232 = vpop.f32.mrb[0].mxu0
    %v2233 = vadd.f32 0.0, %v2232
    %v2234 = vpop.f32.mrb[0].mxu0
    %2235 = vmatprep.mubr.f32.mxu0 0.0
    %2236 = vmatmul.mubr.f32.gmra.mrb[0].mxu0 %v2021
    %v2237 = vpop.f32.mrb[0].mxu0
    %v2238 = vadd.f32 0.0, %v2237
    %v2239 = vpop.f32.mrb[0].mxu0
    %2240 = vmatprep.mubr.f32.mxu0 0.0
    %2241 = vmatmul.mubr.f32.gmra.mrb[0].mxu0 %v2024
    %v2242 = vpop.f32.mrb[0].mxu0
    %v2243 = vadd.f32 0.0, %v2242
    %v2244 = vpop.f32.mrb[0].mxu0
    %2245 = vmatprep.mubr.f32.mxu0 0.0
    %2246 = vmatmul.mubr.f32.gmra.mrb[0].mxu0 %v2027
    %v2247 = vpop.f32.mrb[0].mxu0
    %v2248 = vadd.f32 0.0, %v2247
    %v2249 = vpop.f32.mrb[0].mxu0
    %2250 = vmatprep.mubr.f32.mxu0 0.0
    %2251 = vmatmul.mubr.f32.gmra.mrb[0].mxu0 %v2030
    %v2252 = vpop.f32.mrb[0].mxu0
    %v2253 = vadd.f32 0.0, %v2252
    %v2254 = vpop.f32.mrb[0].mxu0
    %2255 = vdwg.mxu0
    %v2256 = vadd.f32 %v1873, %v2102
    %v2257 = vadd.f32 %v1874, %v2107
    %v2258 = vadd.f32 %v1875, %v2112
    %v2259 = vadd.f32 %v1876, %v2117
    %v2260 = vadd.f32 %v1877, %v2122
    %v2261 = vadd.f32 %v1878, %v2127
    %v2262 = vadd.f32 %v1879, %v2132
    %v2263 = vadd.f32 %v1880, %v2137
    %v2264 = vadd.f32 %v1881, %v2142
    %v2265 = vadd.f32 %v1882, %v2147
    %v2266 = vadd.f32 %v1883, %v2152
    %v2267 = vadd.f32 %v1884, %v2157
    %v2268 = vadd.f32 %v1885, %v2162
    %v2269 = vadd.f32 %v1886, %v2167
    %v2270 = vadd.f32 %v1887, %v2188
    %v2271 = vadd.f32 %v1888, %v2193
    %v2272 = vadd.f32 %v1889, %v2198
    %v2273 = vadd.f32 %v1890, %v2203
    %v2274 = vadd.f32 %v1891, %v2208
    %v2275 = vadd.f32 %v1892, %v2213
    %v2276 = vadd.f32 %v1893, %v2218
    %v2277 = vadd.f32 %v1894, %v2223
    %v2278 = vadd.f32 %v1895, %v2228
    %v2279 = vadd.f32 %v1896, %v2233
    %v2280 = vadd.f32 %v1897, %v2238
    %v2281 = vadd.f32 %v1898, %v2243
    %v2282 = vadd.f32 %v1899, %v2248
    %v2283 = vadd.f32 %v1900, %v2253
    %v2284 = vld [vmem:[%s0 + $0x20] sm:$0xff]
    %v2285 = vld [vmem:[%s0 + $0x28] sm:$0xff]
    %v2286 = vld [vmem:[%s0 + $0x30] sm:$0xff]
    %v2287 = vld [vmem:[%s0 + $0x38] sm:$0xff]
    %v2288 = vld [vmem:[%s0 + $0x40] sm:$0xff]
    %v2289 = vld [vmem:[%s0 + $0x48] sm:$0xff]
    %v2290 = vld [vmem:[%s0 + $0x50] sm:$0xff]
    %v2291 = vld [vmem:[%s0 + $0x58] sm:$0xff]
    %v2292 = vld [vmem:[%s0 + $0x60] sm:$0xff]
    %v2293 = vld [vmem:[%s0 + $0x68] sm:$0xff]
    %v2294 = vld [vmem:[%s0 + $0x70] sm:$0xff]
    %v2295 = vld [vmem:[%s0 + $0x78] sm:$0xff]
    %v2296 = vld [vmem:[%s0 + $0x80] sm:$0xff]
    %v2297 = vld [vmem:[%s0 + $0x88] sm:$0xff]
    %v2298 = vld [vmem:[%s0 + $0x90] sm:$0xff]
    %v2299 = vld [vmem:[%s0 + $0x98] sm:$0xff]
    %v2300 = vld [vmem:[%s0 + $0xa0] sm:$0xff]
    %v2301 = vld [vmem:[%s0 + $0xa8] sm:$0xff]
    %v2302 = vld [vmem:[%s0 + $0xb0] sm:$0xff]
    %v2303 = vld [vmem:[%s0 + $0xb8] sm:$0xff]
    %v2304 = vld [vmem:[%s0 + $0xc0] sm:$0xff]
    %v2305 = vld [vmem:[%s0 + $0xc8] sm:$0xff]
    %v2306 = vld [vmem:[%s0 + $0xd0] sm:$0xff]
    %v2307 = vld [vmem:[%s0 + $0xd8] sm:$0xff]
    %v2308 = vld [vmem:[%s0 + $0xe0] sm:$0xff]
    %v2309 = vld [vmem:[%s0 + $0xe8] sm:$0xff]
    %v2310 = vld [vmem:[%s0 + $0xf0] sm:$0xff]
    %v2311 = vld [vmem:[%s0 + $0xf8] sm:$0xff]
    %v2312 = vld [vmem:[%s0 + $0x100] sm:$0xff]
    %v2313 = vld [vmem:[%s0 + $0x108] sm:$0xff]
    %v2314 = vld [vmem:[%s0 + $0x110] sm:$0xff]
    %v2315 = vld [vmem:[%s0 + $0x118] sm:$0xff]
    %s2316 = scalar_lea.vmem %s1, 96
    %v2317 = vld [vmem:[%s2316] sm:$0xff]
    %v2318 = vld [vmem:[%s2316 + $0x8] sm:$0x1f]
    %v2320 = vsel %vm110, %v2284, 0
    %v2323 = vsel %vm110, %v2285, 0
    %v2326 = vsel %vm110, %v2286, 0
    %v2329 = vsel %vm110, %v2287, 0
    %v2332 = vsel %vm110, %v2288, 0
    %v2335 = vsel %vm110, %v2289, 0
    %v2338 = vsel %vm110, %v2290, 0
    %v2341 = vsel %vm110, %v2291, 0
    %v2344 = vsel %vm110, %v2292, 0
    %v2347 = vsel %vm110, %v2293, 0
    %v2350 = vsel %vm110, %v2294, 0
    %v2353 = vsel %vm110, %v2295, 0
    %v2356 = vsel %vm110, %v2296, 0
    %v2359 = vsel %vm110, %v2297, 0
    %v2362 = vsel %vm110, %v2298, 0
    %v2365 = vsel %vm110, %v2299, 0
    %v2368 = vsel %vm110, %v2300, 0
    %v2371 = vsel %vm110, %v2301, 0
    %v2374 = vsel %vm110, %v2302, 0
    %v2377 = vsel %vm110, %v2303, 0
    %v2380 = vsel %vm110, %v2304, 0
    %v2383 = vsel %vm110, %v2305, 0
    %v2386 = vsel %vm110, %v2306, 0
    %v2389 = vsel %vm110, %v2307, 0
    %v2392 = vsel %vm110, %v2308, 0
    %v2395 = vsel %vm110, %v2309, 0
    %v2398 = vsel %vm110, %v2310, 0
    %v2401 = vsel %vm110, %v2311, 0
    %v2404 = vsel %vm110, %v2312, 0
    %v2407 = vsel %vm110, %v2313, 0
    %v2410 = vsel %vm110, %v2314, 0
    %v2413 = vsel %vm110, %v2315, 0
    %v2416 = vsel %vm207, %v2318, 0
    %2418 = vmatprep.subr.mxu0 0.0
    %2419 = vmatpush1.msra.mxu0 %v2317
    %2420 = vmatprep.subr.mxu0 0.0
    %2421 = vmatpush1.msra.mxu0 %v2416
    %2422 = vmatprep.subr.mxu0 0.0
    %2423 = vmatpush1.msra.mxu0 0.0
    %2424 = vmatprep.subr.mxu0 0.0
    %2425 = vmatpush1.msra.mxu0 0.0
    %2426 = vmatprep.subr.mxu0 0.0
    %2427 = vmatpush1.msra.mxu0 0.0
    %2428 = vmatprep.subr.mxu0 0.0
    %2429 = vmatpush1.msra.mxu0 0.0
    %2430 = vmatprep.subr.mxu0 0.0
    %2431 = vmatpush1.msra.mxu0 0.0
    %2432 = vmatprep.subr.mxu0 0.0
    %2433 = vmatpush1.msra.mxu0 0.0
    %2434 = vmatprep.subr.mxu0 0.0
    %2435 = vmatpush1.msra.mxu0 0.0
    %2436 = vmatprep.subr.mxu0 0.0
    %2437 = vmatpush1.msra.mxu0 0.0
    %2438 = vmatprep.subr.mxu0 0.0
    %2439 = vmatpush1.msra.mxu0 0.0
    %2440 = vmatprep.subr.mxu0 0.0
    %2441 = vmatpush1.msra.mxu0 0.0
    %2442 = vmatprep.subr.mxu0 0.0
    %2443 = vmatpush1.msra.mxu0 0.0
    %2444 = vmatprep.subr.mxu0 0.0
    %2445 = vmatpush1.msra.mxu0 0.0
    %2446 = vmatprep.subr.mxu0 0.0
    %2447 = vmatpush1.msra.mxu0 0.0
    %2448 = vmatprep.subr.mxu0 0.0
    %2449 = vmatpush1.msra.mxu0 0.0
    %2450 = vmatprep.subr.mxu0 0.0
    %2451 = vmatpush1.msra.mxu0 0.0
    %2452 = vmatprep.subr.mxu0 0.0
    %2453 = vmatpush1.msra.mxu0 0.0
    %2454 = vmatprep.subr.mxu0 0.0
    %2455 = vmatpush1.msra.mxu0 0.0
    %2456 = vmatprep.subr.mxu0 0.0
    %2457 = vmatpush1.msra.mxu0 0.0
    %2458 = vmatprep.subr.mxu0 0.0
    %2459 = vmatpush1.msra.mxu0 0.0
    %2460 = vmatprep.subr.mxu0 0.0
    %2461 = vmatpush1.msra.mxu0 0.0
    %2462 = vmatprep.subr.mxu0 0.0
    %2463 = vmatpush1.msra.mxu0 0.0
    %2464 = vmatprep.subr.mxu0 0.0
    %2465 = vmatpush1.msra.mxu0 0.0
    %2466 = vmatprep.subr.mxu0 0.0
    %2467 = vmatpush1.msra.mxu0 0.0
    %2468 = vmatprep.subr.mxu0 0.0
    %2469 = vmatpush1.msra.mxu0 0.0
    %2470 = vmatprep.subr.mxu0 0.0
    %2471 = vmatpush1.msra.mxu0 0.0
    %2472 = vmatprep.subr.mxu0 0.0
    %2473 = vmatpush1.msra.mxu0 0.0
    %2474 = vmatprep.subr.mxu0 0.0
    %2475 = vmatpush1.msra.mxu0 0.0
    %2476 = vmatprep.subr.mxu0 0.0
    %2477 = vmatpush1.msra.mxu0 0.0
    %2478 = vmatprep.subr.mxu0 0.0
    %2479 = vmatpush1.msra.mxu0 0.0
    %2480 = vmatprep.subr.mxu0 0.0
    %2481 = vmatpush1.msra.mxu0 0.0
    %2482 = vmatprep.mubr.f32.mxu0 0.0
    %2483 = vmatmul.mubr.f32.gmra.mrb[0].mxu0 %v2320
    %v2484 = vpop.f32.mrb[0].mxu0
    %v2485 = vadd.f32 0.0, %v2484
    %v2486 = vpop.f32.mrb[0].mxu0
    %2487 = vmatprep.mubr.f32.mxu0 0.0
    %2488 = vmatmul.mubr.f32.gmra.mrb[0].mxu0 %v2323
    %v2489 = vpop.f32.mrb[0].mxu0
    %v2490 = vadd.f32 0.0, %v2489
    %v2491 = vpop.f32.mrb[0].mxu0
    %2492 = vmatprep.mubr.f32.mxu0 0.0
    %2493 = vmatmul.mubr.f32.gmra.mrb[0].mxu0 %v2326
    %v2494 = vpop.f32.mrb[0].mxu0
    %v2495 = vadd.f32 0.0, %v2494
    %v2496 = vpop.f32.mrb[0].mxu0
    %2497 = vmatprep.mubr.f32.mxu0 0.0
    %2498 = vmatmul.mubr.f32.gmra.mrb[0].mxu0 %v2329
    %v2499 = vpop.f32.mrb[0].mxu0
    %v2500 = vadd.f32 0.0, %v2499
    %v2501 = vpop.f32.mrb[0].mxu0
    %2502 = vmatprep.mubr.f32.mxu0 0.0
    %2503 = vmatmul.mubr.f32.gmra.mrb[0].mxu0 %v2332
    %v2504 = vpop.f32.mrb[0].mxu0
    %v2505 = vadd.f32 0.0, %v2504
    %v2506 = vpop.f32.mrb[0].mxu0
    %2507 = vmatprep.mubr.f32.mxu0 0.0
    %2508 = vmatmul.mubr.f32.gmra.mrb[0].mxu0 %v2335
    %v2509 = vpop.f32.mrb[0].mxu0
    %v2510 = vadd.f32 0.0, %v2509
    %v2511 = vpop.f32.mrb[0].mxu0
    %2512 = vmatprep.mubr.f32.mxu0 0.0
    %2513 = vmatmul.mubr.f32.gmra.mrb[0].mxu0 %v2338
    %v2514 = vpop.f32.mrb[0].mxu0
    %v2515 = vadd.f32 0.0, %v2514
    %v2516 = vpop.f32.mrb[0].mxu0
    %2517 = vmatprep.mubr.f32.mxu0 0.0
    %2518 = vmatmul.mubr.f32.gmra.mrb[0].mxu0 %v2341
    %v2519 = vpop.f32.mrb[0].mxu0
    %v2520 = vadd.f32 0.0, %v2519
    %v2521 = vpop.f32.mrb[0].mxu0
    %2522 = vmatprep.mubr.f32.mxu0 0.0
    %2523 = vmatmul.mubr.f32.gmra.mrb[0].mxu0 %v2344
    %v2524 = vpop.f32.mrb[0].mxu0
    %v2525 = vadd.f32 0.0, %v2524
    %v2526 = vpop.f32.mrb[0].mxu0
    %2527 = vmatprep.mubr.f32.mxu0 0.0
    %2528 = vmatmul.mubr.f32.gmra.mrb[0].mxu0 %v2347
    %v2529 = vpop.f32.mrb[0].mxu0
    %v2530 = vadd.f32 0.0, %v2529
    %v2531 = vpop.f32.mrb[0].mxu0
    %2532 = vmatprep.mubr.f32.mxu0 0.0
    %2533 = vmatmul.mubr.f32.gmra.mrb[0].mxu0 %v2350
    %v2534 = vpop.f32.mrb[0].mxu0
    %v2535 = vadd.f32 0.0, %v2534
    %v2536 = vpop.f32.mrb[0].mxu0
    %2537 = vmatprep.mubr.f32.mxu0 0.0
    %2538 = vmatmul.mubr.f32.gmra.mrb[0].mxu0 %v2353
    %v2539 = vpop.f32.mrb[0].mxu0
    %v2540 = vadd.f32 0.0, %v2539
    %v2541 = vpop.f32.mrb[0].mxu0
    %2542 = vmatprep.mubr.f32.mxu0 0.0
    %2543 = vmatmul.mubr.f32.gmra.mrb[0].mxu0 %v2356
    %v2544 = vpop.f32.mrb[0].mxu0
    %v2545 = vadd.f32 0.0, %v2544
    %v2546 = vpop.f32.mrb[0].mxu0
    %2547 = vmatprep.mubr.f32.mxu0 0.0
    %2548 = vmatmul.mubr.f32.gmra.mrb[0].mxu0 %v2359
    %v2549 = vpop.f32.mrb[0].mxu0
    %v2550 = vadd.f32 0.0, %v2549
    %v2551 = vpop.f32.mrb[0].mxu0
    %2552 = vmatprep.mubr.f32.mxu0 0.0
    %2553 = vmatmul.mubr.f32.gmra.mrb[0].mxu0 %v2362
    %v2554 = vpop.f32.mrb[0].mxu0
    %v2555 = vpop.f32.mrb[0].mxu0
    %2556 = vmatprep.mubr.f32.mxu0 0.0
    %2557 = vmatmul.mubr.f32.gmra.mrb[0].mxu0 %v2365
    %v2558 = vpop.f32.mrb[0].mxu0
    %v2559 = vpop.f32.mrb[0].mxu0
    %2560 = vmatprep.mubr.f32.mxu0 0.0
    %2561 = vmatmul.mubr.f32.gmra.mrb[0].mxu0 %v2368
    %v2562 = vpop.f32.mrb[0].mxu0
    %v2563 = vpop.f32.mrb[0].mxu0
    %2564 = vmatprep.mubr.f32.mxu0 0.0
    %2565 = vmatmul.mubr.f32.gmra.mrb[0].mxu0 %v2371
    %v2566 = vpop.f32.mrb[0].mxu0
    %v2567 = vpop.f32.mrb[0].mxu0
    %2568 = vmatprep.mubr.f32.mxu0 0.0
    %2569 = vmatmul.mubr.f32.gmra.mrb[0].mxu0 %v2374
    %v2570 = vpop.f32.mrb[0].mxu0
    %v2571 = vadd.f32 0.0, %v2570
    %v2572 = vpop.f32.mrb[0].mxu0
    %2573 = vmatprep.mubr.f32.mxu0 0.0
    %2574 = vmatmul.mubr.f32.gmra.mrb[0].mxu0 %v2377
    %v2575 = vpop.f32.mrb[0].mxu0
    %v2576 = vadd.f32 0.0, %v2575
    %v2577 = vpop.f32.mrb[0].mxu0
    %2578 = vmatprep.mubr.f32.mxu0 0.0
    %2579 = vmatmul.mubr.f32.gmra.mrb[0].mxu0 %v2380
    %v2580 = vpop.f32.mrb[0].mxu0
    %v2581 = vadd.f32 0.0, %v2580
    %v2582 = vpop.f32.mrb[0].mxu0
    %2583 = vmatprep.mubr.f32.mxu0 0.0
    %2584 = vmatmul.mubr.f32.gmra.mrb[0].mxu0 %v2383
    %v2585 = vpop.f32.mrb[0].mxu0
    %v2586 = vadd.f32 0.0, %v2585
    %v2587 = vpop.f32.mrb[0].mxu0
    %2588 = vmatprep.mubr.f32.mxu0 0.0
    %2589 = vmatmul.mubr.f32.gmra.mrb[0].mxu0 %v2386
    %v2590 = vpop.f32.mrb[0].mxu0
    %v2591 = vadd.f32 0.0, %v2590
    %v2592 = vpop.f32.mrb[0].mxu0
    %2593 = vmatprep.mubr.f32.mxu0 0.0
    %2594 = vmatmul.mubr.f32.gmra.mrb[0].mxu0 %v2389
    %v2595 = vpop.f32.mrb[0].mxu0
    %v2596 = vadd.f32 0.0, %v2595
    %v2597 = vpop.f32.mrb[0].mxu0
    %2598 = vmatprep.mubr.f32.mxu0 0.0
    %2599 = vmatmul.mubr.f32.gmra.mrb[0].mxu0 %v2392
    %v2600 = vpop.f32.mrb[0].mxu0
    %v2601 = vadd.f32 0.0, %v2600
    %v2602 = vpop.f32.mrb[0].mxu0
    %2603 = vmatprep.mubr.f32.mxu0 0.0
    %2604 = vmatmul.mubr.f32.gmra.mrb[0].mxu0 %v2395
    %v2605 = vpop.f32.mrb[0].mxu0
    %v2606 = vadd.f32 0.0, %v2605
    %v2607 = vpop.f32.mrb[0].mxu0
    %2608 = vmatprep.mubr.f32.mxu0 0.0
    %2609 = vmatmul.mubr.f32.gmra.mrb[0].mxu0 %v2398
    %v2610 = vpop.f32.mrb[0].mxu0
    %v2611 = vadd.f32 0.0, %v2610
    %v2612 = vpop.f32.mrb[0].mxu0
    %2613 = vmatprep.mubr.f32.mxu0 0.0
    %2614 = vmatmul.mubr.f32.gmra.mrb[0].mxu0 %v2401
    %v2615 = vpop.f32.mrb[0].mxu0
    %v2616 = vadd.f32 0.0, %v2615
    %v2617 = vpop.f32.mrb[0].mxu0
    %2618 = vmatprep.mubr.f32.mxu0 0.0
    %2619 = vmatmul.mubr.f32.gmra.mrb[0].mxu0 %v2404
    %v2620 = vpop.f32.mrb[0].mxu0
    %v2621 = vadd.f32 0.0, %v2620
    %v2622 = vpop.f32.mrb[0].mxu0
    %2623 = vmatprep.mubr.f32.mxu0 0.0
    %2624 = vmatmul.mubr.f32.gmra.mrb[0].mxu0 %v2407
    %v2625 = vpop.f32.mrb[0].mxu0
    %v2626 = vadd.f32 0.0, %v2625
    %v2627 = vpop.f32.mrb[0].mxu0
    %2628 = vmatprep.mubr.f32.mxu0 0.0
    %2629 = vmatmul.mubr.f32.gmra.mrb[0].mxu0 %v2410
    %v2630 = vpop.f32.mrb[0].mxu0
    %v2631 = vadd.f32 0.0, %v2630
    %v2632 = vpop.f32.mrb[0].mxu0
    %2633 = vmatprep.mubr.f32.mxu0 0.0
    %2634 = vmatmul.mubr.f32.gmra.mrb[0].mxu0 %v2413
    %v2635 = vpop.f32.mrb[0].mxu0
    %v2636 = vadd.f32 0.0, %v2635
    %v2637 = vpop.f32.mrb[0].mxu0
    %2638 = vdwg.mxu0
    %v2639 = vadd.f32 %v2256, %v2485
    %v2640 = vadd.f32 %v2257, %v2490
    %v2641 = vadd.f32 %v2258, %v2495
    %v2642 = vadd.f32 %v2259, %v2500
    %v2643 = vadd.f32 %v2260, %v2505
    %v2644 = vadd.f32 %v2261, %v2510
    %v2645 = vadd.f32 %v2262, %v2515
    %v2646 = vadd.f32 %v2263, %v2520
    %v2647 = vadd.f32 %v2264, %v2525
    %v2648 = vadd.f32 %v2265, %v2530
    %v2649 = vadd.f32 %v2266, %v2535
    %v2650 = vadd.f32 %v2267, %v2540
    %v2651 = vadd.f32 %v2268, %v2545
    %v2652 = vadd.f32 %v2269, %v2550
    %v2653 = vadd.f32 %v2270, %v2571
    %v2654 = vadd.f32 %v2271, %v2576
    %v2655 = vadd.f32 %v2272, %v2581
    %v2656 = vadd.f32 %v2273, %v2586
    %v2657 = vadd.f32 %v2274, %v2591
    %v2658 = vadd.f32 %v2275, %v2596
    %v2659 = vadd.f32 %v2276, %v2601
    %v2660 = vadd.f32 %v2277, %v2606
    %v2661 = vadd.f32 %v2278, %v2611
    %v2662 = vadd.f32 %v2279, %v2616
    %v2663 = vadd.f32 %v2280, %v2621
    %v2664 = vadd.f32 %v2281, %v2626
    %v2665 = vadd.f32 %v2282, %v2631
    %v2666 = vadd.f32 %v2283, %v2636
    %v2667 = vld [vmem:[%s0 + $0x21] sm:$0xff]
    %v2668 = vld [vmem:[%s0 + $0x29] sm:$0xff]
    %v2669 = vld [vmem:[%s0 + $0x31] sm:$0xff]
    %v2670 = vld [vmem:[%s0 + $0x39] sm:$0xff]
    %v2671 = vld [vmem:[%s0 + $0x41] sm:$0xff]
    %v2672 = vld [vmem:[%s0 + $0x49] sm:$0xff]
    %v2673 = vld [vmem:[%s0 + $0x51] sm:$0xff]
    %v2674 = vld [vmem:[%s0 + $0x59] sm:$0xff]
    %v2675 = vld [vmem:[%s0 + $0x61] sm:$0xff]
    %v2676 = vld [vmem:[%s0 + $0x69] sm:$0xff]
    %v2677 = vld [vmem:[%s0 + $0x71] sm:$0xff]
    %v2678 = vld [vmem:[%s0 + $0x79] sm:$0xff]
    %v2679 = vld [vmem:[%s0 + $0x81] sm:$0xff]
    %v2680 = vld [vmem:[%s0 + $0x89] sm:$0xff]
    %v2681 = vld [vmem:[%s0 + $0x91] sm:$0xff]
    %v2682 = vld [vmem:[%s0 + $0x99] sm:$0xff]
    %v2683 = vld [vmem:[%s0 + $0xa1] sm:$0xff]
    %v2684 = vld [vmem:[%s0 + $0xa9] sm:$0xff]
    %v2685 = vld [vmem:[%s0 + $0xb1] sm:$0xff]
    %v2686 = vld [vmem:[%s0 + $0xb9] sm:$0xff]
    %v2687 = vld [vmem:[%s0 + $0xc1] sm:$0xff]
    %v2688 = vld [vmem:[%s0 + $0xc9] sm:$0xff]
    %v2689 = vld [vmem:[%s0 + $0xd1] sm:$0xff]
    %v2690 = vld [vmem:[%s0 + $0xd9] sm:$0xff]
    %v2691 = vld [vmem:[%s0 + $0xe1] sm:$0xff]
    %v2692 = vld [vmem:[%s0 + $0xe9] sm:$0xff]
    %v2693 = vld [vmem:[%s0 + $0xf1] sm:$0xff]
    %v2694 = vld [vmem:[%s0 + $0xf9] sm:$0xff]
    %v2695 = vld [vmem:[%s0 + $0x101] sm:$0xff]
    %v2696 = vld [vmem:[%s0 + $0x109] sm:$0xff]
    %v2697 = vld [vmem:[%s0 + $0x111] sm:$0xff]
    %v2698 = vld [vmem:[%s0 + $0x119] sm:$0xff]
    %s2699 = scalar_lea.vmem %s1, 112
    %v2700 = vld [vmem:[%s2699] sm:$0xff]
    %v2701 = vld [vmem:[%s2699 + $0x8] sm:$0x1f]
    %v2703 = vsel %vm110, %v2667, 0
    %v2706 = vsel %vm110, %v2668, 0
    %v2709 = vsel %vm110, %v2669, 0
    %v2712 = vsel %vm110, %v2670, 0
    %v2715 = vsel %vm110, %v2671, 0
    %v2718 = vsel %vm110, %v2672, 0
    %v2721 = vsel %vm110, %v2673, 0
    %v2724 = vsel %vm110, %v2674, 0
    %v2727 = vsel %vm110, %v2675, 0
    %v2730 = vsel %vm110, %v2676, 0
    %v2733 = vsel %vm110, %v2677, 0
    %v2736 = vsel %vm110, %v2678, 0
    %v2739 = vsel %vm110, %v2679, 0
    %v2742 = vsel %vm110, %v2680, 0
    %v2745 = vsel %vm110, %v2681, 0
    %v2748 = vsel %vm110, %v2682, 0
    %v2751 = vsel %vm110, %v2683, 0
    %v2754 = vsel %vm110, %v2684, 0
    %v2757 = vsel %vm110, %v2685, 0
    %v2760 = vsel %vm110, %v2686, 0
    %v2763 = vsel %vm110, %v2687, 0
    %v2766 = vsel %vm110, %v2688, 0
    %v2769 = vsel %vm110, %v2689, 0
    %v2772 = vsel %vm110, %v2690, 0
    %v2775 = vsel %vm110, %v2691, 0
    %v2778 = vsel %vm110, %v2692, 0
    %v2781 = vsel %vm110, %v2693, 0
    %v2784 = vsel %vm110, %v2694, 0
    %v2787 = vsel %vm110, %v2695, 0
    %v2790 = vsel %vm110, %v2696, 0
    %v2793 = vsel %vm110, %v2697, 0
    %v2796 = vsel %vm110, %v2698, 0
    %v2799 = vsel %vm207, %v2701, 0
    %2801 = vmatprep.subr.mxu0 0.0
    %2802 = vmatpush1.msra.mxu0 %v2700
    %2803 = vmatprep.subr.mxu0 0.0
    %2804 = vmatpush1.msra.mxu0 %v2799
    %2805 = vmatprep.subr.mxu0 0.0
    %2806 = vmatpush1.msra.mxu0 0.0
    %2807 = vmatprep.subr.mxu0 0.0
    %2808 = vmatpush1.msra.mxu0 0.0
    %2809 = vmatprep.subr.mxu0 0.0
    %2810 = vmatpush1.msra.mxu0 0.0
    %2811 = vmatprep.subr.mxu0 0.0
    %2812 = vmatpush1.msra.mxu0 0.0
    %2813 = vmatprep.subr.mxu0 0.0
    %2814 = vmatpush1.msra.mxu0 0.0
    %2815 = vmatprep.subr.mxu0 0.0
    %2816 = vmatpush1.msra.mxu0 0.0
    %2817 = vmatprep.subr.mxu0 0.0
    %2818 = vmatpush1.msra.mxu0 0.0
    %2819 = vmatprep.subr.mxu0 0.0
    %2820 = vmatpush1.msra.mxu0 0.0
    %2821 = vmatprep.subr.mxu0 0.0
    %2822 = vmatpush1.msra.mxu0 0.0
    %2823 = vmatprep.subr.mxu0 0.0
    %2824 = vmatpush1.msra.mxu0 0.0
    %2825 = vmatprep.subr.mxu0 0.0
    %2826 = vmatpush1.msra.mxu0 0.0
    %2827 = vmatprep.subr.mxu0 0.0
    %2828 = vmatpush1.msra.mxu0 0.0
    %2829 = vmatprep.subr.mxu0 0.0
    %2830 = vmatpush1.msra.mxu0 0.0
    %2831 = vmatprep.subr.mxu0 0.0
    %2832 = vmatpush1.msra.mxu0 0.0
    %2833 = vmatprep.subr.mxu0 0.0
    %2834 = vmatpush1.msra.mxu0 0.0
    %2835 = vmatprep.subr.mxu0 0.0
    %2836 = vmatpush1.msra.mxu0 0.0
    %2837 = vmatprep.subr.mxu0 0.0
    %2838 = vmatpush1.msra.mxu0 0.0
    %2839 = vmatprep.subr.mxu0 0.0
    %2840 = vmatpush1.msra.mxu0 0.0
    %2841 = vmatprep.subr.mxu0 0.0
    %2842 = vmatpush1.msra.mxu0 0.0
    %2843 = vmatprep.subr.mxu0 0.0
    %2844 = vmatpush1.msra.mxu0 0.0
    %2845 = vmatprep.subr.mxu0 0.0
    %2846 = vmatpush1.msra.mxu0 0.0
    %2847 = vmatprep.subr.mxu0 0.0
    %2848 = vmatpush1.msra.mxu0 0.0
    %2849 = vmatprep.subr.mxu0 0.0
    %2850 = vmatpush1.msra.mxu0 0.0
    %2851 = vmatprep.subr.mxu0 0.0
    %2852 = vmatpush1.msra.mxu0 0.0
    %2853 = vmatprep.subr.mxu0 0.0
    %2854 = vmatpush1.msra.mxu0 0.0
    %2855 = vmatprep.subr.mxu0 0.0
    %2856 = vmatpush1.msra.mxu0 0.0
    %2857 = vmatprep.subr.mxu0 0.0
    %2858 = vmatpush1.msra.mxu0 0.0
    %2859 = vmatprep.subr.mxu0 0.0
    %2860 = vmatpush1.msra.mxu0 0.0
    %2861 = vmatprep.subr.mxu0 0.0
    %2862 = vmatpush1.msra.mxu0 0.0
    %2863 = vmatprep.subr.mxu0 0.0
    %2864 = vmatpush1.msra.mxu0 0.0
    %2865 = vmatprep.mubr.f32.mxu0 0.0
    %2866 = vmatmul.mubr.f32.gmra.mrb[0].mxu0 %v2703
    %v2867 = vpop.f32.mrb[0].mxu0
    %v2868 = vadd.f32 0.0, %v2867
    %v2869 = vpop.f32.mrb[0].mxu0
    %2870 = vmatprep.mubr.f32.mxu0 0.0
    %2871 = vmatmul.mubr.f32.gmra.mrb[0].mxu0 %v2706
    %v2872 = vpop.f32.mrb[0].mxu0
    %v2873 = vadd.f32 0.0, %v2872
    %v2874 = vpop.f32.mrb[0].mxu0
    %2875 = vmatprep.mubr.f32.mxu0 0.0
    %2876 = vmatmul.mubr.f32.gmra.mrb[0].mxu0 %v2709
    %v2877 = vpop.f32.mrb[0].mxu0
    %v2878 = vadd.f32 0.0, %v2877
    %v2879 = vpop.f32.mrb[0].mxu0
    %2880 = vmatprep.mubr.f32.mxu0 0.0
    %2881 = vmatmul.mubr.f32.gmra.mrb[0].mxu0 %v2712
    %v2882 = vpop.f32.mrb[0].mxu0
    %v2883 = vadd.f32 0.0, %v2882
    %v2884 = vpop.f32.mrb[0].mxu0
    %2885 = vmatprep.mubr.f32.mxu0 0.0
    %2886 = vmatmul.mubr.f32.gmra.mrb[0].mxu0 %v2715
    %v2887 = vpop.f32.mrb[0].mxu0
    %v2888 = vadd.f32 0.0, %v2887
    %v2889 = vpop.f32.mrb[0].mxu0
    %2890 = vmatprep.mubr.f32.mxu0 0.0
    %2891 = vmatmul.mubr.f32.gmra.mrb[0].mxu0 %v2718
    %v2892 = vpop.f32.mrb[0].mxu0
    %v2893 = vadd.f32 0.0, %v2892
    %v2894 = vpop.f32.mrb[0].mxu0
    %2895 = vmatprep.mubr.f32.mxu0 0.0
    %2896 = vmatmul.mubr.f32.gmra.mrb[0].mxu0 %v2721
    %v2897 = vpop.f32.mrb[0].mxu0
    %v2898 = vadd.f32 0.0, %v2897
    %v2899 = vpop.f32.mrb[0].mxu0
    %2900 = vmatprep.mubr.f32.mxu0 0.0
    %2901 = vmatmul.mubr.f32.gmra.mrb[0].mxu0 %v2724
    %v2902 = vpop.f32.mrb[0].mxu0
    %v2903 = vadd.f32 0.0, %v2902
    %v2904 = vpop.f32.mrb[0].mxu0
    %2905 = vmatprep.mubr.f32.mxu0 0.0
    %2906 = vmatmul.mubr.f32.gmra.mrb[0].mxu0 %v2727
    %v2907 = vpop.f32.mrb[0].mxu0
    %v2908 = vadd.f32 0.0, %v2907
    %v2909 = vpop.f32.mrb[0].mxu0
    %2910 = vmatprep.mubr.f32.mxu0 0.0
    %2911 = vmatmul.mubr.f32.gmra.mrb[0].mxu0 %v2730
    %v2912 = vpop.f32.mrb[0].mxu0
    %v2913 = vadd.f32 0.0, %v2912
    %v2914 = vpop.f32.mrb[0].mxu0
    %2915 = vmatprep.mubr.f32.mxu0 0.0
    %2916 = vmatmul.mubr.f32.gmra.mrb[0].mxu0 %v2733
    %v2917 = vpop.f32.mrb[0].mxu0
    %v2918 = vadd.f32 0.0, %v2917
    %v2919 = vpop.f32.mrb[0].mxu0
    %2920 = vmatprep.mubr.f32.mxu0 0.0
    %2921 = vmatmul.mubr.f32.gmra.mrb[0].mxu0 %v2736
    %v2922 = vpop.f32.mrb[0].mxu0
    %v2923 = vadd.f32 0.0, %v2922
    %v2924 = vpop.f32.mrb[0].mxu0
    %2925 = vmatprep.mubr.f32.mxu0 0.0
    %2926 = vmatmul.mubr.f32.gmra.mrb[0].mxu0 %v2739
    %v2927 = vpop.f32.mrb[0].mxu0
    %v2928 = vadd.f32 0.0, %v2927
    %v2929 = vpop.f32.mrb[0].mxu0
    %2930 = vmatprep.mubr.f32.mxu0 0.0
    %2931 = vmatmul.mubr.f32.gmra.mrb[0].mxu0 %v2742
    %v2932 = vpop.f32.mrb[0].mxu0
    %v2933 = vadd.f32 0.0, %v2932
    %v2934 = vpop.f32.mrb[0].mxu0
    %2935 = vmatprep.mubr.f32.mxu0 0.0
    %2936 = vmatmul.mubr.f32.gmra.mrb[0].mxu0 %v2745
    %v2937 = vpop.f32.mrb[0].mxu0
    %v2938 = vpop.f32.mrb[0].mxu0
    %2939 = vmatprep.mubr.f32.mxu0 0.0
    %2940 = vmatmul.mubr.f32.gmra.mrb[0].mxu0 %v2748
    %v2941 = vpop.f32.mrb[0].mxu0
    %v2942 = vpop.f32.mrb[0].mxu0
    %2943 = vmatprep.mubr.f32.mxu0 0.0
    %2944 = vmatmul.mubr.f32.gmra.mrb[0].mxu0 %v2751
    %v2945 = vpop.f32.mrb[0].mxu0
    %v2946 = vpop.f32.mrb[0].mxu0
    %2947 = vmatprep.mubr.f32.mxu0 0.0
    %2948 = vmatmul.mubr.f32.gmra.mrb[0].mxu0 %v2754
    %v2949 = vpop.f32.mrb[0].mxu0
    %v2950 = vpop.f32.mrb[0].mxu0
    %2951 = vmatprep.mubr.f32.mxu0 0.0
    %2952 = vmatmul.mubr.f32.gmra.mrb[0].mxu0 %v2757
    %v2953 = vpop.f32.mrb[0].mxu0
    %v2954 = vadd.f32 0.0, %v2953
    %v2955 = vpop.f32.mrb[0].mxu0
    %2956 = vmatprep.mubr.f32.mxu0 0.0
    %2957 = vmatmul.mubr.f32.gmra.mrb[0].mxu0 %v2760
    %v2958 = vpop.f32.mrb[0].mxu0
    %v2959 = vadd.f32 0.0, %v2958
    %v2960 = vpop.f32.mrb[0].mxu0
    %2961 = vmatprep.mubr.f32.mxu0 0.0
    %2962 = vmatmul.mubr.f32.gmra.mrb[0].mxu0 %v2763
    %v2963 = vpop.f32.mrb[0].mxu0
    %v2964 = vadd.f32 0.0, %v2963
    %v2965 = vpop.f32.mrb[0].mxu0
    %2966 = vmatprep.mubr.f32.mxu0 0.0
    %2967 = vmatmul.mubr.f32.gmra.mrb[0].mxu0 %v2766
    %v2968 = vpop.f32.mrb[0].mxu0
    %v2969 = vadd.f32 0.0, %v2968
    %v2970 = vpop.f32.mrb[0].mxu0
    %2971 = vmatprep.mubr.f32.mxu0 0.0
    %2972 = vmatmul.mubr.f32.gmra.mrb[0].mxu0 %v2769
    %v2973 = vpop.f32.mrb[0].mxu0
    %v2974 = vadd.f32 0.0, %v2973
    %v2975 = vpop.f32.mrb[0].mxu0
    %2976 = vmatprep.mubr.f32.mxu0 0.0
    %2977 = vmatmul.mubr.f32.gmra.mrb[0].mxu0 %v2772
    %v2978 = vpop.f32.mrb[0].mxu0
    %v2979 = vadd.f32 0.0, %v2978
    %v2980 = vpop.f32.mrb[0].mxu0
    %2981 = vmatprep.mubr.f32.mxu0 0.0
    %2982 = vmatmul.mubr.f32.gmra.mrb[0].mxu0 %v2775
    %v2983 = vpop.f32.mrb[0].mxu0
    %v2984 = vadd.f32 0.0, %v2983
    %v2985 = vpop.f32.mrb[0].mxu0
    %2986 = vmatprep.mubr.f32.mxu0 0.0
    %2987 = vmatmul.mubr.f32.gmra.mrb[0].mxu0 %v2778
    %v2988 = vpop.f32.mrb[0].mxu0
    %v2989 = vadd.f32 0.0, %v2988
    %v2990 = vpop.f32.mrb[0].mxu0
    %2991 = vmatprep.mubr.f32.mxu0 0.0
    %2992 = vmatmul.mubr.f32.gmra.mrb[0].mxu0 %v2781
    %v2993 = vpop.f32.mrb[0].mxu0
    %v2994 = vadd.f32 0.0, %v2993
    %v2995 = vpop.f32.mrb[0].mxu0
    %2996 = vmatprep.mubr.f32.mxu0 0.0
    %2997 = vmatmul.mubr.f32.gmra.mrb[0].mxu0 %v2784
    %v2998 = vpop.f32.mrb[0].mxu0
    %v2999 = vadd.f32 0.0, %v2998
    %v3000 = vpop.f32.mrb[0].mxu0
    %3001 = vmatprep.mubr.f32.mxu0 0.0
    %3002 = vmatmul.mubr.f32.gmra.mrb[0].mxu0 %v2787
    %v3003 = vpop.f32.mrb[0].mxu0
    %v3004 = vadd.f32 0.0, %v3003
    %v3005 = vpop.f32.mrb[0].mxu0
    %3006 = vmatprep.mubr.f32.mxu0 0.0
    %3007 = vmatmul.mubr.f32.gmra.mrb[0].mxu0 %v2790
    %v3008 = vpop.f32.mrb[0].mxu0
    %v3009 = vadd.f32 0.0, %v3008
    %v3010 = vpop.f32.mrb[0].mxu0
    %3011 = vmatprep.mubr.f32.mxu0 0.0
    %3012 = vmatmul.mubr.f32.gmra.mrb[0].mxu0 %v2793
    %v3013 = vpop.f32.mrb[0].mxu0
    %v3014 = vadd.f32 0.0, %v3013
    %v3015 = vpop.f32.mrb[0].mxu0
    %3016 = vmatprep.mubr.f32.mxu0 0.0
    %3017 = vmatmul.mubr.f32.gmra.mrb[0].mxu0 %v2796
    %v3018 = vpop.f32.mrb[0].mxu0
    %v3019 = vadd.f32 0.0, %v3018
    %v3020 = vpop.f32.mrb[0].mxu0
    %3021 = vdwg.mxu0
    %v3022 = vadd.f32 %v2639, %v2868
    %v3023 = vadd.f32 %v2640, %v2873
    %v3024 = vadd.f32 %v2641, %v2878
    %v3025 = vadd.f32 %v2642, %v2883
    %v3026 = vadd.f32 %v2643, %v2888
    %v3027 = vadd.f32 %v2644, %v2893
    %v3028 = vadd.f32 %v2645, %v2898
    %v3029 = vadd.f32 %v2646, %v2903
    %v3030 = vadd.f32 %v2647, %v2908
    %v3031 = vadd.f32 %v2648, %v2913
    %v3032 = vadd.f32 %v2649, %v2918
    %v3033 = vadd.f32 %v2650, %v2923
    %v3034 = vadd.f32 %v2651, %v2928
    %v3035 = vadd.f32 %v2652, %v2933
    %v3036 = vadd.f32 %v2653, %v2954
    %v3037 = vadd.f32 %v2654, %v2959
    %v3038 = vadd.f32 %v2655, %v2964
    %v3039 = vadd.f32 %v2656, %v2969
    %v3040 = vadd.f32 %v2657, %v2974
    %v3041 = vadd.f32 %v2658, %v2979
    %v3042 = vadd.f32 %v2659, %v2984
    %v3043 = vadd.f32 %v2660, %v2989
    %v3044 = vadd.f32 %v2661, %v2994
    %v3045 = vadd.f32 %v2662, %v2999
    %v3046 = vadd.f32 %v2663, %v3004
    %v3047 = vadd.f32 %v2664, %v3009
    %v3048 = vadd.f32 %v2665, %v3014
    %v3049 = vadd.f32 %v2666, %v3019
    %v3050 = vld [vmem:[%s0 + $0x22] sm:$0xff]
    %v3051 = vld [vmem:[%s0 + $0x2a] sm:$0xff]
    %v3052 = vld [vmem:[%s0 + $0x32] sm:$0xff]
    %v3053 = vld [vmem:[%s0 + $0x3a] sm:$0xff]
    %v3054 = vld [vmem:[%s0 + $0x42] sm:$0xff]
    %v3055 = vld [vmem:[%s0 + $0x4a] sm:$0xff]
    %v3056 = vld [vmem:[%s0 + $0x52] sm:$0xff]
    %v3057 = vld [vmem:[%s0 + $0x5a] sm:$0xff]
    %v3058 = vld [vmem:[%s0 + $0x62] sm:$0xff]
    %v3059 = vld [vmem:[%s0 + $0x6a] sm:$0xff]
    %v3060 = vld [vmem:[%s0 + $0x72] sm:$0xff]
    %v3061 = vld [vmem:[%s0 + $0x7a] sm:$0xff]
    %v3062 = vld [vmem:[%s0 + $0x82] sm:$0xff]
    %v3063 = vld [vmem:[%s0 + $0x8a] sm:$0xff]
    %v3064 = vld [vmem:[%s0 + $0x92] sm:$0xff]
    %v3065 = vld [vmem:[%s0 + $0x9a] sm:$0xff]
    %v3066 = vld [vmem:[%s0 + $0xa2] sm:$0xff]
    %v3067 = vld [vmem:[%s0 + $0xaa] sm:$0xff]
    %v3068 = vld [vmem:[%s0 + $0xb2] sm:$0xff]
    %v3069 = vld [vmem:[%s0 + $0xba] sm:$0xff]
    %v3070 = vld [vmem:[%s0 + $0xc2] sm:$0xff]
    %v3071 = vld [vmem:[%s0 + $0xca] sm:$0xff]
    %v3072 = vld [vmem:[%s0 + $0xd2] sm:$0xff]
    %v3073 = vld [vmem:[%s0 + $0xda] sm:$0xff]
    %v3074 = vld [vmem:[%s0 + $0xe2] sm:$0xff]
    %v3075 = vld [vmem:[%s0 + $0xea] sm:$0xff]
    %v3076 = vld [vmem:[%s0 + $0xf2] sm:$0xff]
    %v3077 = vld [vmem:[%s0 + $0xfa] sm:$0xff]
    %v3078 = vld [vmem:[%s0 + $0x102] sm:$0xff]
    %v3079 = vld [vmem:[%s0 + $0x10a] sm:$0xff]
    %v3080 = vld [vmem:[%s0 + $0x112] sm:$0xff]
    %v3081 = vld [vmem:[%s0 + $0x11a] sm:$0xff]
    %s3082 = scalar_lea.vmem %s1, 128
    %v3083 = vld [vmem:[%s3082] sm:$0xff]
    %v3084 = vld [vmem:[%s3082 + $0x8] sm:$0x1f]
    %v3086 = vsel %vm110, %v3050, 0
    %v3089 = vsel %vm110, %v3051, 0
    %v3092 = vsel %vm110, %v3052, 0
    %v3095 = vsel %vm110, %v3053, 0
    %v3098 = vsel %vm110, %v3054, 0
    %v3101 = vsel %vm110, %v3055, 0
    %v3104 = vsel %vm110, %v3056, 0
    %v3107 = vsel %vm110, %v3057, 0
    %v3110 = vsel %vm110, %v3058, 0
    %v3113 = vsel %vm110, %v3059, 0
    %v3116 = vsel %vm110, %v3060, 0
    %v3119 = vsel %vm110, %v3061, 0
    %v3122 = vsel %vm110, %v3062, 0
    %v3125 = vsel %vm110, %v3063, 0
    %v3128 = vsel %vm110, %v3064, 0
    %v3131 = vsel %vm110, %v3065, 0
    %v3134 = vsel %vm110, %v3066, 0
    %v3137 = vsel %vm110, %v3067, 0
    %v3140 = vsel %vm110, %v3068, 0
    %v3143 = vsel %vm110, %v3069, 0
    %v3146 = vsel %vm110, %v3070, 0
    %v3149 = vsel %vm110, %v3071, 0
    %v3152 = vsel %vm110, %v3072, 0
    %v3155 = vsel %vm110, %v3073, 0
    %v3158 = vsel %vm110, %v3074, 0
    %v3161 = vsel %vm110, %v3075, 0
    %v3164 = vsel %vm110, %v3076, 0
    %v3167 = vsel %vm110, %v3077, 0
    %v3170 = vsel %vm110, %v3078, 0
    %v3173 = vsel %vm110, %v3079, 0
    %v3176 = vsel %vm110, %v3080, 0
    %v3179 = vsel %vm110, %v3081, 0
    %v3182 = vsel %vm207, %v3084, 0
    %3184 = vmatprep.subr.mxu0 0.0
    %3185 = vmatpush1.msra.mxu0 %v3083
    %3186 = vmatprep.subr.mxu0 0.0
    %3187 = vmatpush1.msra.mxu0 %v3182
    %3188 = vmatprep.subr.mxu0 0.0
    %3189 = vmatpush1.msra.mxu0 0.0
    %3190 = vmatprep.subr.mxu0 0.0
    %3191 = vmatpush1.msra.mxu0 0.0
    %3192 = vmatprep.subr.mxu0 0.0
    %3193 = vmatpush1.msra.mxu0 0.0
    %3194 = vmatprep.subr.mxu0 0.0
    %3195 = vmatpush1.msra.mxu0 0.0
    %3196 = vmatprep.subr.mxu0 0.0
    %3197 = vmatpush1.msra.mxu0 0.0
    %3198 = vmatprep.subr.mxu0 0.0
    %3199 = vmatpush1.msra.mxu0 0.0
    %3200 = vmatprep.subr.mxu0 0.0
    %3201 = vmatpush1.msra.mxu0 0.0
    %3202 = vmatprep.subr.mxu0 0.0
    %3203 = vmatpush1.msra.mxu0 0.0
    %3204 = vmatprep.subr.mxu0 0.0
    %3205 = vmatpush1.msra.mxu0 0.0
    %3206 = vmatprep.subr.mxu0 0.0
    %3207 = vmatpush1.msra.mxu0 0.0
    %3208 = vmatprep.subr.mxu0 0.0
    %3209 = vmatpush1.msra.mxu0 0.0
    %3210 = vmatprep.subr.mxu0 0.0
    %3211 = vmatpush1.msra.mxu0 0.0
    %3212 = vmatprep.subr.mxu0 0.0
    %3213 = vmatpush1.msra.mxu0 0.0
    %3214 = vmatprep.subr.mxu0 0.0
    %3215 = vmatpush1.msra.mxu0 0.0
    %3216 = vmatprep.subr.mxu0 0.0
    %3217 = vmatpush1.msra.mxu0 0.0
    %3218 = vmatprep.subr.mxu0 0.0
    %3219 = vmatpush1.msra.mxu0 0.0
    %3220 = vmatprep.subr.mxu0 0.0
    %3221 = vmatpush1.msra.mxu0 0.0
    %3222 = vmatprep.subr.mxu0 0.0
    %3223 = vmatpush1.msra.mxu0 0.0
    %3224 = vmatprep.subr.mxu0 0.0
    %3225 = vmatpush1.msra.mxu0 0.0
    %3226 = vmatprep.subr.mxu0 0.0
    %3227 = vmatpush1.msra.mxu0 0.0
    %3228 = vmatprep.subr.mxu0 0.0
    %3229 = vmatpush1.msra.mxu0 0.0
    %3230 = vmatprep.subr.mxu0 0.0
    %3231 = vmatpush1.msra.mxu0 0.0
    %3232 = vmatprep.subr.mxu0 0.0
    %3233 = vmatpush1.msra.mxu0 0.0
    %3234 = vmatprep.subr.mxu0 0.0
    %3235 = vmatpush1.msra.mxu0 0.0
    %3236 = vmatprep.subr.mxu0 0.0
    %3237 = vmatpush1.msra.mxu0 0.0
    %3238 = vmatprep.subr.mxu0 0.0
    %3239 = vmatpush1.msra.mxu0 0.0
    %3240 = vmatprep.subr.mxu0 0.0
    %3241 = vmatpush1.msra.mxu0 0.0
    %3242 = vmatprep.subr.mxu0 0.0
    %3243 = vmatpush1.msra.mxu0 0.0
    %3244 = vmatprep.subr.mxu0 0.0
    %3245 = vmatpush1.msra.mxu0 0.0
    %3246 = vmatprep.subr.mxu0 0.0
    %3247 = vmatpush1.msra.mxu0 0.0
    %3248 = vmatprep.mubr.f32.mxu0 0.0
    %3249 = vmatmul.mubr.f32.gmra.mrb[0].mxu0 %v3086
    %v3250 = vpop.f32.mrb[0].mxu0
    %v3251 = vadd.f32 0.0, %v3250
    %v3252 = vpop.f32.mrb[0].mxu0
    %3253 = vmatprep.mubr.f32.mxu0 0.0
    %3254 = vmatmul.mubr.f32.gmra.mrb[0].mxu0 %v3089
    %v3255 = vpop.f32.mrb[0].mxu0
    %v3256 = vadd.f32 0.0, %v3255
    %v3257 = vpop.f32.mrb[0].mxu0
    %3258 = vmatprep.mubr.f32.mxu0 0.0
    %3259 = vmatmul.mubr.f32.gmra.mrb[0].mxu0 %v3092
    %v3260 = vpop.f32.mrb[0].mxu0
    %v3261 = vadd.f32 0.0, %v3260
    %v3262 = vpop.f32.mrb[0].mxu0
    %3263 = vmatprep.mubr.f32.mxu0 0.0
    %3264 = vmatmul.mubr.f32.gmra.mrb[0].mxu0 %v3095
    %v3265 = vpop.f32.mrb[0].mxu0
    %v3266 = vadd.f32 0.0, %v3265
    %v3267 = vpop.f32.mrb[0].mxu0
    %3268 = vmatprep.mubr.f32.mxu0 0.0
    %3269 = vmatmul.mubr.f32.gmra.mrb[0].mxu0 %v3098
    %v3270 = vpop.f32.mrb[0].mxu0
    %v3271 = vadd.f32 0.0, %v3270
    %v3272 = vpop.f32.mrb[0].mxu0
    %3273 = vmatprep.mubr.f32.mxu0 0.0
    %3274 = vmatmul.mubr.f32.gmra.mrb[0].mxu0 %v3101
    %v3275 = vpop.f32.mrb[0].mxu0
    %v3276 = vadd.f32 0.0, %v3275
    %v3277 = vpop.f32.mrb[0].mxu0
    %3278 = vmatprep.mubr.f32.mxu0 0.0
    %3279 = vmatmul.mubr.f32.gmra.mrb[0].mxu0 %v3104
    %v3280 = vpop.f32.mrb[0].mxu0
    %v3281 = vadd.f32 0.0, %v3280
    %v3282 = vpop.f32.mrb[0].mxu0
    %3283 = vmatprep.mubr.f32.mxu0 0.0
    %3284 = vmatmul.mubr.f32.gmra.mrb[0].mxu0 %v3107
    %v3285 = vpop.f32.mrb[0].mxu0
    %v3286 = vadd.f32 0.0, %v3285
    %v3287 = vpop.f32.mrb[0].mxu0
    %3288 = vmatprep.mubr.f32.mxu0 0.0
    %3289 = vmatmul.mubr.f32.gmra.mrb[0].mxu0 %v3110
    %v3290 = vpop.f32.mrb[0].mxu0
    %v3291 = vadd.f32 0.0, %v3290
    %v3292 = vpop.f32.mrb[0].mxu0
    %3293 = vmatprep.mubr.f32.mxu0 0.0
    %3294 = vmatmul.mubr.f32.gmra.mrb[0].mxu0 %v3113
    %v3295 = vpop.f32.mrb[0].mxu0
    %v3296 = vadd.f32 0.0, %v3295
    %v3297 = vpop.f32.mrb[0].mxu0
    %3298 = vmatprep.mubr.f32.mxu0 0.0
    %3299 = vmatmul.mubr.f32.gmra.mrb[0].mxu0 %v3116
    %v3300 = vpop.f32.mrb[0].mxu0
    %v3301 = vadd.f32 0.0, %v3300
    %v3302 = vpop.f32.mrb[0].mxu0
    %3303 = vmatprep.mubr.f32.mxu0 0.0
    %3304 = vmatmul.mubr.f32.gmra.mrb[0].mxu0 %v3119
    %v3305 = vpop.f32.mrb[0].mxu0
    %v3306 = vadd.f32 0.0, %v3305
    %v3307 = vpop.f32.mrb[0].mxu0
    %3308 = vmatprep.mubr.f32.mxu0 0.0
    %3309 = vmatmul.mubr.f32.gmra.mrb[0].mxu0 %v3122
    %v3310 = vpop.f32.mrb[0].mxu0
    %v3311 = vadd.f32 0.0, %v3310
    %v3312 = vpop.f32.mrb[0].mxu0
    %3313 = vmatprep.mubr.f32.mxu0 0.0
    %3314 = vmatmul.mubr.f32.gmra.mrb[0].mxu0 %v3125
    %v3315 = vpop.f32.mrb[0].mxu0
    %v3316 = vadd.f32 0.0, %v3315
    %v3317 = vpop.f32.mrb[0].mxu0
    %3318 = vmatprep.mubr.f32.mxu0 0.0
    %3319 = vmatmul.mubr.f32.gmra.mrb[0].mxu0 %v3128
    %v3320 = vpop.f32.mrb[0].mxu0
    %v3321 = vpop.f32.mrb[0].mxu0
    %3322 = vmatprep.mubr.f32.mxu0 0.0
    %3323 = vmatmul.mubr.f32.gmra.mrb[0].mxu0 %v3131
    %v3324 = vpop.f32.mrb[0].mxu0
    %v3325 = vpop.f32.mrb[0].mxu0
    %3326 = vmatprep.mubr.f32.mxu0 0.0
    %3327 = vmatmul.mubr.f32.gmra.mrb[0].mxu0 %v3134
    %v3328 = vpop.f32.mrb[0].mxu0
    %v3329 = vpop.f32.mrb[0].mxu0
    %3330 = vmatprep.mubr.f32.mxu0 0.0
    %3331 = vmatmul.mubr.f32.gmra.mrb[0].mxu0 %v3137
    %v3332 = vpop.f32.mrb[0].mxu0
    %v3333 = vpop.f32.mrb[0].mxu0
    %3334 = vmatprep.mubr.f32.mxu0 0.0
    %3335 = vmatmul.mubr.f32.gmra.mrb[0].mxu0 %v3140
    %v3336 = vpop.f32.mrb[0].mxu0
    %v3337 = vadd.f32 0.0, %v3336
    %v3338 = vpop.f32.mrb[0].mxu0
    %3339 = vmatprep.mubr.f32.mxu0 0.0
    %3340 = vmatmul.mubr.f32.gmra.mrb[0].mxu0 %v3143
    %v3341 = vpop.f32.mrb[0].mxu0
    %v3342 = vadd.f32 0.0, %v3341
    %v3343 = vpop.f32.mrb[0].mxu0
    %3344 = vmatprep.mubr.f32.mxu0 0.0
    %3345 = vmatmul.mubr.f32.gmra.mrb[0].mxu0 %v3146
    %v3346 = vpop.f32.mrb[0].mxu0
    %v3347 = vadd.f32 0.0, %v3346
    %v3348 = vpop.f32.mrb[0].mxu0
    %3349 = vmatprep.mubr.f32.mxu0 0.0
    %3350 = vmatmul.mubr.f32.gmra.mrb[0].mxu0 %v3149
    %v3351 = vpop.f32.mrb[0].mxu0
    %v3352 = vadd.f32 0.0, %v3351
    %v3353 = vpop.f32.mrb[0].mxu0
    %3354 = vmatprep.mubr.f32.mxu0 0.0
    %3355 = vmatmul.mubr.f32.gmra.mrb[0].mxu0 %v3152
    %v3356 = vpop.f32.mrb[0].mxu0
    %v3357 = vadd.f32 0.0, %v3356
    %v3358 = vpop.f32.mrb[0].mxu0
    %3359 = vmatprep.mubr.f32.mxu0 0.0
    %3360 = vmatmul.mubr.f32.gmra.mrb[0].mxu0 %v3155
    %v3361 = vpop.f32.mrb[0].mxu0
    %v3362 = vadd.f32 0.0, %v3361
    %v3363 = vpop.f32.mrb[0].mxu0
    %3364 = vmatprep.mubr.f32.mxu0 0.0
    %3365 = vmatmul.mubr.f32.gmra.mrb[0].mxu0 %v3158
    %v3366 = vpop.f32.mrb[0].mxu0
    %v3367 = vadd.f32 0.0, %v3366
    %v3368 = vpop.f32.mrb[0].mxu0
    %3369 = vmatprep.mubr.f32.mxu0 0.0
    %3370 = vmatmul.mubr.f32.gmra.mrb[0].mxu0 %v3161
    %v3371 = vpop.f32.mrb[0].mxu0
    %v3372 = vadd.f32 0.0, %v3371
    %v3373 = vpop.f32.mrb[0].mxu0
    %3374 = vmatprep.mubr.f32.mxu0 0.0
    %3375 = vmatmul.mubr.f32.gmra.mrb[0].mxu0 %v3164
    %v3376 = vpop.f32.mrb[0].mxu0
    %v3377 = vadd.f32 0.0, %v3376
    %v3378 = vpop.f32.mrb[0].mxu0
    %3379 = vmatprep.mubr.f32.mxu0 0.0
    %3380 = vmatmul.mubr.f32.gmra.mrb[0].mxu0 %v3167
    %v3381 = vpop.f32.mrb[0].mxu0
    %v3382 = vadd.f32 0.0, %v3381
    %v3383 = vpop.f32.mrb[0].mxu0
    %3384 = vmatprep.mubr.f32.mxu0 0.0
    %3385 = vmatmul.mubr.f32.gmra.mrb[0].mxu0 %v3170
    %v3386 = vpop.f32.mrb[0].mxu0
    %v3387 = vadd.f32 0.0, %v3386
    %v3388 = vpop.f32.mrb[0].mxu0
    %3389 = vmatprep.mubr.f32.mxu0 0.0
    %3390 = vmatmul.mubr.f32.gmra.mrb[0].mxu0 %v3173
    %v3391 = vpop.f32.mrb[0].mxu0
    %v3392 = vadd.f32 0.0, %v3391
    %v3393 = vpop.f32.mrb[0].mxu0
    %3394 = vmatprep.mubr.f32.mxu0 0.0
    %3395 = vmatmul.mubr.f32.gmra.mrb[0].mxu0 %v3176
    %v3396 = vpop.f32.mrb[0].mxu0
    %v3397 = vadd.f32 0.0, %v3396
    %v3398 = vpop.f32.mrb[0].mxu0
    %3399 = vmatprep.mubr.f32.mxu0 0.0
    %3400 = vmatmul.mubr.f32.gmra.mrb[0].mxu0 %v3179
    %v3401 = vpop.f32.mrb[0].mxu0
    %v3402 = vadd.f32 0.0, %v3401
    %v3403 = vpop.f32.mrb[0].mxu0
    %3404 = vdwg.mxu0
    %v3405 = vadd.f32 %v3022, %v3251
    %v3406 = vadd.f32 %v3023, %v3256
    %v3407 = vadd.f32 %v3024, %v3261
    %v3408 = vadd.f32 %v3025, %v3266
    %v3409 = vadd.f32 %v3026, %v3271
    %v3410 = vadd.f32 %v3027, %v3276
    %v3411 = vadd.f32 %v3028, %v3281
    %v3412 = vadd.f32 %v3029, %v3286
    %v3413 = vadd.f32 %v3030, %v3291
    %v3414 = vadd.f32 %v3031, %v3296
    %v3415 = vadd.f32 %v3032, %v3301
    %v3416 = vadd.f32 %v3033, %v3306
    %v3417 = vadd.f32 %v3034, %v3311
    %v3418 = vadd.f32 %v3035, %v3316
    %v3419 = vadd.f32 %v3036, %v3337
    %v3420 = vadd.f32 %v3037, %v3342
    %v3421 = vadd.f32 %v3038, %v3347
    %v3422 = vadd.f32 %v3039, %v3352
    %v3423 = vadd.f32 %v3040, %v3357
    %v3424 = vadd.f32 %v3041, %v3362
    %v3425 = vadd.f32 %v3042, %v3367
    %v3426 = vadd.f32 %v3043, %v3372
    %v3427 = vadd.f32 %v3044, %v3377
    %v3428 = vadd.f32 %v3045, %v3382
    %v3429 = vadd.f32 %v3046, %v3387
    %v3430 = vadd.f32 %v3047, %v3392
    %v3431 = vadd.f32 %v3048, %v3397
    %v3432 = vadd.f32 %v3049, %v3402
    %v3433 = vld [vmem:[%s2] sm:$0x1]
    %v3435 = vlaneseq
    %v3436 = vshrl.u32 %v3435, 7
    %v3437 = vsub.s32 0, %v3436
    %v3438 = vrot.slane %v3433, %v3437
    %v3440 = vadd.f32 %v3405, %v3438
    %v3441 = vadd.f32 %v3406, %v3438
    %v3442 = vadd.f32 %v3407, %v3438
    %v3443 = vadd.f32 %v3408, %v3438
    %v3444 = vadd.f32 %v3409, %v3438
    %v3445 = vadd.f32 %v3410, %v3438
    %v3446 = vadd.f32 %v3411, %v3438
    %v3447 = vadd.f32 %v3412, %v3438
    %v3448 = vadd.f32 %v3413, %v3438
    %v3449 = vadd.f32 %v3414, %v3438
    %v3450 = vadd.f32 %v3415, %v3438
    %v3451 = vadd.f32 %v3416, %v3438
    %v3452 = vadd.f32 %v3417, %v3438
    %v3453 = vadd.f32 %v3418, %v3438
    %v3454 = vadd.f32 %v3419, %v3438
    %v3455 = vadd.f32 %v3420, %v3438
    %v3456 = vadd.f32 %v3421, %v3438
    %v3457 = vadd.f32 %v3422, %v3438
    %v3458 = vadd.f32 %v3423, %v3438
    %v3459 = vadd.f32 %v3424, %v3438
    %v3460 = vadd.f32 %v3425, %v3438
    %v3461 = vadd.f32 %v3426, %v3438
    %v3462 = vadd.f32 %v3427, %v3438
    %v3463 = vadd.f32 %v3428, %v3438
    %v3464 = vadd.f32 %v3429, %v3438
    %v3465 = vadd.f32 %v3430, %v3438
    %v3466 = vadd.f32 %v3431, %v3438
    %v3467 = vadd.f32 %v3432, %v3438
    %v3468 = vmax.f32 %v3440, 0.0
    %v3469 = vmax.f32 %v3441, 0.0
    %v3470 = vmax.f32 %v3442, 0.0
    %v3471 = vmax.f32 %v3443, 0.0
    %v3472 = vmax.f32 %v3444, 0.0
    %v3473 = vmax.f32 %v3445, 0.0
    %v3474 = vmax.f32 %v3446, 0.0
    %v3475 = vmax.f32 %v3447, 0.0
    %v3476 = vmax.f32 %v3448, 0.0
    %v3477 = vmax.f32 %v3449, 0.0
    %v3478 = vmax.f32 %v3450, 0.0
    %v3479 = vmax.f32 %v3451, 0.0
    %v3480 = vmax.f32 %v3452, 0.0
    %v3481 = vmax.f32 %v3453, 0.0
    %v3482 = vmax.f32 %v3454, 0.0
    %v3483 = vmax.f32 %v3455, 0.0
    %v3484 = vmax.f32 %v3456, 0.0
    %v3485 = vmax.f32 %v3457, 0.0
    %v3486 = vmax.f32 %v3458, 0.0
    %v3487 = vmax.f32 %v3459, 0.0
    %v3488 = vmax.f32 %v3460, 0.0
    %v3489 = vmax.f32 %v3461, 0.0
    %v3490 = vmax.f32 %v3462, 0.0
    %v3491 = vmax.f32 %v3463, 0.0
    %v3492 = vmax.f32 %v3464, 0.0
    %v3493 = vmax.f32 %v3465, 0.0
    %v3494 = vmax.f32 %v3466, 0.0
    %v3495 = vmax.f32 %v3467, 0.0
    %3496 = vst.msk [vmem:[#allocation2] sm:$0xff] %vm36, %v3468
    %3497 = vst.msk [vmem:[#allocation2 + $0x8] sm:$0xff] %vm36, %v3469
    %3498 = vst.msk [vmem:[#allocation2 + $0x10] sm:$0xff] %vm36, %v3470
    %3499 = vst.msk [vmem:[#allocation2 + $0x18] sm:$0xff] %vm36, %v3471
    %3500 = vst.msk [vmem:[#allocation2 + $0x20] sm:$0xff] %vm36, %v3472
    %3501 = vst.msk [vmem:[#allocation2 + $0x28] sm:$0xff] %vm36, %v3473
    %3502 = vst.msk [vmem:[#allocation2 + $0x30] sm:$0xff] %vm36, %v3474
    %3503 = vst.msk [vmem:[#allocation2 + $0x38] sm:$0xff] %vm36, %v3475
    %3504 = vst.msk [vmem:[#allocation2 + $0x40] sm:$0xff] %vm36, %v3476
    %3505 = vst.msk [vmem:[#allocation2 + $0x48] sm:$0xff] %vm36, %v3477
    %3506 = vst.msk [vmem:[#allocation2 + $0x50] sm:$0xff] %vm36, %v3478
    %3507 = vst.msk [vmem:[#allocation2 + $0x58] sm:$0xff] %vm36, %v3479
    %3508 = vst.msk [vmem:[#allocation2 + $0x60] sm:$0xff] %vm36, %v3480
    %3509 = vst.msk [vmem:[#allocation2 + $0x68] sm:$0xff] %vm36, %v3481
    %3510 = vst.msk [vmem:[#allocation2 + $0x70] sm:$0xff] %vm36, %v3482
    %3511 = vst.msk [vmem:[#allocation2 + $0x78] sm:$0xff] %vm36, %v3483
    %3512 = vst.msk [vmem:[#allocation2 + $0x80] sm:$0xff] %vm36, %v3484
    %3513 = vst.msk [vmem:[#allocation2 + $0x88] sm:$0xff] %vm36, %v3485
    %3514 = vst.msk [vmem:[#allocation2 + $0x90] sm:$0xff] %vm36, %v3486
    %3515 = vst.msk [vmem:[#allocation2 + $0x98] sm:$0xff] %vm36, %v3487
    %3516 = vst.msk [vmem:[#allocation2 + $0xa0] sm:$0xff] %vm36, %v3488
    %3517 = vst.msk [vmem:[#allocation2 + $0xa8] sm:$0xff] %vm36, %v3489
    %3518 = vst.msk [vmem:[#allocation2 + $0xb0] sm:$0xff] %vm36, %v3490
    %3519 = vst.msk [vmem:[#allocation2 + $0xb8] sm:$0xff] %vm36, %v3491
    %3520 = vst.msk [vmem:[#allocation2 + $0xc0] sm:$0xff] %vm36, %v3492
    %3521 = vst.msk [vmem:[#allocation2 + $0xc8] sm:$0xff] %vm36, %v3493
    %3522 = vst.msk [vmem:[#allocation2 + $0xd0] sm:$0xff] %vm36, %v3494
    %3523 = vst.msk [vmem:[#allocation2 + $0xd8] sm:$0xff] %vm36, %v3495
    %v3524 = vld [vmem:[#allocation2] sm:$0xff]
    %v3525 = vld [vmem:[#allocation2 + $0x8] sm:$0xff]
    %v3526 = vld [vmem:[#allocation2 + $0x10] sm:$0xff]
    %v3527 = vld [vmem:[#allocation2 + $0x18] sm:$0xff]
    %v3528 = vld [vmem:[#allocation2 + $0x20] sm:$0xff]
    %v3529 = vld [vmem:[#allocation2 + $0x28] sm:$0xff]
    %v3530 = vld [vmem:[#allocation2 + $0x30] sm:$0xff]
    %v3531 = vld [vmem:[#allocation2 + $0x38] sm:$0xff]
    %v3532 = vld [vmem:[#allocation2 + $0x40] sm:$0xff]
    %v3533 = vld [vmem:[#allocation2 + $0x48] sm:$0xff]
    %v3534 = vld [vmem:[#allocation2 + $0x50] sm:$0xff]
    %v3535 = vld [vmem:[#allocation2 + $0x58] sm:$0xff]
    %v3536 = vld [vmem:[#allocation2 + $0x60] sm:$0xff]
    %v3537 = vld [vmem:[#allocation2 + $0x68] sm:$0xff]
    %v3538 = vld [vmem:[#allocation2 + $0x70] sm:$0xff]
    %v3539 = vld [vmem:[#allocation2 + $0x78] sm:$0xff]
    %v3540 = vld [vmem:[#allocation2 + $0x80] sm:$0xff]
    %v3541 = vld [vmem:[#allocation2 + $0x88] sm:$0xff]
    %v3542 = vld [vmem:[#allocation2 + $0x90] sm:$0xff]
    %v3543 = vld [vmem:[#allocation2 + $0x98] sm:$0xff]
    %v3544 = vld [vmem:[#allocation2 + $0xa0] sm:$0xff]
    %v3545 = vld [vmem:[#allocation2 + $0xa8] sm:$0xff]
    %v3546 = vld [vmem:[#allocation2 + $0xb0] sm:$0xff]
    %v3547 = vld [vmem:[#allocation2 + $0xb8] sm:$0xff]
    %v3548 = vld [vmem:[%s3] sm:$0xff]
    %v3549 = vld [vmem:[%s3 + $0x8] sm:$0xff]
    %v3550 = vld [vmem:[%s3 + $0x10] sm:$0xff]
    %v3551 = vld [vmem:[%s3 + $0x18] sm:$0xff]
    %v3552 = vld [vmem:[%s3 + $0x20] sm:$0xff]
    %v3553 = vld [vmem:[%s3 + $0x28] sm:$0xff]
    %v3554 = vld [vmem:[%s3 + $0x30] sm:$0xff]
    %v3555 = vld [vmem:[%s3 + $0x38] sm:$0xff]
    %v3556 = vld [vmem:[#allocation2 + $0x1] sm:$0xff]
    %v3557 = vld [vmem:[#allocation2 + $0x9] sm:$0xff]
    %v3558 = vld [vmem:[#allocation2 + $0x11] sm:$0xff]
    %v3559 = vld [vmem:[#allocation2 + $0x19] sm:$0xff]
    %v3560 = vld [vmem:[#allocation2 + $0x21] sm:$0xff]
    %v3561 = vld [vmem:[#allocation2 + $0x29] sm:$0xff]
    %v3562 = vld [vmem:[#allocation2 + $0x31] sm:$0xff]
    %v3563 = vld [vmem:[#allocation2 + $0x39] sm:$0xff]
    %v3564 = vld [vmem:[#allocation2 + $0x41] sm:$0xff]
    %v3565 = vld [vmem:[#allocation2 + $0x49] sm:$0xff]
    %v3566 = vld [vmem:[#allocation2 + $0x51] sm:$0xff]
    %v3567 = vld [vmem:[#allocation2 + $0x59] sm:$0xff]
    %v3568 = vld [vmem:[#allocation2 + $0x61] sm:$0xff]
    %v3569 = vld [vmem:[#allocation2 + $0x69] sm:$0xff]
    %v3570 = vld [vmem:[#allocation2 + $0x71] sm:$0xff]
    %v3571 = vld [vmem:[#allocation2 + $0x79] sm:$0xff]
    %v3572 = vld [vmem:[#allocation2 + $0x81] sm:$0xff]
    %v3573 = vld [vmem:[#allocation2 + $0x89] sm:$0xff]
    %v3574 = vld [vmem:[#allocation2 + $0x91] sm:$0xff]
    %v3575 = vld [vmem:[#allocation2 + $0x99] sm:$0xff]
    %v3576 = vld [vmem:[#allocation2 + $0xa1] sm:$0xff]
    %v3577 = vld [vmem:[#allocation2 + $0xa9] sm:$0xff]
    %v3578 = vld [vmem:[#allocation2 + $0xb1] sm:$0xff]
    %v3579 = vld [vmem:[#allocation2 + $0xb9] sm:$0xff]
    %s3580 = scalar_lea.vmem %s3, 64
    %v3581 = vld [vmem:[%s3580] sm:$0xff]
    %v3582 = vld [vmem:[%s3580 + $0x8] sm:$0xff]
    %v3583 = vld [vmem:[%s3580 + $0x10] sm:$0xff]
    %v3584 = vld [vmem:[%s3580 + $0x18] sm:$0xff]
    %v3585 = vld [vmem:[%s3580 + $0x20] sm:$0xff]
    %v3586 = vld [vmem:[%s3580 + $0x28] sm:$0xff]
    %v3587 = vld [vmem:[%s3580 + $0x30] sm:$0xff]
    %v3588 = vld [vmem:[%s3580 + $0x38] sm:$0xff]
    %v3590 = vsel %vm36, %v3556, 0
    %v3593 = vsel %vm36, %v3557, 0
    %v3596 = vsel %vm36, %v3558, 0
    %v3599 = vsel %vm36, %v3559, 0
    %v3602 = vsel %vm36, %v3560, 0
    %v3605 = vsel %vm36, %v3561, 0
    %v3608 = vsel %vm36, %v3562, 0
    %v3611 = vsel %vm36, %v3563, 0
    %v3614 = vsel %vm36, %v3564, 0
    %v3617 = vsel %vm36, %v3565, 0
    %v3620 = vsel %vm36, %v3566, 0
    %v3623 = vsel %vm36, %v3567, 0
    %v3626 = vsel %vm36, %v3568, 0
    %v3629 = vsel %vm36, %v3569, 0
    %v3632 = vsel %vm36, %v3570, 0
    %v3635 = vsel %vm36, %v3571, 0
    %v3638 = vsel %vm36, %v3572, 0
    %v3641 = vsel %vm36, %v3573, 0
    %v3644 = vsel %vm36, %v3574, 0
    %v3647 = vsel %vm36, %v3575, 0
    %v3650 = vsel %vm36, %v3576, 0
    %v3653 = vsel %vm36, %v3577, 0
    %v3656 = vsel %vm36, %v3578, 0
    %v3659 = vsel %vm36, %v3579, 0
    %3661 = vmatprep.subr.mxu0 0.0
    %3662 = vmatpush1.msra.mxu0 %v3581
    %3663 = vmatprep.subr.mxu0 0.0
    %3664 = vmatpush1.msra.mxu0 %v3582
    %3665 = vmatprep.subr.mxu0 0.0
    %3666 = vmatpush1.msra.mxu0 %v3583
    %3667 = vmatprep.subr.mxu0 0.0
    %3668 = vmatpush1.msra.mxu0 %v3584
    %3669 = vmatprep.subr.mxu0 0.0
    %3670 = vmatpush1.msra.mxu0 %v3585
    %3671 = vmatprep.subr.mxu0 0.0
    %3672 = vmatpush1.msra.mxu0 %v3586
    %3673 = vmatprep.subr.mxu0 0.0
    %3674 = vmatpush1.msra.mxu0 %v3587
    %3675 = vmatprep.subr.mxu0 0.0
    %3676 = vmatpush1.msra.mxu0 %v3588
    %3677 = vmatprep.subr.mxu0 0.0
    %3678 = vmatpush1.msra.mxu0 0.0
    %3679 = vmatprep.subr.mxu0 0.0
    %3680 = vmatpush1.msra.mxu0 0.0
    %3681 = vmatprep.subr.mxu0 0.0
    %3682 = vmatpush1.msra.mxu0 0.0
    %3683 = vmatprep.subr.mxu0 0.0
    %3684 = vmatpush1.msra.mxu0 0.0
    %3685 = vmatprep.subr.mxu0 0.0
    %3686 = vmatpush1.msra.mxu0 0.0
    %3687 = vmatprep.subr.mxu0 0.0
    %3688 = vmatpush1.msra.mxu0 0.0
    %3689 = vmatprep.subr.mxu0 0.0
    %3690 = vmatpush1.msra.mxu0 0.0
    %3691 = vmatprep.subr.mxu0 0.0
    %3692 = vmatpush1.msra.mxu0 0.0
    %3693 = vmatprep.subr.mxu0 0.0
    %3694 = vmatpush1.msra.mxu0 0.0
    %3695 = vmatprep.subr.mxu0 0.0
    %3696 = vmatpush1.msra.mxu0 0.0
    %3697 = vmatprep.subr.mxu0 0.0
    %3698 = vmatpush1.msra.mxu0 0.0
    %3699 = vmatprep.subr.mxu0 0.0
    %3700 = vmatpush1.msra.mxu0 0.0
    %3701 = vmatprep.subr.mxu0 0.0
    %3702 = vmatpush1.msra.mxu0 0.0
    %3703 = vmatprep.subr.mxu0 0.0
    %3704 = vmatpush1.msra.mxu0 0.0
    %3705 = vmatprep.subr.mxu0 0.0
    %3706 = vmatpush1.msra.mxu0 0.0
    %3707 = vmatprep.subr.mxu0 0.0
    %3708 = vmatpush1.msra.mxu0 0.0
    %3709 = vmatprep.subr.mxu0 0.0
    %3710 = vmatpush1.msra.mxu0 0.0
    %3711 = vmatprep.subr.mxu0 0.0
    %3712 = vmatpush1.msra.mxu0 0.0
    %3713 = vmatprep.subr.mxu0 0.0
    %3714 = vmatpush1.msra.mxu0 0.0
    %3715 = vmatprep.subr.mxu0 0.0
    %3716 = vmatpush1.msra.mxu0 0.0
    %3717 = vmatprep.subr.mxu0 0.0
    %3718 = vmatpush1.msra.mxu0 0.0
    %3719 = vmatprep.subr.mxu0 0.0
    %3720 = vmatpush1.msra.mxu0 0.0
    %3721 = vmatprep.subr.mxu0 0.0
    %3722 = vmatpush1.msra.mxu0 0.0
    %3723 = vmatprep.subr.mxu0 0.0
    %3724 = vmatpush1.msra.mxu0 0.0
    %3725 = vmatprep.mubr.f32.mxu0 0.0
    %3726 = vmatmul.mubr.f32.gmra.mrb[0].mxu0 %v3590
    %v3727 = vpop.f32.mrb[0].mxu0
    %v3728 = vadd.f32 0.0, %v3727
    %v3729 = vpop.f32.mrb[0].mxu0
    %3730 = vmatprep.mubr.f32.mxu0 0.0
    %3731 = vmatmul.mubr.f32.gmra.mrb[0].mxu0 %v3593
    %v3732 = vpop.f32.mrb[0].mxu0
    %v3733 = vadd.f32 0.0, %v3732
    %v3734 = vpop.f32.mrb[0].mxu0
    %3735 = vmatprep.mubr.f32.mxu0 0.0
    %3736 = vmatmul.mubr.f32.gmra.mrb[0].mxu0 %v3596
    %v3737 = vpop.f32.mrb[0].mxu0
    %v3738 = vadd.f32 0.0, %v3737
    %v3739 = vpop.f32.mrb[0].mxu0
    %3740 = vmatprep.mubr.f32.mxu0 0.0
    %3741 = vmatmul.mubr.f32.gmra.mrb[0].mxu0 %v3599
    %v3742 = vpop.f32.mrb[0].mxu0
    %v3743 = vadd.f32 0.0, %v3742
    %v3744 = vpop.f32.mrb[0].mxu0
    %3745 = vmatprep.mubr.f32.mxu0 0.0
    %3746 = vmatmul.mubr.f32.gmra.mrb[0].mxu0 %v3602
    %v3747 = vpop.f32.mrb[0].mxu0
    %v3748 = vadd.f32 0.0, %v3747
    %v3749 = vpop.f32.mrb[0].mxu0
    %3750 = vmatprep.mubr.f32.mxu0 0.0
    %3751 = vmatmul.mubr.f32.gmra.mrb[0].mxu0 %v3605
    %v3752 = vpop.f32.mrb[0].mxu0
    %v3753 = vadd.f32 0.0, %v3752
    %v3754 = vpop.f32.mrb[0].mxu0
    %3755 = vmatprep.mubr.f32.mxu0 0.0
    %3756 = vmatmul.mubr.f32.gmra.mrb[0].mxu0 %v3608
    %v3757 = vpop.f32.mrb[0].mxu0
    %v3758 = vadd.f32 0.0, %v3757
    %v3759 = vpop.f32.mrb[0].mxu0
    %3760 = vmatprep.mubr.f32.mxu0 0.0
    %3761 = vmatmul.mubr.f32.gmra.mrb[0].mxu0 %v3611
    %v3762 = vpop.f32.mrb[0].mxu0
    %v3763 = vadd.f32 0.0, %v3762
    %v3764 = vpop.f32.mrb[0].mxu0
    %3765 = vmatprep.mubr.f32.mxu0 0.0
    %3766 = vmatmul.mubr.f32.gmra.mrb[0].mxu0 %v3614
    %v3767 = vpop.f32.mrb[0].mxu0
    %v3768 = vadd.f32 0.0, %v3767
    %v3769 = vpop.f32.mrb[0].mxu0
    %3770 = vmatprep.mubr.f32.mxu0 0.0
    %3771 = vmatmul.mubr.f32.gmra.mrb[0].mxu0 %v3617
    %v3772 = vpop.f32.mrb[0].mxu0
    %v3773 = vadd.f32 0.0, %v3772
    %v3774 = vpop.f32.mrb[0].mxu0
    %3775 = vmatprep.mubr.f32.mxu0 0.0
    %3776 = vmatmul.mubr.f32.gmra.mrb[0].mxu0 %v3620
    %v3777 = vpop.f32.mrb[0].mxu0
    %v3778 = vpop.f32.mrb[0].mxu0
    %3779 = vmatprep.mubr.f32.mxu0 0.0
    %3780 = vmatmul.mubr.f32.gmra.mrb[0].mxu0 %v3623
    %v3781 = vpop.f32.mrb[0].mxu0
    %v3782 = vpop.f32.mrb[0].mxu0
    %3783 = vmatprep.mubr.f32.mxu0 0.0
    %3784 = vmatmul.mubr.f32.gmra.mrb[0].mxu0 %v3626
    %v3785 = vpop.f32.mrb[0].mxu0
    %v3786 = vpop.f32.mrb[0].mxu0
    %3787 = vmatprep.mubr.f32.mxu0 0.0
    %3788 = vmatmul.mubr.f32.gmra.mrb[0].mxu0 %v3629
    %v3789 = vpop.f32.mrb[0].mxu0
    %v3790 = vpop.f32.mrb[0].mxu0
    %3791 = vmatprep.mubr.f32.mxu0 0.0
    %3792 = vmatmul.mubr.f32.gmra.mrb[0].mxu0 %v3632
    %v3793 = vpop.f32.mrb[0].mxu0
    %v3794 = vadd.f32 0.0, %v3793
    %v3795 = vpop.f32.mrb[0].mxu0
    %3796 = vmatprep.mubr.f32.mxu0 0.0
    %3797 = vmatmul.mubr.f32.gmra.mrb[0].mxu0 %v3635
    %v3798 = vpop.f32.mrb[0].mxu0
    %v3799 = vadd.f32 0.0, %v3798
    %v3800 = vpop.f32.mrb[0].mxu0
    %3801 = vmatprep.mubr.f32.mxu0 0.0
    %3802 = vmatmul.mubr.f32.gmra.mrb[0].mxu0 %v3638
    %v3803 = vpop.f32.mrb[0].mxu0
    %v3804 = vadd.f32 0.0, %v3803
    %v3805 = vpop.f32.mrb[0].mxu0
    %3806 = vmatprep.mubr.f32.mxu0 0.0
    %3807 = vmatmul.mubr.f32.gmra.mrb[0].mxu0 %v3641
    %v3808 = vpop.f32.mrb[0].mxu0
    %v3809 = vadd.f32 0.0, %v3808
    %v3810 = vpop.f32.mrb[0].mxu0
    %3811 = vmatprep.mubr.f32.mxu0 0.0
    %3812 = vmatmul.mubr.f32.gmra.mrb[0].mxu0 %v3644
    %v3813 = vpop.f32.mrb[0].mxu0
    %v3814 = vadd.f32 0.0, %v3813
    %v3815 = vpop.f32.mrb[0].mxu0
    %3816 = vmatprep.mubr.f32.mxu0 0.0
    %3817 = vmatmul.mubr.f32.gmra.mrb[0].mxu0 %v3647
    %v3818 = vpop.f32.mrb[0].mxu0
    %v3819 = vadd.f32 0.0, %v3818
    %v3820 = vpop.f32.mrb[0].mxu0
    %3821 = vmatprep.mubr.f32.mxu0 0.0
    %3822 = vmatmul.mubr.f32.gmra.mrb[0].mxu0 %v3650
    %v3823 = vpop.f32.mrb[0].mxu0
    %v3824 = vadd.f32 0.0, %v3823
    %v3825 = vpop.f32.mrb[0].mxu0
    %3826 = vmatprep.mubr.f32.mxu0 0.0
    %3827 = vmatmul.mubr.f32.gmra.mrb[0].mxu0 %v3653
    %v3828 = vpop.f32.mrb[0].mxu0
    %v3829 = vadd.f32 0.0, %v3828
    %v3830 = vpop.f32.mrb[0].mxu0
    %3831 = vmatprep.mubr.f32.mxu0 0.0
    %3832 = vmatmul.mubr.f32.gmra.mrb[0].mxu0 %v3656
    %v3833 = vpop.f32.mrb[0].mxu0
    %v3834 = vadd.f32 0.0, %v3833
    %v3835 = vpop.f32.mrb[0].mxu0
    %3836 = vmatprep.mubr.f32.mxu0 0.0
    %3837 = vmatmul.mubr.f32.gmra.mrb[0].mxu0 %v3659
    %v3838 = vpop.f32.mrb[0].mxu0
    %v3839 = vadd.f32 0.0, %v3838
    %v3840 = vpop.f32.mrb[0].mxu0
    %3841 = vdwg.mxu0
    %v3843 = vsel %vm36, %v3524, 0
    %v3846 = vsel %vm36, %v3525, 0
    %v3849 = vsel %vm36, %v3526, 0
    %v3852 = vsel %vm36, %v3527, 0
    %v3855 = vsel %vm36, %v3528, 0
    %v3858 = vsel %vm36, %v3529, 0
    %v3861 = vsel %vm36, %v3530, 0
    %v3864 = vsel %vm36, %v3531, 0
    %v3867 = vsel %vm36, %v3532, 0
    %v3870 = vsel %vm36, %v3533, 0
    %v3873 = vsel %vm36, %v3534, 0
    %v3876 = vsel %vm36, %v3535, 0
    %v3879 = vsel %vm36, %v3536, 0
    %v3882 = vsel %vm36, %v3537, 0
    %v3885 = vsel %vm36, %v3538, 0
    %v3888 = vsel %vm36, %v3539, 0
    %v3891 = vsel %vm36, %v3540, 0
    %v3894 = vsel %vm36, %v3541, 0
    %v3897 = vsel %vm36, %v3542, 0
    %v3900 = vsel %vm36, %v3543, 0
    %v3903 = vsel %vm36, %v3544, 0
    %v3906 = vsel %vm36, %v3545, 0
    %v3909 = vsel %vm36, %v3546, 0
    %v3912 = vsel %vm36, %v3547, 0
    %3914 = vmatprep.subr.mxu0 0.0
    %3915 = vmatpush1.msra.mxu0 %v3548
    %3916 = vmatprep.subr.mxu0 0.0
    %3917 = vmatpush1.msra.mxu0 %v3549
    %3918 = vmatprep.subr.mxu0 0.0
    %3919 = vmatpush1.msra.mxu0 %v3550
    %3920 = vmatprep.subr.mxu0 0.0
    %3921 = vmatpush1.msra.mxu0 %v3551
    %3922 = vmatprep.subr.mxu0 0.0
    %3923 = vmatpush1.msra.mxu0 %v3552
    %3924 = vmatprep.subr.mxu0 0.0
    %3925 = vmatpush1.msra.mxu0 %v3553
    %3926 = vmatprep.subr.mxu0 0.0
    %3927 = vmatpush1.msra.mxu0 %v3554
    %3928 = vmatprep.subr.mxu0 0.0
    %3929 = vmatpush1.msra.mxu0 %v3555
    %3930 = vmatprep.subr.mxu0 0.0
    %3931 = vmatpush1.msra.mxu0 0.0
    %3932 = vmatprep.subr.mxu0 0.0
    %3933 = vmatpush1.msra.mxu0 0.0
    %3934 = vmatprep.subr.mxu0 0.0
    %3935 = vmatpush1.msra.mxu0 0.0
    %3936 = vmatprep.subr.mxu0 0.0
    %3937 = vmatpush1.msra.mxu0 0.0
    %3938 = vmatprep.subr.mxu0 0.0
    %3939 = vmatpush1.msra.mxu0 0.0
    %3940 = vmatprep.subr.mxu0 0.0
    %3941 = vmatpush1.msra.mxu0 0.0
    %3942 = vmatprep.subr.mxu0 0.0
    %3943 = vmatpush1.msra.mxu0 0.0
    %3944 = vmatprep.subr.mxu0 0.0
    %3945 = vmatpush1.msra.mxu0 0.0
    %3946 = vmatprep.subr.mxu0 0.0
    %3947 = vmatpush1.msra.mxu0 0.0
    %3948 = vmatprep.subr.mxu0 0.0
    %3949 = vmatpush1.msra.mxu0 0.0
    %3950 = vmatprep.subr.mxu0 0.0
    %3951 = vmatpush1.msra.mxu0 0.0
    %3952 = vmatprep.subr.mxu0 0.0
    %3953 = vmatpush1.msra.mxu0 0.0
    %3954 = vmatprep.subr.mxu0 0.0
    %3955 = vmatpush1.msra.mxu0 0.0
    %3956 = vmatprep.subr.mxu0 0.0
    %3957 = vmatpush1.msra.mxu0 0.0
    %3958 = vmatprep.subr.mxu0 0.0
    %3959 = vmatpush1.msra.mxu0 0.0
    %3960 = vmatprep.subr.mxu0 0.0
    %3961 = vmatpush1.msra.mxu0 0.0
    %3962 = vmatprep.subr.mxu0 0.0
    %3963 = vmatpush1.msra.mxu0 0.0
    %3964 = vmatprep.subr.mxu0 0.0
    %3965 = vmatpush1.msra.mxu0 0.0
    %3966 = vmatprep.subr.mxu0 0.0
    %3967 = vmatpush1.msra.mxu0 0.0
    %3968 = vmatprep.subr.mxu0 0.0
    %3969 = vmatpush1.msra.mxu0 0.0
    %3970 = vmatprep.subr.mxu0 0.0
    %3971 = vmatpush1.msra.mxu0 0.0
    %3972 = vmatprep.subr.mxu0 0.0
    %3973 = vmatpush1.msra.mxu0 0.0
    %3974 = vmatprep.subr.mxu0 0.0
    %3975 = vmatpush1.msra.mxu0 0.0
    %3976 = vmatprep.subr.mxu0 0.0
    %3977 = vmatpush1.msra.mxu0 0.0
    %3978 = vmatprep.mubr.f32.mxu0 0.0
    %3979 = vmatmul.mubr.f32.gmra.mrb[0].mxu0 %v3843
    %v3980 = vpop.f32.mrb[0].mxu0
    %v3981 = vadd.f32 %v3728, %v3980
    %v3982 = vpop.f32.mrb[0].mxu0
    %3983 = vmatprep.mubr.f32.mxu0 0.0
    %3984 = vmatmul.mubr.f32.gmra.mrb[0].mxu0 %v3846
    %v3985 = vpop.f32.mrb[0].mxu0
    %v3986 = vadd.f32 %v3733, %v3985
    %v3987 = vpop.f32.mrb[0].mxu0
    %3988 = vmatprep.mubr.f32.mxu0 0.0
    %3989 = vmatmul.mubr.f32.gmra.mrb[0].mxu0 %v3849
    %v3990 = vpop.f32.mrb[0].mxu0
    %v3991 = vadd.f32 %v3738, %v3990
    %v3992 = vpop.f32.mrb[0].mxu0
    %3993 = vmatprep.mubr.f32.mxu0 0.0
    %3994 = vmatmul.mubr.f32.gmra.mrb[0].mxu0 %v3852
    %v3995 = vpop.f32.mrb[0].mxu0
    %v3996 = vadd.f32 %v3743, %v3995
    %v3997 = vpop.f32.mrb[0].mxu0
    %3998 = vmatprep.mubr.f32.mxu0 0.0
    %3999 = vmatmul.mubr.f32.gmra.mrb[0].mxu0 %v3855
    %v4000 = vpop.f32.mrb[0].mxu0
    %v4001 = vadd.f32 %v3748, %v4000
    %v4002 = vpop.f32.mrb[0].mxu0
    %4003 = vmatprep.mubr.f32.mxu0 0.0
    %4004 = vmatmul.mubr.f32.gmra.mrb[0].mxu0 %v3858
    %v4005 = vpop.f32.mrb[0].mxu0
    %v4006 = vadd.f32 %v3753, %v4005
    %v4007 = vpop.f32.mrb[0].mxu0
    %4008 = vmatprep.mubr.f32.mxu0 0.0
    %4009 = vmatmul.mubr.f32.gmra.mrb[0].mxu0 %v3861
    %v4010 = vpop.f32.mrb[0].mxu0
    %v4011 = vadd.f32 %v3758, %v4010
    %v4012 = vpop.f32.mrb[0].mxu0
    %4013 = vmatprep.mubr.f32.mxu0 0.0
    %4014 = vmatmul.mubr.f32.gmra.mrb[0].mxu0 %v3864
    %v4015 = vpop.f32.mrb[0].mxu0
    %v4016 = vadd.f32 %v3763, %v4015
    %v4017 = vpop.f32.mrb[0].mxu0
    %4018 = vmatprep.mubr.f32.mxu0 0.0
    %4019 = vmatmul.mubr.f32.gmra.mrb[0].mxu0 %v3867
    %v4020 = vpop.f32.mrb[0].mxu0
    %v4021 = vadd.f32 %v3768, %v4020
    %v4022 = vpop.f32.mrb[0].mxu0
    %4023 = vmatprep.mubr.f32.mxu0 0.0
    %4024 = vmatmul.mubr.f32.gmra.mrb[0].mxu0 %v3870
    %v4025 = vpop.f32.mrb[0].mxu0
    %v4026 = vadd.f32 %v3773, %v4025
    %v4027 = vpop.f32.mrb[0].mxu0
    %4028 = vmatprep.mubr.f32.mxu0 0.0
    %4029 = vmatmul.mubr.f32.gmra.mrb[0].mxu0 %v3873
    %v4030 = vpop.f32.mrb[0].mxu0
    %v4031 = vpop.f32.mrb[0].mxu0
    %4032 = vmatprep.mubr.f32.mxu0 0.0
    %4033 = vmatmul.mubr.f32.gmra.mrb[0].mxu0 %v3876
    %v4034 = vpop.f32.mrb[0].mxu0
    %v4035 = vpop.f32.mrb[0].mxu0
    %4036 = vmatprep.mubr.f32.mxu0 0.0
    %4037 = vmatmul.mubr.f32.gmra.mrb[0].mxu0 %v3879
    %v4038 = vpop.f32.mrb[0].mxu0
    %v4039 = vpop.f32.mrb[0].mxu0
    %4040 = vmatprep.mubr.f32.mxu0 0.0
    %4041 = vmatmul.mubr.f32.gmra.mrb[0].mxu0 %v3882
    %v4042 = vpop.f32.mrb[0].mxu0
    %v4043 = vpop.f32.mrb[0].mxu0
    %4044 = vmatprep.mubr.f32.mxu0 0.0
    %4045 = vmatmul.mubr.f32.gmra.mrb[0].mxu0 %v3885
    %v4046 = vpop.f32.mrb[0].mxu0
    %v4047 = vadd.f32 %v3794, %v4046
    %v4048 = vpop.f32.mrb[0].mxu0
    %4049 = vmatprep.mubr.f32.mxu0 0.0
    %4050 = vmatmul.mubr.f32.gmra.mrb[0].mxu0 %v3888
    %v4051 = vpop.f32.mrb[0].mxu0
    %v4052 = vadd.f32 %v3799, %v4051
    %v4053 = vpop.f32.mrb[0].mxu0
    %4054 = vmatprep.mubr.f32.mxu0 0.0
    %4055 = vmatmul.mubr.f32.gmra.mrb[0].mxu0 %v3891
    %v4056 = vpop.f32.mrb[0].mxu0
    %v4057 = vadd.f32 %v3804, %v4056
    %v4058 = vpop.f32.mrb[0].mxu0
    %4059 = vmatprep.mubr.f32.mxu0 0.0
    %4060 = vmatmul.mubr.f32.gmra.mrb[0].mxu0 %v3894
    %v4061 = vpop.f32.mrb[0].mxu0
    %v4062 = vadd.f32 %v3809, %v4061
    %v4063 = vpop.f32.mrb[0].mxu0
    %4064 = vmatprep.mubr.f32.mxu0 0.0
    %4065 = vmatmul.mubr.f32.gmra.mrb[0].mxu0 %v3897
    %v4066 = vpop.f32.mrb[0].mxu0
    %v4067 = vadd.f32 %v3814, %v4066
    %v4068 = vpop.f32.mrb[0].mxu0
    %4069 = vmatprep.mubr.f32.mxu0 0.0
    %4070 = vmatmul.mubr.f32.gmra.mrb[0].mxu0 %v3900
    %v4071 = vpop.f32.mrb[0].mxu0
    %v4072 = vadd.f32 %v3819, %v4071
    %v4073 = vpop.f32.mrb[0].mxu0
    %4074 = vmatprep.mubr.f32.mxu0 0.0
    %4075 = vmatmul.mubr.f32.gmra.mrb[0].mxu0 %v3903
    %v4076 = vpop.f32.mrb[0].mxu0
    %v4077 = vadd.f32 %v3824, %v4076
    %v4078 = vpop.f32.mrb[0].mxu0
    %4079 = vmatprep.mubr.f32.mxu0 0.0
    %4080 = vmatmul.mubr.f32.gmra.mrb[0].mxu0 %v3906
    %v4081 = vpop.f32.mrb[0].mxu0
    %v4082 = vadd.f32 %v3829, %v4081
    %v4083 = vpop.f32.mrb[0].mxu0
    %4084 = vmatprep.mubr.f32.mxu0 0.0
    %4085 = vmatmul.mubr.f32.gmra.mrb[0].mxu0 %v3909
    %v4086 = vpop.f32.mrb[0].mxu0
    %v4087 = vadd.f32 %v3834, %v4086
    %v4088 = vpop.f32.mrb[0].mxu0
    %4089 = vmatprep.mubr.f32.mxu0 0.0
    %4090 = vmatmul.mubr.f32.gmra.mrb[0].mxu0 %v3912
    %v4091 = vpop.f32.mrb[0].mxu0
    %v4092 = vadd.f32 %v3839, %v4091
    %v4093 = vpop.f32.mrb[0].mxu0
    %4094 = vdwg.mxu0
    %v4095 = vld [vmem:[#allocation2 + $0x2] sm:$0xff]
    %v4096 = vld [vmem:[#allocation2 + $0xa] sm:$0xff]
    %v4097 = vld [vmem:[#allocation2 + $0x12] sm:$0xff]
    %v4098 = vld [vmem:[#allocation2 + $0x1a] sm:$0xff]
    %v4099 = vld [vmem:[#allocation2 + $0x22] sm:$0xff]
    %v4100 = vld [vmem:[#allocation2 + $0x2a] sm:$0xff]
    %v4101 = vld [vmem:[#allocation2 + $0x32] sm:$0xff]
    %v4102 = vld [vmem:[#allocation2 + $0x3a] sm:$0xff]
    %v4103 = vld [vmem:[#allocation2 + $0x42] sm:$0xff]
    %v4104 = vld [vmem:[#allocation2 + $0x4a] sm:$0xff]
    %v4105 = vld [vmem:[#allocation2 + $0x52] sm:$0xff]
    %v4106 = vld [vmem:[#allocation2 + $0x5a] sm:$0xff]
    %v4107 = vld [vmem:[#allocation2 + $0x62] sm:$0xff]
    %v4108 = vld [vmem:[#allocation2 + $0x6a] sm:$0xff]
    %v4109 = vld [vmem:[#allocation2 + $0x72] sm:$0xff]
    %v4110 = vld [vmem:[#allocation2 + $0x7a] sm:$0xff]
    %v4111 = vld [vmem:[#allocation2 + $0x82] sm:$0xff]
    %v4112 = vld [vmem:[#allocation2 + $0x8a] sm:$0xff]
    %v4113 = vld [vmem:[#allocation2 + $0x92] sm:$0xff]
    %v4114 = vld [vmem:[#allocation2 + $0x9a] sm:$0xff]
    %v4115 = vld [vmem:[#allocation2 + $0xa2] sm:$0xff]
    %v4116 = vld [vmem:[#allocation2 + $0xaa] sm:$0xff]
    %v4117 = vld [vmem:[#allocation2 + $0xb2] sm:$0xff]
    %v4118 = vld [vmem:[#allocation2 + $0xba] sm:$0xff]
    %s4119 = scalar_lea.vmem %s3, 128
    %v4120 = vld [vmem:[%s4119] sm:$0xff]
    %v4121 = vld [vmem:[%s4119 + $0x8] sm:$0xff]
    %v4122 = vld [vmem:[%s4119 + $0x10] sm:$0xff]
    %v4123 = vld [vmem:[%s4119 + $0x18] sm:$0xff]
    %v4124 = vld [vmem:[%s4119 + $0x20] sm:$0xff]
    %v4125 = vld [vmem:[%s4119 + $0x28] sm:$0xff]
    %v4126 = vld [vmem:[%s4119 + $0x30] sm:$0xff]
    %v4127 = vld [vmem:[%s4119 + $0x38] sm:$0xff]
    %v4129 = vsel %vm36, %v4095, 0
    %v4132 = vsel %vm36, %v4096, 0
    %v4135 = vsel %vm36, %v4097, 0
    %v4138 = vsel %vm36, %v4098, 0
    %v4141 = vsel %vm36, %v4099, 0
    %v4144 = vsel %vm36, %v4100, 0
    %v4147 = vsel %vm36, %v4101, 0
    %v4150 = vsel %vm36, %v4102, 0
    %v4153 = vsel %vm36, %v4103, 0
    %v4156 = vsel %vm36, %v4104, 0
    %v4159 = vsel %vm36, %v4105, 0
    %v4162 = vsel %vm36, %v4106, 0
    %v4165 = vsel %vm36, %v4107, 0
    %v4168 = vsel %vm36, %v4108, 0
    %v4171 = vsel %vm36, %v4109, 0
    %v4174 = vsel %vm36, %v4110, 0
    %v4177 = vsel %vm36, %v4111, 0
    %v4180 = vsel %vm36, %v4112, 0
    %v4183 = vsel %vm36, %v4113, 0
    %v4186 = vsel %vm36, %v4114, 0
    %v4189 = vsel %vm36, %v4115, 0
    %v4192 = vsel %vm36, %v4116, 0
    %v4195 = vsel %vm36, %v4117, 0
    %v4198 = vsel %vm36, %v4118, 0
    %4200 = vmatprep.subr.mxu0 0.0
    %4201 = vmatpush1.msra.mxu0 %v4120
    %4202 = vmatprep.subr.mxu0 0.0
    %4203 = vmatpush1.msra.mxu0 %v4121
    %4204 = vmatprep.subr.mxu0 0.0
    %4205 = vmatpush1.msra.mxu0 %v4122
    %4206 = vmatprep.subr.mxu0 0.0
    %4207 = vmatpush1.msra.mxu0 %v4123
    %4208 = vmatprep.subr.mxu0 0.0
    %4209 = vmatpush1.msra.mxu0 %v4124
    %4210 = vmatprep.subr.mxu0 0.0
    %4211 = vmatpush1.msra.mxu0 %v4125
    %4212 = vmatprep.subr.mxu0 0.0
    %4213 = vmatpush1.msra.mxu0 %v4126
    %4214 = vmatprep.subr.mxu0 0.0
    %4215 = vmatpush1.msra.mxu0 %v4127
    %4216 = vmatprep.subr.mxu0 0.0
    %4217 = vmatpush1.msra.mxu0 0.0
    %4218 = vmatprep.subr.mxu0 0.0
    %4219 = vmatpush1.msra.mxu0 0.0
    %4220 = vmatprep.subr.mxu0 0.0
    %4221 = vmatpush1.msra.mxu0 0.0
    %4222 = vmatprep.subr.mxu0 0.0
    %4223 = vmatpush1.msra.mxu0 0.0
    %4224 = vmatprep.subr.mxu0 0.0
    %4225 = vmatpush1.msra.mxu0 0.0
    %4226 = vmatprep.subr.mxu0 0.0
    %4227 = vmatpush1.msra.mxu0 0.0
    %4228 = vmatprep.subr.mxu0 0.0
    %4229 = vmatpush1.msra.mxu0 0.0
    %4230 = vmatprep.subr.mxu0 0.0
    %4231 = vmatpush1.msra.mxu0 0.0
    %4232 = vmatprep.subr.mxu0 0.0
    %4233 = vmatpush1.msra.mxu0 0.0
    %4234 = vmatprep.subr.mxu0 0.0
    %4235 = vmatpush1.msra.mxu0 0.0
    %4236 = vmatprep.subr.mxu0 0.0
    %4237 = vmatpush1.msra.mxu0 0.0
    %4238 = vmatprep.subr.mxu0 0.0
    %4239 = vmatpush1.msra.mxu0 0.0
    %4240 = vmatprep.subr.mxu0 0.0
    %4241 = vmatpush1.msra.mxu0 0.0
    %4242 = vmatprep.subr.mxu0 0.0
    %4243 = vmatpush1.msra.mxu0 0.0
    %4244 = vmatprep.subr.mxu0 0.0
    %4245 = vmatpush1.msra.mxu0 0.0
    %4246 = vmatprep.subr.mxu0 0.0
    %4247 = vmatpush1.msra.mxu0 0.0
    %4248 = vmatprep.subr.mxu0 0.0
    %4249 = vmatpush1.msra.mxu0 0.0
    %4250 = vmatprep.subr.mxu0 0.0
    %4251 = vmatpush1.msra.mxu0 0.0
    %4252 = vmatprep.subr.mxu0 0.0
    %4253 = vmatpush1.msra.mxu0 0.0
    %4254 = vmatprep.subr.mxu0 0.0
    %4255 = vmatpush1.msra.mxu0 0.0
    %4256 = vmatprep.subr.mxu0 0.0
    %4257 = vmatpush1.msra.mxu0 0.0
    %4258 = vmatprep.subr.mxu0 0.0
    %4259 = vmatpush1.msra.mxu0 0.0
    %4260 = vmatprep.subr.mxu0 0.0
    %4261 = vmatpush1.msra.mxu0 0.0
    %4262 = vmatprep.subr.mxu0 0.0
    %4263 = vmatpush1.msra.mxu0 0.0
    %4264 = vmatprep.mubr.f32.mxu0 0.0
    %4265 = vmatmul.mubr.f32.gmra.mrb[0].mxu0 %v4129
    %v4266 = vpop.f32.mrb[0].mxu0
    %v4267 = vadd.f32 0.0, %v4266
    %v4268 = vpop.f32.mrb[0].mxu0
    %4269 = vmatprep.mubr.f32.mxu0 0.0
    %4270 = vmatmul.mubr.f32.gmra.mrb[0].mxu0 %v4132
    %v4271 = vpop.f32.mrb[0].mxu0
    %v4272 = vadd.f32 0.0, %v4271
    %v4273 = vpop.f32.mrb[0].mxu0
    %4274 = vmatprep.mubr.f32.mxu0 0.0
    %4275 = vmatmul.mubr.f32.gmra.mrb[0].mxu0 %v4135
    %v4276 = vpop.f32.mrb[0].mxu0
    %v4277 = vadd.f32 0.0, %v4276
    %v4278 = vpop.f32.mrb[0].mxu0
    %4279 = vmatprep.mubr.f32.mxu0 0.0
    %4280 = vmatmul.mubr.f32.gmra.mrb[0].mxu0 %v4138
    %v4281 = vpop.f32.mrb[0].mxu0
    %v4282 = vadd.f32 0.0, %v4281
    %v4283 = vpop.f32.mrb[0].mxu0
    %4284 = vmatprep.mubr.f32.mxu0 0.0
    %4285 = vmatmul.mubr.f32.gmra.mrb[0].mxu0 %v4141
    %v4286 = vpop.f32.mrb[0].mxu0
    %v4287 = vadd.f32 0.0, %v4286
    %v4288 = vpop.f32.mrb[0].mxu0
    %4289 = vmatprep.mubr.f32.mxu0 0.0
    %4290 = vmatmul.mubr.f32.gmra.mrb[0].mxu0 %v4144
    %v4291 = vpop.f32.mrb[0].mxu0
    %v4292 = vadd.f32 0.0, %v4291
    %v4293 = vpop.f32.mrb[0].mxu0
    %4294 = vmatprep.mubr.f32.mxu0 0.0
    %4295 = vmatmul.mubr.f32.gmra.mrb[0].mxu0 %v4147
    %v4296 = vpop.f32.mrb[0].mxu0
    %v4297 = vadd.f32 0.0, %v4296
    %v4298 = vpop.f32.mrb[0].mxu0
    %4299 = vmatprep.mubr.f32.mxu0 0.0
    %4300 = vmatmul.mubr.f32.gmra.mrb[0].mxu0 %v4150
    %v4301 = vpop.f32.mrb[0].mxu0
    %v4302 = vadd.f32 0.0, %v4301
    %v4303 = vpop.f32.mrb[0].mxu0
    %4304 = vmatprep.mubr.f32.mxu0 0.0
    %4305 = vmatmul.mubr.f32.gmra.mrb[0].mxu0 %v4153
    %v4306 = vpop.f32.mrb[0].mxu0
    %v4307 = vadd.f32 0.0, %v4306
    %v4308 = vpop.f32.mrb[0].mxu0
    %4309 = vmatprep.mubr.f32.mxu0 0.0
    %4310 = vmatmul.mubr.f32.gmra.mrb[0].mxu0 %v4156
    %v4311 = vpop.f32.mrb[0].mxu0
    %v4312 = vadd.f32 0.0, %v4311
    %v4313 = vpop.f32.mrb[0].mxu0
    %4314 = vmatprep.mubr.f32.mxu0 0.0
    %4315 = vmatmul.mubr.f32.gmra.mrb[0].mxu0 %v4159
    %v4316 = vpop.f32.mrb[0].mxu0
    %v4317 = vpop.f32.mrb[0].mxu0
    %4318 = vmatprep.mubr.f32.mxu0 0.0
    %4319 = vmatmul.mubr.f32.gmra.mrb[0].mxu0 %v4162
    %v4320 = vpop.f32.mrb[0].mxu0
    %v4321 = vpop.f32.mrb[0].mxu0
    %4322 = vmatprep.mubr.f32.mxu0 0.0
    %4323 = vmatmul.mubr.f32.gmra.mrb[0].mxu0 %v4165
    %v4324 = vpop.f32.mrb[0].mxu0
    %v4325 = vpop.f32.mrb[0].mxu0
    %4326 = vmatprep.mubr.f32.mxu0 0.0
    %4327 = vmatmul.mubr.f32.gmra.mrb[0].mxu0 %v4168
    %v4328 = vpop.f32.mrb[0].mxu0
    %v4329 = vpop.f32.mrb[0].mxu0
    %4330 = vmatprep.mubr.f32.mxu0 0.0
    %4331 = vmatmul.mubr.f32.gmra.mrb[0].mxu0 %v4171
    %v4332 = vpop.f32.mrb[0].mxu0
    %v4333 = vadd.f32 0.0, %v4332
    %v4334 = vpop.f32.mrb[0].mxu0
    %4335 = vmatprep.mubr.f32.mxu0 0.0
    %4336 = vmatmul.mubr.f32.gmra.mrb[0].mxu0 %v4174
    %v4337 = vpop.f32.mrb[0].mxu0
    %v4338 = vadd.f32 0.0, %v4337
    %v4339 = vpop.f32.mrb[0].mxu0
    %4340 = vmatprep.mubr.f32.mxu0 0.0
    %4341 = vmatmul.mubr.f32.gmra.mrb[0].mxu0 %v4177
    %v4342 = vpop.f32.mrb[0].mxu0
    %v4343 = vadd.f32 0.0, %v4342
    %v4344 = vpop.f32.mrb[0].mxu0
    %4345 = vmatprep.mubr.f32.mxu0 0.0
    %4346 = vmatmul.mubr.f32.gmra.mrb[0].mxu0 %v4180
    %v4347 = vpop.f32.mrb[0].mxu0
    %v4348 = vadd.f32 0.0, %v4347
    %v4349 = vpop.f32.mrb[0].mxu0
    %4350 = vmatprep.mubr.f32.mxu0 0.0
    %4351 = vmatmul.mubr.f32.gmra.mrb[0].mxu0 %v4183
    %v4352 = vpop.f32.mrb[0].mxu0
    %v4353 = vadd.f32 0.0, %v4352
    %v4354 = vpop.f32.mrb[0].mxu0
    %4355 = vmatprep.mubr.f32.mxu0 0.0
    %4356 = vmatmul.mubr.f32.gmra.mrb[0].mxu0 %v4186
    %v4357 = vpop.f32.mrb[0].mxu0
    %v4358 = vadd.f32 0.0, %v4357
    %v4359 = vpop.f32.mrb[0].mxu0
    %4360 = vmatprep.mubr.f32.mxu0 0.0
    %4361 = vmatmul.mubr.f32.gmra.mrb[0].mxu0 %v4189
    %v4362 = vpop.f32.mrb[0].mxu0
    %v4363 = vadd.f32 0.0, %v4362
    %v4364 = vpop.f32.mrb[0].mxu0
    %4365 = vmatprep.mubr.f32.mxu0 0.0
    %4366 = vmatmul.mubr.f32.gmra.mrb[0].mxu0 %v4192
    %v4367 = vpop.f32.mrb[0].mxu0
    %v4368 = vadd.f32 0.0, %v4367
    %v4369 = vpop.f32.mrb[0].mxu0
    %4370 = vmatprep.mubr.f32.mxu0 0.0
    %4371 = vmatmul.mubr.f32.gmra.mrb[0].mxu0 %v4195
    %v4372 = vpop.f32.mrb[0].mxu0
    %v4373 = vadd.f32 0.0, %v4372
    %v4374 = vpop.f32.mrb[0].mxu0
    %4375 = vmatprep.mubr.f32.mxu0 0.0
    %4376 = vmatmul.mubr.f32.gmra.mrb[0].mxu0 %v4198
    %v4377 = vpop.f32.mrb[0].mxu0
    %v4378 = vadd.f32 0.0, %v4377
    %v4379 = vpop.f32.mrb[0].mxu0
    %4380 = vdwg.mxu0
    %v4381 = vadd.f32 %v3981, %v4267
    %v4382 = vadd.f32 %v3986, %v4272
    %v4383 = vadd.f32 %v3991, %v4277
    %v4384 = vadd.f32 %v3996, %v4282
    %v4385 = vadd.f32 %v4001, %v4287
    %v4386 = vadd.f32 %v4006, %v4292
    %v4387 = vadd.f32 %v4011, %v4297
    %v4388 = vadd.f32 %v4016, %v4302
    %v4389 = vadd.f32 %v4021, %v4307
    %v4390 = vadd.f32 %v4026, %v4312
    %v4391 = vadd.f32 %v4047, %v4333
    %v4392 = vadd.f32 %v4052, %v4338
    %v4393 = vadd.f32 %v4057, %v4343
    %v4394 = vadd.f32 %v4062, %v4348
    %v4395 = vadd.f32 %v4067, %v4353
    %v4396 = vadd.f32 %v4072, %v4358
    %v4397 = vadd.f32 %v4077, %v4363
    %v4398 = vadd.f32 %v4082, %v4368
    %v4399 = vadd.f32 %v4087, %v4373
    %v4400 = vadd.f32 %v4092, %v4378
    %v4401 = vld [vmem:[#allocation2 + $0x10] sm:$0xff]
    %v4402 = vld [vmem:[#allocation2 + $0x18] sm:$0xff]
    %v4403 = vld [vmem:[#allocation2 + $0x20] sm:$0xff]
    %v4404 = vld [vmem:[#allocation2 + $0x28] sm:$0xff]
    %v4405 = vld [vmem:[#allocation2 + $0x30] sm:$0xff]
    %v4406 = vld [vmem:[#allocation2 + $0x38] sm:$0xff]
    %v4407 = vld [vmem:[#allocation2 + $0x40] sm:$0xff]
    %v4408 = vld [vmem:[#allocation2 + $0x48] sm:$0xff]
    %v4409 = vld [vmem:[#allocation2 + $0x50] sm:$0xff]
    %v4410 = vld [vmem:[#allocation2 + $0x58] sm:$0xff]
    %v4411 = vld [vmem:[#allocation2 + $0x60] sm:$0xff]
    %v4412 = vld [vmem:[#allocation2 + $0x68] sm:$0xff]
    %v4413 = vld [vmem:[#allocation2 + $0x70] sm:$0xff]
    %v4414 = vld [vmem:[#allocation2 + $0x78] sm:$0xff]
    %v4415 = vld [vmem:[#allocation2 + $0x80] sm:$0xff]
    %v4416 = vld [vmem:[#allocation2 + $0x88] sm:$0xff]
    %v4417 = vld [vmem:[#allocation2 + $0x90] sm:$0xff]
    %v4418 = vld [vmem:[#allocation2 + $0x98] sm:$0xff]
    %v4419 = vld [vmem:[#allocation2 + $0xa0] sm:$0xff]
    %v4420 = vld [vmem:[#allocation2 + $0xa8] sm:$0xff]
    %v4421 = vld [vmem:[#allocation2 + $0xb0] sm:$0xff]
    %v4422 = vld [vmem:[#allocation2 + $0xb8] sm:$0xff]
    %v4423 = vld [vmem:[#allocation2 + $0xc0] sm:$0xff]
    %v4424 = vld [vmem:[#allocation2 + $0xc8] sm:$0xff]
    %s4425 = scalar_lea.vmem %s3, 192
    %v4426 = vld [vmem:[%s4425] sm:$0xff]
    %v4427 = vld [vmem:[%s4425 + $0x8] sm:$0xff]
    %v4428 = vld [vmem:[%s4425 + $0x10] sm:$0xff]
    %v4429 = vld [vmem:[%s4425 + $0x18] sm:$0xff]
    %v4430 = vld [vmem:[%s4425 + $0x20] sm:$0xff]
    %v4431 = vld [vmem:[%s4425 + $0x28] sm:$0xff]
    %v4432 = vld [vmem:[%s4425 + $0x30] sm:$0xff]
    %v4433 = vld [vmem:[%s4425 + $0x38] sm:$0xff]
    %v4435 = vsel %vm36, %v4401, 0
    %v4438 = vsel %vm36, %v4402, 0
    %v4441 = vsel %vm36, %v4403, 0
    %v4444 = vsel %vm36, %v4404, 0
    %v4447 = vsel %vm36, %v4405, 0
    %v4450 = vsel %vm36, %v4406, 0
    %v4453 = vsel %vm36, %v4407, 0
    %v4456 = vsel %vm36, %v4408, 0
    %v4459 = vsel %vm36, %v4409, 0
    %v4462 = vsel %vm36, %v4410, 0
    %v4465 = vsel %vm36, %v4411, 0
    %v4468 = vsel %vm36, %v4412, 0
    %v4471 = vsel %vm36, %v4413, 0
    %v4474 = vsel %vm36, %v4414, 0
    %v4477 = vsel %vm36, %v4415, 0
    %v4480 = vsel %vm36, %v4416, 0
    %v4483 = vsel %vm36, %v4417, 0
    %v4486 = vsel %vm36, %v4418, 0
    %v4489 = vsel %vm36, %v4419, 0
    %v4492 = vsel %vm36, %v4420, 0
    %v4495 = vsel %vm36, %v4421, 0
    %v4498 = vsel %vm36, %v4422, 0
    %v4501 = vsel %vm36, %v4423, 0
    %v4504 = vsel %vm36, %v4424, 0
    %4506 = vmatprep.subr.mxu0 0.0
    %4507 = vmatpush1.msra.mxu0 %v4426
    %4508 = vmatprep.subr.mxu0 0.0
    %4509 = vmatpush1.msra.mxu0 %v4427
    %4510 = vmatprep.subr.mxu0 0.0
    %4511 = vmatpush1.msra.mxu0 %v4428
    %4512 = vmatprep.subr.mxu0 0.0
    %4513 = vmatpush1.msra.mxu0 %v4429
    %4514 = vmatprep.subr.mxu0 0.0
    %4515 = vmatpush1.msra.mxu0 %v4430
    %4516 = vmatprep.subr.mxu0 0.0
    %4517 = vmatpush1.msra.mxu0 %v4431
    %4518 = vmatprep.subr.mxu0 0.0
    %4519 = vmatpush1.msra.mxu0 %v4432
    %4520 = vmatprep.subr.mxu0 0.0
    %4521 = vmatpush1.msra.mxu0 %v4433
    %4522 = vmatprep.subr.mxu0 0.0
    %4523 = vmatpush1.msra.mxu0 0.0
    %4524 = vmatprep.subr.mxu0 0.0
    %4525 = vmatpush1.msra.mxu0 0.0
    %4526 = vmatprep.subr.mxu0 0.0
    %4527 = vmatpush1.msra.mxu0 0.0
    %4528 = vmatprep.subr.mxu0 0.0
    %4529 = vmatpush1.msra.mxu0 0.0
    %4530 = vmatprep.subr.mxu0 0.0
    %4531 = vmatpush1.msra.mxu0 0.0
    %4532 = vmatprep.subr.mxu0 0.0
    %4533 = vmatpush1.msra.mxu0 0.0
    %4534 = vmatprep.subr.mxu0 0.0
    %4535 = vmatpush1.msra.mxu0 0.0
    %4536 = vmatprep.subr.mxu0 0.0
    %4537 = vmatpush1.msra.mxu0 0.0
    %4538 = vmatprep.subr.mxu0 0.0
    %4539 = vmatpush1.msra.mxu0 0.0
    %4540 = vmatprep.subr.mxu0 0.0
    %4541 = vmatpush1.msra.mxu0 0.0
    %4542 = vmatprep.subr.mxu0 0.0
    %4543 = vmatpush1.msra.mxu0 0.0
    %4544 = vmatprep.subr.mxu0 0.0
    %4545 = vmatpush1.msra.mxu0 0.0
    %4546 = vmatprep.subr.mxu0 0.0
    %4547 = vmatpush1.msra.mxu0 0.0
    %4548 = vmatprep.subr.mxu0 0.0
    %4549 = vmatpush1.msra.mxu0 0.0
    %4550 = vmatprep.subr.mxu0 0.0
    %4551 = vmatpush1.msra.mxu0 0.0
    %4552 = vmatprep.subr.mxu0 0.0
    %4553 = vmatpush1.msra.mxu0 0.0
    %4554 = vmatprep.subr.mxu0 0.0
    %4555 = vmatpush1.msra.mxu0 0.0
    %4556 = vmatprep.subr.mxu0 0.0
    %4557 = vmatpush1.msra.mxu0 0.0
    %4558 = vmatprep.subr.mxu0 0.0
    %4559 = vmatpush1.msra.mxu0 0.0
    %4560 = vmatprep.subr.mxu0 0.0
    %4561 = vmatpush1.msra.mxu0 0.0
    %4562 = vmatprep.subr.mxu0 0.0
    %4563 = vmatpush1.msra.mxu0 0.0
    %4564 = vmatprep.subr.mxu0 0.0
    %4565 = vmatpush1.msra.mxu0 0.0
    %4566 = vmatprep.subr.mxu0 0.0
    %4567 = vmatpush1.msra.mxu0 0.0
    %4568 = vmatprep.subr.mxu0 0.0
    %4569 = vmatpush1.msra.mxu0 0.0
    %4570 = vmatprep.mubr.f32.mxu0 0.0
    %4571 = vmatmul.mubr.f32.gmra.mrb[0].mxu0 %v4435
    %v4572 = vpop.f32.mrb[0].mxu0
    %v4573 = vadd.f32 0.0, %v4572
    %v4574 = vpop.f32.mrb[0].mxu0
    %4575 = vmatprep.mubr.f32.mxu0 0.0
    %4576 = vmatmul.mubr.f32.gmra.mrb[0].mxu0 %v4438
    %v4577 = vpop.f32.mrb[0].mxu0
    %v4578 = vadd.f32 0.0, %v4577
    %v4579 = vpop.f32.mrb[0].mxu0
    %4580 = vmatprep.mubr.f32.mxu0 0.0
    %4581 = vmatmul.mubr.f32.gmra.mrb[0].mxu0 %v4441
    %v4582 = vpop.f32.mrb[0].mxu0
    %v4583 = vadd.f32 0.0, %v4582
    %v4584 = vpop.f32.mrb[0].mxu0
    %4585 = vmatprep.mubr.f32.mxu0 0.0
    %4586 = vmatmul.mubr.f32.gmra.mrb[0].mxu0 %v4444
    %v4587 = vpop.f32.mrb[0].mxu0
    %v4588 = vadd.f32 0.0, %v4587
    %v4589 = vpop.f32.mrb[0].mxu0
    %4590 = vmatprep.mubr.f32.mxu0 0.0
    %4591 = vmatmul.mubr.f32.gmra.mrb[0].mxu0 %v4447
    %v4592 = vpop.f32.mrb[0].mxu0
    %v4593 = vadd.f32 0.0, %v4592
    %v4594 = vpop.f32.mrb[0].mxu0
    %4595 = vmatprep.mubr.f32.mxu0 0.0
    %4596 = vmatmul.mubr.f32.gmra.mrb[0].mxu0 %v4450
    %v4597 = vpop.f32.mrb[0].mxu0
    %v4598 = vadd.f32 0.0, %v4597
    %v4599 = vpop.f32.mrb[0].mxu0
    %4600 = vmatprep.mubr.f32.mxu0 0.0
    %4601 = vmatmul.mubr.f32.gmra.mrb[0].mxu0 %v4453
    %v4602 = vpop.f32.mrb[0].mxu0
    %v4603 = vadd.f32 0.0, %v4602
    %v4604 = vpop.f32.mrb[0].mxu0
    %4605 = vmatprep.mubr.f32.mxu0 0.0
    %4606 = vmatmul.mubr.f32.gmra.mrb[0].mxu0 %v4456
    %v4607 = vpop.f32.mrb[0].mxu0
    %v4608 = vadd.f32 0.0, %v4607
    %v4609 = vpop.f32.mrb[0].mxu0
    %4610 = vmatprep.mubr.f32.mxu0 0.0
    %4611 = vmatmul.mubr.f32.gmra.mrb[0].mxu0 %v4459
    %v4612 = vpop.f32.mrb[0].mxu0
    %v4613 = vadd.f32 0.0, %v4612
    %v4614 = vpop.f32.mrb[0].mxu0
    %4615 = vmatprep.mubr.f32.mxu0 0.0
    %4616 = vmatmul.mubr.f32.gmra.mrb[0].mxu0 %v4462
    %v4617 = vpop.f32.mrb[0].mxu0
    %v4618 = vadd.f32 0.0, %v4617
    %v4619 = vpop.f32.mrb[0].mxu0
    %4620 = vmatprep.mubr.f32.mxu0 0.0
    %4621 = vmatmul.mubr.f32.gmra.mrb[0].mxu0 %v4465
    %v4622 = vpop.f32.mrb[0].mxu0
    %v4623 = vpop.f32.mrb[0].mxu0
    %4624 = vmatprep.mubr.f32.mxu0 0.0
    %4625 = vmatmul.mubr.f32.gmra.mrb[0].mxu0 %v4468
    %v4626 = vpop.f32.mrb[0].mxu0
    %v4627 = vpop.f32.mrb[0].mxu0
    %4628 = vmatprep.mubr.f32.mxu0 0.0
    %4629 = vmatmul.mubr.f32.gmra.mrb[0].mxu0 %v4471
    %v4630 = vpop.f32.mrb[0].mxu0
    %v4631 = vpop.f32.mrb[0].mxu0
    %4632 = vmatprep.mubr.f32.mxu0 0.0
    %4633 = vmatmul.mubr.f32.gmra.mrb[0].mxu0 %v4474
    %v4634 = vpop.f32.mrb[0].mxu0
    %v4635 = vpop.f32.mrb[0].mxu0
    %4636 = vmatprep.mubr.f32.mxu0 0.0
    %4637 = vmatmul.mubr.f32.gmra.mrb[0].mxu0 %v4477
    %v4638 = vpop.f32.mrb[0].mxu0
    %v4639 = vadd.f32 0.0, %v4638
    %v4640 = vpop.f32.mrb[0].mxu0
    %4641 = vmatprep.mubr.f32.mxu0 0.0
    %4642 = vmatmul.mubr.f32.gmra.mrb[0].mxu0 %v4480
    %v4643 = vpop.f32.mrb[0].mxu0
    %v4644 = vadd.f32 0.0, %v4643
    %v4645 = vpop.f32.mrb[0].mxu0
    %4646 = vmatprep.mubr.f32.mxu0 0.0
    %4647 = vmatmul.mubr.f32.gmra.mrb[0].mxu0 %v4483
    %v4648 = vpop.f32.mrb[0].mxu0
    %v4649 = vadd.f32 0.0, %v4648
    %v4650 = vpop.f32.mrb[0].mxu0
    %4651 = vmatprep.mubr.f32.mxu0 0.0
    %4652 = vmatmul.mubr.f32.gmra.mrb[0].mxu0 %v4486
    %v4653 = vpop.f32.mrb[0].mxu0
    %v4654 = vadd.f32 0.0, %v4653
    %v4655 = vpop.f32.mrb[0].mxu0
    %4656 = vmatprep.mubr.f32.mxu0 0.0
    %4657 = vmatmul.mubr.f32.gmra.mrb[0].mxu0 %v4489
    %v4658 = vpop.f32.mrb[0].mxu0
    %v4659 = vadd.f32 0.0, %v4658
    %v4660 = vpop.f32.mrb[0].mxu0
    %4661 = vmatprep.mubr.f32.mxu0 0.0
    %4662 = vmatmul.mubr.f32.gmra.mrb[0].mxu0 %v4492
    %v4663 = vpop.f32.mrb[0].mxu0
    %v4664 = vadd.f32 0.0, %v4663
    %v4665 = vpop.f32.mrb[0].mxu0
    %4666 = vmatprep.mubr.f32.mxu0 0.0
    %4667 = vmatmul.mubr.f32.gmra.mrb[0].mxu0 %v4495
    %v4668 = vpop.f32.mrb[0].mxu0
    %v4669 = vadd.f32 0.0, %v4668
    %v4670 = vpop.f32.mrb[0].mxu0
    %4671 = vmatprep.mubr.f32.mxu0 0.0
    %4672 = vmatmul.mubr.f32.gmra.mrb[0].mxu0 %v4498
    %v4673 = vpop.f32.mrb[0].mxu0
    %v4674 = vadd.f32 0.0, %v4673
    %v4675 = vpop.f32.mrb[0].mxu0
    %4676 = vmatprep.mubr.f32.mxu0 0.0
    %4677 = vmatmul.mubr.f32.gmra.mrb[0].mxu0 %v4501
    %v4678 = vpop.f32.mrb[0].mxu0
    %v4679 = vadd.f32 0.0, %v4678
    %v4680 = vpop.f32.mrb[0].mxu0
    %4681 = vmatprep.mubr.f32.mxu0 0.0
    %4682 = vmatmul.mubr.f32.gmra.mrb[0].mxu0 %v4504
    %v4683 = vpop.f32.mrb[0].mxu0
    %v4684 = vadd.f32 0.0, %v4683
    %v4685 = vpop.f32.mrb[0].mxu0
    %4686 = vdwg.mxu0
    %v4687 = vadd.f32 %v4381, %v4573
    %v4688 = vadd.f32 %v4382, %v4578
    %v4689 = vadd.f32 %v4383, %v4583
    %v4690 = vadd.f32 %v4384, %v4588
    %v4691 = vadd.f32 %v4385, %v4593
    %v4692 = vadd.f32 %v4386, %v4598
    %v4693 = vadd.f32 %v4387, %v4603
    %v4694 = vadd.f32 %v4388, %v4608
    %v4695 = vadd.f32 %v4389, %v4613
    %v4696 = vadd.f32 %v4390, %v4618
    %v4697 = vadd.f32 %v4391, %v4639
    %v4698 = vadd.f32 %v4392, %v4644
    %v4699 = vadd.f32 %v4393, %v4649
    %v4700 = vadd.f32 %v4394, %v4654
    %v4701 = vadd.f32 %v4395, %v4659
    %v4702 = vadd.f32 %v4396, %v4664
    %v4703 = vadd.f32 %v4397, %v4669
    %v4704 = vadd.f32 %v4398, %v4674
    %v4705 = vadd.f32 %v4399, %v4679
    %v4706 = vadd.f32 %v4400, %v4684
    %v4707 = vld [vmem:[#allocation2 + $0x11] sm:$0xff]
    %v4708 = vld [vmem:[#allocation2 + $0x19] sm:$0xff]
    %v4709 = vld [vmem:[#allocation2 + $0x21] sm:$0xff]
    %v4710 = vld [vmem:[#allocation2 + $0x29] sm:$0xff]
    %v4711 = vld [vmem:[#allocation2 + $0x31] sm:$0xff]
    %v4712 = vld [vmem:[#allocation2 + $0x39] sm:$0xff]
    %v4713 = vld [vmem:[#allocation2 + $0x41] sm:$0xff]
    %v4714 = vld [vmem:[#allocation2 + $0x49] sm:$0xff]
    %v4715 = vld [vmem:[#allocation2 + $0x51] sm:$0xff]
    %v4716 = vld [vmem:[#allocation2 + $0x59] sm:$0xff]
    %v4717 = vld [vmem:[#allocation2 + $0x61] sm:$0xff]
    %v4718 = vld [vmem:[#allocation2 + $0x69] sm:$0xff]
    %v4719 = vld [vmem:[#allocation2 + $0x71] sm:$0xff]
    %v4720 = vld [vmem:[#allocation2 + $0x79] sm:$0xff]
    %v4721 = vld [vmem:[#allocation2 + $0x81] sm:$0xff]
    %v4722 = vld [vmem:[#allocation2 + $0x89] sm:$0xff]
    %v4723 = vld [vmem:[#allocation2 + $0x91] sm:$0xff]
    %v4724 = vld [vmem:[#allocation2 + $0x99] sm:$0xff]
    %v4725 = vld [vmem:[#allocation2 + $0xa1] sm:$0xff]
    %v4726 = vld [vmem:[#allocation2 + $0xa9] sm:$0xff]
    %v4727 = vld [vmem:[#allocation2 + $0xb1] sm:$0xff]
    %v4728 = vld [vmem:[#allocation2 + $0xb9] sm:$0xff]
    %v4729 = vld [vmem:[#allocation2 + $0xc1] sm:$0xff]
    %v4730 = vld [vmem:[#allocation2 + $0xc9] sm:$0xff]
    %s4731 = scalar_lea.vmem %s3, 256
    %v4732 = vld [vmem:[%s4731] sm:$0xff]
    %v4733 = vld [vmem:[%s4731 + $0x8] sm:$0xff]
    %v4734 = vld [vmem:[%s4731 + $0x10] sm:$0xff]
    %v4735 = vld [vmem:[%s4731 + $0x18] sm:$0xff]
    %v4736 = vld [vmem:[%s4731 + $0x20] sm:$0xff]
    %v4737 = vld [vmem:[%s4731 + $0x28] sm:$0xff]
    %v4738 = vld [vmem:[%s4731 + $0x30] sm:$0xff]
    %v4739 = vld [vmem:[%s4731 + $0x38] sm:$0xff]
    %v4741 = vsel %vm36, %v4707, 0
    %v4744 = vsel %vm36, %v4708, 0
    %v4747 = vsel %vm36, %v4709, 0
    %v4750 = vsel %vm36, %v4710, 0
    %v4753 = vsel %vm36, %v4711, 0
    %v4756 = vsel %vm36, %v4712, 0
    %v4759 = vsel %vm36, %v4713, 0
    %v4762 = vsel %vm36, %v4714, 0
    %v4765 = vsel %vm36, %v4715, 0
    %v4768 = vsel %vm36, %v4716, 0
    %v4771 = vsel %vm36, %v4717, 0
    %v4774 = vsel %vm36, %v4718, 0
    %v4777 = vsel %vm36, %v4719, 0
    %v4780 = vsel %vm36, %v4720, 0
    %v4783 = vsel %vm36, %v4721, 0
    %v4786 = vsel %vm36, %v4722, 0
    %v4789 = vsel %vm36, %v4723, 0
    %v4792 = vsel %vm36, %v4724, 0
    %v4795 = vsel %vm36, %v4725, 0
    %v4798 = vsel %vm36, %v4726, 0
    %v4801 = vsel %vm36, %v4727, 0
    %v4804 = vsel %vm36, %v4728, 0
    %v4807 = vsel %vm36, %v4729, 0
    %v4810 = vsel %vm36, %v4730, 0
    %4812 = vmatprep.subr.mxu0 0.0
    %4813 = vmatpush1.msra.mxu0 %v4732
    %4814 = vmatprep.subr.mxu0 0.0
    %4815 = vmatpush1.msra.mxu0 %v4733
    %4816 = vmatprep.subr.mxu0 0.0
    %4817 = vmatpush1.msra.mxu0 %v4734
    %4818 = vmatprep.subr.mxu0 0.0
    %4819 = vmatpush1.msra.mxu0 %v4735
    %4820 = vmatprep.subr.mxu0 0.0
    %4821 = vmatpush1.msra.mxu0 %v4736
    %4822 = vmatprep.subr.mxu0 0.0
    %4823 = vmatpush1.msra.mxu0 %v4737
    %4824 = vmatprep.subr.mxu0 0.0
    %4825 = vmatpush1.msra.mxu0 %v4738
    %4826 = vmatprep.subr.mxu0 0.0
    %4827 = vmatpush1.msra.mxu0 %v4739
    %4828 = vmatprep.subr.mxu0 0.0
    %4829 = vmatpush1.msra.mxu0 0.0
    %4830 = vmatprep.subr.mxu0 0.0
    %4831 = vmatpush1.msra.mxu0 0.0
    %4832 = vmatprep.subr.mxu0 0.0
    %4833 = vmatpush1.msra.mxu0 0.0
    %4834 = vmatprep.subr.mxu0 0.0
    %4835 = vmatpush1.msra.mxu0 0.0
    %4836 = vmatprep.subr.mxu0 0.0
    %4837 = vmatpush1.msra.mxu0 0.0
    %4838 = vmatprep.subr.mxu0 0.0
    %4839 = vmatpush1.msra.mxu0 0.0
    %4840 = vmatprep.subr.mxu0 0.0
    %4841 = vmatpush1.msra.mxu0 0.0
    %4842 = vmatprep.subr.mxu0 0.0
    %4843 = vmatpush1.msra.mxu0 0.0
    %4844 = vmatprep.subr.mxu0 0.0
    %4845 = vmatpush1.msra.mxu0 0.0
    %4846 = vmatprep.subr.mxu0 0.0
    %4847 = vmatpush1.msra.mxu0 0.0
    %4848 = vmatprep.subr.mxu0 0.0
    %4849 = vmatpush1.msra.mxu0 0.0
    %4850 = vmatprep.subr.mxu0 0.0
    %4851 = vmatpush1.msra.mxu0 0.0
    %4852 = vmatprep.subr.mxu0 0.0
    %4853 = vmatpush1.msra.mxu0 0.0
    %4854 = vmatprep.subr.mxu0 0.0
    %4855 = vmatpush1.msra.mxu0 0.0
    %4856 = vmatprep.subr.mxu0 0.0
    %4857 = vmatpush1.msra.mxu0 0.0
    %4858 = vmatprep.subr.mxu0 0.0
    %4859 = vmatpush1.msra.mxu0 0.0
    %4860 = vmatprep.subr.mxu0 0.0
    %4861 = vmatpush1.msra.mxu0 0.0
    %4862 = vmatprep.subr.mxu0 0.0
    %4863 = vmatpush1.msra.mxu0 0.0
    %4864 = vmatprep.subr.mxu0 0.0
    %4865 = vmatpush1.msra.mxu0 0.0
    %4866 = vmatprep.subr.mxu0 0.0
    %4867 = vmatpush1.msra.mxu0 0.0
    %4868 = vmatprep.subr.mxu0 0.0
    %4869 = vmatpush1.msra.mxu0 0.0
    %4870 = vmatprep.subr.mxu0 0.0
    %4871 = vmatpush1.msra.mxu0 0.0
    %4872 = vmatprep.subr.mxu0 0.0
    %4873 = vmatpush1.msra.mxu0 0.0
    %4874 = vmatprep.subr.mxu0 0.0
    %4875 = vmatpush1.msra.mxu0 0.0
    %4876 = vmatprep.mubr.f32.mxu0 0.0
    %4877 = vmatmul.mubr.f32.gmra.mrb[0].mxu0 %v4741
    %v4878 = vpop.f32.mrb[0].mxu0
    %v4879 = vadd.f32 0.0, %v4878
    %v4880 = vpop.f32.mrb[0].mxu0
    %4881 = vmatprep.mubr.f32.mxu0 0.0
    %4882 = vmatmul.mubr.f32.gmra.mrb[0].mxu0 %v4744
    %v4883 = vpop.f32.mrb[0].mxu0
    %v4884 = vadd.f32 0.0, %v4883
    %v4885 = vpop.f32.mrb[0].mxu0
    %4886 = vmatprep.mubr.f32.mxu0 0.0
    %4887 = vmatmul.mubr.f32.gmra.mrb[0].mxu0 %v4747
    %v4888 = vpop.f32.mrb[0].mxu0
    %v4889 = vadd.f32 0.0, %v4888
    %v4890 = vpop.f32.mrb[0].mxu0
    %4891 = vmatprep.mubr.f32.mxu0 0.0
    %4892 = vmatmul.mubr.f32.gmra.mrb[0].mxu0 %v4750
    %v4893 = vpop.f32.mrb[0].mxu0
    %v4894 = vadd.f32 0.0, %v4893
    %v4895 = vpop.f32.mrb[0].mxu0
    %4896 = vmatprep.mubr.f32.mxu0 0.0
    %4897 = vmatmul.mubr.f32.gmra.mrb[0].mxu0 %v4753
    %v4898 = vpop.f32.mrb[0].mxu0
    %v4899 = vadd.f32 0.0, %v4898
    %v4900 = vpop.f32.mrb[0].mxu0
    %4901 = vmatprep.mubr.f32.mxu0 0.0
    %4902 = vmatmul.mubr.f32.gmra.mrb[0].mxu0 %v4756
    %v4903 = vpop.f32.mrb[0].mxu0
    %v4904 = vadd.f32 0.0, %v4903
    %v4905 = vpop.f32.mrb[0].mxu0
    %4906 = vmatprep.mubr.f32.mxu0 0.0
    %4907 = vmatmul.mubr.f32.gmra.mrb[0].mxu0 %v4759
    %v4908 = vpop.f32.mrb[0].mxu0
    %v4909 = vadd.f32 0.0, %v4908
    %v4910 = vpop.f32.mrb[0].mxu0
    %4911 = vmatprep.mubr.f32.mxu0 0.0
    %4912 = vmatmul.mubr.f32.gmra.mrb[0].mxu0 %v4762
    %v4913 = vpop.f32.mrb[0].mxu0
    %v4914 = vadd.f32 0.0, %v4913
    %v4915 = vpop.f32.mrb[0].mxu0
    %4916 = vmatprep.mubr.f32.mxu0 0.0
    %4917 = vmatmul.mubr.f32.gmra.mrb[0].mxu0 %v4765
    %v4918 = vpop.f32.mrb[0].mxu0
    %v4919 = vadd.f32 0.0, %v4918
    %v4920 = vpop.f32.mrb[0].mxu0
    %4921 = vmatprep.mubr.f32.mxu0 0.0
    %4922 = vmatmul.mubr.f32.gmra.mrb[0].mxu0 %v4768
    %v4923 = vpop.f32.mrb[0].mxu0
    %v4924 = vadd.f32 0.0, %v4923
    %v4925 = vpop.f32.mrb[0].mxu0
    %4926 = vmatprep.mubr.f32.mxu0 0.0
    %4927 = vmatmul.mubr.f32.gmra.mrb[0].mxu0 %v4771
    %v4928 = vpop.f32.mrb[0].mxu0
    %v4929 = vpop.f32.mrb[0].mxu0
    %4930 = vmatprep.mubr.f32.mxu0 0.0
    %4931 = vmatmul.mubr.f32.gmra.mrb[0].mxu0 %v4774
    %v4932 = vpop.f32.mrb[0].mxu0
    %v4933 = vpop.f32.mrb[0].mxu0
    %4934 = vmatprep.mubr.f32.mxu0 0.0
    %4935 = vmatmul.mubr.f32.gmra.mrb[0].mxu0 %v4777
    %v4936 = vpop.f32.mrb[0].mxu0
    %v4937 = vpop.f32.mrb[0].mxu0
    %4938 = vmatprep.mubr.f32.mxu0 0.0
    %4939 = vmatmul.mubr.f32.gmra.mrb[0].mxu0 %v4780
    %v4940 = vpop.f32.mrb[0].mxu0
    %v4941 = vpop.f32.mrb[0].mxu0
    %4942 = vmatprep.mubr.f32.mxu0 0.0
    %4943 = vmatmul.mubr.f32.gmra.mrb[0].mxu0 %v4783
    %v4944 = vpop.f32.mrb[0].mxu0
    %v4945 = vadd.f32 0.0, %v4944
    %v4946 = vpop.f32.mrb[0].mxu0
    %4947 = vmatprep.mubr.f32.mxu0 0.0
    %4948 = vmatmul.mubr.f32.gmra.mrb[0].mxu0 %v4786
    %v4949 = vpop.f32.mrb[0].mxu0
    %v4950 = vadd.f32 0.0, %v4949
    %v4951 = vpop.f32.mrb[0].mxu0
    %4952 = vmatprep.mubr.f32.mxu0 0.0
    %4953 = vmatmul.mubr.f32.gmra.mrb[0].mxu0 %v4789
    %v4954 = vpop.f32.mrb[0].mxu0
    %v4955 = vadd.f32 0.0, %v4954
    %v4956 = vpop.f32.mrb[0].mxu0
    %4957 = vmatprep.mubr.f32.mxu0 0.0
    %4958 = vmatmul.mubr.f32.gmra.mrb[0].mxu0 %v4792
    %v4959 = vpop.f32.mrb[0].mxu0
    %v4960 = vadd.f32 0.0, %v4959
    %v4961 = vpop.f32.mrb[0].mxu0
    %4962 = vmatprep.mubr.f32.mxu0 0.0
    %4963 = vmatmul.mubr.f32.gmra.mrb[0].mxu0 %v4795
    %v4964 = vpop.f32.mrb[0].mxu0
    %v4965 = vadd.f32 0.0, %v4964
    %v4966 = vpop.f32.mrb[0].mxu0
    %4967 = vmatprep.mubr.f32.mxu0 0.0
    %4968 = vmatmul.mubr.f32.gmra.mrb[0].mxu0 %v4798
    %v4969 = vpop.f32.mrb[0].mxu0
    %v4970 = vadd.f32 0.0, %v4969
    %v4971 = vpop.f32.mrb[0].mxu0
    %4972 = vmatprep.mubr.f32.mxu0 0.0
    %4973 = vmatmul.mubr.f32.gmra.mrb[0].mxu0 %v4801
    %v4974 = vpop.f32.mrb[0].mxu0
    %v4975 = vadd.f32 0.0, %v4974
    %v4976 = vpop.f32.mrb[0].mxu0
    %4977 = vmatprep.mubr.f32.mxu0 0.0
    %4978 = vmatmul.mubr.f32.gmra.mrb[0].mxu0 %v4804
    %v4979 = vpop.f32.mrb[0].mxu0
    %v4980 = vadd.f32 0.0, %v4979
    %v4981 = vpop.f32.mrb[0].mxu0
    %4982 = vmatprep.mubr.f32.mxu0 0.0
    %4983 = vmatmul.mubr.f32.gmra.mrb[0].mxu0 %v4807
    %v4984 = vpop.f32.mrb[0].mxu0
    %v4985 = vadd.f32 0.0, %v4984
    %v4986 = vpop.f32.mrb[0].mxu0
    %4987 = vmatprep.mubr.f32.mxu0 0.0
    %4988 = vmatmul.mubr.f32.gmra.mrb[0].mxu0 %v4810
    %v4989 = vpop.f32.mrb[0].mxu0
    %v4990 = vadd.f32 0.0, %v4989
    %v4991 = vpop.f32.mrb[0].mxu0
    %4992 = vdwg.mxu0
    %v4993 = vadd.f32 %v4687, %v4879
    %v4994 = vadd.f32 %v4688, %v4884
    %v4995 = vadd.f32 %v4689, %v4889
    %v4996 = vadd.f32 %v4690, %v4894
    %v4997 = vadd.f32 %v4691, %v4899
    %v4998 = vadd.f32 %v4692, %v4904
    %v4999 = vadd.f32 %v4693, %v4909
    %v5000 = vadd.f32 %v4694, %v4914
    %v5001 = vadd.f32 %v4695, %v4919
    %v5002 = vadd.f32 %v4696, %v4924
    %v5003 = vadd.f32 %v4697, %v4945
    %v5004 = vadd.f32 %v4698, %v4950
    %v5005 = vadd.f32 %v4699, %v4955
    %v5006 = vadd.f32 %v4700, %v4960
    %v5007 = vadd.f32 %v4701, %v4965
    %v5008 = vadd.f32 %v4702, %v4970
    %v5009 = vadd.f32 %v4703, %v4975
    %v5010 = vadd.f32 %v4704, %v4980
    %v5011 = vadd.f32 %v4705, %v4985
    %v5012 = vadd.f32 %v4706, %v4990
    %v5013 = vld [vmem:[#allocation2 + $0x12] sm:$0xff]
    %v5014 = vld [vmem:[#allocation2 + $0x1a] sm:$0xff]
    %v5015 = vld [vmem:[#allocation2 + $0x22] sm:$0xff]
    %v5016 = vld [vmem:[#allocation2 + $0x2a] sm:$0xff]
    %v5017 = vld [vmem:[#allocation2 + $0x32] sm:$0xff]
    %v5018 = vld [vmem:[#allocation2 + $0x3a] sm:$0xff]
    %v5019 = vld [vmem:[#allocation2 + $0x42] sm:$0xff]
    %v5020 = vld [vmem:[#allocation2 + $0x4a] sm:$0xff]
    %v5021 = vld [vmem:[#allocation2 + $0x52] sm:$0xff]
    %v5022 = vld [vmem:[#allocation2 + $0x5a] sm:$0xff]
    %v5023 = vld [vmem:[#allocation2 + $0x62] sm:$0xff]
    %v5024 = vld [vmem:[#allocation2 + $0x6a] sm:$0xff]
    %v5025 = vld [vmem:[#allocation2 + $0x72] sm:$0xff]
    %v5026 = vld [vmem:[#allocation2 + $0x7a] sm:$0xff]
    %v5027 = vld [vmem:[#allocation2 + $0x82] sm:$0xff]
    %v5028 = vld [vmem:[#allocation2 + $0x8a] sm:$0xff]
    %v5029 = vld [vmem:[#allocation2 + $0x92] sm:$0xff]
    %v5030 = vld [vmem:[#allocation2 + $0x9a] sm:$0xff]
    %v5031 = vld [vmem:[#allocation2 + $0xa2] sm:$0xff]
    %v5032 = vld [vmem:[#allocation2 + $0xaa] sm:$0xff]
    %v5033 = vld [vmem:[#allocation2 + $0xb2] sm:$0xff]
    %v5034 = vld [vmem:[#allocation2 + $0xba] sm:$0xff]
    %v5035 = vld [vmem:[#allocation2 + $0xc2] sm:$0xff]
    %v5036 = vld [vmem:[#allocation2 + $0xca] sm:$0xff]
    %s5037 = scalar_lea.vmem %s3, 320
    %v5038 = vld [vmem:[%s5037] sm:$0xff]
    %v5039 = vld [vmem:[%s5037 + $0x8] sm:$0xff]
    %v5040 = vld [vmem:[%s5037 + $0x10] sm:$0xff]
    %v5041 = vld [vmem:[%s5037 + $0x18] sm:$0xff]
    %v5042 = vld [vmem:[%s5037 + $0x20] sm:$0xff]
    %v5043 = vld [vmem:[%s5037 + $0x28] sm:$0xff]
    %v5044 = vld [vmem:[%s5037 + $0x30] sm:$0xff]
    %v5045 = vld [vmem:[%s5037 + $0x38] sm:$0xff]
    %v5047 = vsel %vm36, %v5013, 0
    %v5050 = vsel %vm36, %v5014, 0
    %v5053 = vsel %vm36, %v5015, 0
    %v5056 = vsel %vm36, %v5016, 0
    %v5059 = vsel %vm36, %v5017, 0
    %v5062 = vsel %vm36, %v5018, 0
    %v5065 = vsel %vm36, %v5019, 0
    %v5068 = vsel %vm36, %v5020, 0
    %v5071 = vsel %vm36, %v5021, 0
    %v5074 = vsel %vm36, %v5022, 0
    %v5077 = vsel %vm36, %v5023, 0
    %v5080 = vsel %vm36, %v5024, 0
    %v5083 = vsel %vm36, %v5025, 0
    %v5086 = vsel %vm36, %v5026, 0
    %v5089 = vsel %vm36, %v5027, 0
    %v5092 = vsel %vm36, %v5028, 0
    %v5095 = vsel %vm36, %v5029, 0
    %v5098 = vsel %vm36, %v5030, 0
    %v5101 = vsel %vm36, %v5031, 0
    %v5104 = vsel %vm36, %v5032, 0
    %v5107 = vsel %vm36, %v5033, 0
    %v5110 = vsel %vm36, %v5034, 0
    %v5113 = vsel %vm36, %v5035, 0
    %v5116 = vsel %vm36, %v5036, 0
    %5118 = vmatprep.subr.mxu0 0.0
    %5119 = vmatpush1.msra.mxu0 %v5038
    %5120 = vmatprep.subr.mxu0 0.0
    %5121 = vmatpush1.msra.mxu0 %v5039
    %5122 = vmatprep.subr.mxu0 0.0
    %5123 = vmatpush1.msra.mxu0 %v5040
    %5124 = vmatprep.subr.mxu0 0.0
    %5125 = vmatpush1.msra.mxu0 %v5041
    %5126 = vmatprep.subr.mxu0 0.0
    %5127 = vmatpush1.msra.mxu0 %v5042
    %5128 = vmatprep.subr.mxu0 0.0
    %5129 = vmatpush1.msra.mxu0 %v5043
    %5130 = vmatprep.subr.mxu0 0.0
    %5131 = vmatpush1.msra.mxu0 %v5044
    %5132 = vmatprep.subr.mxu0 0.0
    %5133 = vmatpush1.msra.mxu0 %v5045
    %5134 = vmatprep.subr.mxu0 0.0
    %5135 = vmatpush1.msra.mxu0 0.0
    %5136 = vmatprep.subr.mxu0 0.0
    %5137 = vmatpush1.msra.mxu0 0.0
    %5138 = vmatprep.subr.mxu0 0.0
    %5139 = vmatpush1.msra.mxu0 0.0
    %5140 = vmatprep.subr.mxu0 0.0
    %5141 = vmatpush1.msra.mxu0 0.0
    %5142 = vmatprep.subr.mxu0 0.0
    %5143 = vmatpush1.msra.mxu0 0.0
    %5144 = vmatprep.subr.mxu0 0.0
    %5145 = vmatpush1.msra.mxu0 0.0
    %5146 = vmatprep.subr.mxu0 0.0
    %5147 = vmatpush1.msra.mxu0 0.0
    %5148 = vmatprep.subr.mxu0 0.0
    %5149 = vmatpush1.msra.mxu0 0.0
    %5150 = vmatprep.subr.mxu0 0.0
    %5151 = vmatpush1.msra.mxu0 0.0
    %5152 = vmatprep.subr.mxu0 0.0
    %5153 = vmatpush1.msra.mxu0 0.0
    %5154 = vmatprep.subr.mxu0 0.0
    %5155 = vmatpush1.msra.mxu0 0.0
    %5156 = vmatprep.subr.mxu0 0.0
    %5157 = vmatpush1.msra.mxu0 0.0
    %5158 = vmatprep.subr.mxu0 0.0
    %5159 = vmatpush1.msra.mxu0 0.0
    %5160 = vmatprep.subr.mxu0 0.0
    %5161 = vmatpush1.msra.mxu0 0.0
    %5162 = vmatprep.subr.mxu0 0.0
    %5163 = vmatpush1.msra.mxu0 0.0
    %5164 = vmatprep.subr.mxu0 0.0
    %5165 = vmatpush1.msra.mxu0 0.0
    %5166 = vmatprep.subr.mxu0 0.0
    %5167 = vmatpush1.msra.mxu0 0.0
    %5168 = vmatprep.subr.mxu0 0.0
    %5169 = vmatpush1.msra.mxu0 0.0
    %5170 = vmatprep.subr.mxu0 0.0
    %5171 = vmatpush1.msra.mxu0 0.0
    %5172 = vmatprep.subr.mxu0 0.0
    %5173 = vmatpush1.msra.mxu0 0.0
    %5174 = vmatprep.subr.mxu0 0.0
    %5175 = vmatpush1.msra.mxu0 0.0
    %5176 = vmatprep.subr.mxu0 0.0
    %5177 = vmatpush1.msra.mxu0 0.0
    %5178 = vmatprep.subr.mxu0 0.0
    %5179 = vmatpush1.msra.mxu0 0.0
    %5180 = vmatprep.subr.mxu0 0.0
    %5181 = vmatpush1.msra.mxu0 0.0
    %5182 = vmatprep.mubr.f32.mxu0 0.0
    %5183 = vmatmul.mubr.f32.gmra.mrb[0].mxu0 %v5047
    %v5184 = vpop.f32.mrb[0].mxu0
    %v5185 = vadd.f32 0.0, %v5184
    %v5186 = vpop.f32.mrb[0].mxu0
    %5187 = vmatprep.mubr.f32.mxu0 0.0
    %5188 = vmatmul.mubr.f32.gmra.mrb[0].mxu0 %v5050
    %v5189 = vpop.f32.mrb[0].mxu0
    %v5190 = vadd.f32 0.0, %v5189
    %v5191 = vpop.f32.mrb[0].mxu0
    %5192 = vmatprep.mubr.f32.mxu0 0.0
    %5193 = vmatmul.mubr.f32.gmra.mrb[0].mxu0 %v5053
    %v5194 = vpop.f32.mrb[0].mxu0
    %v5195 = vadd.f32 0.0, %v5194
    %v5196 = vpop.f32.mrb[0].mxu0
    %5197 = vmatprep.mubr.f32.mxu0 0.0
    %5198 = vmatmul.mubr.f32.gmra.mrb[0].mxu0 %v5056
    %v5199 = vpop.f32.mrb[0].mxu0
    %v5200 = vadd.f32 0.0, %v5199
    %v5201 = vpop.f32.mrb[0].mxu0
    %5202 = vmatprep.mubr.f32.mxu0 0.0
    %5203 = vmatmul.mubr.f32.gmra.mrb[0].mxu0 %v5059
    %v5204 = vpop.f32.mrb[0].mxu0
    %v5205 = vadd.f32 0.0, %v5204
    %v5206 = vpop.f32.mrb[0].mxu0
    %5207 = vmatprep.mubr.f32.mxu0 0.0
    %5208 = vmatmul.mubr.f32.gmra.mrb[0].mxu0 %v5062
    %v5209 = vpop.f32.mrb[0].mxu0
    %v5210 = vadd.f32 0.0, %v5209
    %v5211 = vpop.f32.mrb[0].mxu0
    %5212 = vmatprep.mubr.f32.mxu0 0.0
    %5213 = vmatmul.mubr.f32.gmra.mrb[0].mxu0 %v5065
    %v5214 = vpop.f32.mrb[0].mxu0
    %v5215 = vadd.f32 0.0, %v5214
    %v5216 = vpop.f32.mrb[0].mxu0
    %5217 = vmatprep.mubr.f32.mxu0 0.0
    %5218 = vmatmul.mubr.f32.gmra.mrb[0].mxu0 %v5068
    %v5219 = vpop.f32.mrb[0].mxu0
    %v5220 = vadd.f32 0.0, %v5219
    %v5221 = vpop.f32.mrb[0].mxu0
    %5222 = vmatprep.mubr.f32.mxu0 0.0
    %5223 = vmatmul.mubr.f32.gmra.mrb[0].mxu0 %v5071
    %v5224 = vpop.f32.mrb[0].mxu0
    %v5225 = vadd.f32 0.0, %v5224
    %v5226 = vpop.f32.mrb[0].mxu0
    %5227 = vmatprep.mubr.f32.mxu0 0.0
    %5228 = vmatmul.mubr.f32.gmra.mrb[0].mxu0 %v5074
    %v5229 = vpop.f32.mrb[0].mxu0
    %v5230 = vadd.f32 0.0, %v5229
    %v5231 = vpop.f32.mrb[0].mxu0
    %5232 = vmatprep.mubr.f32.mxu0 0.0
    %5233 = vmatmul.mubr.f32.gmra.mrb[0].mxu0 %v5077
    %v5234 = vpop.f32.mrb[0].mxu0
    %v5235 = vpop.f32.mrb[0].mxu0
    %5236 = vmatprep.mubr.f32.mxu0 0.0
    %5237 = vmatmul.mubr.f32.gmra.mrb[0].mxu0 %v5080
    %v5238 = vpop.f32.mrb[0].mxu0
    %v5239 = vpop.f32.mrb[0].mxu0
    %5240 = vmatprep.mubr.f32.mxu0 0.0
    %5241 = vmatmul.mubr.f32.gmra.mrb[0].mxu0 %v5083
    %v5242 = vpop.f32.mrb[0].mxu0
    %v5243 = vpop.f32.mrb[0].mxu0
    %5244 = vmatprep.mubr.f32.mxu0 0.0
    %5245 = vmatmul.mubr.f32.gmra.mrb[0].mxu0 %v5086
    %v5246 = vpop.f32.mrb[0].mxu0
    %v5247 = vpop.f32.mrb[0].mxu0
    %5248 = vmatprep.mubr.f32.mxu0 0.0
    %5249 = vmatmul.mubr.f32.gmra.mrb[0].mxu0 %v5089
    %v5250 = vpop.f32.mrb[0].mxu0
    %v5251 = vadd.f32 0.0, %v5250
    %v5252 = vpop.f32.mrb[0].mxu0
    %5253 = vmatprep.mubr.f32.mxu0 0.0
    %5254 = vmatmul.mubr.f32.gmra.mrb[0].mxu0 %v5092
    %v5255 = vpop.f32.mrb[0].mxu0
    %v5256 = vadd.f32 0.0, %v5255
    %v5257 = vpop.f32.mrb[0].mxu0
    %5258 = vmatprep.mubr.f32.mxu0 0.0
    %5259 = vmatmul.mubr.f32.gmra.mrb[0].mxu0 %v5095
    %v5260 = vpop.f32.mrb[0].mxu0
    %v5261 = vadd.f32 0.0, %v5260
    %v5262 = vpop.f32.mrb[0].mxu0
    %5263 = vmatprep.mubr.f32.mxu0 0.0
    %5264 = vmatmul.mubr.f32.gmra.mrb[0].mxu0 %v5098
    %v5265 = vpop.f32.mrb[0].mxu0
    %v5266 = vadd.f32 0.0, %v5265
    %v5267 = vpop.f32.mrb[0].mxu0
    %5268 = vmatprep.mubr.f32.mxu0 0.0
    %5269 = vmatmul.mubr.f32.gmra.mrb[0].mxu0 %v5101
    %v5270 = vpop.f32.mrb[0].mxu0
    %v5271 = vadd.f32 0.0, %v5270
    %v5272 = vpop.f32.mrb[0].mxu0
    %5273 = vmatprep.mubr.f32.mxu0 0.0
    %5274 = vmatmul.mubr.f32.gmra.mrb[0].mxu0 %v5104
    %v5275 = vpop.f32.mrb[0].mxu0
    %v5276 = vadd.f32 0.0, %v5275
    %v5277 = vpop.f32.mrb[0].mxu0
    %5278 = vmatprep.mubr.f32.mxu0 0.0
    %5279 = vmatmul.mubr.f32.gmra.mrb[0].mxu0 %v5107
    %v5280 = vpop.f32.mrb[0].mxu0
    %v5281 = vadd.f32 0.0, %v5280
    %v5282 = vpop.f32.mrb[0].mxu0
    %5283 = vmatprep.mubr.f32.mxu0 0.0
    %5284 = vmatmul.mubr.f32.gmra.mrb[0].mxu0 %v5110
    %v5285 = vpop.f32.mrb[0].mxu0
    %v5286 = vadd.f32 0.0, %v5285
    %v5287 = vpop.f32.mrb[0].mxu0
    %5288 = vmatprep.mubr.f32.mxu0 0.0
    %5289 = vmatmul.mubr.f32.gmra.mrb[0].mxu0 %v5113
    %v5290 = vpop.f32.mrb[0].mxu0
    %v5291 = vadd.f32 0.0, %v5290
    %v5292 = vpop.f32.mrb[0].mxu0
    %5293 = vmatprep.mubr.f32.mxu0 0.0
    %5294 = vmatmul.mubr.f32.gmra.mrb[0].mxu0 %v5116
    %v5295 = vpop.f32.mrb[0].mxu0
    %v5296 = vadd.f32 0.0, %v5295
    %v5297 = vpop.f32.mrb[0].mxu0
    %5298 = vdwg.mxu0
    %v5299 = vadd.f32 %v4993, %v5185
    %v5300 = vadd.f32 %v4994, %v5190
    %v5301 = vadd.f32 %v4995, %v5195
    %v5302 = vadd.f32 %v4996, %v5200
    %v5303 = vadd.f32 %v4997, %v5205
    %v5304 = vadd.f32 %v4998, %v5210
    %v5305 = vadd.f32 %v4999, %v5215
    %v5306 = vadd.f32 %v5000, %v5220
    %v5307 = vadd.f32 %v5001, %v5225
    %v5308 = vadd.f32 %v5002, %v5230
    %v5309 = vadd.f32 %v5003, %v5251
    %v5310 = vadd.f32 %v5004, %v5256
    %v5311 = vadd.f32 %v5005, %v5261
    %v5312 = vadd.f32 %v5006, %v5266
    %v5313 = vadd.f32 %v5007, %v5271
    %v5314 = vadd.f32 %v5008, %v5276
    %v5315 = vadd.f32 %v5009, %v5281
    %v5316 = vadd.f32 %v5010, %v5286
    %v5317 = vadd.f32 %v5011, %v5291
    %v5318 = vadd.f32 %v5012, %v5296
    %v5319 = vld [vmem:[#allocation2 + $0x20] sm:$0xff]
    %v5320 = vld [vmem:[#allocation2 + $0x28] sm:$0xff]
    %v5321 = vld [vmem:[#allocation2 + $0x30] sm:$0xff]
    %v5322 = vld [vmem:[#allocation2 + $0x38] sm:$0xff]
    %v5323 = vld [vmem:[#allocation2 + $0x40] sm:$0xff]
    %v5324 = vld [vmem:[#allocation2 + $0x48] sm:$0xff]
    %v5325 = vld [vmem:[#allocation2 + $0x50] sm:$0xff]
    %v5326 = vld [vmem:[#allocation2 + $0x58] sm:$0xff]
    %v5327 = vld [vmem:[#allocation2 + $0x60] sm:$0xff]
    %v5328 = vld [vmem:[#allocation2 + $0x68] sm:$0xff]
    %v5329 = vld [vmem:[#allocation2 + $0x70] sm:$0xff]
    %v5330 = vld [vmem:[#allocation2 + $0x78] sm:$0xff]
    %v5331 = vld [vmem:[#allocation2 + $0x80] sm:$0xff]
    %v5332 = vld [vmem:[#allocation2 + $0x88] sm:$0xff]
    %v5333 = vld [vmem:[#allocation2 + $0x90] sm:$0xff]
    %v5334 = vld [vmem:[#allocation2 + $0x98] sm:$0xff]
    %v5335 = vld [vmem:[#allocation2 + $0xa0] sm:$0xff]
    %v5336 = vld [vmem:[#allocation2 + $0xa8] sm:$0xff]
    %v5337 = vld [vmem:[#allocation2 + $0xb0] sm:$0xff]
    %v5338 = vld [vmem:[#allocation2 + $0xb8] sm:$0xff]
    %v5339 = vld [vmem:[#allocation2 + $0xc0] sm:$0xff]
    %v5340 = vld [vmem:[#allocation2 + $0xc8] sm:$0xff]
    %v5341 = vld [vmem:[#allocation2 + $0xd0] sm:$0xff]
    %v5342 = vld [vmem:[#allocation2 + $0xd8] sm:$0xff]
    %s5343 = scalar_lea.vmem %s3, 384
    %v5344 = vld [vmem:[%s5343] sm:$0xff]
    %v5345 = vld [vmem:[%s5343 + $0x8] sm:$0xff]
    %v5346 = vld [vmem:[%s5343 + $0x10] sm:$0xff]
    %v5347 = vld [vmem:[%s5343 + $0x18] sm:$0xff]
    %v5348 = vld [vmem:[%s5343 + $0x20] sm:$0xff]
    %v5349 = vld [vmem:[%s5343 + $0x28] sm:$0xff]
    %v5350 = vld [vmem:[%s5343 + $0x30] sm:$0xff]
    %v5351 = vld [vmem:[%s5343 + $0x38] sm:$0xff]
    %v5353 = vsel %vm36, %v5319, 0
    %v5356 = vsel %vm36, %v5320, 0
    %v5359 = vsel %vm36, %v5321, 0
    %v5362 = vsel %vm36, %v5322, 0
    %v5365 = vsel %vm36, %v5323, 0
    %v5368 = vsel %vm36, %v5324, 0
    %v5371 = vsel %vm36, %v5325, 0
    %v5374 = vsel %vm36, %v5326, 0
    %v5377 = vsel %vm36, %v5327, 0
    %v5380 = vsel %vm36, %v5328, 0
    %v5383 = vsel %vm36, %v5329, 0
    %v5386 = vsel %vm36, %v5330, 0
    %v5389 = vsel %vm36, %v5331, 0
    %v5392 = vsel %vm36, %v5332, 0
    %v5395 = vsel %vm36, %v5333, 0
    %v5398 = vsel %vm36, %v5334, 0
    %v5401 = vsel %vm36, %v5335, 0
    %v5404 = vsel %vm36, %v5336, 0
    %v5407 = vsel %vm36, %v5337, 0
    %v5410 = vsel %vm36, %v5338, 0
    %v5413 = vsel %vm36, %v5339, 0
    %v5416 = vsel %vm36, %v5340, 0
    %v5419 = vsel %vm36, %v5341, 0
    %v5422 = vsel %vm36, %v5342, 0
    %5424 = vmatprep.subr.mxu0 0.0
    %5425 = vmatpush1.msra.mxu0 %v5344
    %5426 = vmatprep.subr.mxu0 0.0
    %5427 = vmatpush1.msra.mxu0 %v5345
    %5428 = vmatprep.subr.mxu0 0.0
    %5429 = vmatpush1.msra.mxu0 %v5346
    %5430 = vmatprep.subr.mxu0 0.0
    %5431 = vmatpush1.msra.mxu0 %v5347
    %5432 = vmatprep.subr.mxu0 0.0
    %5433 = vmatpush1.msra.mxu0 %v5348
    %5434 = vmatprep.subr.mxu0 0.0
    %5435 = vmatpush1.msra.mxu0 %v5349
    %5436 = vmatprep.subr.mxu0 0.0
    %5437 = vmatpush1.msra.mxu0 %v5350
    %5438 = vmatprep.subr.mxu0 0.0
    %5439 = vmatpush1.msra.mxu0 %v5351
    %5440 = vmatprep.subr.mxu0 0.0
    %5441 = vmatpush1.msra.mxu0 0.0
    %5442 = vmatprep.subr.mxu0 0.0
    %5443 = vmatpush1.msra.mxu0 0.0
    %5444 = vmatprep.subr.mxu0 0.0
    %5445 = vmatpush1.msra.mxu0 0.0
    %5446 = vmatprep.subr.mxu0 0.0
    %5447 = vmatpush1.msra.mxu0 0.0
    %5448 = vmatprep.subr.mxu0 0.0
    %5449 = vmatpush1.msra.mxu0 0.0
    %5450 = vmatprep.subr.mxu0 0.0
    %5451 = vmatpush1.msra.mxu0 0.0
    %5452 = vmatprep.subr.mxu0 0.0
    %5453 = vmatpush1.msra.mxu0 0.0
    %5454 = vmatprep.subr.mxu0 0.0
    %5455 = vmatpush1.msra.mxu0 0.0
    %5456 = vmatprep.subr.mxu0 0.0
    %5457 = vmatpush1.msra.mxu0 0.0
    %5458 = vmatprep.subr.mxu0 0.0
    %5459 = vmatpush1.msra.mxu0 0.0
    %5460 = vmatprep.subr.mxu0 0.0
    %5461 = vmatpush1.msra.mxu0 0.0
    %5462 = vmatprep.subr.mxu0 0.0
    %5463 = vmatpush1.msra.mxu0 0.0
    %5464 = vmatprep.subr.mxu0 0.0
    %5465 = vmatpush1.msra.mxu0 0.0
    %5466 = vmatprep.subr.mxu0 0.0
    %5467 = vmatpush1.msra.mxu0 0.0
    %5468 = vmatprep.subr.mxu0 0.0
    %5469 = vmatpush1.msra.mxu0 0.0
    %5470 = vmatprep.subr.mxu0 0.0
    %5471 = vmatpush1.msra.mxu0 0.0
    %5472 = vmatprep.subr.mxu0 0.0
    %5473 = vmatpush1.msra.mxu0 0.0
    %5474 = vmatprep.subr.mxu0 0.0
    %5475 = vmatpush1.msra.mxu0 0.0
    %5476 = vmatprep.subr.mxu0 0.0
    %5477 = vmatpush1.msra.mxu0 0.0
    %5478 = vmatprep.subr.mxu0 0.0
    %5479 = vmatpush1.msra.mxu0 0.0
    %5480 = vmatprep.subr.mxu0 0.0
    %5481 = vmatpush1.msra.mxu0 0.0
    %5482 = vmatprep.subr.mxu0 0.0
    %5483 = vmatpush1.msra.mxu0 0.0
    %5484 = vmatprep.subr.mxu0 0.0
    %5485 = vmatpush1.msra.mxu0 0.0
    %5486 = vmatprep.subr.mxu0 0.0
    %5487 = vmatpush1.msra.mxu0 0.0
    %5488 = vmatprep.mubr.f32.mxu0 0.0
    %5489 = vmatmul.mubr.f32.gmra.mrb[0].mxu0 %v5353
    %v5490 = vpop.f32.mrb[0].mxu0
    %v5491 = vadd.f32 0.0, %v5490
    %v5492 = vpop.f32.mrb[0].mxu0
    %5493 = vmatprep.mubr.f32.mxu0 0.0
    %5494 = vmatmul.mubr.f32.gmra.mrb[0].mxu0 %v5356
    %v5495 = vpop.f32.mrb[0].mxu0
    %v5496 = vadd.f32 0.0, %v5495
    %v5497 = vpop.f32.mrb[0].mxu0
    %5498 = vmatprep.mubr.f32.mxu0 0.0
    %5499 = vmatmul.mubr.f32.gmra.mrb[0].mxu0 %v5359
    %v5500 = vpop.f32.mrb[0].mxu0
    %v5501 = vadd.f32 0.0, %v5500
    %v5502 = vpop.f32.mrb[0].mxu0
    %5503 = vmatprep.mubr.f32.mxu0 0.0
    %5504 = vmatmul.mubr.f32.gmra.mrb[0].mxu0 %v5362
    %v5505 = vpop.f32.mrb[0].mxu0
    %v5506 = vadd.f32 0.0, %v5505
    %v5507 = vpop.f32.mrb[0].mxu0
    %5508 = vmatprep.mubr.f32.mxu0 0.0
    %5509 = vmatmul.mubr.f32.gmra.mrb[0].mxu0 %v5365
    %v5510 = vpop.f32.mrb[0].mxu0
    %v5511 = vadd.f32 0.0, %v5510
    %v5512 = vpop.f32.mrb[0].mxu0
    %5513 = vmatprep.mubr.f32.mxu0 0.0
    %5514 = vmatmul.mubr.f32.gmra.mrb[0].mxu0 %v5368
    %v5515 = vpop.f32.mrb[0].mxu0
    %v5516 = vadd.f32 0.0, %v5515
    %v5517 = vpop.f32.mrb[0].mxu0
    %5518 = vmatprep.mubr.f32.mxu0 0.0
    %5519 = vmatmul.mubr.f32.gmra.mrb[0].mxu0 %v5371
    %v5520 = vpop.f32.mrb[0].mxu0
    %v5521 = vadd.f32 0.0, %v5520
    %v5522 = vpop.f32.mrb[0].mxu0
    %5523 = vmatprep.mubr.f32.mxu0 0.0
    %5524 = vmatmul.mubr.f32.gmra.mrb[0].mxu0 %v5374
    %v5525 = vpop.f32.mrb[0].mxu0
    %v5526 = vadd.f32 0.0, %v5525
    %v5527 = vpop.f32.mrb[0].mxu0
    %5528 = vmatprep.mubr.f32.mxu0 0.0
    %5529 = vmatmul.mubr.f32.gmra.mrb[0].mxu0 %v5377
    %v5530 = vpop.f32.mrb[0].mxu0
    %v5531 = vadd.f32 0.0, %v5530
    %v5532 = vpop.f32.mrb[0].mxu0
    %5533 = vmatprep.mubr.f32.mxu0 0.0
    %5534 = vmatmul.mubr.f32.gmra.mrb[0].mxu0 %v5380
    %v5535 = vpop.f32.mrb[0].mxu0
    %v5536 = vadd.f32 0.0, %v5535
    %v5537 = vpop.f32.mrb[0].mxu0
    %5538 = vmatprep.mubr.f32.mxu0 0.0
    %5539 = vmatmul.mubr.f32.gmra.mrb[0].mxu0 %v5383
    %v5540 = vpop.f32.mrb[0].mxu0
    %v5541 = vpop.f32.mrb[0].mxu0
    %5542 = vmatprep.mubr.f32.mxu0 0.0
    %5543 = vmatmul.mubr.f32.gmra.mrb[0].mxu0 %v5386
    %v5544 = vpop.f32.mrb[0].mxu0
    %v5545 = vpop.f32.mrb[0].mxu0
    %5546 = vmatprep.mubr.f32.mxu0 0.0
    %5547 = vmatmul.mubr.f32.gmra.mrb[0].mxu0 %v5389
    %v5548 = vpop.f32.mrb[0].mxu0
    %v5549 = vpop.f32.mrb[0].mxu0
    %5550 = vmatprep.mubr.f32.mxu0 0.0
    %5551 = vmatmul.mubr.f32.gmra.mrb[0].mxu0 %v5392
    %v5552 = vpop.f32.mrb[0].mxu0
    %v5553 = vpop.f32.mrb[0].mxu0
    %5554 = vmatprep.mubr.f32.mxu0 0.0
    %5555 = vmatmul.mubr.f32.gmra.mrb[0].mxu0 %v5395
    %v5556 = vpop.f32.mrb[0].mxu0
    %v5557 = vadd.f32 0.0, %v5556
    %v5558 = vpop.f32.mrb[0].mxu0
    %5559 = vmatprep.mubr.f32.mxu0 0.0
    %5560 = vmatmul.mubr.f32.gmra.mrb[0].mxu0 %v5398
    %v5561 = vpop.f32.mrb[0].mxu0
    %v5562 = vadd.f32 0.0, %v5561
    %v5563 = vpop.f32.mrb[0].mxu0
    %5564 = vmatprep.mubr.f32.mxu0 0.0
    %5565 = vmatmul.mubr.f32.gmra.mrb[0].mxu0 %v5401
    %v5566 = vpop.f32.mrb[0].mxu0
    %v5567 = vadd.f32 0.0, %v5566
    %v5568 = vpop.f32.mrb[0].mxu0
    %5569 = vmatprep.mubr.f32.mxu0 0.0
    %5570 = vmatmul.mubr.f32.gmra.mrb[0].mxu0 %v5404
    %v5571 = vpop.f32.mrb[0].mxu0
    %v5572 = vadd.f32 0.0, %v5571
    %v5573 = vpop.f32.mrb[0].mxu0
    %5574 = vmatprep.mubr.f32.mxu0 0.0
    %5575 = vmatmul.mubr.f32.gmra.mrb[0].mxu0 %v5407
    %v5576 = vpop.f32.mrb[0].mxu0
    %v5577 = vadd.f32 0.0, %v5576
    %v5578 = vpop.f32.mrb[0].mxu0
    %5579 = vmatprep.mubr.f32.mxu0 0.0
    %5580 = vmatmul.mubr.f32.gmra.mrb[0].mxu0 %v5410
    %v5581 = vpop.f32.mrb[0].mxu0
    %v5582 = vadd.f32 0.0, %v5581
    %v5583 = vpop.f32.mrb[0].mxu0
    %5584 = vmatprep.mubr.f32.mxu0 0.0
    %5585 = vmatmul.mubr.f32.gmra.mrb[0].mxu0 %v5413
    %v5586 = vpop.f32.mrb[0].mxu0
    %v5587 = vadd.f32 0.0, %v5586
    %v5588 = vpop.f32.mrb[0].mxu0
    %5589 = vmatprep.mubr.f32.mxu0 0.0
    %5590 = vmatmul.mubr.f32.gmra.mrb[0].mxu0 %v5416
    %v5591 = vpop.f32.mrb[0].mxu0
    %v5592 = vadd.f32 0.0, %v5591
    %v5593 = vpop.f32.mrb[0].mxu0
    %5594 = vmatprep.mubr.f32.mxu0 0.0
    %5595 = vmatmul.mubr.f32.gmra.mrb[0].mxu0 %v5419
    %v5596 = vpop.f32.mrb[0].mxu0
    %v5597 = vadd.f32 0.0, %v5596
    %v5598 = vpop.f32.mrb[0].mxu0
    %5599 = vmatprep.mubr.f32.mxu0 0.0
    %5600 = vmatmul.mubr.f32.gmra.mrb[0].mxu0 %v5422
    %v5601 = vpop.f32.mrb[0].mxu0
    %v5602 = vadd.f32 0.0, %v5601
    %v5603 = vpop.f32.mrb[0].mxu0
    %5604 = vdwg.mxu0
    %v5605 = vadd.f32 %v5299, %v5491
    %v5606 = vadd.f32 %v5300, %v5496
    %v5607 = vadd.f32 %v5301, %v5501
    %v5608 = vadd.f32 %v5302, %v5506
    %v5609 = vadd.f32 %v5303, %v5511
    %v5610 = vadd.f32 %v5304, %v5516
    %v5611 = vadd.f32 %v5305, %v5521
    %v5612 = vadd.f32 %v5306, %v5526
    %v5613 = vadd.f32 %v5307, %v5531
    %v5614 = vadd.f32 %v5308, %v5536
    %v5615 = vadd.f32 %v5309, %v5557
    %v5616 = vadd.f32 %v5310, %v5562
    %v5617 = vadd.f32 %v5311, %v5567
    %v5618 = vadd.f32 %v5312, %v5572
    %v5619 = vadd.f32 %v5313, %v5577
    %v5620 = vadd.f32 %v5314, %v5582
    %v5621 = vadd.f32 %v5315, %v5587
    %v5622 = vadd.f32 %v5316, %v5592
    %v5623 = vadd.f32 %v5317, %v5597
    %v5624 = vadd.f32 %v5318, %v5602
    %v5625 = vld [vmem:[#allocation2 + $0x21] sm:$0xff]
    %v5626 = vld [vmem:[#allocation2 + $0x29] sm:$0xff]
    %v5627 = vld [vmem:[#allocation2 + $0x31] sm:$0xff]
    %v5628 = vld [vmem:[#allocation2 + $0x39] sm:$0xff]
    %v5629 = vld [vmem:[#allocation2 + $0x41] sm:$0xff]
    %v5630 = vld [vmem:[#allocation2 + $0x49] sm:$0xff]
    %v5631 = vld [vmem:[#allocation2 + $0x51] sm:$0xff]
    %v5632 = vld [vmem:[#allocation2 + $0x59] sm:$0xff]
    %v5633 = vld [vmem:[#allocation2 + $0x61] sm:$0xff]
    %v5634 = vld [vmem:[#allocation2 + $0x69] sm:$0xff]
    %v5635 = vld [vmem:[#allocation2 + $0x71] sm:$0xff]
    %v5636 = vld [vmem:[#allocation2 + $0x79] sm:$0xff]
    %v5637 = vld [vmem:[#allocation2 + $0x81] sm:$0xff]
    %v5638 = vld [vmem:[#allocation2 + $0x89] sm:$0xff]
    %v5639 = vld [vmem:[#allocation2 + $0x91] sm:$0xff]
    %v5640 = vld [vmem:[#allocation2 + $0x99] sm:$0xff]
    %v5641 = vld [vmem:[#allocation2 + $0xa1] sm:$0xff]
    %v5642 = vld [vmem:[#allocation2 + $0xa9] sm:$0xff]
    %v5643 = vld [vmem:[#allocation2 + $0xb1] sm:$0xff]
    %v5644 = vld [vmem:[#allocation2 + $0xb9] sm:$0xff]
    %v5645 = vld [vmem:[#allocation2 + $0xc1] sm:$0xff]
    %v5646 = vld [vmem:[#allocation2 + $0xc9] sm:$0xff]
    %v5647 = vld [vmem:[#allocation2 + $0xd1] sm:$0xff]
    %v5648 = vld [vmem:[#allocation2 + $0xd9] sm:$0xff]
    %s5649 = scalar_lea.vmem %s3, 448
    %v5650 = vld [vmem:[%s5649] sm:$0xff]
    %v5651 = vld [vmem:[%s5649 + $0x8] sm:$0xff]
    %v5652 = vld [vmem:[%s5649 + $0x10] sm:$0xff]
    %v5653 = vld [vmem:[%s5649 + $0x18] sm:$0xff]
    %v5654 = vld [vmem:[%s5649 + $0x20] sm:$0xff]
    %v5655 = vld [vmem:[%s5649 + $0x28] sm:$0xff]
    %v5656 = vld [vmem:[%s5649 + $0x30] sm:$0xff]
    %v5657 = vld [vmem:[%s5649 + $0x38] sm:$0xff]
    %v5659 = vsel %vm36, %v5625, 0
    %v5662 = vsel %vm36, %v5626, 0
    %v5665 = vsel %vm36, %v5627, 0
    %v5668 = vsel %vm36, %v5628, 0
    %v5671 = vsel %vm36, %v5629, 0
    %v5674 = vsel %vm36, %v5630, 0
    %v5677 = vsel %vm36, %v5631, 0
    %v5680 = vsel %vm36, %v5632, 0
    %v5683 = vsel %vm36, %v5633, 0
    %v5686 = vsel %vm36, %v5634, 0
    %v5689 = vsel %vm36, %v5635, 0
    %v5692 = vsel %vm36, %v5636, 0
    %v5695 = vsel %vm36, %v5637, 0
    %v5698 = vsel %vm36, %v5638, 0
    %v5701 = vsel %vm36, %v5639, 0
    %v5704 = vsel %vm36, %v5640, 0
    %v5707 = vsel %vm36, %v5641, 0
    %v5710 = vsel %vm36, %v5642, 0
    %v5713 = vsel %vm36, %v5643, 0
    %v5716 = vsel %vm36, %v5644, 0
    %v5719 = vsel %vm36, %v5645, 0
    %v5722 = vsel %vm36, %v5646, 0
    %v5725 = vsel %vm36, %v5647, 0
    %v5728 = vsel %vm36, %v5648, 0
    %5730 = vmatprep.subr.mxu0 0.0
    %5731 = vmatpush1.msra.mxu0 %v5650
    %5732 = vmatprep.subr.mxu0 0.0
    %5733 = vmatpush1.msra.mxu0 %v5651
    %5734 = vmatprep.subr.mxu0 0.0
    %5735 = vmatpush1.msra.mxu0 %v5652
    %5736 = vmatprep.subr.mxu0 0.0
    %5737 = vmatpush1.msra.mxu0 %v5653
    %5738 = vmatprep.subr.mxu0 0.0
    %5739 = vmatpush1.msra.mxu0 %v5654
    %5740 = vmatprep.subr.mxu0 0.0
    %5741 = vmatpush1.msra.mxu0 %v5655
    %5742 = vmatprep.subr.mxu0 0.0
    %5743 = vmatpush1.msra.mxu0 %v5656
    %5744 = vmatprep.subr.mxu0 0.0
    %5745 = vmatpush1.msra.mxu0 %v5657
    %5746 = vmatprep.subr.mxu0 0.0
    %5747 = vmatpush1.msra.mxu0 0.0
    %5748 = vmatprep.subr.mxu0 0.0
    %5749 = vmatpush1.msra.mxu0 0.0
    %5750 = vmatprep.subr.mxu0 0.0
    %5751 = vmatpush1.msra.mxu0 0.0
    %5752 = vmatprep.subr.mxu0 0.0
    %5753 = vmatpush1.msra.mxu0 0.0
    %5754 = vmatprep.subr.mxu0 0.0
    %5755 = vmatpush1.msra.mxu0 0.0
    %5756 = vmatprep.subr.mxu0 0.0
    %5757 = vmatpush1.msra.mxu0 0.0
    %5758 = vmatprep.subr.mxu0 0.0
    %5759 = vmatpush1.msra.mxu0 0.0
    %5760 = vmatprep.subr.mxu0 0.0
    %5761 = vmatpush1.msra.mxu0 0.0
    %5762 = vmatprep.subr.mxu0 0.0
    %5763 = vmatpush1.msra.mxu0 0.0
    %5764 = vmatprep.subr.mxu0 0.0
    %5765 = vmatpush1.msra.mxu0 0.0
    %5766 = vmatprep.subr.mxu0 0.0
    %5767 = vmatpush1.msra.mxu0 0.0
    %5768 = vmatprep.subr.mxu0 0.0
    %5769 = vmatpush1.msra.mxu0 0.0
    %5770 = vmatprep.subr.mxu0 0.0
    %5771 = vmatpush1.msra.mxu0 0.0
    %5772 = vmatprep.subr.mxu0 0.0
    %5773 = vmatpush1.msra.mxu0 0.0
    %5774 = vmatprep.subr.mxu0 0.0
    %5775 = vmatpush1.msra.mxu0 0.0
    %5776 = vmatprep.subr.mxu0 0.0
    %5777 = vmatpush1.msra.mxu0 0.0
    %5778 = vmatprep.subr.mxu0 0.0
    %5779 = vmatpush1.msra.mxu0 0.0
    %5780 = vmatprep.subr.mxu0 0.0
    %5781 = vmatpush1.msra.mxu0 0.0
    %5782 = vmatprep.subr.mxu0 0.0
    %5783 = vmatpush1.msra.mxu0 0.0
    %5784 = vmatprep.subr.mxu0 0.0
    %5785 = vmatpush1.msra.mxu0 0.0
    %5786 = vmatprep.subr.mxu0 0.0
    %5787 = vmatpush1.msra.mxu0 0.0
    %5788 = vmatprep.subr.mxu0 0.0
    %5789 = vmatpush1.msra.mxu0 0.0
    %5790 = vmatprep.subr.mxu0 0.0
    %5791 = vmatpush1.msra.mxu0 0.0
    %5792 = vmatprep.subr.mxu0 0.0
    %5793 = vmatpush1.msra.mxu0 0.0
    %5794 = vmatprep.mubr.f32.mxu0 0.0
    %5795 = vmatmul.mubr.f32.gmra.mrb[0].mxu0 %v5659
    %v5796 = vpop.f32.mrb[0].mxu0
    %v5797 = vadd.f32 0.0, %v5796
    %v5798 = vpop.f32.mrb[0].mxu0
    %5799 = vmatprep.mubr.f32.mxu0 0.0
    %5800 = vmatmul.mubr.f32.gmra.mrb[0].mxu0 %v5662
    %v5801 = vpop.f32.mrb[0].mxu0
    %v5802 = vadd.f32 0.0, %v5801
    %v5803 = vpop.f32.mrb[0].mxu0
    %5804 = vmatprep.mubr.f32.mxu0 0.0
    %5805 = vmatmul.mubr.f32.gmra.mrb[0].mxu0 %v5665
    %v5806 = vpop.f32.mrb[0].mxu0
    %v5807 = vadd.f32 0.0, %v5806
    %v5808 = vpop.f32.mrb[0].mxu0
    %5809 = vmatprep.mubr.f32.mxu0 0.0
    %5810 = vmatmul.mubr.f32.gmra.mrb[0].mxu0 %v5668
    %v5811 = vpop.f32.mrb[0].mxu0
    %v5812 = vadd.f32 0.0, %v5811
    %v5813 = vpop.f32.mrb[0].mxu0
    %5814 = vmatprep.mubr.f32.mxu0 0.0
    %5815 = vmatmul.mubr.f32.gmra.mrb[0].mxu0 %v5671
    %v5816 = vpop.f32.mrb[0].mxu0
    %v5817 = vadd.f32 0.0, %v5816
    %v5818 = vpop.f32.mrb[0].mxu0
    %5819 = vmatprep.mubr.f32.mxu0 0.0
    %5820 = vmatmul.mubr.f32.gmra.mrb[0].mxu0 %v5674
    %v5821 = vpop.f32.mrb[0].mxu0
    %v5822 = vadd.f32 0.0, %v5821
    %v5823 = vpop.f32.mrb[0].mxu0
    %5824 = vmatprep.mubr.f32.mxu0 0.0
    %5825 = vmatmul.mubr.f32.gmra.mrb[0].mxu0 %v5677
    %v5826 = vpop.f32.mrb[0].mxu0
    %v5827 = vadd.f32 0.0, %v5826
    %v5828 = vpop.f32.mrb[0].mxu0
    %5829 = vmatprep.mubr.f32.mxu0 0.0
    %5830 = vmatmul.mubr.f32.gmra.mrb[0].mxu0 %v5680
    %v5831 = vpop.f32.mrb[0].mxu0
    %v5832 = vadd.f32 0.0, %v5831
    %v5833 = vpop.f32.mrb[0].mxu0
    %5834 = vmatprep.mubr.f32.mxu0 0.0
    %5835 = vmatmul.mubr.f32.gmra.mrb[0].mxu0 %v5683
    %v5836 = vpop.f32.mrb[0].mxu0
    %v5837 = vadd.f32 0.0, %v5836
    %v5838 = vpop.f32.mrb[0].mxu0
    %5839 = vmatprep.mubr.f32.mxu0 0.0
    %5840 = vmatmul.mubr.f32.gmra.mrb[0].mxu0 %v5686
    %v5841 = vpop.f32.mrb[0].mxu0
    %v5842 = vadd.f32 0.0, %v5841
    %v5843 = vpop.f32.mrb[0].mxu0
    %5844 = vmatprep.mubr.f32.mxu0 0.0
    %5845 = vmatmul.mubr.f32.gmra.mrb[0].mxu0 %v5689
    %v5846 = vpop.f32.mrb[0].mxu0
    %v5847 = vpop.f32.mrb[0].mxu0
    %5848 = vmatprep.mubr.f32.mxu0 0.0
    %5849 = vmatmul.mubr.f32.gmra.mrb[0].mxu0 %v5692
    %v5850 = vpop.f32.mrb[0].mxu0
    %v5851 = vpop.f32.mrb[0].mxu0
    %5852 = vmatprep.mubr.f32.mxu0 0.0
    %5853 = vmatmul.mubr.f32.gmra.mrb[0].mxu0 %v5695
    %v5854 = vpop.f32.mrb[0].mxu0
    %v5855 = vpop.f32.mrb[0].mxu0
    %5856 = vmatprep.mubr.f32.mxu0 0.0
    %5857 = vmatmul.mubr.f32.gmra.mrb[0].mxu0 %v5698
    %v5858 = vpop.f32.mrb[0].mxu0
    %v5859 = vpop.f32.mrb[0].mxu0
    %5860 = vmatprep.mubr.f32.mxu0 0.0
    %5861 = vmatmul.mubr.f32.gmra.mrb[0].mxu0 %v5701
    %v5862 = vpop.f32.mrb[0].mxu0
    %v5863 = vadd.f32 0.0, %v5862
    %v5864 = vpop.f32.mrb[0].mxu0
    %5865 = vmatprep.mubr.f32.mxu0 0.0
    %5866 = vmatmul.mubr.f32.gmra.mrb[0].mxu0 %v5704
    %v5867 = vpop.f32.mrb[0].mxu0
    %v5868 = vadd.f32 0.0, %v5867
    %v5869 = vpop.f32.mrb[0].mxu0
    %5870 = vmatprep.mubr.f32.mxu0 0.0
    %5871 = vmatmul.mubr.f32.gmra.mrb[0].mxu0 %v5707
    %v5872 = vpop.f32.mrb[0].mxu0
    %v5873 = vadd.f32 0.0, %v5872
    %v5874 = vpop.f32.mrb[0].mxu0
    %5875 = vmatprep.mubr.f32.mxu0 0.0
    %5876 = vmatmul.mubr.f32.gmra.mrb[0].mxu0 %v5710
    %v5877 = vpop.f32.mrb[0].mxu0
    %v5878 = vadd.f32 0.0, %v5877
    %v5879 = vpop.f32.mrb[0].mxu0
    %5880 = vmatprep.mubr.f32.mxu0 0.0
    %5881 = vmatmul.mubr.f32.gmra.mrb[0].mxu0 %v5713
    %v5882 = vpop.f32.mrb[0].mxu0
    %v5883 = vadd.f32 0.0, %v5882
    %v5884 = vpop.f32.mrb[0].mxu0
    %5885 = vmatprep.mubr.f32.mxu0 0.0
    %5886 = vmatmul.mubr.f32.gmra.mrb[0].mxu0 %v5716
    %v5887 = vpop.f32.mrb[0].mxu0
    %v5888 = vadd.f32 0.0, %v5887
    %v5889 = vpop.f32.mrb[0].mxu0
    %5890 = vmatprep.mubr.f32.mxu0 0.0
    %5891 = vmatmul.mubr.f32.gmra.mrb[0].mxu0 %v5719
    %v5892 = vpop.f32.mrb[0].mxu0
    %v5893 = vadd.f32 0.0, %v5892
    %v5894 = vpop.f32.mrb[0].mxu0
    %5895 = vmatprep.mubr.f32.mxu0 0.0
    %5896 = vmatmul.mubr.f32.gmra.mrb[0].mxu0 %v5722
    %v5897 = vpop.f32.mrb[0].mxu0
    %v5898 = vadd.f32 0.0, %v5897
    %v5899 = vpop.f32.mrb[0].mxu0
    %5900 = vmatprep.mubr.f32.mxu0 0.0
    %5901 = vmatmul.mubr.f32.gmra.mrb[0].mxu0 %v5725
    %v5902 = vpop.f32.mrb[0].mxu0
    %v5903 = vadd.f32 0.0, %v5902
    %v5904 = vpop.f32.mrb[0].mxu0
    %5905 = vmatprep.mubr.f32.mxu0 0.0
    %5906 = vmatmul.mubr.f32.gmra.mrb[0].mxu0 %v5728
    %v5907 = vpop.f32.mrb[0].mxu0
    %v5908 = vadd.f32 0.0, %v5907
    %v5909 = vpop.f32.mrb[0].mxu0
    %5910 = vdwg.mxu0
    %v5911 = vadd.f32 %v5605, %v5797
    %v5912 = vadd.f32 %v5606, %v5802
    %v5913 = vadd.f32 %v5607, %v5807
    %v5914 = vadd.f32 %v5608, %v5812
    %v5915 = vadd.f32 %v5609, %v5817
    %v5916 = vadd.f32 %v5610, %v5822
    %v5917 = vadd.f32 %v5611, %v5827
    %v5918 = vadd.f32 %v5612, %v5832
    %v5919 = vadd.f32 %v5613, %v5837
    %v5920 = vadd.f32 %v5614, %v5842
    %v5921 = vadd.f32 %v5615, %v5863
    %v5922 = vadd.f32 %v5616, %v5868
    %v5923 = vadd.f32 %v5617, %v5873
    %v5924 = vadd.f32 %v5618, %v5878
    %v5925 = vadd.f32 %v5619, %v5883
    %v5926 = vadd.f32 %v5620, %v5888
    %v5927 = vadd.f32 %v5621, %v5893
    %v5928 = vadd.f32 %v5622, %v5898
    %v5929 = vadd.f32 %v5623, %v5903
    %v5930 = vadd.f32 %v5624, %v5908
    %v5931 = vld [vmem:[#allocation2 + $0x22] sm:$0xff]
    %v5932 = vld [vmem:[#allocation2 + $0x2a] sm:$0xff]
    %v5933 = vld [vmem:[#allocation2 + $0x32] sm:$0xff]
    %v5934 = vld [vmem:[#allocation2 + $0x3a] sm:$0xff]
    %v5935 = vld [vmem:[#allocation2 + $0x42] sm:$0xff]
    %v5936 = vld [vmem:[#allocation2 + $0x4a] sm:$0xff]
    %v5937 = vld [vmem:[#allocation2 + $0x52] sm:$0xff]
    %v5938 = vld [vmem:[#allocation2 + $0x5a] sm:$0xff]
    %v5939 = vld [vmem:[#allocation2 + $0x62] sm:$0xff]
    %v5940 = vld [vmem:[#allocation2 + $0x6a] sm:$0xff]
    %v5941 = vld [vmem:[#allocation2 + $0x72] sm:$0xff]
    %v5942 = vld [vmem:[#allocation2 + $0x7a] sm:$0xff]
    %v5943 = vld [vmem:[#allocation2 + $0x82] sm:$0xff]
    %v5944 = vld [vmem:[#allocation2 + $0x8a] sm:$0xff]
    %v5945 = vld [vmem:[#allocation2 + $0x92] sm:$0xff]
    %v5946 = vld [vmem:[#allocation2 + $0x9a] sm:$0xff]
    %v5947 = vld [vmem:[#allocation2 + $0xa2] sm:$0xff]
    %v5948 = vld [vmem:[#allocation2 + $0xaa] sm:$0xff]
    %v5949 = vld [vmem:[#allocation2 + $0xb2] sm:$0xff]
    %v5950 = vld [vmem:[#allocation2 + $0xba] sm:$0xff]
    %v5951 = vld [vmem:[#allocation2 + $0xc2] sm:$0xff]
    %v5952 = vld [vmem:[#allocation2 + $0xca] sm:$0xff]
    %v5953 = vld [vmem:[#allocation2 + $0xd2] sm:$0xff]
    %v5954 = vld [vmem:[#allocation2 + $0xda] sm:$0xff]
    %s5955 = scalar_lea.vmem %s3, 512
    %v5956 = vld [vmem:[%s5955] sm:$0xff]
    %v5957 = vld [vmem:[%s5955 + $0x8] sm:$0xff]
    %v5958 = vld [vmem:[%s5955 + $0x10] sm:$0xff]
    %v5959 = vld [vmem:[%s5955 + $0x18] sm:$0xff]
    %v5960 = vld [vmem:[%s5955 + $0x20] sm:$0xff]
    %v5961 = vld [vmem:[%s5955 + $0x28] sm:$0xff]
    %v5962 = vld [vmem:[%s5955 + $0x30] sm:$0xff]
    %v5963 = vld [vmem:[%s5955 + $0x38] sm:$0xff]
    %v5965 = vsel %vm36, %v5931, 0
    %v5968 = vsel %vm36, %v5932, 0
    %v5971 = vsel %vm36, %v5933, 0
    %v5974 = vsel %vm36, %v5934, 0
    %v5977 = vsel %vm36, %v5935, 0
    %v5980 = vsel %vm36, %v5936, 0
    %v5983 = vsel %vm36, %v5937, 0
    %v5986 = vsel %vm36, %v5938, 0
    %v5989 = vsel %vm36, %v5939, 0
    %v5992 = vsel %vm36, %v5940, 0
    %v5995 = vsel %vm36, %v5941, 0
    %v5998 = vsel %vm36, %v5942, 0
    %v6001 = vsel %vm36, %v5943, 0
    %v6004 = vsel %vm36, %v5944, 0
    %v6007 = vsel %vm36, %v5945, 0
    %v6010 = vsel %vm36, %v5946, 0
    %v6013 = vsel %vm36, %v5947, 0
    %v6016 = vsel %vm36, %v5948, 0
    %v6019 = vsel %vm36, %v5949, 0
    %v6022 = vsel %vm36, %v5950, 0
    %v6025 = vsel %vm36, %v5951, 0
    %v6028 = vsel %vm36, %v5952, 0
    %v6031 = vsel %vm36, %v5953, 0
    %v6034 = vsel %vm36, %v5954, 0
    %6036 = vmatprep.subr.mxu0 0.0
    %6037 = vmatpush1.msra.mxu0 %v5956
    %6038 = vmatprep.subr.mxu0 0.0
    %6039 = vmatpush1.msra.mxu0 %v5957
    %6040 = vmatprep.subr.mxu0 0.0
    %6041 = vmatpush1.msra.mxu0 %v5958
    %6042 = vmatprep.subr.mxu0 0.0
    %6043 = vmatpush1.msra.mxu0 %v5959
    %6044 = vmatprep.subr.mxu0 0.0
    %6045 = vmatpush1.msra.mxu0 %v5960
    %6046 = vmatprep.subr.mxu0 0.0
    %6047 = vmatpush1.msra.mxu0 %v5961
    %6048 = vmatprep.subr.mxu0 0.0
    %6049 = vmatpush1.msra.mxu0 %v5962
    %6050 = vmatprep.subr.mxu0 0.0
    %6051 = vmatpush1.msra.mxu0 %v5963
    %6052 = vmatprep.subr.mxu0 0.0
    %6053 = vmatpush1.msra.mxu0 0.0
    %6054 = vmatprep.subr.mxu0 0.0
    %6055 = vmatpush1.msra.mxu0 0.0
    %6056 = vmatprep.subr.mxu0 0.0
    %6057 = vmatpush1.msra.mxu0 0.0
    %6058 = vmatprep.subr.mxu0 0.0
    %6059 = vmatpush1.msra.mxu0 0.0
    %6060 = vmatprep.subr.mxu0 0.0
    %6061 = vmatpush1.msra.mxu0 0.0
    %6062 = vmatprep.subr.mxu0 0.0
    %6063 = vmatpush1.msra.mxu0 0.0
    %6064 = vmatprep.subr.mxu0 0.0
    %6065 = vmatpush1.msra.mxu0 0.0
    %6066 = vmatprep.subr.mxu0 0.0
    %6067 = vmatpush1.msra.mxu0 0.0
    %6068 = vmatprep.subr.mxu0 0.0
    %6069 = vmatpush1.msra.mxu0 0.0
    %6070 = vmatprep.subr.mxu0 0.0
    %6071 = vmatpush1.msra.mxu0 0.0
    %6072 = vmatprep.subr.mxu0 0.0
    %6073 = vmatpush1.msra.mxu0 0.0
    %6074 = vmatprep.subr.mxu0 0.0
    %6075 = vmatpush1.msra.mxu0 0.0
    %6076 = vmatprep.subr.mxu0 0.0
    %6077 = vmatpush1.msra.mxu0 0.0
    %6078 = vmatprep.subr.mxu0 0.0
    %6079 = vmatpush1.msra.mxu0 0.0
    %6080 = vmatprep.subr.mxu0 0.0
    %6081 = vmatpush1.msra.mxu0 0.0
    %6082 = vmatprep.subr.mxu0 0.0
    %6083 = vmatpush1.msra.mxu0 0.0
    %6084 = vmatprep.subr.mxu0 0.0
    %6085 = vmatpush1.msra.mxu0 0.0
    %6086 = vmatprep.subr.mxu0 0.0
    %6087 = vmatpush1.msra.mxu0 0.0
    %6088 = vmatprep.subr.mxu0 0.0
    %6089 = vmatpush1.msra.mxu0 0.0
    %6090 = vmatprep.subr.mxu0 0.0
    %6091 = vmatpush1.msra.mxu0 0.0
    %6092 = vmatprep.subr.mxu0 0.0
    %6093 = vmatpush1.msra.mxu0 0.0
    %6094 = vmatprep.subr.mxu0 0.0
    %6095 = vmatpush1.msra.mxu0 0.0
    %6096 = vmatprep.subr.mxu0 0.0
    %6097 = vmatpush1.msra.mxu0 0.0
    %6098 = vmatprep.subr.mxu0 0.0
    %6099 = vmatpush1.msra.mxu0 0.0
    %6100 = vmatprep.mubr.f32.mxu0 0.0
    %6101 = vmatmul.mubr.f32.gmra.mrb[0].mxu0 %v5965
    %v6102 = vpop.f32.mrb[0].mxu0
    %v6103 = vadd.f32 0.0, %v6102
    %v6104 = vpop.f32.mrb[0].mxu0
    %6105 = vmatprep.mubr.f32.mxu0 0.0
    %6106 = vmatmul.mubr.f32.gmra.mrb[0].mxu0 %v5968
    %v6107 = vpop.f32.mrb[0].mxu0
    %v6108 = vadd.f32 0.0, %v6107
    %v6109 = vpop.f32.mrb[0].mxu0
    %6110 = vmatprep.mubr.f32.mxu0 0.0
    %6111 = vmatmul.mubr.f32.gmra.mrb[0].mxu0 %v5971
    %v6112 = vpop.f32.mrb[0].mxu0
    %v6113 = vadd.f32 0.0, %v6112
    %v6114 = vpop.f32.mrb[0].mxu0
    %6115 = vmatprep.mubr.f32.mxu0 0.0
    %6116 = vmatmul.mubr.f32.gmra.mrb[0].mxu0 %v5974
    %v6117 = vpop.f32.mrb[0].mxu0
    %v6118 = vadd.f32 0.0, %v6117
    %v6119 = vpop.f32.mrb[0].mxu0
    %6120 = vmatprep.mubr.f32.mxu0 0.0
    %6121 = vmatmul.mubr.f32.gmra.mrb[0].mxu0 %v5977
    %v6122 = vpop.f32.mrb[0].mxu0
    %v6123 = vadd.f32 0.0, %v6122
    %v6124 = vpop.f32.mrb[0].mxu0
    %6125 = vmatprep.mubr.f32.mxu0 0.0
    %6126 = vmatmul.mubr.f32.gmra.mrb[0].mxu0 %v5980
    %v6127 = vpop.f32.mrb[0].mxu0
    %v6128 = vadd.f32 0.0, %v6127
    %v6129 = vpop.f32.mrb[0].mxu0
    %6130 = vmatprep.mubr.f32.mxu0 0.0
    %6131 = vmatmul.mubr.f32.gmra.mrb[0].mxu0 %v5983
    %v6132 = vpop.f32.mrb[0].mxu0
    %v6133 = vadd.f32 0.0, %v6132
    %v6134 = vpop.f32.mrb[0].mxu0
    %6135 = vmatprep.mubr.f32.mxu0 0.0
    %6136 = vmatmul.mubr.f32.gmra.mrb[0].mxu0 %v5986
    %v6137 = vpop.f32.mrb[0].mxu0
    %v6138 = vadd.f32 0.0, %v6137
    %v6139 = vpop.f32.mrb[0].mxu0
    %6140 = vmatprep.mubr.f32.mxu0 0.0
    %6141 = vmatmul.mubr.f32.gmra.mrb[0].mxu0 %v5989
    %v6142 = vpop.f32.mrb[0].mxu0
    %v6143 = vadd.f32 0.0, %v6142
    %v6144 = vpop.f32.mrb[0].mxu0
    %6145 = vmatprep.mubr.f32.mxu0 0.0
    %6146 = vmatmul.mubr.f32.gmra.mrb[0].mxu0 %v5992
    %v6147 = vpop.f32.mrb[0].mxu0
    %v6148 = vadd.f32 0.0, %v6147
    %v6149 = vpop.f32.mrb[0].mxu0
    %6150 = vmatprep.mubr.f32.mxu0 0.0
    %6151 = vmatmul.mubr.f32.gmra.mrb[0].mxu0 %v5995
    %v6152 = vpop.f32.mrb[0].mxu0
    %v6153 = vpop.f32.mrb[0].mxu0
    %6154 = vmatprep.mubr.f32.mxu0 0.0
    %6155 = vmatmul.mubr.f32.gmra.mrb[0].mxu0 %v5998
    %v6156 = vpop.f32.mrb[0].mxu0
    %v6157 = vpop.f32.mrb[0].mxu0
    %6158 = vmatprep.mubr.f32.mxu0 0.0
    %6159 = vmatmul.mubr.f32.gmra.mrb[0].mxu0 %v6001
    %v6160 = vpop.f32.mrb[0].mxu0
    %v6161 = vpop.f32.mrb[0].mxu0
    %6162 = vmatprep.mubr.f32.mxu0 0.0
    %6163 = vmatmul.mubr.f32.gmra.mrb[0].mxu0 %v6004
    %v6164 = vpop.f32.mrb[0].mxu0
    %v6165 = vpop.f32.mrb[0].mxu0
    %6166 = vmatprep.mubr.f32.mxu0 0.0
    %6167 = vmatmul.mubr.f32.gmra.mrb[0].mxu0 %v6007
    %v6168 = vpop.f32.mrb[0].mxu0
    %v6169 = vadd.f32 0.0, %v6168
    %v6170 = vpop.f32.mrb[0].mxu0
    %6171 = vmatprep.mubr.f32.mxu0 0.0
    %6172 = vmatmul.mubr.f32.gmra.mrb[0].mxu0 %v6010
    %v6173 = vpop.f32.mrb[0].mxu0
    %v6174 = vadd.f32 0.0, %v6173
    %v6175 = vpop.f32.mrb[0].mxu0
    %6176 = vmatprep.mubr.f32.mxu0 0.0
    %6177 = vmatmul.mubr.f32.gmra.mrb[0].mxu0 %v6013
    %v6178 = vpop.f32.mrb[0].mxu0
    %v6179 = vadd.f32 0.0, %v6178
    %v6180 = vpop.f32.mrb[0].mxu0
    %6181 = vmatprep.mubr.f32.mxu0 0.0
    %6182 = vmatmul.mubr.f32.gmra.mrb[0].mxu0 %v6016
    %v6183 = vpop.f32.mrb[0].mxu0
    %v6184 = vadd.f32 0.0, %v6183
    %v6185 = vpop.f32.mrb[0].mxu0
    %6186 = vmatprep.mubr.f32.mxu0 0.0
    %6187 = vmatmul.mubr.f32.gmra.mrb[0].mxu0 %v6019
    %v6188 = vpop.f32.mrb[0].mxu0
    %v6189 = vadd.f32 0.0, %v6188
    %v6190 = vpop.f32.mrb[0].mxu0
    %6191 = vmatprep.mubr.f32.mxu0 0.0
    %6192 = vmatmul.mubr.f32.gmra.mrb[0].mxu0 %v6022
    %v6193 = vpop.f32.mrb[0].mxu0
    %v6194 = vadd.f32 0.0, %v6193
    %v6195 = vpop.f32.mrb[0].mxu0
    %6196 = vmatprep.mubr.f32.mxu0 0.0
    %6197 = vmatmul.mubr.f32.gmra.mrb[0].mxu0 %v6025
    %v6198 = vpop.f32.mrb[0].mxu0
    %v6199 = vadd.f32 0.0, %v6198
    %v6200 = vpop.f32.mrb[0].mxu0
    %6201 = vmatprep.mubr.f32.mxu0 0.0
    %6202 = vmatmul.mubr.f32.gmra.mrb[0].mxu0 %v6028
    %v6203 = vpop.f32.mrb[0].mxu0
    %v6204 = vadd.f32 0.0, %v6203
    %v6205 = vpop.f32.mrb[0].mxu0
    %6206 = vmatprep.mubr.f32.mxu0 0.0
    %6207 = vmatmul.mubr.f32.gmra.mrb[0].mxu0 %v6031
    %v6208 = vpop.f32.mrb[0].mxu0
    %v6209 = vadd.f32 0.0, %v6208
    %v6210 = vpop.f32.mrb[0].mxu0
    %6211 = vmatprep.mubr.f32.mxu0 0.0
    %6212 = vmatmul.mubr.f32.gmra.mrb[0].mxu0 %v6034
    %v6213 = vpop.f32.mrb[0].mxu0
    %v6214 = vadd.f32 0.0, %v6213
    %v6215 = vpop.f32.mrb[0].mxu0
    %6216 = vdwg.mxu0
    %v6217 = vadd.f32 %v5911, %v6103
    %v6218 = vadd.f32 %v5912, %v6108
    %v6219 = vadd.f32 %v5913, %v6113
    %v6220 = vadd.f32 %v5914, %v6118
    %v6221 = vadd.f32 %v5915, %v6123
    %v6222 = vadd.f32 %v5916, %v6128
    %v6223 = vadd.f32 %v5917, %v6133
    %v6224 = vadd.f32 %v5918, %v6138
    %v6225 = vadd.f32 %v5919, %v6143
    %v6226 = vadd.f32 %v5920, %v6148
    %v6227 = vadd.f32 %v5921, %v6169
    %v6228 = vadd.f32 %v5922, %v6174
    %v6229 = vadd.f32 %v5923, %v6179
    %v6230 = vadd.f32 %v5924, %v6184
    %v6231 = vadd.f32 %v5925, %v6189
    %v6232 = vadd.f32 %v5926, %v6194
    %v6233 = vadd.f32 %v5927, %v6199
    %v6234 = vadd.f32 %v5928, %v6204
    %v6235 = vadd.f32 %v5929, %v6209
    %v6236 = vadd.f32 %v5930, %v6214
    %v6237 = vld [vmem:[%s4] sm:$0x1]
    %v6239 = vlaneseq
    %v6240 = vshrl.u32 %v6239, 7
    %v6241 = vsub.s32 0, %v6240
    %v6242 = vrot.slane %v6237, %v6241
    %v6244 = vadd.f32 %v6217, %v6242
    %v6245 = vadd.f32 %v6218, %v6242
    %v6246 = vadd.f32 %v6219, %v6242
    %v6247 = vadd.f32 %v6220, %v6242
    %v6248 = vadd.f32 %v6221, %v6242
    %v6249 = vadd.f32 %v6222, %v6242
    %v6250 = vadd.f32 %v6223, %v6242
    %v6251 = vadd.f32 %v6224, %v6242
    %v6252 = vadd.f32 %v6225, %v6242
    %v6253 = vadd.f32 %v6226, %v6242
    %v6254 = vadd.f32 %v6227, %v6242
    %v6255 = vadd.f32 %v6228, %v6242
    %v6256 = vadd.f32 %v6229, %v6242
    %v6257 = vadd.f32 %v6230, %v6242
    %v6258 = vadd.f32 %v6231, %v6242
    %v6259 = vadd.f32 %v6232, %v6242
    %v6260 = vadd.f32 %v6233, %v6242
    %v6261 = vadd.f32 %v6234, %v6242
    %v6262 = vadd.f32 %v6235, %v6242
    %v6263 = vadd.f32 %v6236, %v6242
    %v6264 = vmax.f32 %v6244, 0.0
    %v6265 = vmax.f32 %v6245, 0.0
    %v6266 = vmax.f32 %v6246, 0.0
    %v6267 = vmax.f32 %v6247, 0.0
    %v6268 = vmax.f32 %v6248, 0.0
    %v6269 = vmax.f32 %v6249, 0.0
    %v6270 = vmax.f32 %v6250, 0.0
    %v6271 = vmax.f32 %v6251, 0.0
    %v6272 = vmax.f32 %v6252, 0.0
    %v6273 = vmax.f32 %v6253, 0.0
    %v6274 = vmax.f32 %v6254, 0.0
    %v6275 = vmax.f32 %v6255, 0.0
    %v6276 = vmax.f32 %v6256, 0.0
    %v6277 = vmax.f32 %v6257, 0.0
    %v6278 = vmax.f32 %v6258, 0.0
    %v6279 = vmax.f32 %v6259, 0.0
    %v6280 = vmax.f32 %v6260, 0.0
    %v6281 = vmax.f32 %v6261, 0.0
    %v6282 = vmax.f32 %v6262, 0.0
    %v6283 = vmax.f32 %v6263, 0.0
    %6284 = vst [vmem:[#allocation3] sm:$0xff] %v6264
    %6285 = vst [vmem:[#allocation3 + $0x8] sm:$0xff] %v6265
    %6286 = vst [vmem:[#allocation3 + $0x10] sm:$0xff] %v6266
    %6287 = vst [vmem:[#allocation3 + $0x18] sm:$0xff] %v6267
    %6288 = vst [vmem:[#allocation3 + $0x20] sm:$0xff] %v6268
    %6289 = vst [vmem:[#allocation3 + $0x28] sm:$0xff] %v6269
    %6290 = vst [vmem:[#allocation3 + $0x30] sm:$0xff] %v6270
    %6291 = vst [vmem:[#allocation3 + $0x38] sm:$0xff] %v6271
    %6292 = vst [vmem:[#allocation3 + $0x40] sm:$0xff] %v6272
    %6293 = vst [vmem:[#allocation3 + $0x48] sm:$0xff] %v6273
    %6294 = vst [vmem:[#allocation3 + $0x50] sm:$0xff] %v6274
    %6295 = vst [vmem:[#allocation3 + $0x58] sm:$0xff] %v6275
    %6296 = vst [vmem:[#allocation3 + $0x60] sm:$0xff] %v6276
    %6297 = vst [vmem:[#allocation3 + $0x68] sm:$0xff] %v6277
    %6298 = vst [vmem:[#allocation3 + $0x70] sm:$0xff] %v6278
    %6299 = vst [vmem:[#allocation3 + $0x78] sm:$0xff] %v6279
    %6300 = vst [vmem:[#allocation3 + $0x80] sm:$0xff] %v6280
    %6301 = vst [vmem:[#allocation3 + $0x88] sm:$0xff] %v6281
    %6302 = vst [vmem:[#allocation3 + $0x90] sm:$0xff] %v6282
    %6303 = vst [vmem:[#allocation3 + $0x98] sm:$0xff] %v6283
    %v6304 = vld [vmem:[#allocation3] sm:$0xff]
    %v6305 = vld [vmem:[#allocation3 + $0x8] sm:$0xff]
    %v6306 = vld [vmem:[#allocation3 + $0x10] sm:$0xff]
    %v6307 = vld [vmem:[#allocation3 + $0x18] sm:$0xff]
    %v6308 = vld [vmem:[#allocation3 + $0x20] sm:$0xff]
    %v6309 = vld [vmem:[#allocation3 + $0x28] sm:$0xff]
    %v6310 = vld [vmem:[#allocation3 + $0x30] sm:$0xff]
    %v6311 = vld [vmem:[#allocation3 + $0x38] sm:$0xff]
    %v6312 = vld [vmem:[#allocation3 + $0x40] sm:$0xff]
    %v6313 = vld [vmem:[#allocation3 + $0x48] sm:$0xff]
    %v6314 = vld [vmem:[#allocation3 + $0x50] sm:$0xff]
    %v6315 = vld [vmem:[#allocation3 + $0x58] sm:$0xff]
    %v6316 = vld [vmem:[#allocation3 + $0x60] sm:$0xff]
    %v6317 = vld [vmem:[#allocation3 + $0x68] sm:$0xff]
    %v6318 = vld [vmem:[#allocation3 + $0x70] sm:$0xff]
    %v6319 = vld [vmem:[#allocation3 + $0x78] sm:$0xff]
    %v6320 = vld [vmem:[%s5] sm:$0xff]
    %v6321 = vld [vmem:[%s5 + $0x8] sm:$0xff]
    %v6322 = vld [vmem:[%s5 + $0x10] sm:$0xff]
    %v6323 = vld [vmem:[%s5 + $0x18] sm:$0xff]
    %v6324 = vld [vmem:[%s5 + $0x20] sm:$0xff]
    %v6325 = vld [vmem:[%s5 + $0x28] sm:$0xff]
    %v6326 = vld [vmem:[%s5 + $0x30] sm:$0xff]
    %v6327 = vld [vmem:[%s5 + $0x38] sm:$0xff]
    %v6328 = vld [vmem:[%s5 + $0x40] sm:$0xff]
    %v6329 = vld [vmem:[%s5 + $0x48] sm:$0xff]
    %v6330 = vld [vmem:[%s5 + $0x50] sm:$0xff]
    %v6331 = vld [vmem:[%s5 + $0x58] sm:$0xff]
    %v6332 = vld [vmem:[%s5 + $0x60] sm:$0xff]
    %v6333 = vld [vmem:[%s5 + $0x68] sm:$0xff]
    %v6334 = vld [vmem:[%s5 + $0x70] sm:$0xff]
    %v6335 = vld [vmem:[%s5 + $0x78] sm:$0xff]
    %v6336 = vld [vmem:[%s5 + $0x80] sm:$0xff]
    %v6337 = vld [vmem:[%s5 + $0x88] sm:$0xff]
    %v6338 = vld [vmem:[%s5 + $0x90] sm:$0xff]
    %v6339 = vld [vmem:[%s5 + $0x98] sm:$0xff]
    %v6340 = vld [vmem:[%s5 + $0xa0] sm:$0xff]
    %v6341 = vld [vmem:[%s5 + $0xa8] sm:$0xff]
    %v6342 = vld [vmem:[%s5 + $0xb0] sm:$0xff]
    %v6343 = vld [vmem:[%s5 + $0xb8] sm:$0xff]
    %v6344 = vld [vmem:[%s5 + $0xc0] sm:$0xff]
    %v6345 = vld [vmem:[%s5 + $0xc8] sm:$0xff]
    %v6346 = vld [vmem:[%s5 + $0xd0] sm:$0xff]
    %v6347 = vld [vmem:[%s5 + $0xd8] sm:$0xff]
    %v6348 = vld [vmem:[%s5 + $0xe0] sm:$0xff]
    %v6349 = vld [vmem:[%s5 + $0xe8] sm:$0xff]
    %v6350 = vld [vmem:[%s5 + $0xf0] sm:$0xff]
    %v6351 = vld [vmem:[%s5 + $0xf8] sm:$0xff]
    %v6352 = vld [vmem:[#allocation3 + $0x1] sm:$0xff]
    %v6353 = vld [vmem:[#allocation3 + $0x9] sm:$0xff]
    %v6354 = vld [vmem:[#allocation3 + $0x11] sm:$0xff]
    %v6355 = vld [vmem:[#allocation3 + $0x19] sm:$0xff]
    %v6356 = vld [vmem:[#allocation3 + $0x21] sm:$0xff]
    %v6357 = vld [vmem:[#allocation3 + $0x29] sm:$0xff]
    %v6358 = vld [vmem:[#allocation3 + $0x31] sm:$0xff]
    %v6359 = vld [vmem:[#allocation3 + $0x39] sm:$0xff]
    %v6360 = vld [vmem:[#allocation3 + $0x41] sm:$0xff]
    %v6361 = vld [vmem:[#allocation3 + $0x49] sm:$0xff]
    %v6362 = vld [vmem:[#allocation3 + $0x51] sm:$0xff]
    %v6363 = vld [vmem:[#allocation3 + $0x59] sm:$0xff]
    %v6364 = vld [vmem:[#allocation3 + $0x61] sm:$0xff]
    %v6365 = vld [vmem:[#allocation3 + $0x69] sm:$0xff]
    %v6366 = vld [vmem:[#allocation3 + $0x71] sm:$0xff]
    %v6367 = vld [vmem:[#allocation3 + $0x79] sm:$0xff]
    %s6368 = scalar_lea.vmem %s5, 256
    %v6369 = vld [vmem:[%s6368] sm:$0xff]
    %v6370 = vld [vmem:[%s6368 + $0x8] sm:$0xff]
    %v6371 = vld [vmem:[%s6368 + $0x10] sm:$0xff]
    %v6372 = vld [vmem:[%s6368 + $0x18] sm:$0xff]
    %v6373 = vld [vmem:[%s6368 + $0x20] sm:$0xff]
    %v6374 = vld [vmem:[%s6368 + $0x28] sm:$0xff]
    %v6375 = vld [vmem:[%s6368 + $0x30] sm:$0xff]
    %v6376 = vld [vmem:[%s6368 + $0x38] sm:$0xff]
    %v6377 = vld [vmem:[%s6368 + $0x40] sm:$0xff]
    %v6378 = vld [vmem:[%s6368 + $0x48] sm:$0xff]
    %v6379 = vld [vmem:[%s6368 + $0x50] sm:$0xff]
    %v6380 = vld [vmem:[%s6368 + $0x58] sm:$0xff]
    %v6381 = vld [vmem:[%s6368 + $0x60] sm:$0xff]
    %v6382 = vld [vmem:[%s6368 + $0x68] sm:$0xff]
    %v6383 = vld [vmem:[%s6368 + $0x70] sm:$0xff]
    %v6384 = vld [vmem:[%s6368 + $0x78] sm:$0xff]
    %v6385 = vld [vmem:[%s6368 + $0x80] sm:$0xff]
    %v6386 = vld [vmem:[%s6368 + $0x88] sm:$0xff]
    %v6387 = vld [vmem:[%s6368 + $0x90] sm:$0xff]
    %v6388 = vld [vmem:[%s6368 + $0x98] sm:$0xff]
    %v6389 = vld [vmem:[%s6368 + $0xa0] sm:$0xff]
    %v6390 = vld [vmem:[%s6368 + $0xa8] sm:$0xff]
    %v6391 = vld [vmem:[%s6368 + $0xb0] sm:$0xff]
    %v6392 = vld [vmem:[%s6368 + $0xb8] sm:$0xff]
    %v6393 = vld [vmem:[%s6368 + $0xc0] sm:$0xff]
    %v6394 = vld [vmem:[%s6368 + $0xc8] sm:$0xff]
    %v6395 = vld [vmem:[%s6368 + $0xd0] sm:$0xff]
    %v6396 = vld [vmem:[%s6368 + $0xd8] sm:$0xff]
    %v6397 = vld [vmem:[%s6368 + $0xe0] sm:$0xff]
    %v6398 = vld [vmem:[%s6368 + $0xe8] sm:$0xff]
    %v6399 = vld [vmem:[%s6368 + $0xf0] sm:$0xff]
    %v6400 = vld [vmem:[%s6368 + $0xf8] sm:$0xff]
    %6401 = vmatprep.subr.mxu0 %v6370
    %6402 = vmatpush1.msra.mxu0 %v6369
    %6403 = vmatprep.subr.mxu0 %v6372
    %6404 = vmatpush1.msra.mxu0 %v6371
    %6405 = vmatprep.subr.mxu0 %v6374
    %6406 = vmatpush1.msra.mxu0 %v6373
    %6407 = vmatprep.subr.mxu0 %v6376
    %6408 = vmatpush1.msra.mxu0 %v6375
    %6409 = vmatprep.subr.mxu0 %v6378
    %6410 = vmatpush1.msra.mxu0 %v6377
    %6411 = vmatprep.subr.mxu0 %v6380
    %6412 = vmatpush1.msra.mxu0 %v6379
    %6413 = vmatprep.subr.mxu0 %v6382
    %6414 = vmatpush1.msra.mxu0 %v6381
    %6415 = vmatprep.subr.mxu0 %v6384
    %6416 = vmatpush1.msra.mxu0 %v6383
    %6417 = vmatprep.subr.mxu0 %v6386
    %6418 = vmatpush1.msra.mxu0 %v6385
    %6419 = vmatprep.subr.mxu0 %v6388
    %6420 = vmatpush1.msra.mxu0 %v6387
    %6421 = vmatprep.subr.mxu0 %v6390
    %6422 = vmatpush1.msra.mxu0 %v6389
    %6423 = vmatprep.subr.mxu0 %v6392
    %6424 = vmatpush1.msra.mxu0 %v6391
    %6425 = vmatprep.subr.mxu0 %v6394
    %6426 = vmatpush1.msra.mxu0 %v6393
    %6427 = vmatprep.subr.mxu0 %v6396
    %6428 = vmatpush1.msra.mxu0 %v6395
    %6429 = vmatprep.subr.mxu0 %v6398
    %6430 = vmatpush1.msra.mxu0 %v6397
    %6431 = vmatprep.subr.mxu0 %v6400
    %6432 = vmatpush1.msra.mxu0 %v6399
    %6433 = vmatprep.subr.mxu0 0.0
    %6434 = vmatpush1.msra.mxu0 0.0
    %6435 = vmatprep.subr.mxu0 0.0
    %6436 = vmatpush1.msra.mxu0 0.0
    %6437 = vmatprep.subr.mxu0 0.0
    %6438 = vmatpush1.msra.mxu0 0.0
    %6439 = vmatprep.subr.mxu0 0.0
    %6440 = vmatpush1.msra.mxu0 0.0
    %6441 = vmatprep.subr.mxu0 0.0
    %6442 = vmatpush1.msra.mxu0 0.0
    %6443 = vmatprep.subr.mxu0 0.0
    %6444 = vmatpush1.msra.mxu0 0.0
    %6445 = vmatprep.subr.mxu0 0.0
    %6446 = vmatpush1.msra.mxu0 0.0
    %6447 = vmatprep.subr.mxu0 0.0
    %6448 = vmatpush1.msra.mxu0 0.0
    %6449 = vmatprep.subr.mxu0 0.0
    %6450 = vmatpush1.msra.mxu0 0.0
    %6451 = vmatprep.subr.mxu0 0.0
    %6452 = vmatpush1.msra.mxu0 0.0
    %6453 = vmatprep.subr.mxu0 0.0
    %6454 = vmatpush1.msra.mxu0 0.0
    %6455 = vmatprep.subr.mxu0 0.0
    %6456 = vmatpush1.msra.mxu0 0.0
    %6457 = vmatprep.subr.mxu0 0.0
    %6458 = vmatpush1.msra.mxu0 0.0
    %6459 = vmatprep.subr.mxu0 0.0
    %6460 = vmatpush1.msra.mxu0 0.0
    %6461 = vmatprep.subr.mxu0 0.0
    %6462 = vmatpush1.msra.mxu0 0.0
    %6463 = vmatprep.subr.mxu0 0.0
    %6464 = vmatpush1.msra.mxu0 0.0
    %6465 = vmatprep.mubr.f32.mxu0 0.0
    %6466 = vmatmul.mubr.f32.gmra.mrb[0].mxu0 %v6352
    %v6467 = vpop.f32.mrb[0].mxu0
    %v6468 = vadd.f32 0.0, %v6467
    %v6469 = vpop.f32.mrb[0].mxu0
    %v6470 = vadd.f32 0.0, %v6469
    %6471 = vmatprep.mubr.f32.mxu0 0.0
    %6472 = vmatmul.mubr.f32.gmra.mrb[0].mxu0 %v6353
    %v6473 = vpop.f32.mrb[0].mxu0
    %v6474 = vadd.f32 0.0, %v6473
    %v6475 = vpop.f32.mrb[0].mxu0
    %v6476 = vadd.f32 0.0, %v6475
    %6477 = vmatprep.mubr.f32.mxu0 0.0
    %6478 = vmatmul.mubr.f32.gmra.mrb[0].mxu0 %v6354
    %v6479 = vpop.f32.mrb[0].mxu0
    %v6480 = vadd.f32 0.0, %v6479
    %v6481 = vpop.f32.mrb[0].mxu0
    %v6482 = vadd.f32 0.0, %v6481
    %6483 = vmatprep.mubr.f32.mxu0 0.0
    %6484 = vmatmul.mubr.f32.gmra.mrb[0].mxu0 %v6355
    %v6485 = vpop.f32.mrb[0].mxu0
    %v6486 = vadd.f32 0.0, %v6485
    %v6487 = vpop.f32.mrb[0].mxu0
    %v6488 = vadd.f32 0.0, %v6487
    %6489 = vmatprep.mubr.f32.mxu0 0.0
    %6490 = vmatmul.mubr.f32.gmra.mrb[0].mxu0 %v6356
    %v6491 = vpop.f32.mrb[0].mxu0
    %v6492 = vadd.f32 0.0, %v6491
    %v6493 = vpop.f32.mrb[0].mxu0
    %v6494 = vadd.f32 0.0, %v6493
    %6495 = vmatprep.mubr.f32.mxu0 0.0
    %6496 = vmatmul.mubr.f32.gmra.mrb[0].mxu0 %v6357
    %v6497 = vpop.f32.mrb[0].mxu0
    %v6498 = vadd.f32 0.0, %v6497
    %v6499 = vpop.f32.mrb[0].mxu0
    %v6500 = vadd.f32 0.0, %v6499
    %6501 = vmatprep.mubr.f32.mxu0 0.0
    %6502 = vmatmul.mubr.f32.gmra.mrb[0].mxu0 %v6358
    %v6503 = vpop.f32.mrb[0].mxu0
    %v6504 = vpop.f32.mrb[0].mxu0
    %6505 = vmatprep.mubr.f32.mxu0 0.0
    %6506 = vmatmul.mubr.f32.gmra.mrb[0].mxu0 %v6359
    %v6507 = vpop.f32.mrb[0].mxu0
    %v6508 = vpop.f32.mrb[0].mxu0
    %6509 = vmatprep.mubr.f32.mxu0 0.0
    %6510 = vmatmul.mubr.f32.gmra.mrb[0].mxu0 %v6360
    %v6511 = vpop.f32.mrb[0].mxu0
    %v6512 = vpop.f32.mrb[0].mxu0
    %6513 = vmatprep.mubr.f32.mxu0 0.0
    %6514 = vmatmul.mubr.f32.gmra.mrb[0].mxu0 %v6361
    %v6515 = vpop.f32.mrb[0].mxu0
    %v6516 = vpop.f32.mrb[0].mxu0
    %6517 = vmatprep.mubr.f32.mxu0 0.0
    %6518 = vmatmul.mubr.f32.gmra.mrb[0].mxu0 %v6362
    %v6519 = vpop.f32.mrb[0].mxu0
    %v6520 = vadd.f32 0.0, %v6519
    %v6521 = vpop.f32.mrb[0].mxu0
    %v6522 = vadd.f32 0.0, %v6521
    %6523 = vmatprep.mubr.f32.mxu0 0.0
    %6524 = vmatmul.mubr.f32.gmra.mrb[0].mxu0 %v6363
    %v6525 = vpop.f32.mrb[0].mxu0
    %v6526 = vadd.f32 0.0, %v6525
    %v6527 = vpop.f32.mrb[0].mxu0
    %v6528 = vadd.f32 0.0, %v6527
    %6529 = vmatprep.mubr.f32.mxu0 0.0
    %6530 = vmatmul.mubr.f32.gmra.mrb[0].mxu0 %v6364
    %v6531 = vpop.f32.mrb[0].mxu0
    %v6532 = vadd.f32 0.0, %v6531
    %v6533 = vpop.f32.mrb[0].mxu0
    %v6534 = vadd.f32 0.0, %v6533
    %6535 = vmatprep.mubr.f32.mxu0 0.0
    %6536 = vmatmul.mubr.f32.gmra.mrb[0].mxu0 %v6365
    %v6537 = vpop.f32.mrb[0].mxu0
    %v6538 = vadd.f32 0.0, %v6537
    %v6539 = vpop.f32.mrb[0].mxu0
    %v6540 = vadd.f32 0.0, %v6539
    %6541 = vmatprep.mubr.f32.mxu0 0.0
    %6542 = vmatmul.mubr.f32.gmra.mrb[0].mxu0 %v6366
    %v6543 = vpop.f32.mrb[0].mxu0
    %v6544 = vadd.f32 0.0, %v6543
    %v6545 = vpop.f32.mrb[0].mxu0
    %v6546 = vadd.f32 0.0, %v6545
    %6547 = vmatprep.mubr.f32.mxu0 0.0
    %6548 = vmatmul.mubr.f32.gmra.mrb[0].mxu0 %v6367
    %v6549 = vpop.f32.mrb[0].mxu0
    %v6550 = vadd.f32 0.0, %v6549
    %v6551 = vpop.f32.mrb[0].mxu0
    %v6552 = vadd.f32 0.0, %v6551
    %6553 = vdwg.mxu0
    %6554 = vmatprep.subr.mxu0 %v6321
    %6555 = vmatpush1.msra.mxu0 %v6320
    %6556 = vmatprep.subr.mxu0 %v6323
    %6557 = vmatpush1.msra.mxu0 %v6322
    %6558 = vmatprep.subr.mxu0 %v6325
    %6559 = vmatpush1.msra.mxu0 %v6324
    %6560 = vmatprep.subr.mxu0 %v6327
    %6561 = vmatpush1.msra.mxu0 %v6326
    %6562 = vmatprep.subr.mxu0 %v6329
    %6563 = vmatpush1.msra.mxu0 %v6328
    %6564 = vmatprep.subr.mxu0 %v6331
    %6565 = vmatpush1.msra.mxu0 %v6330
    %6566 = vmatprep.subr.mxu0 %v6333
    %6567 = vmatpush1.msra.mxu0 %v6332
    %6568 = vmatprep.subr.mxu0 %v6335
    %6569 = vmatpush1.msra.mxu0 %v6334
    %6570 = vmatprep.subr.mxu0 %v6337
    %6571 = vmatpush1.msra.mxu0 %v6336
    %6572 = vmatprep.subr.mxu0 %v6339
    %6573 = vmatpush1.msra.mxu0 %v6338
    %6574 = vmatprep.subr.mxu0 %v6341
    %6575 = vmatpush1.msra.mxu0 %v6340
    %6576 = vmatprep.subr.mxu0 %v6343
    %6577 = vmatpush1.msra.mxu0 %v6342
    %6578 = vmatprep.subr.mxu0 %v6345
    %6579 = vmatpush1.msra.mxu0 %v6344
    %6580 = vmatprep.subr.mxu0 %v6347
    %6581 = vmatpush1.msra.mxu0 %v6346
    %6582 = vmatprep.subr.mxu0 %v6349
    %6583 = vmatpush1.msra.mxu0 %v6348
    %6584 = vmatprep.subr.mxu0 %v6351
    %6585 = vmatpush1.msra.mxu0 %v6350
    %6586 = vmatprep.subr.mxu0 0.0
    %6587 = vmatpush1.msra.mxu0 0.0
    %6588 = vmatprep.subr.mxu0 0.0
    %6589 = vmatpush1.msra.mxu0 0.0
    %6590 = vmatprep.subr.mxu0 0.0
    %6591 = vmatpush1.msra.mxu0 0.0
    %6592 = vmatprep.subr.mxu0 0.0
    %6593 = vmatpush1.msra.mxu0 0.0
    %6594 = vmatprep.subr.mxu0 0.0
    %6595 = vmatpush1.msra.mxu0 0.0
    %6596 = vmatprep.subr.mxu0 0.0
    %6597 = vmatpush1.msra.mxu0 0.0
    %6598 = vmatprep.subr.mxu0 0.0
    %6599 = vmatpush1.msra.mxu0 0.0
    %6600 = vmatprep.subr.mxu0 0.0
    %6601 = vmatpush1.msra.mxu0 0.0
    %6602 = vmatprep.subr.mxu0 0.0
    %6603 = vmatpush1.msra.mxu0 0.0
    %6604 = vmatprep.subr.mxu0 0.0
    %6605 = vmatpush1.msra.mxu0 0.0
    %6606 = vmatprep.subr.mxu0 0.0
    %6607 = vmatpush1.msra.mxu0 0.0
    %6608 = vmatprep.subr.mxu0 0.0
    %6609 = vmatpush1.msra.mxu0 0.0
    %6610 = vmatprep.subr.mxu0 0.0
    %6611 = vmatpush1.msra.mxu0 0.0
    %6612 = vmatprep.subr.mxu0 0.0
    %6613 = vmatpush1.msra.mxu0 0.0
    %6614 = vmatprep.subr.mxu0 0.0
    %6615 = vmatpush1.msra.mxu0 0.0
    %6616 = vmatprep.subr.mxu0 0.0
    %6617 = vmatpush1.msra.mxu0 0.0
    %6618 = vmatprep.mubr.f32.mxu0 0.0
    %6619 = vmatmul.mubr.f32.gmra.mrb[0].mxu0 %v6304
    %v6620 = vpop.f32.mrb[0].mxu0
    %v6621 = vadd.f32 %v6468, %v6620
    %v6622 = vpop.f32.mrb[0].mxu0
    %v6623 = vadd.f32 %v6470, %v6622
    %6624 = vmatprep.mubr.f32.mxu0 0.0
    %6625 = vmatmul.mubr.f32.gmra.mrb[0].mxu0 %v6305
    %v6626 = vpop.f32.mrb[0].mxu0
    %v6627 = vadd.f32 %v6474, %v6626
    %v6628 = vpop.f32.mrb[0].mxu0
    %v6629 = vadd.f32 %v6476, %v6628
    %6630 = vmatprep.mubr.f32.mxu0 0.0
    %6631 = vmatmul.mubr.f32.gmra.mrb[0].mxu0 %v6306
    %v6632 = vpop.f32.mrb[0].mxu0
    %v6633 = vadd.f32 %v6480, %v6632
    %v6634 = vpop.f32.mrb[0].mxu0
    %v6635 = vadd.f32 %v6482, %v6634
    %6636 = vmatprep.mubr.f32.mxu0 0.0
    %6637 = vmatmul.mubr.f32.gmra.mrb[0].mxu0 %v6307
    %v6638 = vpop.f32.mrb[0].mxu0
    %v6639 = vadd.f32 %v6486, %v6638
    %v6640 = vpop.f32.mrb[0].mxu0
    %v6641 = vadd.f32 %v6488, %v6640
    %6642 = vmatprep.mubr.f32.mxu0 0.0
    %6643 = vmatmul.mubr.f32.gmra.mrb[0].mxu0 %v6308
    %v6644 = vpop.f32.mrb[0].mxu0
    %v6645 = vadd.f32 %v6492, %v6644
    %v6646 = vpop.f32.mrb[0].mxu0
    %v6647 = vadd.f32 %v6494, %v6646
    %6648 = vmatprep.mubr.f32.mxu0 0.0
    %6649 = vmatmul.mubr.f32.gmra.mrb[0].mxu0 %v6309
    %v6650 = vpop.f32.mrb[0].mxu0
    %v6651 = vadd.f32 %v6498, %v6650
    %v6652 = vpop.f32.mrb[0].mxu0
    %v6653 = vadd.f32 %v6500, %v6652
    %6654 = vmatprep.mubr.f32.mxu0 0.0
    %6655 = vmatmul.mubr.f32.gmra.mrb[0].mxu0 %v6310
    %v6656 = vpop.f32.mrb[0].mxu0
    %v6657 = vpop.f32.mrb[0].mxu0
    %6658 = vmatprep.mubr.f32.mxu0 0.0
    %6659 = vmatmul.mubr.f32.gmra.mrb[0].mxu0 %v6311
    %v6660 = vpop.f32.mrb[0].mxu0
    %v6661 = vpop.f32.mrb[0].mxu0
    %6662 = vmatprep.mubr.f32.mxu0 0.0
    %6663 = vmatmul.mubr.f32.gmra.mrb[0].mxu0 %v6312
    %v6664 = vpop.f32.mrb[0].mxu0
    %v6665 = vpop.f32.mrb[0].mxu0
    %6666 = vmatprep.mubr.f32.mxu0 0.0
    %6667 = vmatmul.mubr.f32.gmra.mrb[0].mxu0 %v6313
    %v6668 = vpop.f32.mrb[0].mxu0
    %v6669 = vpop.f32.mrb[0].mxu0
    %6670 = vmatprep.mubr.f32.mxu0 0.0
    %6671 = vmatmul.mubr.f32.gmra.mrb[0].mxu0 %v6314
    %v6672 = vpop.f32.mrb[0].mxu0
    %v6673 = vadd.f32 %v6520, %v6672
    %v6674 = vpop.f32.mrb[0].mxu0
    %v6675 = vadd.f32 %v6522, %v6674
    %6676 = vmatprep.mubr.f32.mxu0 0.0
    %6677 = vmatmul.mubr.f32.gmra.mrb[0].mxu0 %v6315
    %v6678 = vpop.f32.mrb[0].mxu0
    %v6679 = vadd.f32 %v6526, %v6678
    %v6680 = vpop.f32.mrb[0].mxu0
    %v6681 = vadd.f32 %v6528, %v6680
    %6682 = vmatprep.mubr.f32.mxu0 0.0
    %6683 = vmatmul.mubr.f32.gmra.mrb[0].mxu0 %v6316
    %v6684 = vpop.f32.mrb[0].mxu0
    %v6685 = vadd.f32 %v6532, %v6684
    %v6686 = vpop.f32.mrb[0].mxu0
    %v6687 = vadd.f32 %v6534, %v6686
    %6688 = vmatprep.mubr.f32.mxu0 0.0
    %6689 = vmatmul.mubr.f32.gmra.mrb[0].mxu0 %v6317
    %v6690 = vpop.f32.mrb[0].mxu0
    %v6691 = vadd.f32 %v6538, %v6690
    %v6692 = vpop.f32.mrb[0].mxu0
    %v6693 = vadd.f32 %v6540, %v6692
    %6694 = vmatprep.mubr.f32.mxu0 0.0
    %6695 = vmatmul.mubr.f32.gmra.mrb[0].mxu0 %v6318
    %v6696 = vpop.f32.mrb[0].mxu0
    %v6697 = vadd.f32 %v6544, %v6696
    %v6698 = vpop.f32.mrb[0].mxu0
    %v6699 = vadd.f32 %v6546, %v6698
    %6700 = vmatprep.mubr.f32.mxu0 0.0
    %6701 = vmatmul.mubr.f32.gmra.mrb[0].mxu0 %v6319
    %v6702 = vpop.f32.mrb[0].mxu0
    %v6703 = vadd.f32 %v6550, %v6702
    %v6704 = vpop.f32.mrb[0].mxu0
    %v6705 = vadd.f32 %v6552, %v6704
    %6706 = vdwg.mxu0
    %v6707 = vld [vmem:[#allocation3 + $0x2] sm:$0xff]
    %v6708 = vld [vmem:[#allocation3 + $0xa] sm:$0xff]
    %v6709 = vld [vmem:[#allocation3 + $0x12] sm:$0xff]
    %v6710 = vld [vmem:[#allocation3 + $0x1a] sm:$0xff]
    %v6711 = vld [vmem:[#allocation3 + $0x22] sm:$0xff]
    %v6712 = vld [vmem:[#allocation3 + $0x2a] sm:$0xff]
    %v6713 = vld [vmem:[#allocation3 + $0x32] sm:$0xff]
    %v6714 = vld [vmem:[#allocation3 + $0x3a] sm:$0xff]
    %v6715 = vld [vmem:[#allocation3 + $0x42] sm:$0xff]
    %v6716 = vld [vmem:[#allocation3 + $0x4a] sm:$0xff]
    %v6717 = vld [vmem:[#allocation3 + $0x52] sm:$0xff]
    %v6718 = vld [vmem:[#allocation3 + $0x5a] sm:$0xff]
    %v6719 = vld [vmem:[#allocation3 + $0x62] sm:$0xff]
    %v6720 = vld [vmem:[#allocation3 + $0x6a] sm:$0xff]
    %v6721 = vld [vmem:[#allocation3 + $0x72] sm:$0xff]
    %v6722 = vld [vmem:[#allocation3 + $0x7a] sm:$0xff]
    %s6723 = scalar_lea.vmem %s5, 512
    %v6724 = vld [vmem:[%s6723] sm:$0xff]
    %v6725 = vld [vmem:[%s6723 + $0x8] sm:$0xff]
    %v6726 = vld [vmem:[%s6723 + $0x10] sm:$0xff]
    %v6727 = vld [vmem:[%s6723 + $0x18] sm:$0xff]
    %v6728 = vld [vmem:[%s6723 + $0x20] sm:$0xff]
    %v6729 = vld [vmem:[%s6723 + $0x28] sm:$0xff]
    %v6730 = vld [vmem:[%s6723 + $0x30] sm:$0xff]
    %v6731 = vld [vmem:[%s6723 + $0x38] sm:$0xff]
    %v6732 = vld [vmem:[%s6723 + $0x40] sm:$0xff]
    %v6733 = vld [vmem:[%s6723 + $0x48] sm:$0xff]
    %v6734 = vld [vmem:[%s6723 + $0x50] sm:$0xff]
    %v6735 = vld [vmem:[%s6723 + $0x58] sm:$0xff]
    %v6736 = vld [vmem:[%s6723 + $0x60] sm:$0xff]
    %v6737 = vld [vmem:[%s6723 + $0x68] sm:$0xff]
    %v6738 = vld [vmem:[%s6723 + $0x70] sm:$0xff]
    %v6739 = vld [vmem:[%s6723 + $0x78] sm:$0xff]
    %v6740 = vld [vmem:[%s6723 + $0x80] sm:$0xff]
    %v6741 = vld [vmem:[%s6723 + $0x88] sm:$0xff]
    %v6742 = vld [vmem:[%s6723 + $0x90] sm:$0xff]
    %v6743 = vld [vmem:[%s6723 + $0x98] sm:$0xff]
    %v6744 = vld [vmem:[%s6723 + $0xa0] sm:$0xff]
    %v6745 = vld [vmem:[%s6723 + $0xa8] sm:$0xff]
    %v6746 = vld [vmem:[%s6723 + $0xb0] sm:$0xff]
    %v6747 = vld [vmem:[%s6723 + $0xb8] sm:$0xff]
    %v6748 = vld [vmem:[%s6723 + $0xc0] sm:$0xff]
    %v6749 = vld [vmem:[%s6723 + $0xc8] sm:$0xff]
    %v6750 = vld [vmem:[%s6723 + $0xd0] sm:$0xff]
    %v6751 = vld [vmem:[%s6723 + $0xd8] sm:$0xff]
    %v6752 = vld [vmem:[%s6723 + $0xe0] sm:$0xff]
    %v6753 = vld [vmem:[%s6723 + $0xe8] sm:$0xff]
    %v6754 = vld [vmem:[%s6723 + $0xf0] sm:$0xff]
    %v6755 = vld [vmem:[%s6723 + $0xf8] sm:$0xff]
    %6756 = vmatprep.subr.mxu0 %v6725
    %6757 = vmatpush1.msra.mxu0 %v6724
    %6758 = vmatprep.subr.mxu0 %v6727
    %6759 = vmatpush1.msra.mxu0 %v6726
    %6760 = vmatprep.subr.mxu0 %v6729
    %6761 = vmatpush1.msra.mxu0 %v6728
    %6762 = vmatprep.subr.mxu0 %v6731
    %6763 = vmatpush1.msra.mxu0 %v6730
    %6764 = vmatprep.subr.mxu0 %v6733
    %6765 = vmatpush1.msra.mxu0 %v6732
    %6766 = vmatprep.subr.mxu0 %v6735
    %6767 = vmatpush1.msra.mxu0 %v6734
    %6768 = vmatprep.subr.mxu0 %v6737
    %6769 = vmatpush1.msra.mxu0 %v6736
    %6770 = vmatprep.subr.mxu0 %v6739
    %6771 = vmatpush1.msra.mxu0 %v6738
    %6772 = vmatprep.subr.mxu0 %v6741
    %6773 = vmatpush1.msra.mxu0 %v6740
    %6774 = vmatprep.subr.mxu0 %v6743
    %6775 = vmatpush1.msra.mxu0 %v6742
    %6776 = vmatprep.subr.mxu0 %v6745
    %6777 = vmatpush1.msra.mxu0 %v6744
    %6778 = vmatprep.subr.mxu0 %v6747
    %6779 = vmatpush1.msra.mxu0 %v6746
    %6780 = vmatprep.subr.mxu0 %v6749
    %6781 = vmatpush1.msra.mxu0 %v6748
    %6782 = vmatprep.subr.mxu0 %v6751
    %6783 = vmatpush1.msra.mxu0 %v6750
    %6784 = vmatprep.subr.mxu0 %v6753
    %6785 = vmatpush1.msra.mxu0 %v6752
    %6786 = vmatprep.subr.mxu0 %v6755
    %6787 = vmatpush1.msra.mxu0 %v6754
    %6788 = vmatprep.subr.mxu0 0.0
    %6789 = vmatpush1.msra.mxu0 0.0
    %6790 = vmatprep.subr.mxu0 0.0
    %6791 = vmatpush1.msra.mxu0 0.0
    %6792 = vmatprep.subr.mxu0 0.0
    %6793 = vmatpush1.msra.mxu0 0.0
    %6794 = vmatprep.subr.mxu0 0.0
    %6795 = vmatpush1.msra.mxu0 0.0
    %6796 = vmatprep.subr.mxu0 0.0
    %6797 = vmatpush1.msra.mxu0 0.0
    %6798 = vmatprep.subr.mxu0 0.0
    %6799 = vmatpush1.msra.mxu0 0.0
    %6800 = vmatprep.subr.mxu0 0.0
    %6801 = vmatpush1.msra.mxu0 0.0
    %6802 = vmatprep.subr.mxu0 0.0
    %6803 = vmatpush1.msra.mxu0 0.0
    %6804 = vmatprep.subr.mxu0 0.0
    %6805 = vmatpush1.msra.mxu0 0.0
    %6806 = vmatprep.subr.mxu0 0.0
    %6807 = vmatpush1.msra.mxu0 0.0
    %6808 = vmatprep.subr.mxu0 0.0
    %6809 = vmatpush1.msra.mxu0 0.0
    %6810 = vmatprep.subr.mxu0 0.0
    %6811 = vmatpush1.msra.mxu0 0.0
    %6812 = vmatprep.subr.mxu0 0.0
    %6813 = vmatpush1.msra.mxu0 0.0
    %6814 = vmatprep.subr.mxu0 0.0
    %6815 = vmatpush1.msra.mxu0 0.0
    %6816 = vmatprep.subr.mxu0 0.0
    %6817 = vmatpush1.msra.mxu0 0.0
    %6818 = vmatprep.subr.mxu0 0.0
    %6819 = vmatpush1.msra.mxu0 0.0
    %6820 = vmatprep.mubr.f32.mxu0 0.0
    %6821 = vmatmul.mubr.f32.gmra.mrb[0].mxu0 %v6707
    %v6822 = vpop.f32.mrb[0].mxu0
    %v6823 = vadd.f32 0.0, %v6822
    %v6824 = vpop.f32.mrb[0].mxu0
    %v6825 = vadd.f32 0.0, %v6824
    %6826 = vmatprep.mubr.f32.mxu0 0.0
    %6827 = vmatmul.mubr.f32.gmra.mrb[0].mxu0 %v6708
    %v6828 = vpop.f32.mrb[0].mxu0
    %v6829 = vadd.f32 0.0, %v6828
    %v6830 = vpop.f32.mrb[0].mxu0
    %v6831 = vadd.f32 0.0, %v6830
    %6832 = vmatprep.mubr.f32.mxu0 0.0
    %6833 = vmatmul.mubr.f32.gmra.mrb[0].mxu0 %v6709
    %v6834 = vpop.f32.mrb[0].mxu0
    %v6835 = vadd.f32 0.0, %v6834
    %v6836 = vpop.f32.mrb[0].mxu0
    %v6837 = vadd.f32 0.0, %v6836
    %6838 = vmatprep.mubr.f32.mxu0 0.0
    %6839 = vmatmul.mubr.f32.gmra.mrb[0].mxu0 %v6710
    %v6840 = vpop.f32.mrb[0].mxu0
    %v6841 = vadd.f32 0.0, %v6840
    %v6842 = vpop.f32.mrb[0].mxu0
    %v6843 = vadd.f32 0.0, %v6842
    %6844 = vmatprep.mubr.f32.mxu0 0.0
    %6845 = vmatmul.mubr.f32.gmra.mrb[0].mxu0 %v6711
    %v6846 = vpop.f32.mrb[0].mxu0
    %v6847 = vadd.f32 0.0, %v6846
    %v6848 = vpop.f32.mrb[0].mxu0
    %v6849 = vadd.f32 0.0, %v6848
    %6850 = vmatprep.mubr.f32.mxu0 0.0
    %6851 = vmatmul.mubr.f32.gmra.mrb[0].mxu0 %v6712
    %v6852 = vpop.f32.mrb[0].mxu0
    %v6853 = vadd.f32 0.0, %v6852
    %v6854 = vpop.f32.mrb[0].mxu0
    %v6855 = vadd.f32 0.0, %v6854
    %6856 = vmatprep.mubr.f32.mxu0 0.0
    %6857 = vmatmul.mubr.f32.gmra.mrb[0].mxu0 %v6713
    %v6858 = vpop.f32.mrb[0].mxu0
    %v6859 = vpop.f32.mrb[0].mxu0
    %6860 = vmatprep.mubr.f32.mxu0 0.0
    %6861 = vmatmul.mubr.f32.gmra.mrb[0].mxu0 %v6714
    %v6862 = vpop.f32.mrb[0].mxu0
    %v6863 = vpop.f32.mrb[0].mxu0
    %6864 = vmatprep.mubr.f32.mxu0 0.0
    %6865 = vmatmul.mubr.f32.gmra.mrb[0].mxu0 %v6715
    %v6866 = vpop.f32.mrb[0].mxu0
    %v6867 = vpop.f32.mrb[0].mxu0
    %6868 = vmatprep.mubr.f32.mxu0 0.0
    %6869 = vmatmul.mubr.f32.gmra.mrb[0].mxu0 %v6716
    %v6870 = vpop.f32.mrb[0].mxu0
    %v6871 = vpop.f32.mrb[0].mxu0
    %6872 = vmatprep.mubr.f32.mxu0 0.0
    %6873 = vmatmul.mubr.f32.gmra.mrb[0].mxu0 %v6717
    %v6874 = vpop.f32.mrb[0].mxu0
    %v6875 = vadd.f32 0.0, %v6874
    %v6876 = vpop.f32.mrb[0].mxu0
    %v6877 = vadd.f32 0.0, %v6876
    %6878 = vmatprep.mubr.f32.mxu0 0.0
    %6879 = vmatmul.mubr.f32.gmra.mrb[0].mxu0 %v6718
    %v6880 = vpop.f32.mrb[0].mxu0
    %v6881 = vadd.f32 0.0, %v6880
    %v6882 = vpop.f32.mrb[0].mxu0
    %v6883 = vadd.f32 0.0, %v6882
    %6884 = vmatprep.mubr.f32.mxu0 0.0
    %6885 = vmatmul.mubr.f32.gmra.mrb[0].mxu0 %v6719
    %v6886 = vpop.f32.mrb[0].mxu0
    %v6887 = vadd.f32 0.0, %v6886
    %v6888 = vpop.f32.mrb[0].mxu0
    %v6889 = vadd.f32 0.0, %v6888
    %6890 = vmatprep.mubr.f32.mxu0 0.0
    %6891 = vmatmul.mubr.f32.gmra.mrb[0].mxu0 %v6720
    %v6892 = vpop.f32.mrb[0].mxu0
    %v6893 = vadd.f32 0.0, %v6892
    %v6894 = vpop.f32.mrb[0].mxu0
    %v6895 = vadd.f32 0.0, %v6894
    %6896 = vmatprep.mubr.f32.mxu0 0.0
    %6897 = vmatmul.mubr.f32.gmra.mrb[0].mxu0 %v6721
    %v6898 = vpop.f32.mrb[0].mxu0
    %v6899 = vadd.f32 0.0, %v6898
    %v6900 = vpop.f32.mrb[0].mxu0
    %v6901 = vadd.f32 0.0, %v6900
    %6902 = vmatprep.mubr.f32.mxu0 0.0
    %6903 = vmatmul.mubr.f32.gmra.mrb[0].mxu0 %v6722
    %v6904 = vpop.f32.mrb[0].mxu0
    %v6905 = vadd.f32 0.0, %v6904
    %v6906 = vpop.f32.mrb[0].mxu0
    %v6907 = vadd.f32 0.0, %v6906
    %6908 = vdwg.mxu0
    %v6909 = vadd.f32 %v6621, %v6823
    %v6910 = vadd.f32 %v6623, %v6825
    %v6911 = vadd.f32 %v6627, %v6829
    %v6912 = vadd.f32 %v6629, %v6831
    %v6913 = vadd.f32 %v6633, %v6835
    %v6914 = vadd.f32 %v6635, %v6837
    %v6915 = vadd.f32 %v6639, %v6841
    %v6916 = vadd.f32 %v6641, %v6843
    %v6917 = vadd.f32 %v6645, %v6847
    %v6918 = vadd.f32 %v6647, %v6849
    %v6919 = vadd.f32 %v6651, %v6853
    %v6920 = vadd.f32 %v6653, %v6855
    %v6921 = vadd.f32 %v6673, %v6875
    %v6922 = vadd.f32 %v6675, %v6877
    %v6923 = vadd.f32 %v6679, %v6881
    %v6924 = vadd.f32 %v6681, %v6883
    %v6925 = vadd.f32 %v6685, %v6887
    %v6926 = vadd.f32 %v6687, %v6889
    %v6927 = vadd.f32 %v6691, %v6893
    %v6928 = vadd.f32 %v6693, %v6895
    %v6929 = vadd.f32 %v6697, %v6899
    %v6930 = vadd.f32 %v6699, %v6901
    %v6931 = vadd.f32 %v6703, %v6905
    %v6932 = vadd.f32 %v6705, %v6907
    %v6933 = vld [vmem:[#allocation3 + $0x10] sm:$0xff]
    %v6934 = vld [vmem:[#allocation3 + $0x18] sm:$0xff]
    %v6935 = vld [vmem:[#allocation3 + $0x20] sm:$0xff]
    %v6936 = vld [vmem:[#allocation3 + $0x28] sm:$0xff]
    %v6937 = vld [vmem:[#allocation3 + $0x30] sm:$0xff]
    %v6938 = vld [vmem:[#allocation3 + $0x38] sm:$0xff]
    %v6939 = vld [vmem:[#allocation3 + $0x40] sm:$0xff]
    %v6940 = vld [vmem:[#allocation3 + $0x48] sm:$0xff]
    %v6941 = vld [vmem:[#allocation3 + $0x50] sm:$0xff]
    %v6942 = vld [vmem:[#allocation3 + $0x58] sm:$0xff]
    %v6943 = vld [vmem:[#allocation3 + $0x60] sm:$0xff]
    %v6944 = vld [vmem:[#allocation3 + $0x68] sm:$0xff]
    %v6945 = vld [vmem:[#allocation3 + $0x70] sm:$0xff]
    %v6946 = vld [vmem:[#allocation3 + $0x78] sm:$0xff]
    %v6947 = vld [vmem:[#allocation3 + $0x80] sm:$0xff]
    %v6948 = vld [vmem:[#allocation3 + $0x88] sm:$0xff]
    %s6949 = scalar_lea.vmem %s5, 768
    %v6950 = vld [vmem:[%s6949] sm:$0xff]
    %v6951 = vld [vmem:[%s6949 + $0x8] sm:$0xff]
    %v6952 = vld [vmem:[%s6949 + $0x10] sm:$0xff]
    %v6953 = vld [vmem:[%s6949 + $0x18] sm:$0xff]
    %v6954 = vld [vmem:[%s6949 + $0x20] sm:$0xff]
    %v6955 = vld [vmem:[%s6949 + $0x28] sm:$0xff]
    %v6956 = vld [vmem:[%s6949 + $0x30] sm:$0xff]
    %v6957 = vld [vmem:[%s6949 + $0x38] sm:$0xff]
    %v6958 = vld [vmem:[%s6949 + $0x40] sm:$0xff]
    %v6959 = vld [vmem:[%s6949 + $0x48] sm:$0xff]
    %v6960 = vld [vmem:[%s6949 + $0x50] sm:$0xff]
    %v6961 = vld [vmem:[%s6949 + $0x58] sm:$0xff]
    %v6962 = vld [vmem:[%s6949 + $0x60] sm:$0xff]
    %v6963 = vld [vmem:[%s6949 + $0x68] sm:$0xff]
    %v6964 = vld [vmem:[%s6949 + $0x70] sm:$0xff]
    %v6965 = vld [vmem:[%s6949 + $0x78] sm:$0xff]
    %v6966 = vld [vmem:[%s6949 + $0x80] sm:$0xff]
    %v6967 = vld [vmem:[%s6949 + $0x88] sm:$0xff]
    %v6968 = vld [vmem:[%s6949 + $0x90] sm:$0xff]
    %v6969 = vld [vmem:[%s6949 + $0x98] sm:$0xff]
    %v6970 = vld [vmem:[%s6949 + $0xa0] sm:$0xff]
    %v6971 = vld [vmem:[%s6949 + $0xa8] sm:$0xff]
    %v6972 = vld [vmem:[%s6949 + $0xb0] sm:$0xff]
    %v6973 = vld [vmem:[%s6949 + $0xb8] sm:$0xff]
    %v6974 = vld [vmem:[%s6949 + $0xc0] sm:$0xff]
    %v6975 = vld [vmem:[%s6949 + $0xc8] sm:$0xff]
    %v6976 = vld [vmem:[%s6949 + $0xd0] sm:$0xff]
    %v6977 = vld [vmem:[%s6949 + $0xd8] sm:$0xff]
    %v6978 = vld [vmem:[%s6949 + $0xe0] sm:$0xff]
    %v6979 = vld [vmem:[%s6949 + $0xe8] sm:$0xff]
    %v6980 = vld [vmem:[%s6949 + $0xf0] sm:$0xff]
    %v6981 = vld [vmem:[%s6949 + $0xf8] sm:$0xff]
    %6982 = vmatprep.subr.mxu0 %v6951
    %6983 = vmatpush1.msra.mxu0 %v6950
    %6984 = vmatprep.subr.mxu0 %v6953
    %6985 = vmatpush1.msra.mxu0 %v6952
    %6986 = vmatprep.subr.mxu0 %v6955
    %6987 = vmatpush1.msra.mxu0 %v6954
    %6988 = vmatprep.subr.mxu0 %v6957
    %6989 = vmatpush1.msra.mxu0 %v6956
    %6990 = vmatprep.subr.mxu0 %v6959
    %6991 = vmatpush1.msra.mxu0 %v6958
    %6992 = vmatprep.subr.mxu0 %v6961
    %6993 = vmatpush1.msra.mxu0 %v6960
    %6994 = vmatprep.subr.mxu0 %v6963
    %6995 = vmatpush1.msra.mxu0 %v6962
    %6996 = vmatprep.subr.mxu0 %v6965
    %6997 = vmatpush1.msra.mxu0 %v6964
    %6998 = vmatprep.subr.mxu0 %v6967
    %6999 = vmatpush1.msra.mxu0 %v6966
    %7000 = vmatprep.subr.mxu0 %v6969
    %7001 = vmatpush1.msra.mxu0 %v6968
    %7002 = vmatprep.subr.mxu0 %v6971
    %7003 = vmatpush1.msra.mxu0 %v6970
    %7004 = vmatprep.subr.mxu0 %v6973
    %7005 = vmatpush1.msra.mxu0 %v6972
    %7006 = vmatprep.subr.mxu0 %v6975
    %7007 = vmatpush1.msra.mxu0 %v6974
    %7008 = vmatprep.subr.mxu0 %v6977
    %7009 = vmatpush1.msra.mxu0 %v6976
    %7010 = vmatprep.subr.mxu0 %v6979
    %7011 = vmatpush1.msra.mxu0 %v6978
    %7012 = vmatprep.subr.mxu0 %v6981
    %7013 = vmatpush1.msra.mxu0 %v6980
    %7014 = vmatprep.subr.mxu0 0.0
    %7015 = vmatpush1.msra.mxu0 0.0
    %7016 = vmatprep.subr.mxu0 0.0
    %7017 = vmatpush1.msra.mxu0 0.0
    %7018 = vmatprep.subr.mxu0 0.0
    %7019 = vmatpush1.msra.mxu0 0.0
    %7020 = vmatprep.subr.mxu0 0.0
    %7021 = vmatpush1.msra.mxu0 0.0
    %7022 = vmatprep.subr.mxu0 0.0
    %7023 = vmatpush1.msra.mxu0 0.0
    %7024 = vmatprep.subr.mxu0 0.0
    %7025 = vmatpush1.msra.mxu0 0.0
    %7026 = vmatprep.subr.mxu0 0.0
    %7027 = vmatpush1.msra.mxu0 0.0
    %7028 = vmatprep.subr.mxu0 0.0
    %7029 = vmatpush1.msra.mxu0 0.0
    %7030 = vmatprep.subr.mxu0 0.0
    %7031 = vmatpush1.msra.mxu0 0.0
    %7032 = vmatprep.subr.mxu0 0.0
    %7033 = vmatpush1.msra.mxu0 0.0
    %7034 = vmatprep.subr.mxu0 0.0
    %7035 = vmatpush1.msra.mxu0 0.0
    %7036 = vmatprep.subr.mxu0 0.0
    %7037 = vmatpush1.msra.mxu0 0.0
    %7038 = vmatprep.subr.mxu0 0.0
    %7039 = vmatpush1.msra.mxu0 0.0
    %7040 = vmatprep.subr.mxu0 0.0
    %7041 = vmatpush1.msra.mxu0 0.0
    %7042 = vmatprep.subr.mxu0 0.0
    %7043 = vmatpush1.msra.mxu0 0.0
    %7044 = vmatprep.subr.mxu0 0.0
    %7045 = vmatpush1.msra.mxu0 0.0
    %7046 = vmatprep.mubr.f32.mxu0 0.0
    %7047 = vmatmul.mubr.f32.gmra.mrb[0].mxu0 %v6933
    %v7048 = vpop.f32.mrb[0].mxu0
    %v7049 = vadd.f32 0.0, %v7048
    %v7050 = vpop.f32.mrb[0].mxu0
    %v7051 = vadd.f32 0.0, %v7050
    %7052 = vmatprep.mubr.f32.mxu0 0.0
    %7053 = vmatmul.mubr.f32.gmra.mrb[0].mxu0 %v6934
    %v7054 = vpop.f32.mrb[0].mxu0
    %v7055 = vadd.f32 0.0, %v7054
    %v7056 = vpop.f32.mrb[0].mxu0
    %v7057 = vadd.f32 0.0, %v7056
    %7058 = vmatprep.mubr.f32.mxu0 0.0
    %7059 = vmatmul.mubr.f32.gmra.mrb[0].mxu0 %v6935
    %v7060 = vpop.f32.mrb[0].mxu0
    %v7061 = vadd.f32 0.0, %v7060
    %v7062 = vpop.f32.mrb[0].mxu0
    %v7063 = vadd.f32 0.0, %v7062
    %7064 = vmatprep.mubr.f32.mxu0 0.0
    %7065 = vmatmul.mubr.f32.gmra.mrb[0].mxu0 %v6936
    %v7066 = vpop.f32.mrb[0].mxu0
    %v7067 = vadd.f32 0.0, %v7066
    %v7068 = vpop.f32.mrb[0].mxu0
    %v7069 = vadd.f32 0.0, %v7068
    %7070 = vmatprep.mubr.f32.mxu0 0.0
    %7071 = vmatmul.mubr.f32.gmra.mrb[0].mxu0 %v6937
    %v7072 = vpop.f32.mrb[0].mxu0
    %v7073 = vadd.f32 0.0, %v7072
    %v7074 = vpop.f32.mrb[0].mxu0
    %v7075 = vadd.f32 0.0, %v7074
    %7076 = vmatprep.mubr.f32.mxu0 0.0
    %7077 = vmatmul.mubr.f32.gmra.mrb[0].mxu0 %v6938
    %v7078 = vpop.f32.mrb[0].mxu0
    %v7079 = vadd.f32 0.0, %v7078
    %v7080 = vpop.f32.mrb[0].mxu0
    %v7081 = vadd.f32 0.0, %v7080
    %7082 = vmatprep.mubr.f32.mxu0 0.0
    %7083 = vmatmul.mubr.f32.gmra.mrb[0].mxu0 %v6939
    %v7084 = vpop.f32.mrb[0].mxu0
    %v7085 = vpop.f32.mrb[0].mxu0
    %7086 = vmatprep.mubr.f32.mxu0 0.0
    %7087 = vmatmul.mubr.f32.gmra.mrb[0].mxu0 %v6940
    %v7088 = vpop.f32.mrb[0].mxu0
    %v7089 = vpop.f32.mrb[0].mxu0
    %7090 = vmatprep.mubr.f32.mxu0 0.0
    %7091 = vmatmul.mubr.f32.gmra.mrb[0].mxu0 %v6941
    %v7092 = vpop.f32.mrb[0].mxu0
    %v7093 = vpop.f32.mrb[0].mxu0
    %7094 = vmatprep.mubr.f32.mxu0 0.0
    %7095 = vmatmul.mubr.f32.gmra.mrb[0].mxu0 %v6942
    %v7096 = vpop.f32.mrb[0].mxu0
    %v7097 = vpop.f32.mrb[0].mxu0
    %7098 = vmatprep.mubr.f32.mxu0 0.0
    %7099 = vmatmul.mubr.f32.gmra.mrb[0].mxu0 %v6943
    %v7100 = vpop.f32.mrb[0].mxu0
    %v7101 = vadd.f32 0.0, %v7100
    %v7102 = vpop.f32.mrb[0].mxu0
    %v7103 = vadd.f32 0.0, %v7102
    %7104 = vmatprep.mubr.f32.mxu0 0.0
    %7105 = vmatmul.mubr.f32.gmra.mrb[0].mxu0 %v6944
    %v7106 = vpop.f32.mrb[0].mxu0
    %v7107 = vadd.f32 0.0, %v7106
    %v7108 = vpop.f32.mrb[0].mxu0
    %v7109 = vadd.f32 0.0, %v7108
    %7110 = vmatprep.mubr.f32.mxu0 0.0
    %7111 = vmatmul.mubr.f32.gmra.mrb[0].mxu0 %v6945
    %v7112 = vpop.f32.mrb[0].mxu0
    %v7113 = vadd.f32 0.0, %v7112
    %v7114 = vpop.f32.mrb[0].mxu0
    %v7115 = vadd.f32 0.0, %v7114
    %7116 = vmatprep.mubr.f32.mxu0 0.0
    %7117 = vmatmul.mubr.f32.gmra.mrb[0].mxu0 %v6946
    %v7118 = vpop.f32.mrb[0].mxu0
    %v7119 = vadd.f32 0.0, %v7118
    %v7120 = vpop.f32.mrb[0].mxu0
    %v7121 = vadd.f32 0.0, %v7120
    %7122 = vmatprep.mubr.f32.mxu0 0.0
    %7123 = vmatmul.mubr.f32.gmra.mrb[0].mxu0 %v6947
    %v7124 = vpop.f32.mrb[0].mxu0
    %v7125 = vadd.f32 0.0, %v7124
    %v7126 = vpop.f32.mrb[0].mxu0
    %v7127 = vadd.f32 0.0, %v7126
    %7128 = vmatprep.mubr.f32.mxu0 0.0
    %7129 = vmatmul.mubr.f32.gmra.mrb[0].mxu0 %v6948
    %v7130 = vpop.f32.mrb[0].mxu0
    %v7131 = vadd.f32 0.0, %v7130
    %v7132 = vpop.f32.mrb[0].mxu0
    %v7133 = vadd.f32 0.0, %v7132
    %7134 = vdwg.mxu0
    %v7135 = vadd.f32 %v6909, %v7049
    %v7136 = vadd.f32 %v6910, %v7051
    %v7137 = vadd.f32 %v6911, %v7055
    %v7138 = vadd.f32 %v6912, %v7057
    %v7139 = vadd.f32 %v6913, %v7061
    %v7140 = vadd.f32 %v6914, %v7063
    %v7141 = vadd.f32 %v6915, %v7067
    %v7142 = vadd.f32 %v6916, %v7069
    %v7143 = vadd.f32 %v6917, %v7073
    %v7144 = vadd.f32 %v6918, %v7075
    %v7145 = vadd.f32 %v6919, %v7079
    %v7146 = vadd.f32 %v6920, %v7081
    %v7147 = vadd.f32 %v6921, %v7101
    %v7148 = vadd.f32 %v6922, %v7103
    %v7149 = vadd.f32 %v6923, %v7107
    %v7150 = vadd.f32 %v6924, %v7109
    %v7151 = vadd.f32 %v6925, %v7113
    %v7152 = vadd.f32 %v6926, %v7115
    %v7153 = vadd.f32 %v6927, %v7119
    %v7154 = vadd.f32 %v6928, %v7121
    %v7155 = vadd.f32 %v6929, %v7125
    %v7156 = vadd.f32 %v6930, %v7127
    %v7157 = vadd.f32 %v6931, %v7131
    %v7158 = vadd.f32 %v6932, %v7133
    %v7159 = vld [vmem:[#allocation3 + $0x11] sm:$0xff]
    %v7160 = vld [vmem:[#allocation3 + $0x19] sm:$0xff]
    %v7161 = vld [vmem:[#allocation3 + $0x21] sm:$0xff]
    %v7162 = vld [vmem:[#allocation3 + $0x29] sm:$0xff]
    %v7163 = vld [vmem:[#allocation3 + $0x31] sm:$0xff]
    %v7164 = vld [vmem:[#allocation3 + $0x39] sm:$0xff]
    %v7165 = vld [vmem:[#allocation3 + $0x41] sm:$0xff]
    %v7166 = vld [vmem:[#allocation3 + $0x49] sm:$0xff]
    %v7167 = vld [vmem:[#allocation3 + $0x51] sm:$0xff]
    %v7168 = vld [vmem:[#allocation3 + $0x59] sm:$0xff]
    %v7169 = vld [vmem:[#allocation3 + $0x61] sm:$0xff]
    %v7170 = vld [vmem:[#allocation3 + $0x69] sm:$0xff]
    %v7171 = vld [vmem:[#allocation3 + $0x71] sm:$0xff]
    %v7172 = vld [vmem:[#allocation3 + $0x79] sm:$0xff]
    %v7173 = vld [vmem:[#allocation3 + $0x81] sm:$0xff]
    %v7174 = vld [vmem:[#allocation3 + $0x89] sm:$0xff]
    %s7175 = scalar_lea.vmem %s5, 1024
    %v7176 = vld [vmem:[%s7175] sm:$0xff]
    %v7177 = vld [vmem:[%s7175 + $0x8] sm:$0xff]
    %v7178 = vld [vmem:[%s7175 + $0x10] sm:$0xff]
    %v7179 = vld [vmem:[%s7175 + $0x18] sm:$0xff]
    %v7180 = vld [vmem:[%s7175 + $0x20] sm:$0xff]
    %v7181 = vld [vmem:[%s7175 + $0x28] sm:$0xff]
    %v7182 = vld [vmem:[%s7175 + $0x30] sm:$0xff]
    %v7183 = vld [vmem:[%s7175 + $0x38] sm:$0xff]
    %v7184 = vld [vmem:[%s7175 + $0x40] sm:$0xff]
    %v7185 = vld [vmem:[%s7175 + $0x48] sm:$0xff]
    %v7186 = vld [vmem:[%s7175 + $0x50] sm:$0xff]
    %v7187 = vld [vmem:[%s7175 + $0x58] sm:$0xff]
    %v7188 = vld [vmem:[%s7175 + $0x60] sm:$0xff]
    %v7189 = vld [vmem:[%s7175 + $0x68] sm:$0xff]
    %v7190 = vld [vmem:[%s7175 + $0x70] sm:$0xff]
    %v7191 = vld [vmem:[%s7175 + $0x78] sm:$0xff]
    %v7192 = vld [vmem:[%s7175 + $0x80] sm:$0xff]
    %v7193 = vld [vmem:[%s7175 + $0x88] sm:$0xff]
    %v7194 = vld [vmem:[%s7175 + $0x90] sm:$0xff]
    %v7195 = vld [vmem:[%s7175 + $0x98] sm:$0xff]
    %v7196 = vld [vmem:[%s7175 + $0xa0] sm:$0xff]
    %v7197 = vld [vmem:[%s7175 + $0xa8] sm:$0xff]
    %v7198 = vld [vmem:[%s7175 + $0xb0] sm:$0xff]
    %v7199 = vld [vmem:[%s7175 + $0xb8] sm:$0xff]
    %v7200 = vld [vmem:[%s7175 + $0xc0] sm:$0xff]
    %v7201 = vld [vmem:[%s7175 + $0xc8] sm:$0xff]
    %v7202 = vld [vmem:[%s7175 + $0xd0] sm:$0xff]
    %v7203 = vld [vmem:[%s7175 + $0xd8] sm:$0xff]
    %v7204 = vld [vmem:[%s7175 + $0xe0] sm:$0xff]
    %v7205 = vld [vmem:[%s7175 + $0xe8] sm:$0xff]
    %v7206 = vld [vmem:[%s7175 + $0xf0] sm:$0xff]
    %v7207 = vld [vmem:[%s7175 + $0xf8] sm:$0xff]
    %7208 = vmatprep.subr.mxu0 %v7177
    %7209 = vmatpush1.msra.mxu0 %v7176
    %7210 = vmatprep.subr.mxu0 %v7179
    %7211 = vmatpush1.msra.mxu0 %v7178
    %7212 = vmatprep.subr.mxu0 %v7181
    %7213 = vmatpush1.msra.mxu0 %v7180
    %7214 = vmatprep.subr.mxu0 %v7183
    %7215 = vmatpush1.msra.mxu0 %v7182
    %7216 = vmatprep.subr.mxu0 %v7185
    %7217 = vmatpush1.msra.mxu0 %v7184
    %7218 = vmatprep.subr.mxu0 %v7187
    %7219 = vmatpush1.msra.mxu0 %v7186
    %7220 = vmatprep.subr.mxu0 %v7189
    %7221 = vmatpush1.msra.mxu0 %v7188
    %7222 = vmatprep.subr.mxu0 %v7191
    %7223 = vmatpush1.msra.mxu0 %v7190
    %7224 = vmatprep.subr.mxu0 %v7193
    %7225 = vmatpush1.msra.mxu0 %v7192
    %7226 = vmatprep.subr.mxu0 %v7195
    %7227 = vmatpush1.msra.mxu0 %v7194
    %7228 = vmatprep.subr.mxu0 %v7197
    %7229 = vmatpush1.msra.mxu0 %v7196
    %7230 = vmatprep.subr.mxu0 %v7199
    %7231 = vmatpush1.msra.mxu0 %v7198
    %7232 = vmatprep.subr.mxu0 %v7201
    %7233 = vmatpush1.msra.mxu0 %v7200
    %7234 = vmatprep.subr.mxu0 %v7203
    %7235 = vmatpush1.msra.mxu0 %v7202
    %7236 = vmatprep.subr.mxu0 %v7205
    %7237 = vmatpush1.msra.mxu0 %v7204
    %7238 = vmatprep.subr.mxu0 %v7207
    %7239 = vmatpush1.msra.mxu0 %v7206
    %7240 = vmatprep.subr.mxu0 0.0
    %7241 = vmatpush1.msra.mxu0 0.0
    %7242 = vmatprep.subr.mxu0 0.0
    %7243 = vmatpush1.msra.mxu0 0.0
    %7244 = vmatprep.subr.mxu0 0.0
    %7245 = vmatpush1.msra.mxu0 0.0
    %7246 = vmatprep.subr.mxu0 0.0
    %7247 = vmatpush1.msra.mxu0 0.0
    %7248 = vmatprep.subr.mxu0 0.0
    %7249 = vmatpush1.msra.mxu0 0.0
    %7250 = vmatprep.subr.mxu0 0.0
    %7251 = vmatpush1.msra.mxu0 0.0
    %7252 = vmatprep.subr.mxu0 0.0
    %7253 = vmatpush1.msra.mxu0 0.0
    %7254 = vmatprep.subr.mxu0 0.0
    %7255 = vmatpush1.msra.mxu0 0.0
    %7256 = vmatprep.subr.mxu0 0.0
    %7257 = vmatpush1.msra.mxu0 0.0
    %7258 = vmatprep.subr.mxu0 0.0
    %7259 = vmatpush1.msra.mxu0 0.0
    %7260 = vmatprep.subr.mxu0 0.0
    %7261 = vmatpush1.msra.mxu0 0.0
    %7262 = vmatprep.subr.mxu0 0.0
    %7263 = vmatpush1.msra.mxu0 0.0
    %7264 = vmatprep.subr.mxu0 0.0
    %7265 = vmatpush1.msra.mxu0 0.0
    %7266 = vmatprep.subr.mxu0 0.0
    %7267 = vmatpush1.msra.mxu0 0.0
    %7268 = vmatprep.subr.mxu0 0.0
    %7269 = vmatpush1.msra.mxu0 0.0
    %7270 = vmatprep.subr.mxu0 0.0
    %7271 = vmatpush1.msra.mxu0 0.0
    %7272 = vmatprep.mubr.f32.mxu0 0.0
    %7273 = vmatmul.mubr.f32.gmra.mrb[0].mxu0 %v7159
    %v7274 = vpop.f32.mrb[0].mxu0
    %v7275 = vadd.f32 0.0, %v7274
    %v7276 = vpop.f32.mrb[0].mxu0
    %v7277 = vadd.f32 0.0, %v7276
    %7278 = vmatprep.mubr.f32.mxu0 0.0
    %7279 = vmatmul.mubr.f32.gmra.mrb[0].mxu0 %v7160
    %v7280 = vpop.f32.mrb[0].mxu0
    %v7281 = vadd.f32 0.0, %v7280
    %v7282 = vpop.f32.mrb[0].mxu0
    %v7283 = vadd.f32 0.0, %v7282
    %7284 = vmatprep.mubr.f32.mxu0 0.0
    %7285 = vmatmul.mubr.f32.gmra.mrb[0].mxu0 %v7161
    %v7286 = vpop.f32.mrb[0].mxu0
    %v7287 = vadd.f32 0.0, %v7286
    %v7288 = vpop.f32.mrb[0].mxu0
    %v7289 = vadd.f32 0.0, %v7288
    %7290 = vmatprep.mubr.f32.mxu0 0.0
    %7291 = vmatmul.mubr.f32.gmra.mrb[0].mxu0 %v7162
    %v7292 = vpop.f32.mrb[0].mxu0
    %v7293 = vadd.f32 0.0, %v7292
    %v7294 = vpop.f32.mrb[0].mxu0
    %v7295 = vadd.f32 0.0, %v7294
    %7296 = vmatprep.mubr.f32.mxu0 0.0
    %7297 = vmatmul.mubr.f32.gmra.mrb[0].mxu0 %v7163
    %v7298 = vpop.f32.mrb[0].mxu0
    %v7299 = vadd.f32 0.0, %v7298
    %v7300 = vpop.f32.mrb[0].mxu0
    %v7301 = vadd.f32 0.0, %v7300
    %7302 = vmatprep.mubr.f32.mxu0 0.0
    %7303 = vmatmul.mubr.f32.gmra.mrb[0].mxu0 %v7164
    %v7304 = vpop.f32.mrb[0].mxu0
    %v7305 = vadd.f32 0.0, %v7304
    %v7306 = vpop.f32.mrb[0].mxu0
    %v7307 = vadd.f32 0.0, %v7306
    %7308 = vmatprep.mubr.f32.mxu0 0.0
    %7309 = vmatmul.mubr.f32.gmra.mrb[0].mxu0 %v7165
    %v7310 = vpop.f32.mrb[0].mxu0
    %v7311 = vpop.f32.mrb[0].mxu0
    %7312 = vmatprep.mubr.f32.mxu0 0.0
    %7313 = vmatmul.mubr.f32.gmra.mrb[0].mxu0 %v7166
    %v7314 = vpop.f32.mrb[0].mxu0
    %v7315 = vpop.f32.mrb[0].mxu0
    %7316 = vmatprep.mubr.f32.mxu0 0.0
    %7317 = vmatmul.mubr.f32.gmra.mrb[0].mxu0 %v7167
    %v7318 = vpop.f32.mrb[0].mxu0
    %v7319 = vpop.f32.mrb[0].mxu0
    %7320 = vmatprep.mubr.f32.mxu0 0.0
    %7321 = vmatmul.mubr.f32.gmra.mrb[0].mxu0 %v7168
    %v7322 = vpop.f32.mrb[0].mxu0
    %v7323 = vpop.f32.mrb[0].mxu0
    %7324 = vmatprep.mubr.f32.mxu0 0.0
    %7325 = vmatmul.mubr.f32.gmra.mrb[0].mxu0 %v7169
    %v7326 = vpop.f32.mrb[0].mxu0
    %v7327 = vadd.f32 0.0, %v7326
    %v7328 = vpop.f32.mrb[0].mxu0
    %v7329 = vadd.f32 0.0, %v7328
    %7330 = vmatprep.mubr.f32.mxu0 0.0
    %7331 = vmatmul.mubr.f32.gmra.mrb[0].mxu0 %v7170
    %v7332 = vpop.f32.mrb[0].mxu0
    %v7333 = vadd.f32 0.0, %v7332
    %v7334 = vpop.f32.mrb[0].mxu0
    %v7335 = vadd.f32 0.0, %v7334
    %7336 = vmatprep.mubr.f32.mxu0 0.0
    %7337 = vmatmul.mubr.f32.gmra.mrb[0].mxu0 %v7171
    %v7338 = vpop.f32.mrb[0].mxu0
    %v7339 = vadd.f32 0.0, %v7338
    %v7340 = vpop.f32.mrb[0].mxu0
    %v7341 = vadd.f32 0.0, %v7340
    %7342 = vmatprep.mubr.f32.mxu0 0.0
    %7343 = vmatmul.mubr.f32.gmra.mrb[0].mxu0 %v7172
    %v7344 = vpop.f32.mrb[0].mxu0
    %v7345 = vadd.f32 0.0, %v7344
    %v7346 = vpop.f32.mrb[0].mxu0
    %v7347 = vadd.f32 0.0, %v7346
    %7348 = vmatprep.mubr.f32.mxu0 0.0
    %7349 = vmatmul.mubr.f32.gmra.mrb[0].mxu0 %v7173
    %v7350 = vpop.f32.mrb[0].mxu0
    %v7351 = vadd.f32 0.0, %v7350
    %v7352 = vpop.f32.mrb[0].mxu0
    %v7353 = vadd.f32 0.0, %v7352
    %7354 = vmatprep.mubr.f32.mxu0 0.0
    %7355 = vmatmul.mubr.f32.gmra.mrb[0].mxu0 %v7174
    %v7356 = vpop.f32.mrb[0].mxu0
    %v7357 = vadd.f32 0.0, %v7356
    %v7358 = vpop.f32.mrb[0].mxu0
    %v7359 = vadd.f32 0.0, %v7358
    %7360 = vdwg.mxu0
    %v7361 = vadd.f32 %v7135, %v7275
    %v7362 = vadd.f32 %v7136, %v7277
    %v7363 = vadd.f32 %v7137, %v7281
    %v7364 = vadd.f32 %v7138, %v7283
    %v7365 = vadd.f32 %v7139, %v7287
    %v7366 = vadd.f32 %v7140, %v7289
    %v7367 = vadd.f32 %v7141, %v7293
    %v7368 = vadd.f32 %v7142, %v7295
    %v7369 = vadd.f32 %v7143, %v7299
    %v7370 = vadd.f32 %v7144, %v7301
    %v7371 = vadd.f32 %v7145, %v7305
    %v7372 = vadd.f32 %v7146, %v7307
    %v7373 = vadd.f32 %v7147, %v7327
    %v7374 = vadd.f32 %v7148, %v7329
    %v7375 = vadd.f32 %v7149, %v7333
    %v7376 = vadd.f32 %v7150, %v7335
    %v7377 = vadd.f32 %v7151, %v7339
    %v7378 = vadd.f32 %v7152, %v7341
    %v7379 = vadd.f32 %v7153, %v7345
    %v7380 = vadd.f32 %v7154, %v7347
    %v7381 = vadd.f32 %v7155, %v7351
    %v7382 = vadd.f32 %v7156, %v7353
    %v7383 = vadd.f32 %v7157, %v7357
    %v7384 = vadd.f32 %v7158, %v7359
    %v7385 = vld [vmem:[#allocation3 + $0x12] sm:$0xff]
    %v7386 = vld [vmem:[#allocation3 + $0x1a] sm:$0xff]
    %v7387 = vld [vmem:[#allocation3 + $0x22] sm:$0xff]
    %v7388 = vld [vmem:[#allocation3 + $0x2a] sm:$0xff]
    %v7389 = vld [vmem:[#allocation3 + $0x32] sm:$0xff]
    %v7390 = vld [vmem:[#allocation3 + $0x3a] sm:$0xff]
    %v7391 = vld [vmem:[#allocation3 + $0x42] sm:$0xff]
    %v7392 = vld [vmem:[#allocation3 + $0x4a] sm:$0xff]
    %v7393 = vld [vmem:[#allocation3 + $0x52] sm:$0xff]
    %v7394 = vld [vmem:[#allocation3 + $0x5a] sm:$0xff]
    %v7395 = vld [vmem:[#allocation3 + $0x62] sm:$0xff]
    %v7396 = vld [vmem:[#allocation3 + $0x6a] sm:$0xff]
    %v7397 = vld [vmem:[#allocation3 + $0x72] sm:$0xff]
    %v7398 = vld [vmem:[#allocation3 + $0x7a] sm:$0xff]
    %v7399 = vld [vmem:[#allocation3 + $0x82] sm:$0xff]
    %v7400 = vld [vmem:[#allocation3 + $0x8a] sm:$0xff]
    %s7401 = scalar_lea.vmem %s5, 1280
    %v7402 = vld [vmem:[%s7401] sm:$0xff]
    %v7403 = vld [vmem:[%s7401 + $0x8] sm:$0xff]
    %v7404 = vld [vmem:[%s7401 + $0x10] sm:$0xff]
    %v7405 = vld [vmem:[%s7401 + $0x18] sm:$0xff]
    %v7406 = vld [vmem:[%s7401 + $0x20] sm:$0xff]
    %v7407 = vld [vmem:[%s7401 + $0x28] sm:$0xff]
    %v7408 = vld [vmem:[%s7401 + $0x30] sm:$0xff]
    %v7409 = vld [vmem:[%s7401 + $0x38] sm:$0xff]
    %v7410 = vld [vmem:[%s7401 + $0x40] sm:$0xff]
    %v7411 = vld [vmem:[%s7401 + $0x48] sm:$0xff]
    %v7412 = vld [vmem:[%s7401 + $0x50] sm:$0xff]
    %v7413 = vld [vmem:[%s7401 + $0x58] sm:$0xff]
    %v7414 = vld [vmem:[%s7401 + $0x60] sm:$0xff]
    %v7415 = vld [vmem:[%s7401 + $0x68] sm:$0xff]
    %v7416 = vld [vmem:[%s7401 + $0x70] sm:$0xff]
    %v7417 = vld [vmem:[%s7401 + $0x78] sm:$0xff]
    %v7418 = vld [vmem:[%s7401 + $0x80] sm:$0xff]
    %v7419 = vld [vmem:[%s7401 + $0x88] sm:$0xff]
    %v7420 = vld [vmem:[%s7401 + $0x90] sm:$0xff]
    %v7421 = vld [vmem:[%s7401 + $0x98] sm:$0xff]
    %v7422 = vld [vmem:[%s7401 + $0xa0] sm:$0xff]
    %v7423 = vld [vmem:[%s7401 + $0xa8] sm:$0xff]
    %v7424 = vld [vmem:[%s7401 + $0xb0] sm:$0xff]
    %v7425 = vld [vmem:[%s7401 + $0xb8] sm:$0xff]
    %v7426 = vld [vmem:[%s7401 + $0xc0] sm:$0xff]
    %v7427 = vld [vmem:[%s7401 + $0xc8] sm:$0xff]
    %v7428 = vld [vmem:[%s7401 + $0xd0] sm:$0xff]
    %v7429 = vld [vmem:[%s7401 + $0xd8] sm:$0xff]
    %v7430 = vld [vmem:[%s7401 + $0xe0] sm:$0xff]
    %v7431 = vld [vmem:[%s7401 + $0xe8] sm:$0xff]
    %v7432 = vld [vmem:[%s7401 + $0xf0] sm:$0xff]
    %v7433 = vld [vmem:[%s7401 + $0xf8] sm:$0xff]
    %7434 = vmatprep.subr.mxu0 %v7403
    %7435 = vmatpush1.msra.mxu0 %v7402
    %7436 = vmatprep.subr.mxu0 %v7405
    %7437 = vmatpush1.msra.mxu0 %v7404
    %7438 = vmatprep.subr.mxu0 %v7407
    %7439 = vmatpush1.msra.mxu0 %v7406
    %7440 = vmatprep.subr.mxu0 %v7409
    %7441 = vmatpush1.msra.mxu0 %v7408
    %7442 = vmatprep.subr.mxu0 %v7411
    %7443 = vmatpush1.msra.mxu0 %v7410
    %7444 = vmatprep.subr.mxu0 %v7413
    %7445 = vmatpush1.msra.mxu0 %v7412
    %7446 = vmatprep.subr.mxu0 %v7415
    %7447 = vmatpush1.msra.mxu0 %v7414
    %7448 = vmatprep.subr.mxu0 %v7417
    %7449 = vmatpush1.msra.mxu0 %v7416
    %7450 = vmatprep.subr.mxu0 %v7419
    %7451 = vmatpush1.msra.mxu0 %v7418
    %7452 = vmatprep.subr.mxu0 %v7421
    %7453 = vmatpush1.msra.mxu0 %v7420
    %7454 = vmatprep.subr.mxu0 %v7423
    %7455 = vmatpush1.msra.mxu0 %v7422
    %7456 = vmatprep.subr.mxu0 %v7425
    %7457 = vmatpush1.msra.mxu0 %v7424
    %7458 = vmatprep.subr.mxu0 %v7427
    %7459 = vmatpush1.msra.mxu0 %v7426
    %7460 = vmatprep.subr.mxu0 %v7429
    %7461 = vmatpush1.msra.mxu0 %v7428
    %7462 = vmatprep.subr.mxu0 %v7431
    %7463 = vmatpush1.msra.mxu0 %v7430
    %7464 = vmatprep.subr.mxu0 %v7433
    %7465 = vmatpush1.msra.mxu0 %v7432
    %7466 = vmatprep.subr.mxu0 0.0
    %7467 = vmatpush1.msra.mxu0 0.0
    %7468 = vmatprep.subr.mxu0 0.0
    %7469 = vmatpush1.msra.mxu0 0.0
    %7470 = vmatprep.subr.mxu0 0.0
    %7471 = vmatpush1.msra.mxu0 0.0
    %7472 = vmatprep.subr.mxu0 0.0
    %7473 = vmatpush1.msra.mxu0 0.0
    %7474 = vmatprep.subr.mxu0 0.0
    %7475 = vmatpush1.msra.mxu0 0.0
    %7476 = vmatprep.subr.mxu0 0.0
    %7477 = vmatpush1.msra.mxu0 0.0
    %7478 = vmatprep.subr.mxu0 0.0
    %7479 = vmatpush1.msra.mxu0 0.0
    %7480 = vmatprep.subr.mxu0 0.0
    %7481 = vmatpush1.msra.mxu0 0.0
    %7482 = vmatprep.subr.mxu0 0.0
    %7483 = vmatpush1.msra.mxu0 0.0
    %7484 = vmatprep.subr.mxu0 0.0
    %7485 = vmatpush1.msra.mxu0 0.0
    %7486 = vmatprep.subr.mxu0 0.0
    %7487 = vmatpush1.msra.mxu0 0.0
    %7488 = vmatprep.subr.mxu0 0.0
    %7489 = vmatpush1.msra.mxu0 0.0
    %7490 = vmatprep.subr.mxu0 0.0
    %7491 = vmatpush1.msra.mxu0 0.0
    %7492 = vmatprep.subr.mxu0 0.0
    %7493 = vmatpush1.msra.mxu0 0.0
    %7494 = vmatprep.subr.mxu0 0.0
    %7495 = vmatpush1.msra.mxu0 0.0
    %7496 = vmatprep.subr.mxu0 0.0
    %7497 = vmatpush1.msra.mxu0 0.0
    %7498 = vmatprep.mubr.f32.mxu0 0.0
    %7499 = vmatmul.mubr.f32.gmra.mrb[0].mxu0 %v7385
    %v7500 = vpop.f32.mrb[0].mxu0
    %v7501 = vadd.f32 0.0, %v7500
    %v7502 = vpop.f32.mrb[0].mxu0
    %v7503 = vadd.f32 0.0, %v7502
    %7504 = vmatprep.mubr.f32.mxu0 0.0
    %7505 = vmatmul.mubr.f32.gmra.mrb[0].mxu0 %v7386
    %v7506 = vpop.f32.mrb[0].mxu0
    %v7507 = vadd.f32 0.0, %v7506
    %v7508 = vpop.f32.mrb[0].mxu0
    %v7509 = vadd.f32 0.0, %v7508
    %7510 = vmatprep.mubr.f32.mxu0 0.0
    %7511 = vmatmul.mubr.f32.gmra.mrb[0].mxu0 %v7387
    %v7512 = vpop.f32.mrb[0].mxu0
    %v7513 = vadd.f32 0.0, %v7512
    %v7514 = vpop.f32.mrb[0].mxu0
    %v7515 = vadd.f32 0.0, %v7514
    %7516 = vmatprep.mubr.f32.mxu0 0.0
    %7517 = vmatmul.mubr.f32.gmra.mrb[0].mxu0 %v7388
    %v7518 = vpop.f32.mrb[0].mxu0
    %v7519 = vadd.f32 0.0, %v7518
    %v7520 = vpop.f32.mrb[0].mxu0
    %v7521 = vadd.f32 0.0, %v7520
    %7522 = vmatprep.mubr.f32.mxu0 0.0
    %7523 = vmatmul.mubr.f32.gmra.mrb[0].mxu0 %v7389
    %v7524 = vpop.f32.mrb[0].mxu0
    %v7525 = vadd.f32 0.0, %v7524
    %v7526 = vpop.f32.mrb[0].mxu0
    %v7527 = vadd.f32 0.0, %v7526
    %7528 = vmatprep.mubr.f32.mxu0 0.0
    %7529 = vmatmul.mubr.f32.gmra.mrb[0].mxu0 %v7390
    %v7530 = vpop.f32.mrb[0].mxu0
    %v7531 = vadd.f32 0.0, %v7530
    %v7532 = vpop.f32.mrb[0].mxu0
    %v7533 = vadd.f32 0.0, %v7532
    %7534 = vmatprep.mubr.f32.mxu0 0.0
    %7535 = vmatmul.mubr.f32.gmra.mrb[0].mxu0 %v7391
    %v7536 = vpop.f32.mrb[0].mxu0
    %v7537 = vpop.f32.mrb[0].mxu0
    %7538 = vmatprep.mubr.f32.mxu0 0.0
    %7539 = vmatmul.mubr.f32.gmra.mrb[0].mxu0 %v7392
    %v7540 = vpop.f32.mrb[0].mxu0
    %v7541 = vpop.f32.mrb[0].mxu0
    %7542 = vmatprep.mubr.f32.mxu0 0.0
    %7543 = vmatmul.mubr.f32.gmra.mrb[0].mxu0 %v7393
    %v7544 = vpop.f32.mrb[0].mxu0
    %v7545 = vpop.f32.mrb[0].mxu0
    %7546 = vmatprep.mubr.f32.mxu0 0.0
    %7547 = vmatmul.mubr.f32.gmra.mrb[0].mxu0 %v7394
    %v7548 = vpop.f32.mrb[0].mxu0
    %v7549 = vpop.f32.mrb[0].mxu0
    %7550 = vmatprep.mubr.f32.mxu0 0.0
    %7551 = vmatmul.mubr.f32.gmra.mrb[0].mxu0 %v7395
    %v7552 = vpop.f32.mrb[0].mxu0
    %v7553 = vadd.f32 0.0, %v7552
    %v7554 = vpop.f32.mrb[0].mxu0
    %v7555 = vadd.f32 0.0, %v7554
    %7556 = vmatprep.mubr.f32.mxu0 0.0
    %7557 = vmatmul.mubr.f32.gmra.mrb[0].mxu0 %v7396
    %v7558 = vpop.f32.mrb[0].mxu0
    %v7559 = vadd.f32 0.0, %v7558
    %v7560 = vpop.f32.mrb[0].mxu0
    %v7561 = vadd.f32 0.0, %v7560
    %7562 = vmatprep.mubr.f32.mxu0 0.0
    %7563 = vmatmul.mubr.f32.gmra.mrb[0].mxu0 %v7397
    %v7564 = vpop.f32.mrb[0].mxu0
    %v7565 = vadd.f32 0.0, %v7564
    %v7566 = vpop.f32.mrb[0].mxu0
    %v7567 = vadd.f32 0.0, %v7566
    %7568 = vmatprep.mubr.f32.mxu0 0.0
    %7569 = vmatmul.mubr.f32.gmra.mrb[0].mxu0 %v7398
    %v7570 = vpop.f32.mrb[0].mxu0
    %v7571 = vadd.f32 0.0, %v7570
    %v7572 = vpop.f32.mrb[0].mxu0
    %v7573 = vadd.f32 0.0, %v7572
    %7574 = vmatprep.mubr.f32.mxu0 0.0
    %7575 = vmatmul.mubr.f32.gmra.mrb[0].mxu0 %v7399
    %v7576 = vpop.f32.mrb[0].mxu0
    %v7577 = vadd.f32 0.0, %v7576
    %v7578 = vpop.f32.mrb[0].mxu0
    %v7579 = vadd.f32 0.0, %v7578
    %7580 = vmatprep.mubr.f32.mxu0 0.0
    %7581 = vmatmul.mubr.f32.gmra.mrb[0].mxu0 %v7400
    %v7582 = vpop.f32.mrb[0].mxu0
    %v7583 = vadd.f32 0.0, %v7582
    %v7584 = vpop.f32.mrb[0].mxu0
    %v7585 = vadd.f32 0.0, %v7584
    %7586 = vdwg.mxu0
    %v7587 = vadd.f32 %v7361, %v7501
    %v7588 = vadd.f32 %v7362, %v7503
    %v7589 = vadd.f32 %v7363, %v7507
    %v7590 = vadd.f32 %v7364, %v7509
    %v7591 = vadd.f32 %v7365, %v7513
    %v7592 = vadd.f32 %v7366, %v7515
    %v7593 = vadd.f32 %v7367, %v7519
    %v7594 = vadd.f32 %v7368, %v7521
    %v7595 = vadd.f32 %v7369, %v7525
    %v7596 = vadd.f32 %v7370, %v7527
    %v7597 = vadd.f32 %v7371, %v7531
    %v7598 = vadd.f32 %v7372, %v7533
    %v7599 = vadd.f32 %v7373, %v7553
    %v7600 = vadd.f32 %v7374, %v7555
    %v7601 = vadd.f32 %v7375, %v7559
    %v7602 = vadd.f32 %v7376, %v7561
    %v7603 = vadd.f32 %v7377, %v7565
    %v7604 = vadd.f32 %v7378, %v7567
    %v7605 = vadd.f32 %v7379, %v7571
    %v7606 = vadd.f32 %v7380, %v7573
    %v7607 = vadd.f32 %v7381, %v7577
    %v7608 = vadd.f32 %v7382, %v7579
    %v7609 = vadd.f32 %v7383, %v7583
    %v7610 = vadd.f32 %v7384, %v7585
    %v7611 = vld [vmem:[#allocation3 + $0x20] sm:$0xff]
    %v7612 = vld [vmem:[#allocation3 + $0x28] sm:$0xff]
    %v7613 = vld [vmem:[#allocation3 + $0x30] sm:$0xff]
    %v7614 = vld [vmem:[#allocation3 + $0x38] sm:$0xff]
    %v7615 = vld [vmem:[#allocation3 + $0x40] sm:$0xff]
    %v7616 = vld [vmem:[#allocation3 + $0x48] sm:$0xff]
    %v7617 = vld [vmem:[#allocation3 + $0x50] sm:$0xff]
    %v7618 = vld [vmem:[#allocation3 + $0x58] sm:$0xff]
    %v7619 = vld [vmem:[#allocation3 + $0x60] sm:$0xff]
    %v7620 = vld [vmem:[#allocation3 + $0x68] sm:$0xff]
    %v7621 = vld [vmem:[#allocation3 + $0x70] sm:$0xff]
    %v7622 = vld [vmem:[#allocation3 + $0x78] sm:$0xff]
    %v7623 = vld [vmem:[#allocation3 + $0x80] sm:$0xff]
    %v7624 = vld [vmem:[#allocation3 + $0x88] sm:$0xff]
    %v7625 = vld [vmem:[#allocation3 + $0x90] sm:$0xff]
    %v7626 = vld [vmem:[#allocation3 + $0x98] sm:$0xff]
    %s7627 = scalar_lea.vmem %s5, 1536
    %v7628 = vld [vmem:[%s7627] sm:$0xff]
    %v7629 = vld [vmem:[%s7627 + $0x8] sm:$0xff]
    %v7630 = vld [vmem:[%s7627 + $0x10] sm:$0xff]
    %v7631 = vld [vmem:[%s7627 + $0x18] sm:$0xff]
    %v7632 = vld [vmem:[%s7627 + $0x20] sm:$0xff]
    %v7633 = vld [vmem:[%s7627 + $0x28] sm:$0xff]
    %v7634 = vld [vmem:[%s7627 + $0x30] sm:$0xff]
    %v7635 = vld [vmem:[%s7627 + $0x38] sm:$0xff]
    %v7636 = vld [vmem:[%s7627 + $0x40] sm:$0xff]
    %v7637 = vld [vmem:[%s7627 + $0x48] sm:$0xff]
    %v7638 = vld [vmem:[%s7627 + $0x50] sm:$0xff]
    %v7639 = vld [vmem:[%s7627 + $0x58] sm:$0xff]
    %v7640 = vld [vmem:[%s7627 + $0x60] sm:$0xff]
    %v7641 = vld [vmem:[%s7627 + $0x68] sm:$0xff]
    %v7642 = vld [vmem:[%s7627 + $0x70] sm:$0xff]
    %v7643 = vld [vmem:[%s7627 + $0x78] sm:$0xff]
    %v7644 = vld [vmem:[%s7627 + $0x80] sm:$0xff]
    %v7645 = vld [vmem:[%s7627 + $0x88] sm:$0xff]
    %v7646 = vld [vmem:[%s7627 + $0x90] sm:$0xff]
    %v7647 = vld [vmem:[%s7627 + $0x98] sm:$0xff]
    %v7648 = vld [vmem:[%s7627 + $0xa0] sm:$0xff]
    %v7649 = vld [vmem:[%s7627 + $0xa8] sm:$0xff]
    %v7650 = vld [vmem:[%s7627 + $0xb0] sm:$0xff]
    %v7651 = vld [vmem:[%s7627 + $0xb8] sm:$0xff]
    %v7652 = vld [vmem:[%s7627 + $0xc0] sm:$0xff]
    %v7653 = vld [vmem:[%s7627 + $0xc8] sm:$0xff]
    %v7654 = vld [vmem:[%s7627 + $0xd0] sm:$0xff]
    %v7655 = vld [vmem:[%s7627 + $0xd8] sm:$0xff]
    %v7656 = vld [vmem:[%s7627 + $0xe0] sm:$0xff]
    %v7657 = vld [vmem:[%s7627 + $0xe8] sm:$0xff]
    %v7658 = vld [vmem:[%s7627 + $0xf0] sm:$0xff]
    %v7659 = vld [vmem:[%s7627 + $0xf8] sm:$0xff]
    %7660 = vmatprep.subr.mxu0 %v7629
    %7661 = vmatpush1.msra.mxu0 %v7628
    %7662 = vmatprep.subr.mxu0 %v7631
    %7663 = vmatpush1.msra.mxu0 %v7630
    %7664 = vmatprep.subr.mxu0 %v7633
    %7665 = vmatpush1.msra.mxu0 %v7632
    %7666 = vmatprep.subr.mxu0 %v7635
    %7667 = vmatpush1.msra.mxu0 %v7634
    %7668 = vmatprep.subr.mxu0 %v7637
    %7669 = vmatpush1.msra.mxu0 %v7636
    %7670 = vmatprep.subr.mxu0 %v7639
    %7671 = vmatpush1.msra.mxu0 %v7638
    %7672 = vmatprep.subr.mxu0 %v7641
    %7673 = vmatpush1.msra.mxu0 %v7640
    %7674 = vmatprep.subr.mxu0 %v7643
    %7675 = vmatpush1.msra.mxu0 %v7642
    %7676 = vmatprep.subr.mxu0 %v7645
    %7677 = vmatpush1.msra.mxu0 %v7644
    %7678 = vmatprep.subr.mxu0 %v7647
    %7679 = vmatpush1.msra.mxu0 %v7646
    %7680 = vmatprep.subr.mxu0 %v7649
    %7681 = vmatpush1.msra.mxu0 %v7648
    %7682 = vmatprep.subr.mxu0 %v7651
    %7683 = vmatpush1.msra.mxu0 %v7650
    %7684 = vmatprep.subr.mxu0 %v7653
    %7685 = vmatpush1.msra.mxu0 %v7652
    %7686 = vmatprep.subr.mxu0 %v7655
    %7687 = vmatpush1.msra.mxu0 %v7654
    %7688 = vmatprep.subr.mxu0 %v7657
    %7689 = vmatpush1.msra.mxu0 %v7656
    %7690 = vmatprep.subr.mxu0 %v7659
    %7691 = vmatpush1.msra.mxu0 %v7658
    %7692 = vmatprep.subr.mxu0 0.0
    %7693 = vmatpush1.msra.mxu0 0.0
    %7694 = vmatprep.subr.mxu0 0.0
    %7695 = vmatpush1.msra.mxu0 0.0
    %7696 = vmatprep.subr.mxu0 0.0
    %7697 = vmatpush1.msra.mxu0 0.0
    %7698 = vmatprep.subr.mxu0 0.0
    %7699 = vmatpush1.msra.mxu0 0.0
    %7700 = vmatprep.subr.mxu0 0.0
    %7701 = vmatpush1.msra.mxu0 0.0
    %7702 = vmatprep.subr.mxu0 0.0
    %7703 = vmatpush1.msra.mxu0 0.0
    %7704 = vmatprep.subr.mxu0 0.0
    %7705 = vmatpush1.msra.mxu0 0.0
    %7706 = vmatprep.subr.mxu0 0.0
    %7707 = vmatpush1.msra.mxu0 0.0
    %7708 = vmatprep.subr.mxu0 0.0
    %7709 = vmatpush1.msra.mxu0 0.0
    %7710 = vmatprep.subr.mxu0 0.0
    %7711 = vmatpush1.msra.mxu0 0.0
    %7712 = vmatprep.subr.mxu0 0.0
    %7713 = vmatpush1.msra.mxu0 0.0
    %7714 = vmatprep.subr.mxu0 0.0
    %7715 = vmatpush1.msra.mxu0 0.0
    %7716 = vmatprep.subr.mxu0 0.0
    %7717 = vmatpush1.msra.mxu0 0.0
    %7718 = vmatprep.subr.mxu0 0.0
    %7719 = vmatpush1.msra.mxu0 0.0
    %7720 = vmatprep.subr.mxu0 0.0
    %7721 = vmatpush1.msra.mxu0 0.0
    %7722 = vmatprep.subr.mxu0 0.0
    %7723 = vmatpush1.msra.mxu0 0.0
    %7724 = vmatprep.mubr.f32.mxu0 0.0
    %7725 = vmatmul.mubr.f32.gmra.mrb[0].mxu0 %v7611
    %v7726 = vpop.f32.mrb[0].mxu0
    %v7727 = vadd.f32 0.0, %v7726
    %v7728 = vpop.f32.mrb[0].mxu0
    %v7729 = vadd.f32 0.0, %v7728
    %7730 = vmatprep.mubr.f32.mxu0 0.0
    %7731 = vmatmul.mubr.f32.gmra.mrb[0].mxu0 %v7612
    %v7732 = vpop.f32.mrb[0].mxu0
    %v7733 = vadd.f32 0.0, %v7732
    %v7734 = vpop.f32.mrb[0].mxu0
    %v7735 = vadd.f32 0.0, %v7734
    %7736 = vmatprep.mubr.f32.mxu0 0.0
    %7737 = vmatmul.mubr.f32.gmra.mrb[0].mxu0 %v7613
    %v7738 = vpop.f32.mrb[0].mxu0
    %v7739 = vadd.f32 0.0, %v7738
    %v7740 = vpop.f32.mrb[0].mxu0
    %v7741 = vadd.f32 0.0, %v7740
    %7742 = vmatprep.mubr.f32.mxu0 0.0
    %7743 = vmatmul.mubr.f32.gmra.mrb[0].mxu0 %v7614
    %v7744 = vpop.f32.mrb[0].mxu0
    %v7745 = vadd.f32 0.0, %v7744
    %v7746 = vpop.f32.mrb[0].mxu0
    %v7747 = vadd.f32 0.0, %v7746
    %7748 = vmatprep.mubr.f32.mxu0 0.0
    %7749 = vmatmul.mubr.f32.gmra.mrb[0].mxu0 %v7615
    %v7750 = vpop.f32.mrb[0].mxu0
    %v7751 = vadd.f32 0.0, %v7750
    %v7752 = vpop.f32.mrb[0].mxu0
    %v7753 = vadd.f32 0.0, %v7752
    %7754 = vmatprep.mubr.f32.mxu0 0.0
    %7755 = vmatmul.mubr.f32.gmra.mrb[0].mxu0 %v7616
    %v7756 = vpop.f32.mrb[0].mxu0
    %v7757 = vadd.f32 0.0, %v7756
    %v7758 = vpop.f32.mrb[0].mxu0
    %v7759 = vadd.f32 0.0, %v7758
    %7760 = vmatprep.mubr.f32.mxu0 0.0
    %7761 = vmatmul.mubr.f32.gmra.mrb[0].mxu0 %v7617
    %v7762 = vpop.f32.mrb[0].mxu0
    %v7763 = vpop.f32.mrb[0].mxu0
    %7764 = vmatprep.mubr.f32.mxu0 0.0
    %7765 = vmatmul.mubr.f32.gmra.mrb[0].mxu0 %v7618
    %v7766 = vpop.f32.mrb[0].mxu0
    %v7767 = vpop.f32.mrb[0].mxu0
    %7768 = vmatprep.mubr.f32.mxu0 0.0
    %7769 = vmatmul.mubr.f32.gmra.mrb[0].mxu0 %v7619
    %v7770 = vpop.f32.mrb[0].mxu0
    %v7771 = vpop.f32.mrb[0].mxu0
    %7772 = vmatprep.mubr.f32.mxu0 0.0
    %7773 = vmatmul.mubr.f32.gmra.mrb[0].mxu0 %v7620
    %v7774 = vpop.f32.mrb[0].mxu0
    %v7775 = vpop.f32.mrb[0].mxu0
    %7776 = vmatprep.mubr.f32.mxu0 0.0
    %7777 = vmatmul.mubr.f32.gmra.mrb[0].mxu0 %v7621
    %v7778 = vpop.f32.mrb[0].mxu0
    %v7779 = vadd.f32 0.0, %v7778
    %v7780 = vpop.f32.mrb[0].mxu0
    %v7781 = vadd.f32 0.0, %v7780
    %7782 = vmatprep.mubr.f32.mxu0 0.0
    %7783 = vmatmul.mubr.f32.gmra.mrb[0].mxu0 %v7622
    %v7784 = vpop.f32.mrb[0].mxu0
    %v7785 = vadd.f32 0.0, %v7784
    %v7786 = vpop.f32.mrb[0].mxu0
    %v7787 = vadd.f32 0.0, %v7786
    %7788 = vmatprep.mubr.f32.mxu0 0.0
    %7789 = vmatmul.mubr.f32.gmra.mrb[0].mxu0 %v7623
    %v7790 = vpop.f32.mrb[0].mxu0
    %v7791 = vadd.f32 0.0, %v7790
    %v7792 = vpop.f32.mrb[0].mxu0
    %v7793 = vadd.f32 0.0, %v7792
    %7794 = vmatprep.mubr.f32.mxu0 0.0
    %7795 = vmatmul.mubr.f32.gmra.mrb[0].mxu0 %v7624
    %v7796 = vpop.f32.mrb[0].mxu0
    %v7797 = vadd.f32 0.0, %v7796
    %v7798 = vpop.f32.mrb[0].mxu0
    %v7799 = vadd.f32 0.0, %v7798
    %7800 = vmatprep.mubr.f32.mxu0 0.0
    %7801 = vmatmul.mubr.f32.gmra.mrb[0].mxu0 %v7625
    %v7802 = vpop.f32.mrb[0].mxu0
    %v7803 = vadd.f32 0.0, %v7802
    %v7804 = vpop.f32.mrb[0].mxu0
    %v7805 = vadd.f32 0.0, %v7804
    %7806 = vmatprep.mubr.f32.mxu0 0.0
    %7807 = vmatmul.mubr.f32.gmra.mrb[0].mxu0 %v7626
    %v7808 = vpop.f32.mrb[0].mxu0
    %v7809 = vadd.f32 0.0, %v7808
    %v7810 = vpop.f32.mrb[0].mxu0
    %v7811 = vadd.f32 0.0, %v7810
    %7812 = vdwg.mxu0
    %v7813 = vadd.f32 %v7587, %v7727
    %v7814 = vadd.f32 %v7588, %v7729
    %v7815 = vadd.f32 %v7589, %v7733
    %v7816 = vadd.f32 %v7590, %v7735
    %v7817 = vadd.f32 %v7591, %v7739
    %v7818 = vadd.f32 %v7592, %v7741
    %v7819 = vadd.f32 %v7593, %v7745
    %v7820 = vadd.f32 %v7594, %v7747
    %v7821 = vadd.f32 %v7595, %v7751
    %v7822 = vadd.f32 %v7596, %v7753
    %v7823 = vadd.f32 %v7597, %v7757
    %v7824 = vadd.f32 %v7598, %v7759
    %v7825 = vadd.f32 %v7599, %v7779
    %v7826 = vadd.f32 %v7600, %v7781
    %v7827 = vadd.f32 %v7601, %v7785
    %v7828 = vadd.f32 %v7602, %v7787
    %v7829 = vadd.f32 %v7603, %v7791
    %v7830 = vadd.f32 %v7604, %v7793
    %v7831 = vadd.f32 %v7605, %v7797
    %v7832 = vadd.f32 %v7606, %v7799
    %v7833 = vadd.f32 %v7607, %v7803
    %v7834 = vadd.f32 %v7608, %v7805
    %v7835 = vadd.f32 %v7609, %v7809
    %v7836 = vadd.f32 %v7610, %v7811
    %v7837 = vld [vmem:[#allocation3 + $0x21] sm:$0xff]
    %v7838 = vld [vmem:[#allocation3 + $0x29] sm:$0xff]
    %v7839 = vld [vmem:[#allocation3 + $0x31] sm:$0xff]
    %v7840 = vld [vmem:[#allocation3 + $0x39] sm:$0xff]
    %v7841 = vld [vmem:[#allocation3 + $0x41] sm:$0xff]
    %v7842 = vld [vmem:[#allocation3 + $0x49] sm:$0xff]
    %v7843 = vld [vmem:[#allocation3 + $0x51] sm:$0xff]
    %v7844 = vld [vmem:[#allocation3 + $0x59] sm:$0xff]
    %v7845 = vld [vmem:[#allocation3 + $0x61] sm:$0xff]
    %v7846 = vld [vmem:[#allocation3 + $0x69] sm:$0xff]
    %v7847 = vld [vmem:[#allocation3 + $0x71] sm:$0xff]
    %v7848 = vld [vmem:[#allocation3 + $0x79] sm:$0xff]
    %v7849 = vld [vmem:[#allocation3 + $0x81] sm:$0xff]
    %v7850 = vld [vmem:[#allocation3 + $0x89] sm:$0xff]
    %v7851 = vld [vmem:[#allocation3 + $0x91] sm:$0xff]
    %v7852 = vld [vmem:[#allocation3 + $0x99] sm:$0xff]
    %s7853 = scalar_lea.vmem %s5, 1792
    %v7854 = vld [vmem:[%s7853] sm:$0xff]
    %v7855 = vld [vmem:[%s7853 + $0x8] sm:$0xff]
    %v7856 = vld [vmem:[%s7853 + $0x10] sm:$0xff]
    %v7857 = vld [vmem:[%s7853 + $0x18] sm:$0xff]
    %v7858 = vld [vmem:[%s7853 + $0x20] sm:$0xff]
    %v7859 = vld [vmem:[%s7853 + $0x28] sm:$0xff]
    %v7860 = vld [vmem:[%s7853 + $0x30] sm:$0xff]
    %v7861 = vld [vmem:[%s7853 + $0x38] sm:$0xff]
    %v7862 = vld [vmem:[%s7853 + $0x40] sm:$0xff]
    %v7863 = vld [vmem:[%s7853 + $0x48] sm:$0xff]
    %v7864 = vld [vmem:[%s7853 + $0x50] sm:$0xff]
    %v7865 = vld [vmem:[%s7853 + $0x58] sm:$0xff]
    %v7866 = vld [vmem:[%s7853 + $0x60] sm:$0xff]
    %v7867 = vld [vmem:[%s7853 + $0x68] sm:$0xff]
    %v7868 = vld [vmem:[%s7853 + $0x70] sm:$0xff]
    %v7869 = vld [vmem:[%s7853 + $0x78] sm:$0xff]
    %v7870 = vld [vmem:[%s7853 + $0x80] sm:$0xff]
    %v7871 = vld [vmem:[%s7853 + $0x88] sm:$0xff]
    %v7872 = vld [vmem:[%s7853 + $0x90] sm:$0xff]
    %v7873 = vld [vmem:[%s7853 + $0x98] sm:$0xff]
    %v7874 = vld [vmem:[%s7853 + $0xa0] sm:$0xff]
    %v7875 = vld [vmem:[%s7853 + $0xa8] sm:$0xff]
    %v7876 = vld [vmem:[%s7853 + $0xb0] sm:$0xff]
    %v7877 = vld [vmem:[%s7853 + $0xb8] sm:$0xff]
    %v7878 = vld [vmem:[%s7853 + $0xc0] sm:$0xff]
    %v7879 = vld [vmem:[%s7853 + $0xc8] sm:$0xff]
    %v7880 = vld [vmem:[%s7853 + $0xd0] sm:$0xff]
    %v7881 = vld [vmem:[%s7853 + $0xd8] sm:$0xff]
    %v7882 = vld [vmem:[%s7853 + $0xe0] sm:$0xff]
    %v7883 = vld [vmem:[%s7853 + $0xe8] sm:$0xff]
    %v7884 = vld [vmem:[%s7853 + $0xf0] sm:$0xff]
    %v7885 = vld [vmem:[%s7853 + $0xf8] sm:$0xff]
    %7886 = vmatprep.subr.mxu0 %v7855
    %7887 = vmatpush1.msra.mxu0 %v7854
    %7888 = vmatprep.subr.mxu0 %v7857
    %7889 = vmatpush1.msra.mxu0 %v7856
    %7890 = vmatprep.subr.mxu0 %v7859
    %7891 = vmatpush1.msra.mxu0 %v7858
    %7892 = vmatprep.subr.mxu0 %v7861
    %7893 = vmatpush1.msra.mxu0 %v7860
    %7894 = vmatprep.subr.mxu0 %v7863
    %7895 = vmatpush1.msra.mxu0 %v7862
    %7896 = vmatprep.subr.mxu0 %v7865
    %7897 = vmatpush1.msra.mxu0 %v7864
    %7898 = vmatprep.subr.mxu0 %v7867
    %7899 = vmatpush1.msra.mxu0 %v7866
    %7900 = vmatprep.subr.mxu0 %v7869
    %7901 = vmatpush1.msra.mxu0 %v7868
    %7902 = vmatprep.subr.mxu0 %v7871
    %7903 = vmatpush1.msra.mxu0 %v7870
    %7904 = vmatprep.subr.mxu0 %v7873
    %7905 = vmatpush1.msra.mxu0 %v7872
    %7906 = vmatprep.subr.mxu0 %v7875
    %7907 = vmatpush1.msra.mxu0 %v7874
    %7908 = vmatprep.subr.mxu0 %v7877
    %7909 = vmatpush1.msra.mxu0 %v7876
    %7910 = vmatprep.subr.mxu0 %v7879
    %7911 = vmatpush1.msra.mxu0 %v7878
    %7912 = vmatprep.subr.mxu0 %v7881
    %7913 = vmatpush1.msra.mxu0 %v7880
    %7914 = vmatprep.subr.mxu0 %v7883
    %7915 = vmatpush1.msra.mxu0 %v7882
    %7916 = vmatprep.subr.mxu0 %v7885
    %7917 = vmatpush1.msra.mxu0 %v7884
    %7918 = vmatprep.subr.mxu0 0.0
    %7919 = vmatpush1.msra.mxu0 0.0
    %7920 = vmatprep.subr.mxu0 0.0
    %7921 = vmatpush1.msra.mxu0 0.0
    %7922 = vmatprep.subr.mxu0 0.0
    %7923 = vmatpush1.msra.mxu0 0.0
    %7924 = vmatprep.subr.mxu0 0.0
    %7925 = vmatpush1.msra.mxu0 0.0
    %7926 = vmatprep.subr.mxu0 0.0
    %7927 = vmatpush1.msra.mxu0 0.0
    %7928 = vmatprep.subr.mxu0 0.0
    %7929 = vmatpush1.msra.mxu0 0.0
    %7930 = vmatprep.subr.mxu0 0.0
    %7931 = vmatpush1.msra.mxu0 0.0
    %7932 = vmatprep.subr.mxu0 0.0
    %7933 = vmatpush1.msra.mxu0 0.0
    %7934 = vmatprep.subr.mxu0 0.0
    %7935 = vmatpush1.msra.mxu0 0.0
    %7936 = vmatprep.subr.mxu0 0.0
    %7937 = vmatpush1.msra.mxu0 0.0
    %7938 = vmatprep.subr.mxu0 0.0
    %7939 = vmatpush1.msra.mxu0 0.0
    %7940 = vmatprep.subr.mxu0 0.0
    %7941 = vmatpush1.msra.mxu0 0.0
    %7942 = vmatprep.subr.mxu0 0.0
    %7943 = vmatpush1.msra.mxu0 0.0
    %7944 = vmatprep.subr.mxu0 0.0
    %7945 = vmatpush1.msra.mxu0 0.0
    %7946 = vmatprep.subr.mxu0 0.0
    %7947 = vmatpush1.msra.mxu0 0.0
    %7948 = vmatprep.subr.mxu0 0.0
    %7949 = vmatpush1.msra.mxu0 0.0
    %7950 = vmatprep.mubr.f32.mxu0 0.0
    %7951 = vmatmul.mubr.f32.gmra.mrb[0].mxu0 %v7837
    %v7952 = vpop.f32.mrb[0].mxu0
    %v7953 = vadd.f32 0.0, %v7952
    %v7954 = vpop.f32.mrb[0].mxu0
    %v7955 = vadd.f32 0.0, %v7954
    %7956 = vmatprep.mubr.f32.mxu0 0.0
    %7957 = vmatmul.mubr.f32.gmra.mrb[0].mxu0 %v7838
    %v7958 = vpop.f32.mrb[0].mxu0
    %v7959 = vadd.f32 0.0, %v7958
    %v7960 = vpop.f32.mrb[0].mxu0
    %v7961 = vadd.f32 0.0, %v7960
    %7962 = vmatprep.mubr.f32.mxu0 0.0
    %7963 = vmatmul.mubr.f32.gmra.mrb[0].mxu0 %v7839
    %v7964 = vpop.f32.mrb[0].mxu0
    %v7965 = vadd.f32 0.0, %v7964
    %v7966 = vpop.f32.mrb[0].mxu0
    %v7967 = vadd.f32 0.0, %v7966
    %7968 = vmatprep.mubr.f32.mxu0 0.0
    %7969 = vmatmul.mubr.f32.gmra.mrb[0].mxu0 %v7840
    %v7970 = vpop.f32.mrb[0].mxu0
    %v7971 = vadd.f32 0.0, %v7970
    %v7972 = vpop.f32.mrb[0].mxu0
    %v7973 = vadd.f32 0.0, %v7972
    %7974 = vmatprep.mubr.f32.mxu0 0.0
    %7975 = vmatmul.mubr.f32.gmra.mrb[0].mxu0 %v7841
    %v7976 = vpop.f32.mrb[0].mxu0
    %v7977 = vadd.f32 0.0, %v7976
    %v7978 = vpop.f32.mrb[0].mxu0
    %v7979 = vadd.f32 0.0, %v7978
    %7980 = vmatprep.mubr.f32.mxu0 0.0
    %7981 = vmatmul.mubr.f32.gmra.mrb[0].mxu0 %v7842
    %v7982 = vpop.f32.mrb[0].mxu0
    %v7983 = vadd.f32 0.0, %v7982
    %v7984 = vpop.f32.mrb[0].mxu0
    %v7985 = vadd.f32 0.0, %v7984
    %7986 = vmatprep.mubr.f32.mxu0 0.0
    %7987 = vmatmul.mubr.f32.gmra.mrb[0].mxu0 %v7843
    %v7988 = vpop.f32.mrb[0].mxu0
    %v7989 = vpop.f32.mrb[0].mxu0
    %7990 = vmatprep.mubr.f32.mxu0 0.0
    %7991 = vmatmul.mubr.f32.gmra.mrb[0].mxu0 %v7844
    %v7992 = vpop.f32.mrb[0].mxu0
    %v7993 = vpop.f32.mrb[0].mxu0
    %7994 = vmatprep.mubr.f32.mxu0 0.0
    %7995 = vmatmul.mubr.f32.gmra.mrb[0].mxu0 %v7845
    %v7996 = vpop.f32.mrb[0].mxu0
    %v7997 = vpop.f32.mrb[0].mxu0
    %7998 = vmatprep.mubr.f32.mxu0 0.0
    %7999 = vmatmul.mubr.f32.gmra.mrb[0].mxu0 %v7846
    %v8000 = vpop.f32.mrb[0].mxu0
    %v8001 = vpop.f32.mrb[0].mxu0
    %8002 = vmatprep.mubr.f32.mxu0 0.0
    %8003 = vmatmul.mubr.f32.gmra.mrb[0].mxu0 %v7847
    %v8004 = vpop.f32.mrb[0].mxu0
    %v8005 = vadd.f32 0.0, %v8004
    %v8006 = vpop.f32.mrb[0].mxu0
    %v8007 = vadd.f32 0.0, %v8006
    %8008 = vmatprep.mubr.f32.mxu0 0.0
    %8009 = vmatmul.mubr.f32.gmra.mrb[0].mxu0 %v7848
    %v8010 = vpop.f32.mrb[0].mxu0
    %v8011 = vadd.f32 0.0, %v8010
    %v8012 = vpop.f32.mrb[0].mxu0
    %v8013 = vadd.f32 0.0, %v8012
    %8014 = vmatprep.mubr.f32.mxu0 0.0
    %8015 = vmatmul.mubr.f32.gmra.mrb[0].mxu0 %v7849
    %v8016 = vpop.f32.mrb[0].mxu0
    %v8017 = vadd.f32 0.0, %v8016
    %v8018 = vpop.f32.mrb[0].mxu0
    %v8019 = vadd.f32 0.0, %v8018
    %8020 = vmatprep.mubr.f32.mxu0 0.0
    %8021 = vmatmul.mubr.f32.gmra.mrb[0].mxu0 %v7850
    %v8022 = vpop.f32.mrb[0].mxu0
    %v8023 = vadd.f32 0.0, %v8022
    %v8024 = vpop.f32.mrb[0].mxu0
    %v8025 = vadd.f32 0.0, %v8024
    %8026 = vmatprep.mubr.f32.mxu0 0.0
    %8027 = vmatmul.mubr.f32.gmra.mrb[0].mxu0 %v7851
    %v8028 = vpop.f32.mrb[0].mxu0
    %v8029 = vadd.f32 0.0, %v8028
    %v8030 = vpop.f32.mrb[0].mxu0
    %v8031 = vadd.f32 0.0, %v8030
    %8032 = vmatprep.mubr.f32.mxu0 0.0
    %8033 = vmatmul.mubr.f32.gmra.mrb[0].mxu0 %v7852
    %v8034 = vpop.f32.mrb[0].mxu0
    %v8035 = vadd.f32 0.0, %v8034
    %v8036 = vpop.f32.mrb[0].mxu0
    %v8037 = vadd.f32 0.0, %v8036
    %8038 = vdwg.mxu0
    %v8039 = vadd.f32 %v7813, %v7953
    %v8040 = vadd.f32 %v7814, %v7955
    %v8041 = vadd.f32 %v7815, %v7959
    %v8042 = vadd.f32 %v7816, %v7961
    %v8043 = vadd.f32 %v7817, %v7965
    %v8044 = vadd.f32 %v7818, %v7967
    %v8045 = vadd.f32 %v7819, %v7971
    %v8046 = vadd.f32 %v7820, %v7973
    %v8047 = vadd.f32 %v7821, %v7977
    %v8048 = vadd.f32 %v7822, %v7979
    %v8049 = vadd.f32 %v7823, %v7983
    %v8050 = vadd.f32 %v7824, %v7985
    %v8051 = vadd.f32 %v7825, %v8005
    %v8052 = vadd.f32 %v7826, %v8007
    %v8053 = vadd.f32 %v7827, %v8011
    %v8054 = vadd.f32 %v7828, %v8013
    %v8055 = vadd.f32 %v7829, %v8017
    %v8056 = vadd.f32 %v7830, %v8019
    %v8057 = vadd.f32 %v7831, %v8023
    %v8058 = vadd.f32 %v7832, %v8025
    %v8059 = vadd.f32 %v7833, %v8029
    %v8060 = vadd.f32 %v7834, %v8031
    %v8061 = vadd.f32 %v7835, %v8035
    %v8062 = vadd.f32 %v7836, %v8037
    %v8063 = vld [vmem:[#allocation3 + $0x22] sm:$0xff]
    %v8064 = vld [vmem:[#allocation3 + $0x2a] sm:$0xff]
    %v8065 = vld [vmem:[#allocation3 + $0x32] sm:$0xff]
    %v8066 = vld [vmem:[#allocation3 + $0x3a] sm:$0xff]
    %v8067 = vld [vmem:[#allocation3 + $0x42] sm:$0xff]
    %v8068 = vld [vmem:[#allocation3 + $0x4a] sm:$0xff]
    %v8069 = vld [vmem:[#allocation3 + $0x52] sm:$0xff]
    %v8070 = vld [vmem:[#allocation3 + $0x5a] sm:$0xff]
    %v8071 = vld [vmem:[#allocation3 + $0x62] sm:$0xff]
    %v8072 = vld [vmem:[#allocation3 + $0x6a] sm:$0xff]
    %v8073 = vld [vmem:[#allocation3 + $0x72] sm:$0xff]
    %v8074 = vld [vmem:[#allocation3 + $0x7a] sm:$0xff]
    %v8075 = vld [vmem:[#allocation3 + $0x82] sm:$0xff]
    %v8076 = vld [vmem:[#allocation3 + $0x8a] sm:$0xff]
    %v8077 = vld [vmem:[#allocation3 + $0x92] sm:$0xff]
    %v8078 = vld [vmem:[#allocation3 + $0x9a] sm:$0xff]
    %s8079 = scalar_lea.vmem %s5, 2048
    %v8080 = vld [vmem:[%s8079] sm:$0xff]
    %v8081 = vld [vmem:[%s8079 + $0x8] sm:$0xff]
    %v8082 = vld [vmem:[%s8079 + $0x10] sm:$0xff]
    %v8083 = vld [vmem:[%s8079 + $0x18] sm:$0xff]
    %v8084 = vld [vmem:[%s8079 + $0x20] sm:$0xff]
    %v8085 = vld [vmem:[%s8079 + $0x28] sm:$0xff]
    %v8086 = vld [vmem:[%s8079 + $0x30] sm:$0xff]
    %v8087 = vld [vmem:[%s8079 + $0x38] sm:$0xff]
    %v8088 = vld [vmem:[%s8079 + $0x40] sm:$0xff]
    %v8089 = vld [vmem:[%s8079 + $0x48] sm:$0xff]
    %v8090 = vld [vmem:[%s8079 + $0x50] sm:$0xff]
    %v8091 = vld [vmem:[%s8079 + $0x58] sm:$0xff]
    %v8092 = vld [vmem:[%s8079 + $0x60] sm:$0xff]
    %v8093 = vld [vmem:[%s8079 + $0x68] sm:$0xff]
    %v8094 = vld [vmem:[%s8079 + $0x70] sm:$0xff]
    %v8095 = vld [vmem:[%s8079 + $0x78] sm:$0xff]
    %v8096 = vld [vmem:[%s8079 + $0x80] sm:$0xff]
    %v8097 = vld [vmem:[%s8079 + $0x88] sm:$0xff]
    %v8098 = vld [vmem:[%s8079 + $0x90] sm:$0xff]
    %v8099 = vld [vmem:[%s8079 + $0x98] sm:$0xff]
    %v8100 = vld [vmem:[%s8079 + $0xa0] sm:$0xff]
    %v8101 = vld [vmem:[%s8079 + $0xa8] sm:$0xff]
    %v8102 = vld [vmem:[%s8079 + $0xb0] sm:$0xff]
    %v8103 = vld [vmem:[%s8079 + $0xb8] sm:$0xff]
    %v8104 = vld [vmem:[%s8079 + $0xc0] sm:$0xff]
    %v8105 = vld [vmem:[%s8079 + $0xc8] sm:$0xff]
    %v8106 = vld [vmem:[%s8079 + $0xd0] sm:$0xff]
    %v8107 = vld [vmem:[%s8079 + $0xd8] sm:$0xff]
    %v8108 = vld [vmem:[%s8079 + $0xe0] sm:$0xff]
    %v8109 = vld [vmem:[%s8079 + $0xe8] sm:$0xff]
    %v8110 = vld [vmem:[%s8079 + $0xf0] sm:$0xff]
    %v8111 = vld [vmem:[%s8079 + $0xf8] sm:$0xff]
    %8112 = vmatprep.subr.mxu0 %v8081
    %8113 = vmatpush1.msra.mxu0 %v8080
    %8114 = vmatprep.subr.mxu0 %v8083
    %8115 = vmatpush1.msra.mxu0 %v8082
    %8116 = vmatprep.subr.mxu0 %v8085
    %8117 = vmatpush1.msra.mxu0 %v8084
    %8118 = vmatprep.subr.mxu0 %v8087
    %8119 = vmatpush1.msra.mxu0 %v8086
    %8120 = vmatprep.subr.mxu0 %v8089
    %8121 = vmatpush1.msra.mxu0 %v8088
    %8122 = vmatprep.subr.mxu0 %v8091
    %8123 = vmatpush1.msra.mxu0 %v8090
    %8124 = vmatprep.subr.mxu0 %v8093
    %8125 = vmatpush1.msra.mxu0 %v8092
    %8126 = vmatprep.subr.mxu0 %v8095
    %8127 = vmatpush1.msra.mxu0 %v8094
    %8128 = vmatprep.subr.mxu0 %v8097
    %8129 = vmatpush1.msra.mxu0 %v8096
    %8130 = vmatprep.subr.mxu0 %v8099
    %8131 = vmatpush1.msra.mxu0 %v8098
    %8132 = vmatprep.subr.mxu0 %v8101
    %8133 = vmatpush1.msra.mxu0 %v8100
    %8134 = vmatprep.subr.mxu0 %v8103
    %8135 = vmatpush1.msra.mxu0 %v8102
    %8136 = vmatprep.subr.mxu0 %v8105
    %8137 = vmatpush1.msra.mxu0 %v8104
    %8138 = vmatprep.subr.mxu0 %v8107
    %8139 = vmatpush1.msra.mxu0 %v8106
    %8140 = vmatprep.subr.mxu0 %v8109
    %8141 = vmatpush1.msra.mxu0 %v8108
    %8142 = vmatprep.subr.mxu0 %v8111
    %8143 = vmatpush1.msra.mxu0 %v8110
    %8144 = vmatprep.subr.mxu0 0.0
    %8145 = vmatpush1.msra.mxu0 0.0
    %8146 = vmatprep.subr.mxu0 0.0
    %8147 = vmatpush1.msra.mxu0 0.0
    %8148 = vmatprep.subr.mxu0 0.0
    %8149 = vmatpush1.msra.mxu0 0.0
    %8150 = vmatprep.subr.mxu0 0.0
    %8151 = vmatpush1.msra.mxu0 0.0
    %8152 = vmatprep.subr.mxu0 0.0
    %8153 = vmatpush1.msra.mxu0 0.0
    %8154 = vmatprep.subr.mxu0 0.0
    %8155 = vmatpush1.msra.mxu0 0.0
    %8156 = vmatprep.subr.mxu0 0.0
    %8157 = vmatpush1.msra.mxu0 0.0
    %8158 = vmatprep.subr.mxu0 0.0
    %8159 = vmatpush1.msra.mxu0 0.0
    %8160 = vmatprep.subr.mxu0 0.0
    %8161 = vmatpush1.msra.mxu0 0.0
    %8162 = vmatprep.subr.mxu0 0.0
    %8163 = vmatpush1.msra.mxu0 0.0
    %8164 = vmatprep.subr.mxu0 0.0
    %8165 = vmatpush1.msra.mxu0 0.0
    %8166 = vmatprep.subr.mxu0 0.0
    %8167 = vmatpush1.msra.mxu0 0.0
    %8168 = vmatprep.subr.mxu0 0.0
    %8169 = vmatpush1.msra.mxu0 0.0
    %8170 = vmatprep.subr.mxu0 0.0
    %8171 = vmatpush1.msra.mxu0 0.0
    %8172 = vmatprep.subr.mxu0 0.0
    %8173 = vmatpush1.msra.mxu0 0.0
    %8174 = vmatprep.subr.mxu0 0.0
    %8175 = vmatpush1.msra.mxu0 0.0
    %8176 = vmatprep.mubr.f32.mxu0 0.0
    %8177 = vmatmul.mubr.f32.gmra.mrb[0].mxu0 %v8063
    %v8178 = vpop.f32.mrb[0].mxu0
    %v8179 = vadd.f32 0.0, %v8178
    %v8180 = vpop.f32.mrb[0].mxu0
    %v8181 = vadd.f32 0.0, %v8180
    %8182 = vmatprep.mubr.f32.mxu0 0.0
    %8183 = vmatmul.mubr.f32.gmra.mrb[0].mxu0 %v8064
    %v8184 = vpop.f32.mrb[0].mxu0
    %v8185 = vadd.f32 0.0, %v8184
    %v8186 = vpop.f32.mrb[0].mxu0
    %v8187 = vadd.f32 0.0, %v8186
    %8188 = vmatprep.mubr.f32.mxu0 0.0
    %8189 = vmatmul.mubr.f32.gmra.mrb[0].mxu0 %v8065
    %v8190 = vpop.f32.mrb[0].mxu0
    %v8191 = vadd.f32 0.0, %v8190
    %v8192 = vpop.f32.mrb[0].mxu0
    %v8193 = vadd.f32 0.0, %v8192
    %8194 = vmatprep.mubr.f32.mxu0 0.0
    %8195 = vmatmul.mubr.f32.gmra.mrb[0].mxu0 %v8066
    %v8196 = vpop.f32.mrb[0].mxu0
    %v8197 = vadd.f32 0.0, %v8196
    %v8198 = vpop.f32.mrb[0].mxu0
    %v8199 = vadd.f32 0.0, %v8198
    %8200 = vmatprep.mubr.f32.mxu0 0.0
    %8201 = vmatmul.mubr.f32.gmra.mrb[0].mxu0 %v8067
    %v8202 = vpop.f32.mrb[0].mxu0
    %v8203 = vadd.f32 0.0, %v8202
    %v8204 = vpop.f32.mrb[0].mxu0
    %v8205 = vadd.f32 0.0, %v8204
    %8206 = vmatprep.mubr.f32.mxu0 0.0
    %8207 = vmatmul.mubr.f32.gmra.mrb[0].mxu0 %v8068
    %v8208 = vpop.f32.mrb[0].mxu0
    %v8209 = vadd.f32 0.0, %v8208
    %v8210 = vpop.f32.mrb[0].mxu0
    %v8211 = vadd.f32 0.0, %v8210
    %8212 = vmatprep.mubr.f32.mxu0 0.0
    %8213 = vmatmul.mubr.f32.gmra.mrb[0].mxu0 %v8069
    %v8214 = vpop.f32.mrb[0].mxu0
    %v8215 = vpop.f32.mrb[0].mxu0
    %8216 = vmatprep.mubr.f32.mxu0 0.0
    %8217 = vmatmul.mubr.f32.gmra.mrb[0].mxu0 %v8070
    %v8218 = vpop.f32.mrb[0].mxu0
    %v8219 = vpop.f32.mrb[0].mxu0
    %8220 = vmatprep.mubr.f32.mxu0 0.0
    %8221 = vmatmul.mubr.f32.gmra.mrb[0].mxu0 %v8071
    %v8222 = vpop.f32.mrb[0].mxu0
    %v8223 = vpop.f32.mrb[0].mxu0
    %8224 = vmatprep.mubr.f32.mxu0 0.0
    %8225 = vmatmul.mubr.f32.gmra.mrb[0].mxu0 %v8072
    %v8226 = vpop.f32.mrb[0].mxu0
    %v8227 = vpop.f32.mrb[0].mxu0
    %8228 = vmatprep.mubr.f32.mxu0 0.0
    %8229 = vmatmul.mubr.f32.gmra.mrb[0].mxu0 %v8073
    %v8230 = vpop.f32.mrb[0].mxu0
    %v8231 = vadd.f32 0.0, %v8230
    %v8232 = vpop.f32.mrb[0].mxu0
    %v8233 = vadd.f32 0.0, %v8232
    %8234 = vmatprep.mubr.f32.mxu0 0.0
    %8235 = vmatmul.mubr.f32.gmra.mrb[0].mxu0 %v8074
    %v8236 = vpop.f32.mrb[0].mxu0
    %v8237 = vadd.f32 0.0, %v8236
    %v8238 = vpop.f32.mrb[0].mxu0
    %v8239 = vadd.f32 0.0, %v8238
    %8240 = vmatprep.mubr.f32.mxu0 0.0
    %8241 = vmatmul.mubr.f32.gmra.mrb[0].mxu0 %v8075
    %v8242 = vpop.f32.mrb[0].mxu0
    %v8243 = vadd.f32 0.0, %v8242
    %v8244 = vpop.f32.mrb[0].mxu0
    %v8245 = vadd.f32 0.0, %v8244
    %8246 = vmatprep.mubr.f32.mxu0 0.0
    %8247 = vmatmul.mubr.f32.gmra.mrb[0].mxu0 %v8076
    %v8248 = vpop.f32.mrb[0].mxu0
    %v8249 = vadd.f32 0.0, %v8248
    %v8250 = vpop.f32.mrb[0].mxu0
    %v8251 = vadd.f32 0.0, %v8250
    %8252 = vmatprep.mubr.f32.mxu0 0.0
    %8253 = vmatmul.mubr.f32.gmra.mrb[0].mxu0 %v8077
    %v8254 = vpop.f32.mrb[0].mxu0
    %v8255 = vadd.f32 0.0, %v8254
    %v8256 = vpop.f32.mrb[0].mxu0
    %v8257 = vadd.f32 0.0, %v8256
    %8258 = vmatprep.mubr.f32.mxu0 0.0
    %8259 = vmatmul.mubr.f32.gmra.mrb[0].mxu0 %v8078
    %v8260 = vpop.f32.mrb[0].mxu0
    %v8261 = vadd.f32 0.0, %v8260
    %v8262 = vpop.f32.mrb[0].mxu0
    %v8263 = vadd.f32 0.0, %v8262
    %8264 = vdwg.mxu0
    %v8265 = vadd.f32 %v8039, %v8179
    %v8266 = vadd.f32 %v8040, %v8181
    %v8267 = vadd.f32 %v8041, %v8185
    %v8268 = vadd.f32 %v8042, %v8187
    %v8269 = vadd.f32 %v8043, %v8191
    %v8270 = vadd.f32 %v8044, %v8193
    %v8271 = vadd.f32 %v8045, %v8197
    %v8272 = vadd.f32 %v8046, %v8199
    %v8273 = vadd.f32 %v8047, %v8203
    %v8274 = vadd.f32 %v8048, %v8205
    %v8275 = vadd.f32 %v8049, %v8209
    %v8276 = vadd.f32 %v8050, %v8211
    %v8277 = vadd.f32 %v8051, %v8231
    %v8278 = vadd.f32 %v8052, %v8233
    %v8279 = vadd.f32 %v8053, %v8237
    %v8280 = vadd.f32 %v8054, %v8239
    %v8281 = vadd.f32 %v8055, %v8243
    %v8282 = vadd.f32 %v8056, %v8245
    %v8283 = vadd.f32 %v8057, %v8249
    %v8284 = vadd.f32 %v8058, %v8251
    %v8285 = vadd.f32 %v8059, %v8255
    %v8286 = vadd.f32 %v8060, %v8257
    %v8287 = vadd.f32 %v8061, %v8261
    %v8288 = vadd.f32 %v8062, %v8263
    %v8289 = vld [vmem:[%s6] sm:$0x3]
    %v8291 = vlaneseq
    %v8292 = vshrl.u32 %v8291, 7
    %v8293 = vsub.s32 0, %v8292
    %v8294 = vrot.slane %v8289, %v8293
    %v8295 = vlaneseq
    %v8296 = vshrl.u32 %v8295, 7
    %v8297 = vsub.s32 1, %v8296
    %v8298 = vrot.slane %v8289, %v8297
    %v8301 = vadd.f32 %v8265, %v8294
    %v8302 = vadd.f32 %v8266, %v8298
    %v8303 = vadd.f32 %v8267, %v8294
    %v8304 = vadd.f32 %v8268, %v8298
    %v8305 = vadd.f32 %v8269, %v8294
    %v8306 = vadd.f32 %v8270, %v8298
    %v8307 = vadd.f32 %v8271, %v8294
    %v8308 = vadd.f32 %v8272, %v8298
    %v8309 = vadd.f32 %v8273, %v8294
    %v8310 = vadd.f32 %v8274, %v8298
    %v8311 = vadd.f32 %v8275, %v8294
    %v8312 = vadd.f32 %v8276, %v8298
    %v8313 = vadd.f32 %v8277, %v8294
    %v8314 = vadd.f32 %v8278, %v8298
    %v8315 = vadd.f32 %v8279, %v8294
    %v8316 = vadd.f32 %v8280, %v8298
    %v8317 = vadd.f32 %v8281, %v8294
    %v8318 = vadd.f32 %v8282, %v8298
    %v8319 = vadd.f32 %v8283, %v8294
    %v8320 = vadd.f32 %v8284, %v8298
    %v8321 = vadd.f32 %v8285, %v8294
    %v8322 = vadd.f32 %v8286, %v8298
    %v8323 = vadd.f32 %v8287, %v8294
    %v8324 = vadd.f32 %v8288, %v8298
    %v8325 = vmax.f32 %v8301, 0.0
    %v8326 = vmax.f32 %v8302, 0.0
    %v8327 = vmax.f32 %v8303, 0.0
    %v8328 = vmax.f32 %v8304, 0.0
    %v8329 = vmax.f32 %v8305, 0.0
    %v8330 = vmax.f32 %v8306, 0.0
    %v8331 = vmax.f32 %v8307, 0.0
    %v8332 = vmax.f32 %v8308, 0.0
    %v8333 = vmax.f32 %v8309, 0.0
    %v8334 = vmax.f32 %v8310, 0.0
    %v8335 = vmax.f32 %v8311, 0.0
    %v8336 = vmax.f32 %v8312, 0.0
    %v8337 = vmax.f32 %v8313, 0.0
    %v8338 = vmax.f32 %v8314, 0.0
    %v8339 = vmax.f32 %v8315, 0.0
    %v8340 = vmax.f32 %v8316, 0.0
    %v8341 = vmax.f32 %v8317, 0.0
    %v8342 = vmax.f32 %v8318, 0.0
    %v8343 = vmax.f32 %v8319, 0.0
    %v8344 = vmax.f32 %v8320, 0.0
    %v8345 = vmax.f32 %v8321, 0.0
    %v8346 = vmax.f32 %v8322, 0.0
    %v8347 = vmax.f32 %v8323, 0.0
    %v8348 = vmax.f32 %v8324, 0.0
    %8349 = vst [vmem:[#allocation4] sm:$0xff] %v8325
    %8350 = vst [vmem:[#allocation4 + $0x8] sm:$0xff] %v8326
    %8351 = vst [vmem:[#allocation4 + $0x10] sm:$0xff] %v8327
    %8352 = vst [vmem:[#allocation4 + $0x18] sm:$0xff] %v8328
    %8353 = vst [vmem:[#allocation4 + $0x20] sm:$0xff] %v8329
    %8354 = vst [vmem:[#allocation4 + $0x28] sm:$0xff] %v8330
    %8355 = vst [vmem:[#allocation4 + $0x30] sm:$0xff] %v8331
    %8356 = vst [vmem:[#allocation4 + $0x38] sm:$0xff] %v8332
    %8357 = vst [vmem:[#allocation4 + $0x40] sm:$0xff] %v8333
    %8358 = vst [vmem:[#allocation4 + $0x48] sm:$0xff] %v8334
    %8359 = vst [vmem:[#allocation4 + $0x50] sm:$0xff] %v8335
    %8360 = vst [vmem:[#allocation4 + $0x58] sm:$0xff] %v8336
    %8361 = vst [vmem:[#allocation4 + $0x60] sm:$0xff] %v8337
    %8362 = vst [vmem:[#allocation4 + $0x68] sm:$0xff] %v8338
    %8363 = vst [vmem:[#allocation4 + $0x70] sm:$0xff] %v8339
    %8364 = vst [vmem:[#allocation4 + $0x78] sm:$0xff] %v8340
    %8365 = vst [vmem:[#allocation4 + $0x80] sm:$0xff] %v8341
    %8366 = vst [vmem:[#allocation4 + $0x88] sm:$0xff] %v8342
    %8367 = vst [vmem:[#allocation4 + $0x90] sm:$0xff] %v8343
    %8368 = vst [vmem:[#allocation4 + $0x98] sm:$0xff] %v8344
    %8369 = vst [vmem:[#allocation4 + $0xa0] sm:$0xff] %v8345
    %8370 = vst [vmem:[#allocation4 + $0xa8] sm:$0xff] %v8346
    %8371 = vst [vmem:[#allocation4 + $0xb0] sm:$0xff] %v8347
    %8372 = vst [vmem:[#allocation4 + $0xb8] sm:$0xff] %v8348
    %v8373 = vld [vmem:[#allocation4] ss:$8 sm:$0x3]
    %v8374 = vlaneseq
    %vm8375 = vcmp.ge.s32.totalorder %v8374, 0
    %vm8376 = vcmp.lt.s32.totalorder %v8374, 256
    %vm8377 = vmand %vm8375, %vm8376
    %8378 = vst.msk [vmem:[%s9] ss:$2 sm:$0x3] %vm8377, %v8373
    %s8379 = scalar_lea.vmem [#allocation4], 1
    %v8380 = vld [vmem:[%s8379] ss:$8 sm:$0x3]
    %s8381 = scalar_lea.vmem %s9, 4
    %8382 = vst.msk [vmem:[%s8381] ss:$2 sm:$0x3] %vm8377, %v8380
    %s8383 = scalar_lea.vmem [#allocation4], 2
    %v8384 = vld [vmem:[%s8383] ss:$8 sm:$0x3]
    %s8385 = scalar_lea.vmem %s9, 8
    %8386 = vst.msk [vmem:[%s8385] ss:$2 sm:$0x3] %vm8377, %v8384
    %s8387 = scalar_lea.vmem [#allocation4], 32
    %v8388 = vld [vmem:[%s8387] ss:$8 sm:$0x3]
    %s8389 = scalar_lea.vmem %s9, 12
    %8390 = vst.msk [vmem:[%s8389] ss:$2 sm:$0x3] %vm8377, %v8388
    %s8391 = scalar_lea.vmem [#allocation4], 33
    %v8392 = vld [vmem:[%s8391] ss:$8 sm:$0x3]
    %s8393 = scalar_lea.vmem %s9, 16
    %8394 = vst.msk [vmem:[%s8393] ss:$2 sm:$0x3] %vm8377, %v8392
    %s8395 = scalar_lea.vmem [#allocation4], 34
    %v8396 = vld [vmem:[%s8395] ss:$8 sm:$0x3]
    %s8397 = scalar_lea.vmem %s9, 20
    %8398 = vst.msk [vmem:[%s8397] ss:$2 sm:$0x3] %vm8377, %v8396
    %s8399 = scalar_lea.vmem [#allocation4], 64
    %v8400 = vld [vmem:[%s8399] ss:$8 sm:$0x3]
    %s8401 = scalar_lea.vmem %s9, 24
    %8402 = vst.msk [vmem:[%s8401] ss:$2 sm:$0x3] %vm8377, %v8400
    %s8403 = scalar_lea.vmem [#allocation4], 65
    %v8404 = vld [vmem:[%s8403] ss:$8 sm:$0x3]
    %s8405 = scalar_lea.vmem %s9, 28
    %8406 = vst.msk [vmem:[%s8405] ss:$2 sm:$0x3] %vm8377, %v8404
    %s8407 = scalar_lea.vmem [#allocation4], 66
    %v8408 = vld [vmem:[%s8407] ss:$8 sm:$0x3]
    %s8409 = scalar_lea.vmem %s9, 32
    %8410 = vst.msk [vmem:[%s8409] ss:$2 sm:$0x3] %vm8377, %v8408
    %s8411 = scalar_lea.vmem [#allocation4], 96
    %v8412 = vld [vmem:[%s8411] ss:$8 sm:$0x3]
    %s8413 = scalar_lea.vmem %s9, 1
    %8414 = vst.msk [vmem:[%s8413] ss:$2 sm:$0x3] %vm8377, %v8412
    %s8415 = scalar_lea.vmem [#allocation4], 97
    %v8416 = vld [vmem:[%s8415] ss:$8 sm:$0x3]
    %s8417 = scalar_lea.vmem %s9, 5
    %8418 = vst.msk [vmem:[%s8417] ss:$2 sm:$0x3] %vm8377, %v8416
    %s8419 = scalar_lea.vmem [#allocation4], 98
    %v8420 = vld [vmem:[%s8419] ss:$8 sm:$0x3]
    %s8421 = scalar_lea.vmem %s9, 9
    %8422 = vst.msk [vmem:[%s8421] ss:$2 sm:$0x3] %vm8377, %v8420
    %s8423 = scalar_lea.vmem [#allocation4], 128
    %v8424 = vld [vmem:[%s8423] ss:$8 sm:$0x3]
    %s8425 = scalar_lea.vmem %s9, 13
    %8426 = vst.msk [vmem:[%s8425] ss:$2 sm:$0x3] %vm8377, %v8424
    %s8427 = scalar_lea.vmem [#allocation4], 129
    %v8428 = vld [vmem:[%s8427] ss:$8 sm:$0x3]
    %s8429 = scalar_lea.vmem %s9, 17
    %8430 = vst.msk [vmem:[%s8429] ss:$2 sm:$0x3] %vm8377, %v8428
    %s8431 = scalar_lea.vmem [#allocation4], 130
    %v8432 = vld [vmem:[%s8431] ss:$8 sm:$0x3]
    %s8433 = scalar_lea.vmem %s9, 21
    %8434 = vst.msk [vmem:[%s8433] ss:$2 sm:$0x3] %vm8377, %v8432
    %s8435 = scalar_lea.vmem [#allocation4], 160
    %v8436 = vld [vmem:[%s8435] ss:$8 sm:$0x3]
    %s8437 = scalar_lea.vmem %s9, 25
    %8438 = vst.msk [vmem:[%s8437] ss:$2 sm:$0x3] %vm8377, %v8436
    %s8439 = scalar_lea.vmem [#allocation4], 161
    %v8440 = vld [vmem:[%s8439] ss:$8 sm:$0x3]
    %s8441 = scalar_lea.vmem %s9, 29
    %8442 = vst.msk [vmem:[%s8441] ss:$2 sm:$0x3] %vm8377, %v8440
    %s8443 = scalar_lea.vmem [#allocation4], 162
    %v8444 = vld [vmem:[%s8443] ss:$8 sm:$0x3]
    %s8445 = scalar_lea.vmem %s9, 33
    %8446 = vst.msk [vmem:[%s8445] ss:$2 sm:$0x3] %vm8377, %v8444
    %v8447 = vld [vmem:[%s9] sm:$0xff]
    %v8448 = vld [vmem:[%s9 + $0x8] sm:$0xff]
    %v8449 = vld [vmem:[%s9 + $0x10] sm:$0xff]
    %v8450 = vld [vmem:[%s9 + $0x18] sm:$0xff]
    %v8451 = vld [vmem:[%s9 + $0x20] sm:$0xf]
    %v8452 = vld [vmem:[%s7] sm:$0xff]
    %v8453 = vld [vmem:[%s7 + $0x8] sm:$0xff]
    %v8454 = vld [vmem:[%s7 + $0x10] sm:$0xff]
    %v8455 = vld [vmem:[%s7 + $0x18] sm:$0xff]
    %v8456 = vld [vmem:[%s7 + $0x20] sm:$0xff]
    %v8457 = vld [vmem:[%s7 + $0x28] sm:$0xff]
    %v8458 = vld [vmem:[%s7 + $0x30] sm:$0xff]
    %v8459 = vld [vmem:[%s7 + $0x38] sm:$0xff]
    %v8460 = vld [vmem:[%s7 + $0x40] sm:$0xff]
    %v8461 = vld [vmem:[%s7 + $0x48] sm:$0xff]
    %v8462 = vld [vmem:[%s7 + $0x50] sm:$0xff]
    %v8463 = vld [vmem:[%s7 + $0x58] sm:$0xff]
    %v8464 = vld [vmem:[%s7 + $0x60] sm:$0xff]
    %v8465 = vld [vmem:[%s7 + $0x68] sm:$0xff]
    %v8466 = vld [vmem:[%s7 + $0x70] sm:$0xff]
    %v8467 = vld [vmem:[%s7 + $0x78] sm:$0xff]
    %v8468 = vld [vmem:[%s7 + $0x80] sm:$0xff]
    %v8469 = vld [vmem:[%s7 + $0x88] sm:$0xff]
    %v8470 = vld [vmem:[%s7 + $0x90] sm:$0xff]
    %v8471 = vld [vmem:[%s7 + $0x98] sm:$0xff]
    %v8472 = vld [vmem:[%s7 + $0xa0] sm:$0xff]
    %v8473 = vld [vmem:[%s7 + $0xa8] sm:$0xff]
    %v8474 = vld [vmem:[%s7 + $0xb0] sm:$0xff]
    %v8475 = vld [vmem:[%s7 + $0xb8] sm:$0xff]
    %v8476 = vld [vmem:[%s7 + $0xc0] sm:$0xff]
    %v8477 = vld [vmem:[%s7 + $0xc8] sm:$0xff]
    %v8478 = vld [vmem:[%s7 + $0xd0] sm:$0xff]
    %v8479 = vld [vmem:[%s7 + $0xd8] sm:$0xff]
    %v8480 = vld [vmem:[%s7 + $0xe0] sm:$0xff]
    %v8481 = vld [vmem:[%s7 + $0xe8] sm:$0xff]
    %v8482 = vld [vmem:[%s7 + $0xf0] sm:$0xff]
    %v8483 = vld [vmem:[%s7 + $0xf8] sm:$0xff]
    %v8484 = vld [vmem:[%s7 + $0x100] sm:$0xff]
    %v8485 = vld [vmem:[%s7 + $0x108] sm:$0xff]
    %v8486 = vld [vmem:[%s7 + $0x110] sm:$0xff]
    %v8487 = vld [vmem:[%s7 + $0x118] sm:$0xff]
    %v8488 = vld [vmem:[%s7 + $0x120] sm:$0xff]
    %v8489 = vld [vmem:[%s7 + $0x128] sm:$0xff]
    %v8490 = vld [vmem:[%s7 + $0x130] sm:$0xff]
    %v8491 = vld [vmem:[%s7 + $0x138] sm:$0xff]
    %v8492 = vld [vmem:[%s7 + $0x140] sm:$0xff]
    %v8493 = vld [vmem:[%s7 + $0x148] sm:$0xff]
    %v8494 = vld [vmem:[%s7 + $0x150] sm:$0xff]
    %v8495 = vld [vmem:[%s7 + $0x158] sm:$0xff]
    %v8496 = vld [vmem:[%s7 + $0x160] sm:$0xff]
    %v8497 = vld [vmem:[%s7 + $0x168] sm:$0xff]
    %v8498 = vld [vmem:[%s7 + $0x170] sm:$0xff]
    %v8499 = vld [vmem:[%s7 + $0x178] sm:$0xff]
    %v8500 = vld [vmem:[%s7 + $0x180] sm:$0xff]
    %v8501 = vld [vmem:[%s7 + $0x188] sm:$0xff]
    %v8502 = vld [vmem:[%s7 + $0x190] sm:$0xff]
    %v8503 = vld [vmem:[%s7 + $0x198] sm:$0xff]
    %v8504 = vld [vmem:[%s7 + $0x1a0] sm:$0xff]
    %v8505 = vld [vmem:[%s7 + $0x1a8] sm:$0xff]
    %v8506 = vld [vmem:[%s7 + $0x1b0] sm:$0xff]
    %v8507 = vld [vmem:[%s7 + $0x1b8] sm:$0xff]
    %v8508 = vld [vmem:[%s7 + $0x1c0] sm:$0xff]
    %v8509 = vld [vmem:[%s7 + $0x1c8] sm:$0xff]
    %v8510 = vld [vmem:[%s7 + $0x1d0] sm:$0xff]
    %v8511 = vld [vmem:[%s7 + $0x1d8] sm:$0xff]
    %v8512 = vld [vmem:[%s7 + $0x1e0] sm:$0xff]
    %v8513 = vld [vmem:[%s7 + $0x1e8] sm:$0xff]
    %v8514 = vld [vmem:[%s7 + $0x1f0] sm:$0xff]
    %v8515 = vld [vmem:[%s7 + $0x1f8] sm:$0xff]
    %v8516 = vld [vmem:[%s7 + $0x200] sm:$0xff]
    %v8517 = vld [vmem:[%s7 + $0x208] sm:$0xff]
    %v8518 = vld [vmem:[%s7 + $0x210] sm:$0xff]
    %v8519 = vld [vmem:[%s7 + $0x218] sm:$0xff]
    %v8520 = vld [vmem:[%s7 + $0x220] sm:$0xff]
    %v8521 = vld [vmem:[%s7 + $0x228] sm:$0xff]
    %v8522 = vld [vmem:[%s7 + $0x230] sm:$0xff]
    %v8523 = vld [vmem:[%s7 + $0x238] sm:$0xff]
    %v8524 = vld [vmem:[%s7 + $0x240] sm:$0xff]
    %v8525 = vld [vmem:[%s7 + $0x248] sm:$0xff]
    %v8526 = vld [vmem:[%s7 + $0x250] sm:$0xff]
    %v8527 = vld [vmem:[%s7 + $0x258] sm:$0xff]
    %v8528 = vld [vmem:[%s7 + $0x260] sm:$0xff]
    %v8529 = vld [vmem:[%s7 + $0x268] sm:$0xff]
    %v8530 = vld [vmem:[%s7 + $0x270] sm:$0xff]
    %v8531 = vld [vmem:[%s7 + $0x278] sm:$0xff]
    %v8532 = vld [vmem:[%s7 + $0x280] sm:$0xff]
    %v8533 = vld [vmem:[%s7 + $0x288] sm:$0xff]
    %v8534 = vld [vmem:[%s7 + $0x290] sm:$0xff]
    %v8535 = vld [vmem:[%s7 + $0x298] sm:$0xff]
    %v8536 = vld [vmem:[%s7 + $0x2a0] sm:$0xff]
    %v8537 = vld [vmem:[%s7 + $0x2a8] sm:$0xff]
    %v8538 = vld [vmem:[%s7 + $0x2b0] sm:$0xff]
    %v8539 = vld [vmem:[%s7 + $0x2b8] sm:$0xff]
    %v8540 = vld [vmem:[%s7 + $0x2c0] sm:$0xff]
    %v8541 = vld [vmem:[%s7 + $0x2c8] sm:$0xff]
    %v8542 = vld [vmem:[%s7 + $0x2d0] sm:$0xff]
    %v8543 = vld [vmem:[%s7 + $0x2d8] sm:$0xff]
    %v8544 = vld [vmem:[%s7 + $0x2e0] sm:$0xff]
    %v8545 = vld [vmem:[%s7 + $0x2e8] sm:$0xff]
    %v8546 = vld [vmem:[%s7 + $0x2f0] sm:$0xff]
    %v8547 = vld [vmem:[%s7 + $0x2f8] sm:$0xff]
    %v8548 = vld [vmem:[%s7 + $0x300] sm:$0xff]
    %v8549 = vld [vmem:[%s7 + $0x308] sm:$0xff]
    %v8550 = vld [vmem:[%s7 + $0x310] sm:$0xff]
    %v8551 = vld [vmem:[%s7 + $0x318] sm:$0xff]
    %v8552 = vld [vmem:[%s7 + $0x320] sm:$0xff]
    %v8553 = vld [vmem:[%s7 + $0x328] sm:$0xff]
    %v8554 = vld [vmem:[%s7 + $0x330] sm:$0xff]
    %v8555 = vld [vmem:[%s7 + $0x338] sm:$0xff]
    %v8556 = vld [vmem:[%s7 + $0x340] sm:$0xff]
    %v8557 = vld [vmem:[%s7 + $0x348] sm:$0xff]
    %v8558 = vld [vmem:[%s7 + $0x350] sm:$0xff]
    %v8559 = vld [vmem:[%s7 + $0x358] sm:$0xff]
    %v8560 = vld [vmem:[%s7 + $0x360] sm:$0xff]
    %v8561 = vld [vmem:[%s7 + $0x368] sm:$0xff]
    %v8562 = vld [vmem:[%s7 + $0x370] sm:$0xff]
    %v8563 = vld [vmem:[%s7 + $0x378] sm:$0xff]
    %v8564 = vld [vmem:[%s7 + $0x380] sm:$0xff]
    %v8565 = vld [vmem:[%s7 + $0x388] sm:$0xff]
    %v8566 = vld [vmem:[%s7 + $0x390] sm:$0xff]
    %v8567 = vld [vmem:[%s7 + $0x398] sm:$0xff]
    %v8568 = vld [vmem:[%s7 + $0x3a0] sm:$0xff]
    %v8569 = vld [vmem:[%s7 + $0x3a8] sm:$0xff]
    %v8570 = vld [vmem:[%s7 + $0x3b0] sm:$0xff]
    %v8571 = vld [vmem:[%s7 + $0x3b8] sm:$0xff]
    %v8572 = vld [vmem:[%s7 + $0x3c0] sm:$0xff]
    %v8573 = vld [vmem:[%s7 + $0x3c8] sm:$0xff]
    %v8574 = vld [vmem:[%s7 + $0x3d0] sm:$0xff]
    %v8575 = vld [vmem:[%s7 + $0x3d8] sm:$0xff]
    %v8576 = vld [vmem:[%s7 + $0x3e0] sm:$0xff]
    %v8577 = vld [vmem:[%s7 + $0x3e8] sm:$0xff]
    %v8578 = vld [vmem:[%s7 + $0x3f0] sm:$0xff]
    %v8579 = vld [vmem:[%s7 + $0x3f8] sm:$0xff]
    %v8580 = vld [vmem:[%s7 + $0x400] sm:$0xff]
    %v8581 = vld [vmem:[%s7 + $0x408] sm:$0xff]
    %v8582 = vld [vmem:[%s7 + $0x410] sm:$0xff]
    %v8583 = vld [vmem:[%s7 + $0x418] sm:$0xff]
    %v8584 = vld [vmem:[%s7 + $0x420] sm:$0xff]
    %v8585 = vld [vmem:[%s7 + $0x428] sm:$0xff]
    %v8586 = vld [vmem:[%s7 + $0x430] sm:$0xff]
    %v8587 = vld [vmem:[%s7 + $0x438] sm:$0xff]
    %v8588 = vld [vmem:[%s7 + $0x440] sm:$0xff]
    %v8589 = vld [vmem:[%s7 + $0x448] sm:$0xff]
    %v8590 = vld [vmem:[%s7 + $0x450] sm:$0xff]
    %v8591 = vld [vmem:[%s7 + $0x458] sm:$0xff]
    %v8592 = vld [vmem:[%s7 + $0x460] sm:$0xff]
    %v8593 = vld [vmem:[%s7 + $0x468] sm:$0xff]
    %v8594 = vld [vmem:[%s7 + $0x470] sm:$0xff]
    %v8595 = vld [vmem:[%s7 + $0x478] sm:$0xff]
    %v8596 = vld [vmem:[%s7 + $0x480] sm:$0xff]
    %v8597 = vld [vmem:[%s7 + $0x488] sm:$0xff]
    %v8598 = vld [vmem:[%s7 + $0x490] sm:$0xff]
    %v8599 = vld [vmem:[%s7 + $0x498] sm:$0xff]
    %v8600 = vld [vmem:[%s7 + $0x4a0] sm:$0xff]
    %v8601 = vld [vmem:[%s7 + $0x4a8] sm:$0xff]
    %v8602 = vld [vmem:[%s7 + $0x4b0] sm:$0xff]
    %v8603 = vld [vmem:[%s7 + $0x4b8] sm:$0xff]
    %v8604 = vld [vmem:[%s7 + $0x4c0] sm:$0xff]
    %v8605 = vld [vmem:[%s7 + $0x4c8] sm:$0xff]
    %v8606 = vld [vmem:[%s7 + $0x4d0] sm:$0xff]
    %v8607 = vld [vmem:[%s7 + $0x4d8] sm:$0xff]
    %v8608 = vld [vmem:[%s7 + $0x4e0] sm:$0xff]
    %v8609 = vld [vmem:[%s7 + $0x4e8] sm:$0xff]
    %v8610 = vld [vmem:[%s7 + $0x4f0] sm:$0xff]
    %v8611 = vld [vmem:[%s7 + $0x4f8] sm:$0xff]
    %v8612 = vld [vmem:[%s7 + $0x500] sm:$0xff]
    %v8613 = vld [vmem:[%s7 + $0x508] sm:$0xff]
    %v8614 = vld [vmem:[%s7 + $0x510] sm:$0xff]
    %v8615 = vld [vmem:[%s7 + $0x518] sm:$0xff]
    %v8616 = vld [vmem:[%s7 + $0x520] sm:$0xff]
    %v8617 = vld [vmem:[%s7 + $0x528] sm:$0xff]
    %v8618 = vld [vmem:[%s7 + $0x530] sm:$0xff]
    %v8619 = vld [vmem:[%s7 + $0x538] sm:$0xff]
    %v8620 = vld [vmem:[%s7 + $0x540] sm:$0xff]
    %v8621 = vld [vmem:[%s7 + $0x548] sm:$0xff]
    %v8622 = vld [vmem:[%s7 + $0x550] sm:$0xff]
    %v8623 = vld [vmem:[%s7 + $0x558] sm:$0xff]
    %v8624 = vld [vmem:[%s7 + $0x560] sm:$0xff]
    %v8625 = vld [vmem:[%s7 + $0x568] sm:$0xff]
    %v8626 = vld [vmem:[%s7 + $0x570] sm:$0xff]
    %v8627 = vld [vmem:[%s7 + $0x578] sm:$0xff]
    %v8628 = vld [vmem:[%s7 + $0x580] sm:$0xff]
    %v8629 = vld [vmem:[%s7 + $0x588] sm:$0xff]
    %v8630 = vld [vmem:[%s7 + $0x590] sm:$0xff]
    %v8631 = vld [vmem:[%s7 + $0x598] sm:$0xff]
    %v8632 = vld [vmem:[%s7 + $0x5a0] sm:$0xff]
    %v8633 = vld [vmem:[%s7 + $0x5a8] sm:$0xff]
    %v8634 = vld [vmem:[%s7 + $0x5b0] sm:$0xff]
    %v8635 = vld [vmem:[%s7 + $0x5b8] sm:$0xff]
    %v8636 = vld [vmem:[%s7 + $0x5c0] sm:$0xff]
    %v8637 = vld [vmem:[%s7 + $0x5c8] sm:$0xff]
    %v8638 = vld [vmem:[%s7 + $0x5d0] sm:$0xff]
    %v8639 = vld [vmem:[%s7 + $0x5d8] sm:$0xff]
    %v8640 = vld [vmem:[%s7 + $0x5e0] sm:$0xff]
    %v8641 = vld [vmem:[%s7 + $0x5e8] sm:$0xff]
    %v8642 = vld [vmem:[%s7 + $0x5f0] sm:$0xff]
    %v8643 = vld [vmem:[%s7 + $0x5f8] sm:$0xff]
    %v8644 = vld [vmem:[%s7 + $0x600] sm:$0xff]
    %v8645 = vld [vmem:[%s7 + $0x608] sm:$0xff]
    %v8646 = vld [vmem:[%s7 + $0x610] sm:$0xff]
    %v8647 = vld [vmem:[%s7 + $0x618] sm:$0xff]
    %v8648 = vld [vmem:[%s7 + $0x620] sm:$0xff]
    %v8649 = vld [vmem:[%s7 + $0x628] sm:$0xff]
    %v8650 = vld [vmem:[%s7 + $0x630] sm:$0xff]
    %v8651 = vld [vmem:[%s7 + $0x638] sm:$0xff]
    %v8652 = vld [vmem:[%s7 + $0x640] sm:$0xff]
    %v8653 = vld [vmem:[%s7 + $0x648] sm:$0xff]
    %v8654 = vld [vmem:[%s7 + $0x650] sm:$0xff]
    %v8655 = vld [vmem:[%s7 + $0x658] sm:$0xff]
    %v8656 = vld [vmem:[%s7 + $0x660] sm:$0xff]
    %v8657 = vld [vmem:[%s7 + $0x668] sm:$0xff]
    %v8658 = vld [vmem:[%s7 + $0x670] sm:$0xff]
    %v8659 = vld [vmem:[%s7 + $0x678] sm:$0xff]
    %v8660 = vld [vmem:[%s7 + $0x680] sm:$0xff]
    %v8661 = vld [vmem:[%s7 + $0x688] sm:$0xff]
    %v8662 = vld [vmem:[%s7 + $0x690] sm:$0xff]
    %v8663 = vld [vmem:[%s7 + $0x698] sm:$0xff]
    %v8664 = vld [vmem:[%s7 + $0x6a0] sm:$0xff]
    %v8665 = vld [vmem:[%s7 + $0x6a8] sm:$0xff]
    %v8666 = vld [vmem:[%s7 + $0x6b0] sm:$0xff]
    %v8667 = vld [vmem:[%s7 + $0x6b8] sm:$0xff]
    %v8668 = vld [vmem:[%s7 + $0x6c0] sm:$0xff]
    %v8669 = vld [vmem:[%s7 + $0x6c8] sm:$0xff]
    %v8670 = vld [vmem:[%s7 + $0x6d0] sm:$0xff]
    %v8671 = vld [vmem:[%s7 + $0x6d8] sm:$0xff]
    %v8672 = vld [vmem:[%s7 + $0x6e0] sm:$0xff]
    %v8673 = vld [vmem:[%s7 + $0x6e8] sm:$0xff]
    %v8674 = vld [vmem:[%s7 + $0x6f0] sm:$0xff]
    %v8675 = vld [vmem:[%s7 + $0x6f8] sm:$0xff]
    %v8676 = vld [vmem:[%s7 + $0x700] sm:$0xff]
    %v8677 = vld [vmem:[%s7 + $0x708] sm:$0xff]
    %v8678 = vld [vmem:[%s7 + $0x710] sm:$0xff]
    %v8679 = vld [vmem:[%s7 + $0x718] sm:$0xff]
    %v8680 = vld [vmem:[%s7 + $0x720] sm:$0xff]
    %v8681 = vld [vmem:[%s7 + $0x728] sm:$0xff]
    %v8682 = vld [vmem:[%s7 + $0x730] sm:$0xff]
    %v8683 = vld [vmem:[%s7 + $0x738] sm:$0xff]
    %v8684 = vld [vmem:[%s7 + $0x740] sm:$0xff]
    %v8685 = vld [vmem:[%s7 + $0x748] sm:$0xff]
    %v8686 = vld [vmem:[%s7 + $0x750] sm:$0xff]
    %v8687 = vld [vmem:[%s7 + $0x758] sm:$0xff]
    %v8688 = vld [vmem:[%s7 + $0x760] sm:$0xff]
    %v8689 = vld [vmem:[%s7 + $0x768] sm:$0xff]
    %v8690 = vld [vmem:[%s7 + $0x770] sm:$0xff]
    %v8691 = vld [vmem:[%s7 + $0x778] sm:$0xff]
    %v8692 = vld [vmem:[%s7 + $0x780] sm:$0xff]
    %v8693 = vld [vmem:[%s7 + $0x788] sm:$0xff]
    %v8694 = vld [vmem:[%s7 + $0x790] sm:$0xff]
    %v8695 = vld [vmem:[%s7 + $0x798] sm:$0xff]
    %v8696 = vld [vmem:[%s7 + $0x7a0] sm:$0xff]
    %v8697 = vld [vmem:[%s7 + $0x7a8] sm:$0xff]
    %v8698 = vld [vmem:[%s7 + $0x7b0] sm:$0xff]
    %v8699 = vld [vmem:[%s7 + $0x7b8] sm:$0xff]
    %v8700 = vld [vmem:[%s7 + $0x7c0] sm:$0xff]
    %v8701 = vld [vmem:[%s7 + $0x7c8] sm:$0xff]
    %v8702 = vld [vmem:[%s7 + $0x7d0] sm:$0xff]
    %v8703 = vld [vmem:[%s7 + $0x7d8] sm:$0xff]
    %v8704 = vld [vmem:[%s7 + $0x7e0] sm:$0xff]
    %v8705 = vld [vmem:[%s7 + $0x7e8] sm:$0xff]
    %v8706 = vld [vmem:[%s7 + $0x7f0] sm:$0xff]
    %v8707 = vld [vmem:[%s7 + $0x7f8] sm:$0xff]
    %v8708 = vld [vmem:[%s7 + $0x800] sm:$0xff]
    %v8709 = vld [vmem:[%s7 + $0x808] sm:$0xff]
    %v8710 = vld [vmem:[%s7 + $0x810] sm:$0xff]
    %v8711 = vld [vmem:[%s7 + $0x818] sm:$0xff]
    %v8712 = vld [vmem:[%s7 + $0x820] sm:$0xff]
    %v8713 = vld [vmem:[%s7 + $0x828] sm:$0xff]
    %v8714 = vld [vmem:[%s7 + $0x830] sm:$0xff]
    %v8715 = vld [vmem:[%s7 + $0x838] sm:$0xff]
    %v8716 = vld [vmem:[%s7 + $0x840] sm:$0xff]
    %v8717 = vld [vmem:[%s7 + $0x848] sm:$0xff]
    %v8718 = vld [vmem:[%s7 + $0x850] sm:$0xff]
    %v8719 = vld [vmem:[%s7 + $0x858] sm:$0xff]
    %v8720 = vld [vmem:[%s7 + $0x860] sm:$0xff]
    %v8721 = vld [vmem:[%s7 + $0x868] sm:$0xff]
    %v8722 = vld [vmem:[%s7 + $0x870] sm:$0xff]
    %v8723 = vld [vmem:[%s7 + $0x878] sm:$0xff]
    %v8724 = vld [vmem:[%s7 + $0x880] sm:$0xff]
    %v8725 = vld [vmem:[%s7 + $0x888] sm:$0xff]
    %v8726 = vld [vmem:[%s7 + $0x890] sm:$0xff]
    %v8727 = vld [vmem:[%s7 + $0x898] sm:$0xff]
    %v8728 = vld [vmem:[%s7 + $0x8a0] sm:$0xff]
    %v8729 = vld [vmem:[%s7 + $0x8a8] sm:$0xff]
    %v8730 = vld [vmem:[%s7 + $0x8b0] sm:$0xff]
    %v8731 = vld [vmem:[%s7 + $0x8b8] sm:$0xff]
    %v8732 = vld [vmem:[%s7 + $0x8c0] sm:$0xff]
    %v8733 = vld [vmem:[%s7 + $0x8c8] sm:$0xff]
    %v8734 = vld [vmem:[%s7 + $0x8d0] sm:$0xff]
    %v8735 = vld [vmem:[%s7 + $0x8d8] sm:$0xff]
    %v8736 = vld [vmem:[%s7 + $0x8e0] sm:$0xff]
    %v8737 = vld [vmem:[%s7 + $0x8e8] sm:$0xff]
    %v8738 = vld [vmem:[%s7 + $0x8f0] sm:$0xff]
    %v8739 = vld [vmem:[%s7 + $0x8f8] sm:$0xff]
    %v8740 = vld [vmem:[%s8] sm:$0x1]
    %v8742 = vlaneseq
    %v8743 = vshrl.u32 %v8742, 7
    %v8744 = vsub.s32 0, %v8743
    %v8745 = vrot.slane %v8740, %v8744
    %v8752 = vcombine.high %v8447, %v8447
    %v8754 = vunpack.c.l.s4 1983009808
    %v8755 = vunpack.c.0.s8 %v8754
    %v8756 = vlaneseq
    %v8757 = vshrl.u32 %v8756, 7
    %v8758 = vsub.s32 %v8755, %v8757
    %v8759 = vrot.slane %v8447, %v8758
    %v8761 = vunpack.c.l.s4 1983009808
    %v8762 = vunpack.c.0.s8 %v8761
    %v8763 = vlaneseq
    %v8764 = vshrl.u32 %v8763, 7
    %v8765 = vsub.s32 %v8762, %v8764
    %v8766 = vrot.slane %v8752, %v8765
    %v8767 = vcombine.high %v8759, %v8759
    %v8768 = vcombine.high %v8766, %v8766
    %v8769 = vcombine.high %v8448, %v8448
    %v8771 = vunpack.c.l.s4 1983009808
    %v8772 = vunpack.c.0.s8 %v8771
    %v8773 = vlaneseq
    %v8774 = vshrl.u32 %v8773, 7
    %v8775 = vsub.s32 %v8772, %v8774
    %v8776 = vrot.slane %v8448, %v8775
    %v8778 = vunpack.c.l.s4 1983009808
    %v8779 = vunpack.c.0.s8 %v8778
    %v8780 = vlaneseq
    %v8781 = vshrl.u32 %v8780, 7
    %v8782 = vsub.s32 %v8779, %v8781
    %v8783 = vrot.slane %v8769, %v8782
    %v8784 = vcombine.high %v8776, %v8776
    %v8785 = vcombine.high %v8783, %v8783
    %v8786 = vcombine.high %v8449, %v8449
    %v8788 = vunpack.c.l.s4 1983009808
    %v8789 = vunpack.c.0.s8 %v8788
    %v8790 = vlaneseq
    %v8791 = vshrl.u32 %v8790, 7
    %v8792 = vsub.s32 %v8789, %v8791
    %v8793 = vrot.slane %v8449, %v8792
    %v8795 = vunpack.c.l.s4 1983009808
    %v8796 = vunpack.c.0.s8 %v8795
    %v8797 = vlaneseq
    %v8798 = vshrl.u32 %v8797, 7
    %v8799 = vsub.s32 %v8796, %v8798
    %v8800 = vrot.slane %v8786, %v8799
    %v8801 = vcombine.high %v8793, %v8793
    %v8802 = vcombine.high %v8800, %v8800
    %v8803 = vcombine.high %v8450, %v8450
    %v8805 = vunpack.c.l.s4 1983009808
    %v8806 = vunpack.c.0.s8 %v8805
    %v8807 = vlaneseq
    %v8808 = vshrl.u32 %v8807, 7
    %v8809 = vsub.s32 %v8806, %v8808
    %v8810 = vrot.slane %v8450, %v8809
    %v8812 = vunpack.c.l.s4 1983009808
    %v8813 = vunpack.c.0.s8 %v8812
    %v8814 = vlaneseq
    %v8815 = vshrl.u32 %v8814, 7
    %v8816 = vsub.s32 %v8813, %v8815
    %v8817 = vrot.slane %v8803, %v8816
    %v8818 = vcombine.high %v8810, %v8810
    %v8819 = vcombine.high %v8817, %v8817
    %v8821 = vunpack.c.l.s4 1983009808
    %v8822 = vunpack.c.0.s8 %v8821
    %v8823 = vlaneseq
    %v8824 = vshrl.u32 %v8823, 7
    %v8825 = vsub.s32 %v8822, %v8824
    %v8826 = vrot.slane %v8451, %v8825
    %v8827 = vcombine.high %v8826, %v8826
    %8846 = vmatprep.subr.mxu0 0.0
    %8847 = vmatpush1.msra.mxu0 %v8452
    %8848 = vmatprep.subr.mxu0 0.0
    %8849 = vmatpush1.msra.mxu0 %v8453
    %8850 = vmatprep.subr.mxu0 0.0
    %8851 = vmatpush1.msra.mxu0 %v8454
    %8852 = vmatprep.subr.mxu0 0.0
    %8853 = vmatpush1.msra.mxu0 %v8455
    %8854 = vmatprep.subr.mxu0 0.0
    %8855 = vmatpush1.msra.mxu0 %v8456
    %8856 = vmatprep.subr.mxu0 0.0
    %8857 = vmatpush1.msra.mxu0 %v8457
    %8858 = vmatprep.subr.mxu0 0.0
    %8859 = vmatpush1.msra.mxu0 %v8458
    %8860 = vmatprep.subr.mxu0 0.0
    %8861 = vmatpush1.msra.mxu0 %v8459
    %8862 = vmatprep.subr.mxu0 0.0
    %8863 = vmatpush1.msra.mxu0 %v8460
    %8864 = vmatprep.subr.mxu0 0.0
    %8865 = vmatpush1.msra.mxu0 %v8461
    %8866 = vmatprep.subr.mxu0 0.0
    %8867 = vmatpush1.msra.mxu0 %v8462
    %8868 = vmatprep.subr.mxu0 0.0
    %8869 = vmatpush1.msra.mxu0 %v8463
    %8870 = vmatprep.subr.mxu0 0.0
    %8871 = vmatpush1.msra.mxu0 %v8464
    %8872 = vmatprep.subr.mxu0 0.0
    %8873 = vmatpush1.msra.mxu0 %v8465
    %8874 = vmatprep.subr.mxu0 0.0
    %8875 = vmatpush1.msra.mxu0 %v8466
    %8876 = vmatprep.subr.mxu0 0.0
    %8877 = vmatpush1.msra.mxu0 %v8467
    %8878 = vmatprep.subr.mxu0 0.0
    %8879 = vmatpush1.msra.mxu0 %v8468
    %8880 = vmatprep.subr.mxu0 0.0
    %8881 = vmatpush1.msra.mxu0 %v8469
    %8882 = vmatprep.subr.mxu0 0.0
    %8883 = vmatpush1.msra.mxu0 %v8470
    %8884 = vmatprep.subr.mxu0 0.0
    %8885 = vmatpush1.msra.mxu0 %v8471
    %8886 = vmatprep.subr.mxu0 0.0
    %8887 = vmatpush1.msra.mxu0 %v8472
    %8888 = vmatprep.subr.mxu0 0.0
    %8889 = vmatpush1.msra.mxu0 %v8473
    %8890 = vmatprep.subr.mxu0 0.0
    %8891 = vmatpush1.msra.mxu0 %v8474
    %8892 = vmatprep.subr.mxu0 0.0
    %8893 = vmatpush1.msra.mxu0 %v8475
    %8894 = vmatprep.subr.mxu0 0.0
    %8895 = vmatpush1.msra.mxu0 %v8476
    %8896 = vmatprep.subr.mxu0 0.0
    %8897 = vmatpush1.msra.mxu0 %v8477
    %8898 = vmatprep.subr.mxu0 0.0
    %8899 = vmatpush1.msra.mxu0 %v8478
    %8900 = vmatprep.subr.mxu0 0.0
    %8901 = vmatpush1.msra.mxu0 %v8479
    %8902 = vmatprep.subr.mxu0 0.0
    %8903 = vmatpush1.msra.mxu0 %v8480
    %8904 = vmatprep.subr.mxu0 0.0
    %8905 = vmatpush1.msra.mxu0 %v8481
    %8906 = vmatprep.subr.mxu0 0.0
    %8907 = vmatpush1.msra.mxu0 %v8482
    %8908 = vmatprep.subr.mxu0 0.0
    %8909 = vmatpush1.msra.mxu0 %v8483
    %8910 = vmatprep.mubr.f32.mxu0 %v8767
    %8911 = vmatmul.mubr.f32.gmra.mrb[0].mxu0 %v8759
    %v8912 = vpop.f32.mrb[0].mxu0
    %v8913 = vadd.f32 %v8745, %v8912
    %v8914 = vpop.f32.mrb[0].mxu0
    %8915 = vdwg.mxu0
    %8916 = vmatprep.subr.mxu0 0.0
    %8917 = vmatpush1.msra.mxu0 %v8484
    %8918 = vmatprep.subr.mxu0 0.0
    %8919 = vmatpush1.msra.mxu0 %v8485
    %8920 = vmatprep.subr.mxu0 0.0
    %8921 = vmatpush1.msra.mxu0 %v8486
    %8922 = vmatprep.subr.mxu0 0.0
    %8923 = vmatpush1.msra.mxu0 %v8487
    %8924 = vmatprep.subr.mxu0 0.0
    %8925 = vmatpush1.msra.mxu0 %v8488
    %8926 = vmatprep.subr.mxu0 0.0
    %8927 = vmatpush1.msra.mxu0 %v8489
    %8928 = vmatprep.subr.mxu0 0.0
    %8929 = vmatpush1.msra.mxu0 %v8490
    %8930 = vmatprep.subr.mxu0 0.0
    %8931 = vmatpush1.msra.mxu0 %v8491
    %8932 = vmatprep.subr.mxu0 0.0
    %8933 = vmatpush1.msra.mxu0 %v8492
    %8934 = vmatprep.subr.mxu0 0.0
    %8935 = vmatpush1.msra.mxu0 %v8493
    %8936 = vmatprep.subr.mxu0 0.0
    %8937 = vmatpush1.msra.mxu0 %v8494
    %8938 = vmatprep.subr.mxu0 0.0
    %8939 = vmatpush1.msra.mxu0 %v8495
    %8940 = vmatprep.subr.mxu0 0.0
    %8941 = vmatpush1.msra.mxu0 %v8496
    %8942 = vmatprep.subr.mxu0 0.0
    %8943 = vmatpush1.msra.mxu0 %v8497
    %8944 = vmatprep.subr.mxu0 0.0
    %8945 = vmatpush1.msra.mxu0 %v8498
    %8946 = vmatprep.subr.mxu0 0.0
    %8947 = vmatpush1.msra.mxu0 %v8499
    %8948 = vmatprep.subr.mxu0 0.0
    %8949 = vmatpush1.msra.mxu0 %v8500
    %8950 = vmatprep.subr.mxu0 0.0
    %8951 = vmatpush1.msra.mxu0 %v8501
    %8952 = vmatprep.subr.mxu0 0.0
    %8953 = vmatpush1.msra.mxu0 %v8502
    %8954 = vmatprep.subr.mxu0 0.0
    %8955 = vmatpush1.msra.mxu0 %v8503
    %8956 = vmatprep.subr.mxu0 0.0
    %8957 = vmatpush1.msra.mxu0 %v8504
    %8958 = vmatprep.subr.mxu0 0.0
    %8959 = vmatpush1.msra.mxu0 %v8505
    %8960 = vmatprep.subr.mxu0 0.0
    %8961 = vmatpush1.msra.mxu0 %v8506
    %8962 = vmatprep.subr.mxu0 0.0
    %8963 = vmatpush1.msra.mxu0 %v8507
    %8964 = vmatprep.subr.mxu0 0.0
    %8965 = vmatpush1.msra.mxu0 %v8508
    %8966 = vmatprep.subr.mxu0 0.0
    %8967 = vmatpush1.msra.mxu0 %v8509
    %8968 = vmatprep.subr.mxu0 0.0
    %8969 = vmatpush1.msra.mxu0 %v8510
    %8970 = vmatprep.subr.mxu0 0.0
    %8971 = vmatpush1.msra.mxu0 %v8511
    %8972 = vmatprep.subr.mxu0 0.0
    %8973 = vmatpush1.msra.mxu0 %v8512
    %8974 = vmatprep.subr.mxu0 0.0
    %8975 = vmatpush1.msra.mxu0 %v8513
    %8976 = vmatprep.subr.mxu0 0.0
    %8977 = vmatpush1.msra.mxu0 %v8514
    %8978 = vmatprep.subr.mxu0 0.0
    %8979 = vmatpush1.msra.mxu0 %v8515
    %8980 = vmatprep.mubr.f32.mxu0 %v8768
    %8981 = vmatmul.mubr.f32.gmra.mrb[0].mxu0 %v8766
    %v8982 = vpop.f32.mrb[0].mxu0
    %v8983 = vadd.f32 %v8913, %v8982
    %v8984 = vpop.f32.mrb[0].mxu0
    %8985 = vdwg.mxu0
    %8986 = vmatprep.subr.mxu0 0.0
    %8987 = vmatpush1.msra.mxu0 %v8516
    %8988 = vmatprep.subr.mxu0 0.0
    %8989 = vmatpush1.msra.mxu0 %v8517
    %8990 = vmatprep.subr.mxu0 0.0
    %8991 = vmatpush1.msra.mxu0 %v8518
    %8992 = vmatprep.subr.mxu0 0.0
    %8993 = vmatpush1.msra.mxu0 %v8519
    %8994 = vmatprep.subr.mxu0 0.0
    %8995 = vmatpush1.msra.mxu0 %v8520
    %8996 = vmatprep.subr.mxu0 0.0
    %8997 = vmatpush1.msra.mxu0 %v8521
    %8998 = vmatprep.subr.mxu0 0.0
    %8999 = vmatpush1.msra.mxu0 %v8522
    %9000 = vmatprep.subr.mxu0 0.0
    %9001 = vmatpush1.msra.mxu0 %v8523
    %9002 = vmatprep.subr.mxu0 0.0
    %9003 = vmatpush1.msra.mxu0 %v8524
    %9004 = vmatprep.subr.mxu0 0.0
    %9005 = vmatpush1.msra.mxu0 %v8525
    %9006 = vmatprep.subr.mxu0 0.0
    %9007 = vmatpush1.msra.mxu0 %v8526
    %9008 = vmatprep.subr.mxu0 0.0
    %9009 = vmatpush1.msra.mxu0 %v8527
    %9010 = vmatprep.subr.mxu0 0.0
    %9011 = vmatpush1.msra.mxu0 %v8528
    %9012 = vmatprep.subr.mxu0 0.0
    %9013 = vmatpush1.msra.mxu0 %v8529
    %9014 = vmatprep.subr.mxu0 0.0
    %9015 = vmatpush1.msra.mxu0 %v8530
    %9016 = vmatprep.subr.mxu0 0.0
    %9017 = vmatpush1.msra.mxu0 %v8531
    %9018 = vmatprep.subr.mxu0 0.0
    %9019 = vmatpush1.msra.mxu0 %v8532
    %9020 = vmatprep.subr.mxu0 0.0
    %9021 = vmatpush1.msra.mxu0 %v8533
    %9022 = vmatprep.subr.mxu0 0.0
    %9023 = vmatpush1.msra.mxu0 %v8534
    %9024 = vmatprep.subr.mxu0 0.0
    %9025 = vmatpush1.msra.mxu0 %v8535
    %9026 = vmatprep.subr.mxu0 0.0
    %9027 = vmatpush1.msra.mxu0 %v8536
    %9028 = vmatprep.subr.mxu0 0.0
    %9029 = vmatpush1.msra.mxu0 %v8537
    %9030 = vmatprep.subr.mxu0 0.0
    %9031 = vmatpush1.msra.mxu0 %v8538
    %9032 = vmatprep.subr.mxu0 0.0
    %9033 = vmatpush1.msra.mxu0 %v8539
    %9034 = vmatprep.subr.mxu0 0.0
    %9035 = vmatpush1.msra.mxu0 %v8540
    %9036 = vmatprep.subr.mxu0 0.0
    %9037 = vmatpush1.msra.mxu0 %v8541
    %9038 = vmatprep.subr.mxu0 0.0
    %9039 = vmatpush1.msra.mxu0 %v8542
    %9040 = vmatprep.subr.mxu0 0.0
    %9041 = vmatpush1.msra.mxu0 %v8543
    %9042 = vmatprep.subr.mxu0 0.0
    %9043 = vmatpush1.msra.mxu0 %v8544
    %9044 = vmatprep.subr.mxu0 0.0
    %9045 = vmatpush1.msra.mxu0 %v8545
    %9046 = vmatprep.subr.mxu0 0.0
    %9047 = vmatpush1.msra.mxu0 %v8546
    %9048 = vmatprep.subr.mxu0 0.0
    %9049 = vmatpush1.msra.mxu0 %v8547
    %9050 = vmatprep.mubr.f32.mxu0 %v8784
    %9051 = vmatmul.mubr.f32.gmra.mrb[0].mxu0 %v8776
    %v9052 = vpop.f32.mrb[0].mxu0
    %v9053 = vadd.f32 %v8983, %v9052
    %v9054 = vpop.f32.mrb[0].mxu0
    %9055 = vdwg.mxu0
    %9056 = vmatprep.subr.mxu0 0.0
    %9057 = vmatpush1.msra.mxu0 %v8548
    %9058 = vmatprep.subr.mxu0 0.0
    %9059 = vmatpush1.msra.mxu0 %v8549
    %9060 = vmatprep.subr.mxu0 0.0
    %9061 = vmatpush1.msra.mxu0 %v8550
    %9062 = vmatprep.subr.mxu0 0.0
    %9063 = vmatpush1.msra.mxu0 %v8551
    %9064 = vmatprep.subr.mxu0 0.0
    %9065 = vmatpush1.msra.mxu0 %v8552
    %9066 = vmatprep.subr.mxu0 0.0
    %9067 = vmatpush1.msra.mxu0 %v8553
    %9068 = vmatprep.subr.mxu0 0.0
    %9069 = vmatpush1.msra.mxu0 %v8554
    %9070 = vmatprep.subr.mxu0 0.0
    %9071 = vmatpush1.msra.mxu0 %v8555
    %9072 = vmatprep.subr.mxu0 0.0
    %9073 = vmatpush1.msra.mxu0 %v8556
    %9074 = vmatprep.subr.mxu0 0.0
    %9075 = vmatpush1.msra.mxu0 %v8557
    %9076 = vmatprep.subr.mxu0 0.0
    %9077 = vmatpush1.msra.mxu0 %v8558
    %9078 = vmatprep.subr.mxu0 0.0
    %9079 = vmatpush1.msra.mxu0 %v8559
    %9080 = vmatprep.subr.mxu0 0.0
    %9081 = vmatpush1.msra.mxu0 %v8560
    %9082 = vmatprep.subr.mxu0 0.0
    %9083 = vmatpush1.msra.mxu0 %v8561
    %9084 = vmatprep.subr.mxu0 0.0
    %9085 = vmatpush1.msra.mxu0 %v8562
    %9086 = vmatprep.subr.mxu0 0.0
    %9087 = vmatpush1.msra.mxu0 %v8563
    %9088 = vmatprep.subr.mxu0 0.0
    %9089 = vmatpush1.msra.mxu0 %v8564
    %9090 = vmatprep.subr.mxu0 0.0
    %9091 = vmatpush1.msra.mxu0 %v8565
    %9092 = vmatprep.subr.mxu0 0.0
    %9093 = vmatpush1.msra.mxu0 %v8566
    %9094 = vmatprep.subr.mxu0 0.0
    %9095 = vmatpush1.msra.mxu0 %v8567
    %9096 = vmatprep.subr.mxu0 0.0
    %9097 = vmatpush1.msra.mxu0 %v8568
    %9098 = vmatprep.subr.mxu0 0.0
    %9099 = vmatpush1.msra.mxu0 %v8569
    %9100 = vmatprep.subr.mxu0 0.0
    %9101 = vmatpush1.msra.mxu0 %v8570
    %9102 = vmatprep.subr.mxu0 0.0
    %9103 = vmatpush1.msra.mxu0 %v8571
    %9104 = vmatprep.subr.mxu0 0.0
    %9105 = vmatpush1.msra.mxu0 %v8572
    %9106 = vmatprep.subr.mxu0 0.0
    %9107 = vmatpush1.msra.mxu0 %v8573
    %9108 = vmatprep.subr.mxu0 0.0
    %9109 = vmatpush1.msra.mxu0 %v8574
    %9110 = vmatprep.subr.mxu0 0.0
    %9111 = vmatpush1.msra.mxu0 %v8575
    %9112 = vmatprep.subr.mxu0 0.0
    %9113 = vmatpush1.msra.mxu0 %v8576
    %9114 = vmatprep.subr.mxu0 0.0
    %9115 = vmatpush1.msra.mxu0 %v8577
    %9116 = vmatprep.subr.mxu0 0.0
    %9117 = vmatpush1.msra.mxu0 %v8578
    %9118 = vmatprep.subr.mxu0 0.0
    %9119 = vmatpush1.msra.mxu0 %v8579
    %9120 = vmatprep.mubr.f32.mxu0 %v8785
    %9121 = vmatmul.mubr.f32.gmra.mrb[0].mxu0 %v8783
    %v9122 = vpop.f32.mrb[0].mxu0
    %v9123 = vadd.f32 %v9053, %v9122
    %v9124 = vpop.f32.mrb[0].mxu0
    %9125 = vdwg.mxu0
    %9126 = vmatprep.subr.mxu0 0.0
    %9127 = vmatpush1.msra.mxu0 %v8580
    %9128 = vmatprep.subr.mxu0 0.0
    %9129 = vmatpush1.msra.mxu0 %v8581
    %9130 = vmatprep.subr.mxu0 0.0
    %9131 = vmatpush1.msra.mxu0 %v8582
    %9132 = vmatprep.subr.mxu0 0.0
    %9133 = vmatpush1.msra.mxu0 %v8583
    %9134 = vmatprep.subr.mxu0 0.0
    %9135 = vmatpush1.msra.mxu0 %v8584
    %9136 = vmatprep.subr.mxu0 0.0
    %9137 = vmatpush1.msra.mxu0 %v8585
    %9138 = vmatprep.subr.mxu0 0.0
    %9139 = vmatpush1.msra.mxu0 %v8586
    %9140 = vmatprep.subr.mxu0 0.0
    %9141 = vmatpush1.msra.mxu0 %v8587
    %9142 = vmatprep.subr.mxu0 0.0
    %9143 = vmatpush1.msra.mxu0 %v8588
    %9144 = vmatprep.subr.mxu0 0.0
    %9145 = vmatpush1.msra.mxu0 %v8589
    %9146 = vmatprep.subr.mxu0 0.0
    %9147 = vmatpush1.msra.mxu0 %v8590
    %9148 = vmatprep.subr.mxu0 0.0
    %9149 = vmatpush1.msra.mxu0 %v8591
    %9150 = vmatprep.subr.mxu0 0.0
    %9151 = vmatpush1.msra.mxu0 %v8592
    %9152 = vmatprep.subr.mxu0 0.0
    %9153 = vmatpush1.msra.mxu0 %v8593
    %9154 = vmatprep.subr.mxu0 0.0
    %9155 = vmatpush1.msra.mxu0 %v8594
    %9156 = vmatprep.subr.mxu0 0.0
    %9157 = vmatpush1.msra.mxu0 %v8595
    %9158 = vmatprep.subr.mxu0 0.0
    %9159 = vmatpush1.msra.mxu0 %v8596
    %9160 = vmatprep.subr.mxu0 0.0
    %9161 = vmatpush1.msra.mxu0 %v8597
    %9162 = vmatprep.subr.mxu0 0.0
    %9163 = vmatpush1.msra.mxu0 %v8598
    %9164 = vmatprep.subr.mxu0 0.0
    %9165 = vmatpush1.msra.mxu0 %v8599
    %9166 = vmatprep.subr.mxu0 0.0
    %9167 = vmatpush1.msra.mxu0 %v8600
    %9168 = vmatprep.subr.mxu0 0.0
    %9169 = vmatpush1.msra.mxu0 %v8601
    %9170 = vmatprep.subr.mxu0 0.0
    %9171 = vmatpush1.msra.mxu0 %v8602
    %9172 = vmatprep.subr.mxu0 0.0
    %9173 = vmatpush1.msra.mxu0 %v8603
    %9174 = vmatprep.subr.mxu0 0.0
    %9175 = vmatpush1.msra.mxu0 %v8604
    %9176 = vmatprep.subr.mxu0 0.0
    %9177 = vmatpush1.msra.mxu0 %v8605
    %9178 = vmatprep.subr.mxu0 0.0
    %9179 = vmatpush1.msra.mxu0 %v8606
    %9180 = vmatprep.subr.mxu0 0.0
    %9181 = vmatpush1.msra.mxu0 %v8607
    %9182 = vmatprep.subr.mxu0 0.0
    %9183 = vmatpush1.msra.mxu0 %v8608
    %9184 = vmatprep.subr.mxu0 0.0
    %9185 = vmatpush1.msra.mxu0 %v8609
    %9186 = vmatprep.subr.mxu0 0.0
    %9187 = vmatpush1.msra.mxu0 %v8610
    %9188 = vmatprep.subr.mxu0 0.0
    %9189 = vmatpush1.msra.mxu0 %v8611
    %9190 = vmatprep.mubr.f32.mxu0 %v8801
    %9191 = vmatmul.mubr.f32.gmra.mrb[0].mxu0 %v8793
    %v9192 = vpop.f32.mrb[0].mxu0
    %v9193 = vadd.f32 %v9123, %v9192
    %v9194 = vpop.f32.mrb[0].mxu0
    %9195 = vdwg.mxu0
    %9196 = vmatprep.subr.mxu0 0.0
    %9197 = vmatpush1.msra.mxu0 %v8612
    %9198 = vmatprep.subr.mxu0 0.0
    %9199 = vmatpush1.msra.mxu0 %v8613
    %9200 = vmatprep.subr.mxu0 0.0
    %9201 = vmatpush1.msra.mxu0 %v8614
    %9202 = vmatprep.subr.mxu0 0.0
    %9203 = vmatpush1.msra.mxu0 %v8615
    %9204 = vmatprep.subr.mxu0 0.0
    %9205 = vmatpush1.msra.mxu0 %v8616
    %9206 = vmatprep.subr.mxu0 0.0
    %9207 = vmatpush1.msra.mxu0 %v8617
    %9208 = vmatprep.subr.mxu0 0.0
    %9209 = vmatpush1.msra.mxu0 %v8618
    %9210 = vmatprep.subr.mxu0 0.0
    %9211 = vmatpush1.msra.mxu0 %v8619
    %9212 = vmatprep.subr.mxu0 0.0
    %9213 = vmatpush1.msra.mxu0 %v8620
    %9214 = vmatprep.subr.mxu0 0.0
    %9215 = vmatpush1.msra.mxu0 %v8621
    %9216 = vmatprep.subr.mxu0 0.0
    %9217 = vmatpush1.msra.mxu0 %v8622
    %9218 = vmatprep.subr.mxu0 0.0
    %9219 = vmatpush1.msra.mxu0 %v8623
    %9220 = vmatprep.subr.mxu0 0.0
    %9221 = vmatpush1.msra.mxu0 %v8624
    %9222 = vmatprep.subr.mxu0 0.0
    %9223 = vmatpush1.msra.mxu0 %v8625
    %9224 = vmatprep.subr.mxu0 0.0
    %9225 = vmatpush1.msra.mxu0 %v8626
    %9226 = vmatprep.subr.mxu0 0.0
    %9227 = vmatpush1.msra.mxu0 %v8627
    %9228 = vmatprep.subr.mxu0 0.0
    %9229 = vmatpush1.msra.mxu0 %v8628
    %9230 = vmatprep.subr.mxu0 0.0
    %9231 = vmatpush1.msra.mxu0 %v8629
    %9232 = vmatprep.subr.mxu0 0.0
    %9233 = vmatpush1.msra.mxu0 %v8630
    %9234 = vmatprep.subr.mxu0 0.0
    %9235 = vmatpush1.msra.mxu0 %v8631
    %9236 = vmatprep.subr.mxu0 0.0
    %9237 = vmatpush1.msra.mxu0 %v8632
    %9238 = vmatprep.subr.mxu0 0.0
    %9239 = vmatpush1.msra.mxu0 %v8633
    %9240 = vmatprep.subr.mxu0 0.0
    %9241 = vmatpush1.msra.mxu0 %v8634
    %9242 = vmatprep.subr.mxu0 0.0
    %9243 = vmatpush1.msra.mxu0 %v8635
    %9244 = vmatprep.subr.mxu0 0.0
    %9245 = vmatpush1.msra.mxu0 %v8636
    %9246 = vmatprep.subr.mxu0 0.0
    %9247 = vmatpush1.msra.mxu0 %v8637
    %9248 = vmatprep.subr.mxu0 0.0
    %9249 = vmatpush1.msra.mxu0 %v8638
    %9250 = vmatprep.subr.mxu0 0.0
    %9251 = vmatpush1.msra.mxu0 %v8639
    %9252 = vmatprep.subr.mxu0 0.0
    %9253 = vmatpush1.msra.mxu0 %v8640
    %9254 = vmatprep.subr.mxu0 0.0
    %9255 = vmatpush1.msra.mxu0 %v8641
    %9256 = vmatprep.subr.mxu0 0.0
    %9257 = vmatpush1.msra.mxu0 %v8642
    %9258 = vmatprep.subr.mxu0 0.0
    %9259 = vmatpush1.msra.mxu0 %v8643
    %9260 = vmatprep.mubr.f32.mxu0 %v8802
    %9261 = vmatmul.mubr.f32.gmra.mrb[0].mxu0 %v8800
    %v9262 = vpop.f32.mrb[0].mxu0
    %v9263 = vadd.f32 %v9193, %v9262
    %v9264 = vpop.f32.mrb[0].mxu0
    %9265 = vdwg.mxu0
    %9266 = vmatprep.subr.mxu0 0.0
    %9267 = vmatpush1.msra.mxu0 %v8644
    %9268 = vmatprep.subr.mxu0 0.0
    %9269 = vmatpush1.msra.mxu0 %v8645
    %9270 = vmatprep.subr.mxu0 0.0
    %9271 = vmatpush1.msra.mxu0 %v8646
    %9272 = vmatprep.subr.mxu0 0.0
    %9273 = vmatpush1.msra.mxu0 %v8647
    %9274 = vmatprep.subr.mxu0 0.0
    %9275 = vmatpush1.msra.mxu0 %v8648
    %9276 = vmatprep.subr.mxu0 0.0
    %9277 = vmatpush1.msra.mxu0 %v8649
    %9278 = vmatprep.subr.mxu0 0.0
    %9279 = vmatpush1.msra.mxu0 %v8650
    %9280 = vmatprep.subr.mxu0 0.0
    %9281 = vmatpush1.msra.mxu0 %v8651
    %9282 = vmatprep.subr.mxu0 0.0
    %9283 = vmatpush1.msra.mxu0 %v8652
    %9284 = vmatprep.subr.mxu0 0.0
    %9285 = vmatpush1.msra.mxu0 %v8653
    %9286 = vmatprep.subr.mxu0 0.0
    %9287 = vmatpush1.msra.mxu0 %v8654
    %9288 = vmatprep.subr.mxu0 0.0
    %9289 = vmatpush1.msra.mxu0 %v8655
    %9290 = vmatprep.subr.mxu0 0.0
    %9291 = vmatpush1.msra.mxu0 %v8656
    %9292 = vmatprep.subr.mxu0 0.0
    %9293 = vmatpush1.msra.mxu0 %v8657
    %9294 = vmatprep.subr.mxu0 0.0
    %9295 = vmatpush1.msra.mxu0 %v8658
    %9296 = vmatprep.subr.mxu0 0.0
    %9297 = vmatpush1.msra.mxu0 %v8659
    %9298 = vmatprep.subr.mxu0 0.0
    %9299 = vmatpush1.msra.mxu0 %v8660
    %9300 = vmatprep.subr.mxu0 0.0
    %9301 = vmatpush1.msra.mxu0 %v8661
    %9302 = vmatprep.subr.mxu0 0.0
    %9303 = vmatpush1.msra.mxu0 %v8662
    %9304 = vmatprep.subr.mxu0 0.0
    %9305 = vmatpush1.msra.mxu0 %v8663
    %9306 = vmatprep.subr.mxu0 0.0
    %9307 = vmatpush1.msra.mxu0 %v8664
    %9308 = vmatprep.subr.mxu0 0.0
    %9309 = vmatpush1.msra.mxu0 %v8665
    %9310 = vmatprep.subr.mxu0 0.0
    %9311 = vmatpush1.msra.mxu0 %v8666
    %9312 = vmatprep.subr.mxu0 0.0
    %9313 = vmatpush1.msra.mxu0 %v8667
    %9314 = vmatprep.subr.mxu0 0.0
    %9315 = vmatpush1.msra.mxu0 %v8668
    %9316 = vmatprep.subr.mxu0 0.0
    %9317 = vmatpush1.msra.mxu0 %v8669
    %9318 = vmatprep.subr.mxu0 0.0
    %9319 = vmatpush1.msra.mxu0 %v8670
    %9320 = vmatprep.subr.mxu0 0.0
    %9321 = vmatpush1.msra.mxu0 %v8671
    %9322 = vmatprep.subr.mxu0 0.0
    %9323 = vmatpush1.msra.mxu0 %v8672
    %9324 = vmatprep.subr.mxu0 0.0
    %9325 = vmatpush1.msra.mxu0 %v8673
    %9326 = vmatprep.subr.mxu0 0.0
    %9327 = vmatpush1.msra.mxu0 %v8674
    %9328 = vmatprep.subr.mxu0 0.0
    %9329 = vmatpush1.msra.mxu0 %v8675
    %9330 = vmatprep.mubr.f32.mxu0 %v8818
    %9331 = vmatmul.mubr.f32.gmra.mrb[0].mxu0 %v8810
    %v9332 = vpop.f32.mrb[0].mxu0
    %v9333 = vadd.f32 %v9263, %v9332
    %v9334 = vpop.f32.mrb[0].mxu0
    %9335 = vdwg.mxu0
    %9336 = vmatprep.subr.mxu0 0.0
    %9337 = vmatpush1.msra.mxu0 %v8676
    %9338 = vmatprep.subr.mxu0 0.0
    %9339 = vmatpush1.msra.mxu0 %v8677
    %9340 = vmatprep.subr.mxu0 0.0
    %9341 = vmatpush1.msra.mxu0 %v8678
    %9342 = vmatprep.subr.mxu0 0.0
    %9343 = vmatpush1.msra.mxu0 %v8679
    %9344 = vmatprep.subr.mxu0 0.0
    %9345 = vmatpush1.msra.mxu0 %v8680
    %9346 = vmatprep.subr.mxu0 0.0
    %9347 = vmatpush1.msra.mxu0 %v8681
    %9348 = vmatprep.subr.mxu0 0.0
    %9349 = vmatpush1.msra.mxu0 %v8682
    %9350 = vmatprep.subr.mxu0 0.0
    %9351 = vmatpush1.msra.mxu0 %v8683
    %9352 = vmatprep.subr.mxu0 0.0
    %9353 = vmatpush1.msra.mxu0 %v8684
    %9354 = vmatprep.subr.mxu0 0.0
    %9355 = vmatpush1.msra.mxu0 %v8685
    %9356 = vmatprep.subr.mxu0 0.0
    %9357 = vmatpush1.msra.mxu0 %v8686
    %9358 = vmatprep.subr.mxu0 0.0
    %9359 = vmatpush1.msra.mxu0 %v8687
    %9360 = vmatprep.subr.mxu0 0.0
    %9361 = vmatpush1.msra.mxu0 %v8688
    %9362 = vmatprep.subr.mxu0 0.0
    %9363 = vmatpush1.msra.mxu0 %v8689
    %9364 = vmatprep.subr.mxu0 0.0
    %9365 = vmatpush1.msra.mxu0 %v8690
    %9366 = vmatprep.subr.mxu0 0.0
    %9367 = vmatpush1.msra.mxu0 %v8691
    %9368 = vmatprep.subr.mxu0 0.0
    %9369 = vmatpush1.msra.mxu0 %v8692
    %9370 = vmatprep.subr.mxu0 0.0
    %9371 = vmatpush1.msra.mxu0 %v8693
    %9372 = vmatprep.subr.mxu0 0.0
    %9373 = vmatpush1.msra.mxu0 %v8694
    %9374 = vmatprep.subr.mxu0 0.0
    %9375 = vmatpush1.msra.mxu0 %v8695
    %9376 = vmatprep.subr.mxu0 0.0
    %9377 = vmatpush1.msra.mxu0 %v8696
    %9378 = vmatprep.subr.mxu0 0.0
    %9379 = vmatpush1.msra.mxu0 %v8697
    %9380 = vmatprep.subr.mxu0 0.0
    %9381 = vmatpush1.msra.mxu0 %v8698
    %9382 = vmatprep.subr.mxu0 0.0
    %9383 = vmatpush1.msra.mxu0 %v8699
    %9384 = vmatprep.subr.mxu0 0.0
    %9385 = vmatpush1.msra.mxu0 %v8700
    %9386 = vmatprep.subr.mxu0 0.0
    %9387 = vmatpush1.msra.mxu0 %v8701
    %9388 = vmatprep.subr.mxu0 0.0
    %9389 = vmatpush1.msra.mxu0 %v8702
    %9390 = vmatprep.subr.mxu0 0.0
    %9391 = vmatpush1.msra.mxu0 %v8703
    %9392 = vmatprep.subr.mxu0 0.0
    %9393 = vmatpush1.msra.mxu0 %v8704
    %9394 = vmatprep.subr.mxu0 0.0
    %9395 = vmatpush1.msra.mxu0 %v8705
    %9396 = vmatprep.subr.mxu0 0.0
    %9397 = vmatpush1.msra.mxu0 %v8706
    %9398 = vmatprep.subr.mxu0 0.0
    %9399 = vmatpush1.msra.mxu0 %v8707
    %9400 = vmatprep.mubr.f32.mxu0 %v8819
    %9401 = vmatmul.mubr.f32.gmra.mrb[0].mxu0 %v8817
    %v9402 = vpop.f32.mrb[0].mxu0
    %v9403 = vadd.f32 %v9333, %v9402
    %v9404 = vpop.f32.mrb[0].mxu0
    %9405 = vdwg.mxu0
    %9406 = vmatprep.subr.mxu0 0.0
    %9407 = vmatpush1.msra.mxu0 %v8708
    %9408 = vmatprep.subr.mxu0 0.0
    %9409 = vmatpush1.msra.mxu0 %v8709
    %9410 = vmatprep.subr.mxu0 0.0
    %9411 = vmatpush1.msra.mxu0 %v8710
    %9412 = vmatprep.subr.mxu0 0.0
    %9413 = vmatpush1.msra.mxu0 %v8711
    %9414 = vmatprep.subr.mxu0 0.0
    %9415 = vmatpush1.msra.mxu0 %v8712
    %9416 = vmatprep.subr.mxu0 0.0
    %9417 = vmatpush1.msra.mxu0 %v8713
    %9418 = vmatprep.subr.mxu0 0.0
    %9419 = vmatpush1.msra.mxu0 %v8714
    %9420 = vmatprep.subr.mxu0 0.0
    %9421 = vmatpush1.msra.mxu0 %v8715
    %9422 = vmatprep.subr.mxu0 0.0
    %9423 = vmatpush1.msra.mxu0 %v8716
    %9424 = vmatprep.subr.mxu0 0.0
    %9425 = vmatpush1.msra.mxu0 %v8717
    %9426 = vmatprep.subr.mxu0 0.0
    %9427 = vmatpush1.msra.mxu0 %v8718
    %9428 = vmatprep.subr.mxu0 0.0
    %9429 = vmatpush1.msra.mxu0 %v8719
    %9430 = vmatprep.subr.mxu0 0.0
    %9431 = vmatpush1.msra.mxu0 %v8720
    %9432 = vmatprep.subr.mxu0 0.0
    %9433 = vmatpush1.msra.mxu0 %v8721
    %9434 = vmatprep.subr.mxu0 0.0
    %9435 = vmatpush1.msra.mxu0 %v8722
    %9436 = vmatprep.subr.mxu0 0.0
    %9437 = vmatpush1.msra.mxu0 %v8723
    %9438 = vmatprep.subr.mxu0 0.0
    %9439 = vmatpush1.msra.mxu0 %v8724
    %9440 = vmatprep.subr.mxu0 0.0
    %9441 = vmatpush1.msra.mxu0 %v8725
    %9442 = vmatprep.subr.mxu0 0.0
    %9443 = vmatpush1.msra.mxu0 %v8726
    %9444 = vmatprep.subr.mxu0 0.0
    %9445 = vmatpush1.msra.mxu0 %v8727
    %9446 = vmatprep.subr.mxu0 0.0
    %9447 = vmatpush1.msra.mxu0 %v8728
    %9448 = vmatprep.subr.mxu0 0.0
    %9449 = vmatpush1.msra.mxu0 %v8729
    %9450 = vmatprep.subr.mxu0 0.0
    %9451 = vmatpush1.msra.mxu0 %v8730
    %9452 = vmatprep.subr.mxu0 0.0
    %9453 = vmatpush1.msra.mxu0 %v8731
    %9454 = vmatprep.subr.mxu0 0.0
    %9455 = vmatpush1.msra.mxu0 %v8732
    %9456 = vmatprep.subr.mxu0 0.0
    %9457 = vmatpush1.msra.mxu0 %v8733
    %9458 = vmatprep.subr.mxu0 0.0
    %9459 = vmatpush1.msra.mxu0 %v8734
    %9460 = vmatprep.subr.mxu0 0.0
    %9461 = vmatpush1.msra.mxu0 %v8735
    %9462 = vmatprep.subr.mxu0 0.0
    %9463 = vmatpush1.msra.mxu0 %v8736
    %9464 = vmatprep.subr.mxu0 0.0
    %9465 = vmatpush1.msra.mxu0 %v8737
    %9466 = vmatprep.subr.mxu0 0.0
    %9467 = vmatpush1.msra.mxu0 %v8738
    %9468 = vmatprep.subr.mxu0 0.0
    %9469 = vmatpush1.msra.mxu0 %v8739
    %9470 = vmatprep.mubr.f32.mxu0 %v8827
    %9471 = vmatmul.mubr.f32.gmra.mrb[0].mxu0 %v8826
    %v9472 = vpop.f32.mrb[0].mxu0
    %v9473 = vadd.f32 %v9403, %v9472
    %v9474 = vpop.f32.mrb[0].mxu0
    %9475 = vdwg.mxu0
    %vm9476 = vcmask 41984
    %v9477 = vsel %vm9476, %v9473, -inf
    %9478 = vmax.xlane.f32.xlu0 %v9477
    %v9479 = vpop.xlane.xlu0 %9478
    %v9480 = vsub.f32 %v9473, %v9479
    %v9481 = vmul.f32 %v9480, 1.442695
    %v9482 = vpow.pop %v9481
    %v9483 = vsel %vm9476, %v9482, 0.0
    %9484 = vadd.xlane.f32.xlu0 %v9483
    %v9485 = vpop.xlane.xlu0 %9484
    %v9486 = vrcp.pop %v9485
    %v9487 = vmul.f32 %v9482, %v9486
    %9488 = vst.msk [vmem:[#allocation5] sm:$0x3] %vm9476, %v9487
    %9490 = vrot.lane.b32.xlu0 %v9473, 122
    %v9491 = vpop.permute.xlu0 %9490
    %vm9493 = vcmask 1024
    %9494 = vst.msk [vmem:[%s11] sm:$0x3] %vm9493, %v9491
    // Predicated region
    $region38: #{actor_critic_apply.1} parent=1 // pred_check
      _
    $region39: #{actor_critic_apply.1} parent=1 // pred_check_branch
      %9496 = sbr.rel (0) target = $region41
    $region40: #{actor_critic_apply.1} parent=1 // pred_region
      _
    $region41: #{actor_critic_apply.1} parent=1 // pred_fallthru
      _
    // Predicated region
    $region42: #{actor_critic_apply.1} parent=1 // pred_check
      _
    $region43: #{actor_critic_apply.1} parent=1 // pred_check_branch
      %9498 = sbr.rel (0) target = $region45
    $region44: #{actor_critic_apply.1} parent=1 // pred_region
      %s9500 = ssub.s32 32, 32
      %9501 = vsyncadd [#allocation6], %s9500
      %s9503 = sshll.u32 [#allocation5], 4
      %s9504 = int_to_ptr.vmem [resolvable:$true] %s9503
      %9506 = dma.vmem_to_hbm [thread:$0]  %s9504, 32, %s10, [#allocation6]
    $region45: #{actor_critic_apply.1} parent=1 // pred_fallthru
      _
    // Predicated region
    $region46: #{actor_critic_apply.1} parent=1 // pred_check
      _
    $region47: #{actor_critic_apply.1} parent=1 // pred_check_branch
      %9508 = sbr.rel (0) target = $region49
    $region48: #{actor_critic_apply.1} parent=1 // pred_region
      _
    $region49: #{actor_critic_apply.1} parent=1 // pred_fallthru
      _
    // Predicated region
    $region50: #{actor_critic_apply.1} parent=1 // pred_check
      _
    $region51: #{actor_critic_apply.1} parent=1 // pred_check_branch
      %9510 = sbr.rel (0) target = $region53
    $region52: #{actor_critic_apply.1} parent=1 // pred_region
      _
    $region53: #{actor_critic_apply.1} parent=1 // pred_fallthru
      _
    // Predicated region
    $region54: #{actor_critic_apply.1} parent=1 // pred_check
      _
    $region55: #{actor_critic_apply.1} parent=1 // pred_check_branch
      %9512 = sbr.rel (0) target = $region57
    $region56: #{actor_critic_apply.1} parent=1 // pred_region
      %9513 = dma.done [#allocation6], 32
    $region57: #{actor_critic_apply.1} parent=1 // pred_fallthru
      _
    // Predicated region
    $region58: #{actor_critic_apply.1} parent=1 // pred_check
      _
    $region59: #{actor_critic_apply.1} parent=1 // pred_check_branch
      %9515 = sbr.rel (0) target = $region61
    $region60: #{actor_critic_apply.1} parent=1 // pred_region
      _
    $region61: #{actor_critic_apply.1} parent=1 // pred_fallthru
      _
    %9516 = vsyncpa [#allocation6], 1

</llo_original>
